<compile_context>
chip_gen: v7x
topology: tpu7x:2x2x1
jax: 0.10.0
libtpu: 0.0.40
codegen_flags: <defaults>
</compile_context>

<pallas_src>
import numpy as np
import jax
import jax.numpy as jnp
from jax import lax
from jax.experimental import pallas as pl
from jax.experimental.pallas import tpu as pltpu

# ------------------------------ configuration --------------------------------
B, H, W = 2, 8, 8           # batch, input_resolution
C = 32                      # dim
NUM_HEADS = 4
WS = 4                      # window_size
SHIFT = 2                   # shift_size (SW-MSA path, exercises the attn mask)
MLP_RATIO = 4.0
HIDDEN = int(C * MLP_RATIO)
N = WS * WS                 # tokens per window
NW = (H // WS) * (W // WS)  # windows per image
L = H * W                   # tokens per image
BL = B * L                  # batch folded into matmul M dimension (=128)
HEAD_DIM = C // NUM_HEADS
SCALE = HEAD_DIM ** -0.5
EPS = 1e-5                  # PyTorch nn.LayerNorm default eps
NEG = -1e9                  # cross-window / cross-batch mask (softmax weight -> 0)


# ------------------------------ in-kernel helpers ------------------------------
def _erf(x):
    """Abramowitz & Stegun 7.1.26 (max abs err 1.5e-7): only exp / VALU ops."""
    a1, a2, a3, a4, a5 = (0.254829592, -0.284496736, 1.421413741,
                          -1.453152027, 1.061405429)
    p = 0.3275911
    ax = jnp.abs(x)
    t = 1.0 / (1.0 + p * ax)
    poly = ((((a5 * t + a4) * t + a3) * t + a2) * t + a1) * t
    y = 1.0 - poly * jnp.exp(-ax * ax)
    return jnp.where(x >= 0, y, -y)


def _gelu_exact(x):
    return 0.5 * x * (1.0 + _erf(x * 0.7071067811865476))


# ------------------------------ Pallas kernel ---------------------------------
def _swin_block_kernel(x_ref, bias_ref, ln_ref, wqkv_ref, bqkv_ref,
                       wproj_ref, pb_ref, w1_ref, fb1_ref, w2_ref, o_ref):
    """Whole SwinTransformerBlock for all B*L tokens in one shot."""
    x = x_ref[...]                                       # (BL, C)
    ln = ln_ref[...]                                     # (4, C): g1, b1, g2, b2
    pb = pb_ref[...]                                     # (2, C): proj_b, fc2_b

    # ---- norm1 ----
    mu = jnp.mean(x, axis=-1, keepdims=True)
    var = jnp.mean((x - mu) ** 2, axis=-1, keepdims=True)
    xn = (x - mu) * lax.rsqrt(var + EPS) * ln[0:1, :] + ln[1:2, :]

    # ---- shifted-window multi-head attention; window structure lives entirely
    #      in bias_ref (same-window: rel-pos bias + shift mask; else -1e9).
    #      Per-head weights are pre-split host-side, so no lane slicing, no
    #      concat, no kh.T; the output projection is accumulated per head. ----
    acc = jnp.zeros((BL, C), jnp.float32)
    nt = (((1,), (1,)), ((), ()))                        # contract last dims: q @ k^T
    for h in range(NUM_HEADS):
        qh = jnp.dot(xn, wqkv_ref[0, h],
                     preferred_element_type=jnp.float32) + bqkv_ref[0, h]   # (BL, hd)
        kh = jnp.dot(xn, wqkv_ref[1, h],
                     preferred_element_type=jnp.float32) + bqkv_ref[1, h]
        vh = jnp.dot(xn, wqkv_ref[2, h],
                     preferred_element_type=jnp.float32) + bqkv_ref[2, h]
        s = lax.dot_general(qh, kh, dimension_numbers=nt,
                            preferred_element_type=jnp.float32)             # (BL, BL)
        s = s + bias_ref[h]
        m = jnp.max(s, axis=-1, keepdims=True)
        e = jnp.exp(s - m)
        r = jnp.sum(e, axis=-1, keepdims=True)
        p = e * pl.reciprocal(r, approx=True)            # divide on the EUP slot
        oh = jnp.dot(p, vh, preferred_element_type=jnp.float32)             # (BL, hd)
        acc = acc + jnp.dot(oh, wproj_ref[h],
                            preferred_element_type=jnp.float32)             # (BL, C)

    # ---- first residual (drop_path = identity) ----
    y = x + acc + pb[0:1, :]

    # ---- norm2 + MLP (fc1 -> exact GELU -> fc2) + second residual ----
    mu2 = jnp.mean(y, axis=-1, keepdims=True)
    var2 = jnp.mean((y - mu2) ** 2, axis=-1, keepdims=True)
    yn = (y - mu2) * lax.rsqrt(var2 + EPS) * ln[2:3, :] + ln[3:4, :]
    hid = jnp.dot(yn, w1_ref[...],
                  preferred_element_type=jnp.float32) + fb1_ref[...]        # (BL, HIDDEN)
    hid = _gelu_exact(hid)
    mlp = jnp.dot(hid, w2_ref[...],
                  preferred_element_type=jnp.float32) + pb[1:2, :]          # (BL, C)

    o_ref[...] = (y + mlp).astype(o_ref.dtype)


# ------------------------------ pallas_call wrapper ----------------------------
def swin_block_forward(x, kp):
    """x: (B, L, C) -> (B, L, C). Single launch, batch folded into M=B*L."""
    xf = x.reshape(BL, C)
    out = pl.pallas_call(
        _swin_block_kernel,
        out_shape=jax.ShapeDtypeStruct((BL, C), jnp.float32),
        # grid-less single invocation: every operand mapped whole into VMEM
        # (total footprint < 1 MiB on all generations incl. v7x's 64 MiB).
    )(xf, kp["bias"], kp["ln"], kp["wqkv"], kp["bqkv"], kp["wproj"],
      kp["pb"], kp["w1"], kp["fb1"], kp["w2"])
    return out.reshape(B, L, C)


# --------------------------- host-side static tables ---------------------------
def build_relative_position_index():
    coords = np.stack(np.meshgrid(np.arange(WS), np.arange(WS), indexing="ij"))
    coords_flatten = coords.reshape(2, -1)
    rel = coords_flatten[:, :, None] - coords_flatten[:, None, :]
    rel = rel.transpose(1, 2, 0).astype(np.int64)
    rel[:, :, 0] += WS - 1
    rel[:, :, 1] += WS - 1
    rel[:, :, 0] *= 2 * WS - 1
    return rel.sum(-1)                                             # (N, N)


def build_attn_mask_np():
    """PyTorch-identical shifted-window mask: (NW, N, N) with 0 / -100."""
    if SHIFT == 0:
        return np.zeros((NW, N, N), np.float32)
    img = np.zeros((H, W), np.float32)
    slices = (slice(0, -WS), slice(-WS, -SHIFT), slice(-SHIFT, None))
    cnt = 0
    for hs in slices:
        for ws_ in slices:
            img[hs, ws_] = cnt
            cnt += 1
    mw = img.reshape(H // WS, WS, W // WS, WS).transpose(0, 2, 1, 3).reshape(-1, N)
    diff = mw[:, None, :] - mw[:, :, None]
    return np.where(diff != 0, -100.0, 0.0).astype(np.float32)


def build_token_permutation():
    """perm[w*N + n] = original token index landing at window w, slot n after
    roll(-SHIFT, -SHIFT) + window_partition."""
    perm = np.zeros(L, np.int64)
    nwx = W // WS
    for hh in range(H):
        for ww in range(W):
            w = (hh // WS) * nwx + (ww // WS)
            n = (hh % WS) * WS + (ww % WS)
            perm[w * N + n] = ((hh + SHIFT) % H) * W + ((ww + SHIFT) % W)
    return perm


def build_fused_bias(rel_table_np):
    """(num_heads, B*L, B*L): block-diagonal per batch; same-window pairs get
    rel-pos bias + shift mask, everything else (incl. cross-batch) gets -1e9.
    NOTE: dense L x L (here B*L x B*L) bias is a toy-size-only formulation —
    do not scale this shape to real Swin resolutions (grows as L^2)."""
    rel_index = build_relative_position_index()
    rel_bias = rel_table_np[rel_index.reshape(-1)].reshape(N, N, NUM_HEADS)
    rel_bias = rel_bias.transpose(2, 0, 1).astype(np.float32)      # (heads, N, N)
    shift_mask = build_attn_mask_np()                              # (NW, N, N)
    perm = build_token_permutation()
    big = np.full((NUM_HEADS, BL, BL), NEG, np.float32)
    for b in range(B):
        for w in range(NW):
            tok = b * L + perm[w * N:(w + 1) * N]                  # original token ids
            big[:, tok[:, None], tok[None, :]] = rel_bias + shift_mask[w][None]
    return big, rel_bias, shift_mask


def build_kernel_params(p, big_bias_np):
    """Pre-split / pre-scale PyTorch-form parameters into kernel-form tensors."""
    qkv_w = np.asarray(p["qkv_w"])                                 # (C, 3C)
    qkv_b = np.asarray(p["qkv_b"])                                 # (3C,)
    # qkv output last dim layout = (3, heads, head_dim)
    wqkv = qkv_w.reshape(C, 3, NUM_HEADS, HEAD_DIM).transpose(1, 2, 0, 3).copy()
    bqkv = qkv_b.reshape(3, NUM_HEADS, 1, HEAD_DIM).copy()
    wqkv[0] *= SCALE                                               # fold qk scale into Q
    bqkv[0] *= SCALE
    wproj = np.asarray(p["proj_w"]).reshape(NUM_HEADS, HEAD_DIM, C)
    ln = np.stack([np.asarray(p["norm1_g"]), np.asarray(p["norm1_b"]),
                   np.asarray(p["norm2_g"]), np.asarray(p["norm2_b"])], 0)   # (4, C)
    pb = np.stack([np.asarray(p["proj_b"]), np.asarray(p["fc2_b"])], 0)      # (2, C)
    return {
        "bias": jnp.asarray(big_bias_np),
        "ln": jnp.asarray(ln, jnp.float32),
        "wqkv": jnp.asarray(wqkv, jnp.float32),
        "bqkv": jnp.asarray(bqkv, jnp.float32),
        "wproj": jnp.asarray(wproj, jnp.float32),
        "pb": jnp.asarray(pb, jnp.float32),
        "w1": jnp.asarray(p["fc1_w"], jnp.float32),
        "fb1": jnp.asarray(np.asarray(p["fc1_b"]).reshape(1, HIDDEN), jnp.float32),
        "w2": jnp.asarray(p["fc2_w"], jnp.float32),
    }


# ---------------------- pure-JAX reference (module-exact) ----------------------
def window_partition(x, ws):
    b, h, w, c = x.shape
    x = x.reshape(b, h // ws, ws, w // ws, ws, c)
    return x.transpose(0, 1, 3, 2, 4, 5).reshape(-1, ws, ws, c)


def window_reverse(windows, ws, h, w):
    b = windows.shape[0] // (h * w // ws // ws)
    x = windows.reshape(b, h // ws, w // ws, ws, ws, -1)
    return x.transpose(0, 1, 3, 2, 4, 5).reshape(b, h, w, -1)


def reference_forward(x, p, attn_mask, rel_bias):
    def ln(v, g, b):
        mu = jnp.mean(v, -1, keepdims=True)
        var = jnp.mean((v - mu) ** 2, -1, keepdims=True)
        return (v - mu) / jnp.sqrt(var + EPS) * g + b

    shortcut = x
    xn = ln(x, p["norm1_g"], p["norm1_b"])
    xi = xn.reshape(B, H, W, C)
    if SHIFT > 0:
        xi = jnp.roll(xi, (-SHIFT, -SHIFT), axis=(1, 2))
    xw = window_partition(xi, WS).reshape(-1, N, C)
    qkv = xw @ p["qkv_w"] + p["qkv_b"]
    qkv = qkv.reshape(-1, N, 3, NUM_HEADS, HEAD_DIM).transpose(2, 0, 3, 1, 4)
    q, k, v = qkv[0] * SCALE, qkv[1], qkv[2]
    attn = jnp.einsum('bhnd,bhmd->bhnm', q, k)
    attn = attn + rel_bias[None]
    attn = attn.reshape(B, NW, NUM_HEADS, N, N) + attn_mask[None, :, None]
    attn = jax.nn.softmax(attn.reshape(-1, NUM_HEADS, N, N), -1)
    out = jnp.einsum('bhnm,bhmd->bhnd', attn, v)
    out = out.transpose(0, 2, 1, 3).reshape(-1, N, C)
    out = out @ p["proj_w"] + p["proj_b"]
    sx = window_reverse(out.reshape(-1, WS, WS, C), WS, H, W)
    if SHIFT > 0:
        sx = jnp.roll(sx, (SHIFT, SHIFT), axis=(1, 2))
    x = shortcut + sx.reshape(B, L, C)
    xn2 = ln(x, p["norm2_g"], p["norm2_b"])
    hid = jax.nn.gelu(xn2 @ p["fc1_w"] + p["fc1_b"], approximate=False)
    return x + (hid @ p["fc2_w"] + p["fc2_b"])


# ----------------------------------- main --------------------------------------
if __name__ == "__main__":
    key = jax.random.PRNGKey(0)
    ks = jax.random.split(key, 10)

    params = {
        "norm1_g": jnp.ones((C,), jnp.float32),
        "norm1_b": jnp.zeros((C,), jnp.float32),
        "qkv_w":  (0.02 * jax.random.normal(ks[0], (C, 3 * C))).astype(jnp.float32),
        "qkv_b":  (0.02 * jax.random.normal(ks[1], (3 * C,))).astype(jnp.float32),
        "proj_w": (0.02 * jax.random.normal(ks[2], (C, C))).astype(jnp.float32),
        "proj_b": (0.02 * jax.random.normal(ks[3], (C,))).astype(jnp.float32),
        "norm2_g": jnp.ones((C,), jnp.float32),
        "norm2_b": jnp.zeros((C,), jnp.float32),
        "fc1_w":  (0.02 * jax.random.normal(ks[4], (C, HIDDEN))).astype(jnp.float32),
        "fc1_b":  (0.02 * jax.random.normal(ks[5], (HIDDEN,))).astype(jnp.float32),
        "fc2_w":  (0.02 * jax.random.normal(ks[6], (HIDDEN, C))).astype(jnp.float32),
        "fc2_b":  (0.02 * jax.random.normal(ks[7], (C,))).astype(jnp.float32),
    }
    rel_table = np.asarray(
        0.02 * jax.random.normal(ks[8], ((2 * WS - 1) * (2 * WS - 1), NUM_HEADS)),
        dtype=np.float32)

    big_bias_np, rel_bias_np, attn_mask_np = build_fused_bias(rel_table)
    kparams = build_kernel_params(params, big_bias_np)

    x = jax.random.normal(ks[9], (B, L, C), jnp.float32)

    out = jax.block_until_ready(swin_block_forward(x, kparams))

    ref = jax.block_until_ready(
        reference_forward(x, params, jnp.asarray(attn_mask_np), jnp.asarray(rel_bias_np)))
    np.testing.assert_allclose(np.asarray(out), np.asarray(ref),
                               atol=1e-3, rtol=1e-3)

    print("KERNEL_OK")
</pallas_src>

<mosaic_0001>
module attributes {stable_mosaic.version = 11 : i64} {
  func.func @_swin_block_kernel(%arg0: memref<128x32xf32, #tpu.memory_space<vmem>>, %arg1: memref<4x128x128xf32, #tpu.memory_space<vmem>>, %arg2: memref<4x32xf32, #tpu.memory_space<vmem>>, %arg3: memref<3x4x32x8xf32, #tpu.memory_space<vmem>>, %arg4: memref<3x4x1x8xf32, #tpu.memory_space<vmem>>, %arg5: memref<4x8x32xf32, #tpu.memory_space<vmem>>, %arg6: memref<2x32xf32, #tpu.memory_space<vmem>>, %arg7: memref<32x128xf32, #tpu.memory_space<vmem>>, %arg8: memref<1x128xf32, #tpu.memory_space<vmem>>, %arg9: memref<128x32xf32, #tpu.memory_space<vmem>>, %arg10: memref<128x32xf32, #tpu.memory_space<vmem>>) attributes {dimension_semantics = [], scalar_prefetch = 0 : i64, scratch_operands = 0 : i64, tpu.core_type = #tpu.core_type<tc>} {
    %c0 = arith.constant 0 : index
    %c0_0 = arith.constant 0 : index
    %0 = vector.load %arg0[%c0, %c0_0] : memref<128x32xf32, #tpu.memory_space<vmem>>, vector<128x32xf32>
    %c0_1 = arith.constant 0 : index
    %c0_2 = arith.constant 0 : index
    %1 = vector.load %arg2[%c0_1, %c0_2] : memref<4x32xf32, #tpu.memory_space<vmem>>, vector<4x32xf32>
    %c0_3 = arith.constant 0 : index
    %c0_4 = arith.constant 0 : index
    %2 = vector.load %arg6[%c0_3, %c0_4] : memref<2x32xf32, #tpu.memory_space<vmem>>, vector<2x32xf32>
    %cst = arith.constant dense<0.000000e+00> : vector<128xf32>
    %3 = vector.multi_reduction <add>, %0, %cst [1] : vector<128x32xf32> to vector<128xf32>
    %4 = vector.shape_cast %3 : vector<128xf32> to vector<128x1xf32>
    %cst_5 = arith.constant 3.200000e+01 : f32
    %5 = vector.broadcast %cst_5 : f32 to vector<128x1xf32>
    %6 = arith.divf %4, %5 : vector<128x1xf32>
    %7 = vector.broadcast %6 : vector<128x1xf32> to vector<128x32xf32>
    %8 = arith.subf %0, %7 : vector<128x32xf32>
    %9 = arith.mulf %8, %8 : vector<128x32xf32>
    %cst_6 = arith.constant dense<0.000000e+00> : vector<128xf32>
    %10 = vector.multi_reduction <add>, %9, %cst_6 [1] : vector<128x32xf32> to vector<128xf32>
    %11 = vector.shape_cast %10 : vector<128xf32> to vector<128x1xf32>
    %cst_7 = arith.constant 3.200000e+01 : f32
    %12 = vector.broadcast %cst_7 : f32 to vector<128x1xf32>
    %13 = arith.divf %11, %12 : vector<128x1xf32>
    %14 = vector.broadcast %6 : vector<128x1xf32> to vector<128x32xf32>
    %15 = arith.subf %0, %14 : vector<128x32xf32>
    %cst_8 = arith.constant 9.99999974E-6 : f32
    %16 = vector.broadcast %cst_8 : f32 to vector<128x1xf32>
    %17 = arith.addf %13, %16 : vector<128x1xf32>
    %18 = math.rsqrt %17 : vector<128x1xf32>
    %19 = vector.broadcast %18 : vector<128x1xf32> to vector<128x32xf32>
    %20 = arith.mulf %15, %19 : vector<128x32xf32>
    %21 = vector.extract_strided_slice %1 {offsets = [0, 0], sizes = [1, 32], strides = [1, 1]} : vector<4x32xf32> to vector<1x32xf32>
    %22 = vector.broadcast %21 : vector<1x32xf32> to vector<128x32xf32>
    %23 = arith.mulf %20, %22 : vector<128x32xf32>
    %24 = vector.extract_strided_slice %1 {offsets = [1, 0], sizes = [1, 32], strides = [1, 1]} : vector<4x32xf32> to vector<1x32xf32>
    %25 = vector.broadcast %24 : vector<1x32xf32> to vector<128x32xf32>
    %26 = arith.addf %23, %25 : vector<128x32xf32>
    %cst_9 = arith.constant 0.000000e+00 : f32
    %27 = vector.broadcast %cst_9 : f32 to vector<128x32xf32>
    %c0_10 = arith.constant 0 : index
    %c0_11 = arith.constant 0 : index
    %c0_12 = arith.constant 0 : index
    %c0_13 = arith.constant 0 : index
    %28 = vector.load %arg3[%c0_10, %c0_11, %c0_12, %c0_13] : memref<3x4x32x8xf32, #tpu.memory_space<vmem>>, vector<1x1x32x8xf32>
    %29 = vector.shape_cast %28 : vector<1x1x32x8xf32> to vector<32x8xf32>
    %cst_14 = arith.constant dense<0.000000e+00> : vector<128x8xf32>
    %30 = tpu.matmul %26, %29, %cst_14 {dimension_numbers = #tpu.dot_dimension_numbers<[1], [0], [0], [1], [0, 0, 1, 1], [], []>} : vector<128x32xf32>, vector<32x8xf32>, vector<128x8xf32> -> vector<128x8xf32>
    %c0_15 = arith.constant 0 : index
    %c0_16 = arith.constant 0 : index
    %c0_17 = arith.constant 0 : index
    %c0_18 = arith.constant 0 : index
    %31 = vector.load %arg4[%c0_15, %c0_16, %c0_17, %c0_18] : memref<3x4x1x8xf32, #tpu.memory_space<vmem>>, vector<1x1x1x8xf32>
    %32 = vector.shape_cast %31 : vector<1x1x1x8xf32> to vector<1x8xf32>
    %33 = vector.broadcast %32 : vector<1x8xf32> to vector<128x8xf32>
    %34 = arith.addf %30, %33 : vector<128x8xf32>
    %c1 = arith.constant 1 : index
    %c0_19 = arith.constant 0 : index
    %c0_20 = arith.constant 0 : index
    %c0_21 = arith.constant 0 : index
    %35 = vector.load %arg3[%c1, %c0_19, %c0_20, %c0_21] : memref<3x4x32x8xf32, #tpu.memory_space<vmem>>, vector<1x1x32x8xf32>
    %36 = vector.shape_cast %35 : vector<1x1x32x8xf32> to vector<32x8xf32>
    %cst_22 = arith.constant dense<0.000000e+00> : vector<128x8xf32>
    %37 = tpu.matmul %26, %36, %cst_22 {dimension_numbers = #tpu.dot_dimension_numbers<[1], [0], [0], [1], [0, 0, 1, 1], [], []>} : vector<128x32xf32>, vector<32x8xf32>, vector<128x8xf32> -> vector<128x8xf32>
    %c1_23 = arith.constant 1 : index
    %c0_24 = arith.constant 0 : index
    %c0_25 = arith.constant 0 : index
    %c0_26 = arith.constant 0 : index
    %38 = vector.load %arg4[%c1_23, %c0_24, %c0_25, %c0_26] : memref<3x4x1x8xf32, #tpu.memory_space<vmem>>, vector<1x1x1x8xf32>
    %39 = vector.shape_cast %38 : vector<1x1x1x8xf32> to vector<1x8xf32>
    %40 = vector.broadcast %39 : vector<1x8xf32> to vector<128x8xf32>
    %41 = arith.addf %37, %40 : vector<128x8xf32>
    %c2 = arith.constant 2 : index
    %c0_27 = arith.constant 0 : index
    %c0_28 = arith.constant 0 : index
    %c0_29 = arith.constant 0 : index
    %42 = vector.load %arg3[%c2, %c0_27, %c0_28, %c0_29] : memref<3x4x32x8xf32, #tpu.memory_space<vmem>>, vector<1x1x32x8xf32>
    %43 = vector.shape_cast %42 : vector<1x1x32x8xf32> to vector<32x8xf32>
    %cst_30 = arith.constant dense<0.000000e+00> : vector<128x8xf32>
    %44 = tpu.matmul %26, %43, %cst_30 {dimension_numbers = #tpu.dot_dimension_numbers<[1], [0], [0], [1], [0, 0, 1, 1], [], []>} : vector<128x32xf32>, vector<32x8xf32>, vector<128x8xf32> -> vector<128x8xf32>
    %c2_31 = arith.constant 2 : index
    %c0_32 = arith.constant 0 : index
    %c0_33 = arith.constant 0 : index
    %c0_34 = arith.constant 0 : index
    %45 = vector.load %arg4[%c2_31, %c0_32, %c0_33, %c0_34] : memref<3x4x1x8xf32, #tpu.memory_space<vmem>>, vector<1x1x1x8xf32>
    %46 = vector.shape_cast %45 : vector<1x1x1x8xf32> to vector<1x8xf32>
    %47 = vector.broadcast %46 : vector<1x8xf32> to vector<128x8xf32>
    %48 = arith.addf %44, %47 : vector<128x8xf32>
    %cst_35 = arith.constant dense<0.000000e+00> : vector<128x128xf32>
    %49 = tpu.matmul %34, %41, %cst_35 {dimension_numbers = #tpu.dot_dimension_numbers<[1], [1], [0], [0], [0, 0, 1, 0], [], []>} : vector<128x8xf32>, vector<128x8xf32>, vector<128x128xf32> -> vector<128x128xf32>
    %c0_36 = arith.constant 0 : index
    %c0_37 = arith.constant 0 : index
    %c0_38 = arith.constant 0 : index
    %50 = vector.load %arg1[%c0_36, %c0_37, %c0_38] : memref<4x128x128xf32, #tpu.memory_space<vmem>>, vector<1x128x128xf32>
    %51 = vector.shape_cast %50 : vector<1x128x128xf32> to vector<128x128xf32>
    %52 = arith.addf %49, %51 : vector<128x128xf32>
    %cst_39 = arith.constant dense<0xFF800000> : vector<128xf32>
    %53 = vector.multi_reduction <maximumf>, %52, %cst_39 [1] : vector<128x128xf32> to vector<128xf32>
    %54 = vector.shape_cast %53 : vector<128xf32> to vector<128x1xf32>
    %55 = vector.broadcast %54 : vector<128x1xf32> to vector<128x128xf32>
    %56 = arith.subf %52, %55 : vector<128x128xf32>
    %57 = math.exp %56 : vector<128x128xf32>
    %cst_40 = arith.constant dense<0.000000e+00> : vector<128xf32>
    %58 = vector.multi_reduction <add>, %57, %cst_40 [1] : vector<128x128xf32> to vector<128xf32>
    %59 = vector.shape_cast %58 : vector<128xf32> to vector<128x1xf32>
    %60 = tpu.reciprocal %59 {approx = true} : vector<128x1xf32> -> vector<128x1xf32>
    %61 = vector.broadcast %60 : vector<128x1xf32> to vector<128x128xf32>
    %62 = arith.mulf %57, %61 : vector<128x128xf32>
    %cst_41 = arith.constant dense<0.000000e+00> : vector<128x8xf32>
    %63 = tpu.matmul %62, %48, %cst_41 {dimension_numbers = #tpu.dot_dimension_numbers<[1], [0], [0], [1], [0, 0, 1, 1], [], []>} : vector<128x128xf32>, vector<128x8xf32>, vector<128x8xf32> -> vector<128x8xf32>
    %c0_42 = arith.constant 0 : index
    %c0_43 = arith.constant 0 : index
    %c0_44 = arith.constant 0 : index
    %64 = vector.load %arg5[%c0_42, %c0_43, %c0_44] : memref<4x8x32xf32, #tpu.memory_space<vmem>>, vector<1x8x32xf32>
    %65 = vector.shape_cast %64 : vector<1x8x32xf32> to vector<8x32xf32>
    %cst_45 = arith.constant dense<0.000000e+00> : vector<128x32xf32>
    %66 = tpu.matmul %63, %65, %cst_45 {dimension_numbers = #tpu.dot_dimension_numbers<[1], [0], [0], [1], [0, 0, 1, 1], [], []>} : vector<128x8xf32>, vector<8x32xf32>, vector<128x32xf32> -> vector<128x32xf32>
    %67 = arith.addf %27, %66 : vector<128x32xf32>
    %c0_46 = arith.constant 0 : index
    %c1_47 = arith.constant 1 : index
    %c0_48 = arith.constant 0 : index
    %c0_49 = arith.constant 0 : index
    %68 = vector.load %arg3[%c0_46, %c1_47, %c0_48, %c0_49] : memref<3x4x32x8xf32, #tpu.memory_space<vmem>>, vector<1x1x32x8xf32>
    %69 = vector.shape_cast %68 : vector<1x1x32x8xf32> to vector<32x8xf32>
    %cst_50 = arith.constant dense<0.000000e+00> : vector<128x8xf32>
    %70 = tpu.matmul %26, %69, %cst_50 {dimension_numbers = #tpu.dot_dimension_numbers<[1], [0], [0], [1], [0, 0, 1, 1], [], []>} : vector<128x32xf32>, vector<32x8xf32>, vector<128x8xf32> -> vector<128x8xf32>
    %c0_51 = arith.constant 0 : index
    %c1_52 = arith.constant 1 : index
    %c0_53 = arith.constant 0 : index
    %c0_54 = arith.constant 0 : index
    %71 = vector.load %arg4[%c0_51, %c1_52, %c0_53, %c0_54] : memref<3x4x1x8xf32, #tpu.memory_space<vmem>>, vector<1x1x1x8xf32>
    %72 = vector.shape_cast %71 : vector<1x1x1x8xf32> to vector<1x8xf32>
    %73 = vector.broadcast %72 : vector<1x8xf32> to vector<128x8xf32>
    %74 = arith.addf %70, %73 : vector<128x8xf32>
    %c1_55 = arith.constant 1 : index
    %c1_56 = arith.constant 1 : index
    %c0_57 = arith.constant 0 : index
    %c0_58 = arith.constant 0 : index
    %75 = vector.load %arg3[%c1_55, %c1_56, %c0_57, %c0_58] : memref<3x4x32x8xf32, #tpu.memory_space<vmem>>, vector<1x1x32x8xf32>
    %76 = vector.shape_cast %75 : vector<1x1x32x8xf32> to vector<32x8xf32>
    %cst_59 = arith.constant dense<0.000000e+00> : vector<128x8xf32>
    %77 = tpu.matmul %26, %76, %cst_59 {dimension_numbers = #tpu.dot_dimension_numbers<[1], [0], [0], [1], [0, 0, 1, 1], [], []>} : vector<128x32xf32>, vector<32x8xf32>, vector<128x8xf32> -> vector<128x8xf32>
    %c1_60 = arith.constant 1 : index
    %c1_61 = arith.constant 1 : index
    %c0_62 = arith.constant 0 : index
    %c0_63 = arith.constant 0 : index
    %78 = vector.load %arg4[%c1_60, %c1_61, %c0_62, %c0_63] : memref<3x4x1x8xf32, #tpu.memory_space<vmem>>, vector<1x1x1x8xf32>
    %79 = vector.shape_cast %78 : vector<1x1x1x8xf32> to vector<1x8xf32>
    %80 = vector.broadcast %79 : vector<1x8xf32> to vector<128x8xf32>
    %81 = arith.addf %77, %80 : vector<128x8xf32>
    %c2_64 = arith.constant 2 : index
    %c1_65 = arith.constant 1 : index
    %c0_66 = arith.constant 0 : index
    %c0_67 = arith.constant 0 : index
    %82 = vector.load %arg3[%c2_64, %c1_65, %c0_66, %c0_67] : memref<3x4x32x8xf32, #tpu.memory_space<vmem>>, vector<1x1x32x8xf32>
    %83 = vector.shape_cast %82 : vector<1x1x32x8xf32> to vector<32x8xf32>
    %cst_68 = arith.constant dense<0.000000e+00> : vector<128x8xf32>
    %84 = tpu.matmul %26, %83, %cst_68 {dimension_numbers = #tpu.dot_dimension_numbers<[1], [0], [0], [1], [0, 0, 1, 1], [], []>} : vector<128x32xf32>, vector<32x8xf32>, vector<128x8xf32> -> vector<128x8xf32>
    %c2_69 = arith.constant 2 : index
    %c1_70 = arith.constant 1 : index
    %c0_71 = arith.constant 0 : index
    %c0_72 = arith.constant 0 : index
    %85 = vector.load %arg4[%c2_69, %c1_70, %c0_71, %c0_72] : memref<3x4x1x8xf32, #tpu.memory_space<vmem>>, vector<1x1x1x8xf32>
    %86 = vector.shape_cast %85 : vector<1x1x1x8xf32> to vector<1x8xf32>
    %87 = vector.broadcast %86 : vector<1x8xf32> to vector<128x8xf32>
    %88 = arith.addf %84, %87 : vector<128x8xf32>
    %cst_73 = arith.constant dense<0.000000e+00> : vector<128x128xf32>
    %89 = tpu.matmul %74, %81, %cst_73 {dimension_numbers = #tpu.dot_dimension_numbers<[1], [1], [0], [0], [0, 0, 1, 0], [], []>} : vector<128x8xf32>, vector<128x8xf32>, vector<128x128xf32> -> vector<128x128xf32>
    %c1_74 = arith.constant 1 : index
    %c0_75 = arith.constant 0 : index
    %c0_76 = arith.constant 0 : index
    %90 = vector.load %arg1[%c1_74, %c0_75, %c0_76] : memref<4x128x128xf32, #tpu.memory_space<vmem>>, vector<1x128x128xf32>
    %91 = vector.shape_cast %90 : vector<1x128x128xf32> to vector<128x128xf32>
    %92 = arith.addf %89, %91 : vector<128x128xf32>
    %cst_77 = arith.constant dense<0xFF800000> : vector<128xf32>
    %93 = vector.multi_reduction <maximumf>, %92, %cst_77 [1] : vector<128x128xf32> to vector<128xf32>
    %94 = vector.shape_cast %93 : vector<128xf32> to vector<128x1xf32>
    %95 = vector.broadcast %94 : vector<128x1xf32> to vector<128x128xf32>
    %96 = arith.subf %92, %95 : vector<128x128xf32>
    %97 = math.exp %96 : vector<128x128xf32>
    %cst_78 = arith.constant dense<0.000000e+00> : vector<128xf32>
    %98 = vector.multi_reduction <add>, %97, %cst_78 [1] : vector<128x128xf32> to vector<128xf32>
    %99 = vector.shape_cast %98 : vector<128xf32> to vector<128x1xf32>
    %100 = tpu.reciprocal %99 {approx = true} : vector<128x1xf32> -> vector<128x1xf32>
    %101 = vector.broadcast %100 : vector<128x1xf32> to vector<128x128xf32>
    %102 = arith.mulf %97, %101 : vector<128x128xf32>
    %cst_79 = arith.constant dense<0.000000e+00> : vector<128x8xf32>
    %103 = tpu.matmul %102, %88, %cst_79 {dimension_numbers = #tpu.dot_dimension_numbers<[1], [0], [0], [1], [0, 0, 1, 1], [], []>} : vector<128x128xf32>, vector<128x8xf32>, vector<128x8xf32> -> vector<128x8xf32>
    %c1_80 = arith.constant 1 : index
    %c0_81 = arith.constant 0 : index
    %c0_82 = arith.constant 0 : index
    %104 = vector.load %arg5[%c1_80, %c0_81, %c0_82] : memref<4x8x32xf32, #tpu.memory_space<vmem>>, vector<1x8x32xf32>
    %105 = vector.shape_cast %104 : vector<1x8x32xf32> to vector<8x32xf32>
    %cst_83 = arith.constant dense<0.000000e+00> : vector<128x32xf32>
    %106 = tpu.matmul %103, %105, %cst_83 {dimension_numbers = #tpu.dot_dimension_numbers<[1], [0], [0], [1], [0, 0, 1, 1], [], []>} : vector<128x8xf32>, vector<8x32xf32>, vector<128x32xf32> -> vector<128x32xf32>
    %107 = arith.addf %67, %106 : vector<128x32xf32>
    %c0_84 = arith.constant 0 : index
    %c2_85 = arith.constant 2 : index
    %c0_86 = arith.constant 0 : index
    %c0_87 = arith.constant 0 : index
    %108 = vector.load %arg3[%c0_84, %c2_85, %c0_86, %c0_87] : memref<3x4x32x8xf32, #tpu.memory_space<vmem>>, vector<1x1x32x8xf32>
    %109 = vector.shape_cast %108 : vector<1x1x32x8xf32> to vector<32x8xf32>
    %cst_88 = arith.constant dense<0.000000e+00> : vector<128x8xf32>
    %110 = tpu.matmul %26, %109, %cst_88 {dimension_numbers = #tpu.dot_dimension_numbers<[1], [0], [0], [1], [0, 0, 1, 1], [], []>} : vector<128x32xf32>, vector<32x8xf32>, vector<128x8xf32> -> vector<128x8xf32>
    %c0_89 = arith.constant 0 : index
    %c2_90 = arith.constant 2 : index
    %c0_91 = arith.constant 0 : index
    %c0_92 = arith.constant 0 : index
    %111 = vector.load %arg4[%c0_89, %c2_90, %c0_91, %c0_92] : memref<3x4x1x8xf32, #tpu.memory_space<vmem>>, vector<1x1x1x8xf32>
    %112 = vector.shape_cast %111 : vector<1x1x1x8xf32> to vector<1x8xf32>
    %113 = vector.broadcast %112 : vector<1x8xf32> to vector<128x8xf32>
    %114 = arith.addf %110, %113 : vector<128x8xf32>
    %c1_93 = arith.constant 1 : index
    %c2_94 = arith.constant 2 : index
    %c0_95 = arith.constant 0 : index
    %c0_96 = arith.constant 0 : index
    %115 = vector.load %arg3[%c1_93, %c2_94, %c0_95, %c0_96] : memref<3x4x32x8xf32, #tpu.memory_space<vmem>>, vector<1x1x32x8xf32>
    %116 = vector.shape_cast %115 : vector<1x1x32x8xf32> to vector<32x8xf32>
    %cst_97 = arith.constant dense<0.000000e+00> : vector<128x8xf32>
    %117 = tpu.matmul %26, %116, %cst_97 {dimension_numbers = #tpu.dot_dimension_numbers<[1], [0], [0], [1], [0, 0, 1, 1], [], []>} : vector<128x32xf32>, vector<32x8xf32>, vector<128x8xf32> -> vector<128x8xf32>
    %c1_98 = arith.constant 1 : index
    %c2_99 = arith.constant 2 : index
    %c0_100 = arith.constant 0 : index
    %c0_101 = arith.constant 0 : index
    %118 = vector.load %arg4[%c1_98, %c2_99, %c0_100, %c0_101] : memref<3x4x1x8xf32, #tpu.memory_space<vmem>>, vector<1x1x1x8xf32>
    %119 = vector.shape_cast %118 : vector<1x1x1x8xf32> to vector<1x8xf32>
    %120 = vector.broadcast %119 : vector<1x8xf32> to vector<128x8xf32>
    %121 = arith.addf %117, %120 : vector<128x8xf32>
    %c2_102 = arith.constant 2 : index
    %c2_103 = arith.constant 2 : index
    %c0_104 = arith.constant 0 : index
    %c0_105 = arith.constant 0 : index
    %122 = vector.load %arg3[%c2_102, %c2_103, %c0_104, %c0_105] : memref<3x4x32x8xf32, #tpu.memory_space<vmem>>, vector<1x1x32x8xf32>
    %123 = vector.shape_cast %122 : vector<1x1x32x8xf32> to vector<32x8xf32>
    %cst_106 = arith.constant dense<0.000000e+00> : vector<128x8xf32>
    %124 = tpu.matmul %26, %123, %cst_106 {dimension_numbers = #tpu.dot_dimension_numbers<[1], [0], [0], [1], [0, 0, 1, 1], [], []>} : vector<128x32xf32>, vector<32x8xf32>, vector<128x8xf32> -> vector<128x8xf32>
    %c2_107 = arith.constant 2 : index
    %c2_108 = arith.constant 2 : index
    %c0_109 = arith.constant 0 : index
    %c0_110 = arith.constant 0 : index
    %125 = vector.load %arg4[%c2_107, %c2_108, %c0_109, %c0_110] : memref<3x4x1x8xf32, #tpu.memory_space<vmem>>, vector<1x1x1x8xf32>
    %126 = vector.shape_cast %125 : vector<1x1x1x8xf32> to vector<1x8xf32>
    %127 = vector.broadcast %126 : vector<1x8xf32> to vector<128x8xf32>
    %128 = arith.addf %124, %127 : vector<128x8xf32>
    %cst_111 = arith.constant dense<0.000000e+00> : vector<128x128xf32>
    %129 = tpu.matmul %114, %121, %cst_111 {dimension_numbers = #tpu.dot_dimension_numbers<[1], [1], [0], [0], [0, 0, 1, 0], [], []>} : vector<128x8xf32>, vector<128x8xf32>, vector<128x128xf32> -> vector<128x128xf32>
    %c2_112 = arith.constant 2 : index
    %c0_113 = arith.constant 0 : index
    %c0_114 = arith.constant 0 : index
    %130 = vector.load %arg1[%c2_112, %c0_113, %c0_114] : memref<4x128x128xf32, #tpu.memory_space<vmem>>, vector<1x128x128xf32>
    %131 = vector.shape_cast %130 : vector<1x128x128xf32> to vector<128x128xf32>
    %132 = arith.addf %129, %131 : vector<128x128xf32>
    %cst_115 = arith.constant dense<0xFF800000> : vector<128xf32>
    %133 = vector.multi_reduction <maximumf>, %132, %cst_115 [1] : vector<128x128xf32> to vector<128xf32>
    %134 = vector.shape_cast %133 : vector<128xf32> to vector<128x1xf32>
    %135 = vector.broadcast %134 : vector<128x1xf32> to vector<128x128xf32>
    %136 = arith.subf %132, %135 : vector<128x128xf32>
    %137 = math.exp %136 : vector<128x128xf32>
    %cst_116 = arith.constant dense<0.000000e+00> : vector<128xf32>
    %138 = vector.multi_reduction <add>, %137, %cst_116 [1] : vector<128x128xf32> to vector<128xf32>
    %139 = vector.shape_cast %138 : vector<128xf32> to vector<128x1xf32>
    %140 = tpu.reciprocal %139 {approx = true} : vector<128x1xf32> -> vector<128x1xf32>
    %141 = vector.broadcast %140 : vector<128x1xf32> to vector<128x128xf32>
    %142 = arith.mulf %137, %141 : vector<128x128xf32>
    %cst_117 = arith.constant dense<0.000000e+00> : vector<128x8xf32>
    %143 = tpu.matmul %142, %128, %cst_117 {dimension_numbers = #tpu.dot_dimension_numbers<[1], [0], [0], [1], [0, 0, 1, 1], [], []>} : vector<128x128xf32>, vector<128x8xf32>, vector<128x8xf32> -> vector<128x8xf32>
    %c2_118 = arith.constant 2 : index
    %c0_119 = arith.constant 0 : index
    %c0_120 = arith.constant 0 : index
    %144 = vector.load %arg5[%c2_118, %c0_119, %c0_120] : memref<4x8x32xf32, #tpu.memory_space<vmem>>, vector<1x8x32xf32>
    %145 = vector.shape_cast %144 : vector<1x8x32xf32> to vector<8x32xf32>
    %cst_121 = arith.constant dense<0.000000e+00> : vector<128x32xf32>
    %146 = tpu.matmul %143, %145, %cst_121 {dimension_numbers = #tpu.dot_dimension_numbers<[1], [0], [0], [1], [0, 0, 1, 1], [], []>} : vector<128x8xf32>, vector<8x32xf32>, vector<128x32xf32> -> vector<128x32xf32>
    %147 = arith.addf %107, %146 : vector<128x32xf32>
    %c0_122 = arith.constant 0 : index
    %c3 = arith.constant 3 : index
    %c0_123 = arith.constant 0 : index
    %c0_124 = arith.constant 0 : index
    %148 = vector.load %arg3[%c0_122, %c3, %c0_123, %c0_124] : memref<3x4x32x8xf32, #tpu.memory_space<vmem>>, vector<1x1x32x8xf32>
    %149 = vector.shape_cast %148 : vector<1x1x32x8xf32> to vector<32x8xf32>
    %cst_125 = arith.constant dense<0.000000e+00> : vector<128x8xf32>
    %150 = tpu.matmul %26, %149, %cst_125 {dimension_numbers = #tpu.dot_dimension_numbers<[1], [0], [0], [1], [0, 0, 1, 1], [], []>} : vector<128x32xf32>, vector<32x8xf32>, vector<128x8xf32> -> vector<128x8xf32>
    %c0_126 = arith.constant 0 : index
    %c3_127 = arith.constant 3 : index
    %c0_128 = arith.constant 0 : index
    %c0_129 = arith.constant 0 : index
    %151 = vector.load %arg4[%c0_126, %c3_127, %c0_128, %c0_129] : memref<3x4x1x8xf32, #tpu.memory_space<vmem>>, vector<1x1x1x8xf32>
    %152 = vector.shape_cast %151 : vector<1x1x1x8xf32> to vector<1x8xf32>
    %153 = vector.broadcast %152 : vector<1x8xf32> to vector<128x8xf32>
    %154 = arith.addf %150, %153 : vector<128x8xf32>
    %c1_130 = arith.constant 1 : index
    %c3_131 = arith.constant 3 : index
    %c0_132 = arith.constant 0 : index
    %c0_133 = arith.constant 0 : index
    %155 = vector.load %arg3[%c1_130, %c3_131, %c0_132, %c0_133] : memref<3x4x32x8xf32, #tpu.memory_space<vmem>>, vector<1x1x32x8xf32>
    %156 = vector.shape_cast %155 : vector<1x1x32x8xf32> to vector<32x8xf32>
    %cst_134 = arith.constant dense<0.000000e+00> : vector<128x8xf32>
    %157 = tpu.matmul %26, %156, %cst_134 {dimension_numbers = #tpu.dot_dimension_numbers<[1], [0], [0], [1], [0, 0, 1, 1], [], []>} : vector<128x32xf32>, vector<32x8xf32>, vector<128x8xf32> -> vector<128x8xf32>
    %c1_135 = arith.constant 1 : index
    %c3_136 = arith.constant 3 : index
    %c0_137 = arith.constant 0 : index
    %c0_138 = arith.constant 0 : index
    %158 = vector.load %arg4[%c1_135, %c3_136, %c0_137, %c0_138] : memref<3x4x1x8xf32, #tpu.memory_space<vmem>>, vector<1x1x1x8xf32>
    %159 = vector.shape_cast %158 : vector<1x1x1x8xf32> to vector<1x8xf32>
    %160 = vector.broadcast %159 : vector<1x8xf32> to vector<128x8xf32>
    %161 = arith.addf %157, %160 : vector<128x8xf32>
    %c2_139 = arith.constant 2 : index
    %c3_140 = arith.constant 3 : index
    %c0_141 = arith.constant 0 : index
    %c0_142 = arith.constant 0 : index
    %162 = vector.load %arg3[%c2_139, %c3_140, %c0_141, %c0_142] : memref<3x4x32x8xf32, #tpu.memory_space<vmem>>, vector<1x1x32x8xf32>
    %163 = vector.shape_cast %162 : vector<1x1x32x8xf32> to vector<32x8xf32>
    %cst_143 = arith.constant dense<0.000000e+00> : vector<128x8xf32>
    %164 = tpu.matmul %26, %163, %cst_143 {dimension_numbers = #tpu.dot_dimension_numbers<[1], [0], [0], [1], [0, 0, 1, 1], [], []>} : vector<128x32xf32>, vector<32x8xf32>, vector<128x8xf32> -> vector<128x8xf32>
    %c2_144 = arith.constant 2 : index
    %c3_145 = arith.constant 3 : index
    %c0_146 = arith.constant 0 : index
    %c0_147 = arith.constant 0 : index
    %165 = vector.load %arg4[%c2_144, %c3_145, %c0_146, %c0_147] : memref<3x4x1x8xf32, #tpu.memory_space<vmem>>, vector<1x1x1x8xf32>
    %166 = vector.shape_cast %165 : vector<1x1x1x8xf32> to vector<1x8xf32>
    %167 = vector.broadcast %166 : vector<1x8xf32> to vector<128x8xf32>
    %168 = arith.addf %164, %167 : vector<128x8xf32>
    %cst_148 = arith.constant dense<0.000000e+00> : vector<128x128xf32>
    %169 = tpu.matmul %154, %161, %cst_148 {dimension_numbers = #tpu.dot_dimension_numbers<[1], [1], [0], [0], [0, 0, 1, 0], [], []>} : vector<128x8xf32>, vector<128x8xf32>, vector<128x128xf32> -> vector<128x128xf32>
    %c3_149 = arith.constant 3 : index
    %c0_150 = arith.constant 0 : index
    %c0_151 = arith.constant 0 : index
    %170 = vector.load %arg1[%c3_149, %c0_150, %c0_151] : memref<4x128x128xf32, #tpu.memory_space<vmem>>, vector<1x128x128xf32>
    %171 = vector.shape_cast %170 : vector<1x128x128xf32> to vector<128x128xf32>
    %172 = arith.addf %169, %171 : vector<128x128xf32>
    %cst_152 = arith.constant dense<0xFF800000> : vector<128xf32>
    %173 = vector.multi_reduction <maximumf>, %172, %cst_152 [1] : vector<128x128xf32> to vector<128xf32>
    %174 = vector.shape_cast %173 : vector<128xf32> to vector<128x1xf32>
    %175 = vector.broadcast %174 : vector<128x1xf32> to vector<128x128xf32>
    %176 = arith.subf %172, %175 : vector<128x128xf32>
    %177 = math.exp %176 : vector<128x128xf32>
    %cst_153 = arith.constant dense<0.000000e+00> : vector<128xf32>
    %178 = vector.multi_reduction <add>, %177, %cst_153 [1] : vector<128x128xf32> to vector<128xf32>
    %179 = vector.shape_cast %178 : vector<128xf32> to vector<128x1xf32>
    %180 = tpu.reciprocal %179 {approx = true} : vector<128x1xf32> -> vector<128x1xf32>
    %181 = vector.broadcast %180 : vector<128x1xf32> to vector<128x128xf32>
    %182 = arith.mulf %177, %181 : vector<128x128xf32>
    %cst_154 = arith.constant dense<0.000000e+00> : vector<128x8xf32>
    %183 = tpu.matmul %182, %168, %cst_154 {dimension_numbers = #tpu.dot_dimension_numbers<[1], [0], [0], [1], [0, 0, 1, 1], [], []>} : vector<128x128xf32>, vector<128x8xf32>, vector<128x8xf32> -> vector<128x8xf32>
    %c3_155 = arith.constant 3 : index
    %c0_156 = arith.constant 0 : index
    %c0_157 = arith.constant 0 : index
    %184 = vector.load %arg5[%c3_155, %c0_156, %c0_157] : memref<4x8x32xf32, #tpu.memory_space<vmem>>, vector<1x8x32xf32>
    %185 = vector.shape_cast %184 : vector<1x8x32xf32> to vector<8x32xf32>
    %cst_158 = arith.constant dense<0.000000e+00> : vector<128x32xf32>
    %186 = tpu.matmul %183, %185, %cst_158 {dimension_numbers = #tpu.dot_dimension_numbers<[1], [0], [0], [1], [0, 0, 1, 1], [], []>} : vector<128x8xf32>, vector<8x32xf32>, vector<128x32xf32> -> vector<128x32xf32>
    %187 = arith.addf %147, %186 : vector<128x32xf32>
    %188 = arith.addf %0, %187 : vector<128x32xf32>
    %189 = vector.extract_strided_slice %2 {offsets = [0, 0], sizes = [1, 32], strides = [1, 1]} : vector<2x32xf32> to vector<1x32xf32>
    %190 = vector.broadcast %189 : vector<1x32xf32> to vector<128x32xf32>
    %191 = arith.addf %188, %190 : vector<128x32xf32>
    %cst_159 = arith.constant dense<0.000000e+00> : vector<128xf32>
    %192 = vector.multi_reduction <add>, %191, %cst_159 [1] : vector<128x32xf32> to vector<128xf32>
    %193 = vector.shape_cast %192 : vector<128xf32> to vector<128x1xf32>
    %cst_160 = arith.constant 3.200000e+01 : f32
    %194 = vector.broadcast %cst_160 : f32 to vector<128x1xf32>
    %195 = arith.divf %193, %194 : vector<128x1xf32>
    %196 = vector.broadcast %195 : vector<128x1xf32> to vector<128x32xf32>
    %197 = arith.subf %191, %196 : vector<128x32xf32>
    %198 = arith.mulf %197, %197 : vector<128x32xf32>
    %cst_161 = arith.constant dense<0.000000e+00> : vector<128xf32>
    %199 = vector.multi_reduction <add>, %198, %cst_161 [1] : vector<128x32xf32> to vector<128xf32>
    %200 = vector.shape_cast %199 : vector<128xf32> to vector<128x1xf32>
    %cst_162 = arith.constant 3.200000e+01 : f32
    %201 = vector.broadcast %cst_162 : f32 to vector<128x1xf32>
    %202 = arith.divf %200, %201 : vector<128x1xf32>
    %203 = vector.broadcast %195 : vector<128x1xf32> to vector<128x32xf32>
    %204 = arith.subf %191, %203 : vector<128x32xf32>
    %cst_163 = arith.constant 9.99999974E-6 : f32
    %205 = vector.broadcast %cst_163 : f32 to vector<128x1xf32>
    %206 = arith.addf %202, %205 : vector<128x1xf32>
    %207 = math.rsqrt %206 : vector<128x1xf32>
    %208 = vector.broadcast %207 : vector<128x1xf32> to vector<128x32xf32>
    %209 = arith.mulf %204, %208 : vector<128x32xf32>
    %210 = vector.extract_strided_slice %1 {offsets = [2, 0], sizes = [1, 32], strides = [1, 1]} : vector<4x32xf32> to vector<1x32xf32>
    %211 = vector.broadcast %210 : vector<1x32xf32> to vector<128x32xf32>
    %212 = arith.mulf %209, %211 : vector<128x32xf32>
    %213 = vector.extract_strided_slice %1 {offsets = [3, 0], sizes = [1, 32], strides = [1, 1]} : vector<4x32xf32> to vector<1x32xf32>
    %214 = vector.broadcast %213 : vector<1x32xf32> to vector<128x32xf32>
    %215 = arith.addf %212, %214 : vector<128x32xf32>
    %c0_164 = arith.constant 0 : index
    %c0_165 = arith.constant 0 : index
    %216 = vector.load %arg7[%c0_164, %c0_165] : memref<32x128xf32, #tpu.memory_space<vmem>>, vector<32x128xf32>
    %cst_166 = arith.constant dense<0.000000e+00> : vector<128x128xf32>
    %217 = tpu.matmul %215, %216, %cst_166 {dimension_numbers = #tpu.dot_dimension_numbers<[1], [0], [0], [1], [0, 0, 1, 1], [], []>} : vector<128x32xf32>, vector<32x128xf32>, vector<128x128xf32> -> vector<128x128xf32>
    %c0_167 = arith.constant 0 : index
    %c0_168 = arith.constant 0 : index
    %218 = vector.load %arg8[%c0_167, %c0_168] : memref<1x128xf32, #tpu.memory_space<vmem>>, vector<1x128xf32>
    %219 = vector.broadcast %218 : vector<1x128xf32> to vector<128x128xf32>
    %220 = arith.addf %217, %219 : vector<128x128xf32>
    %cst_169 = arith.constant 5.000000e-01 : f32
    %221 = vector.broadcast %cst_169 : f32 to vector<128x128xf32>
    %222 = arith.mulf %221, %220 : vector<128x128xf32>
    %cst_170 = arith.constant 0.707106769 : f32
    %223 = vector.broadcast %cst_170 : f32 to vector<128x128xf32>
    %224 = arith.mulf %220, %223 : vector<128x128xf32>
    %225 = math.absf %224 : vector<128x128xf32>
    %cst_171 = arith.constant 0.327591091 : f32
    %226 = vector.broadcast %cst_171 : f32 to vector<128x128xf32>
    %227 = arith.mulf %226, %225 : vector<128x128xf32>
    %cst_172 = arith.constant 1.000000e+00 : f32
    %228 = vector.broadcast %cst_172 : f32 to vector<128x128xf32>
    %229 = arith.addf %228, %227 : vector<128x128xf32>
    %cst_173 = arith.constant 1.000000e+00 : f32
    %230 = vector.broadcast %cst_173 : f32 to vector<128x128xf32>
    %231 = arith.divf %230, %229 : vector<128x128xf32>
    %cst_174 = arith.constant 1.06140542 : f32
    %232 = vector.broadcast %cst_174 : f32 to vector<128x128xf32>
    %233 = arith.mulf %232, %231 : vector<128x128xf32>
    %cst_175 = arith.constant -1.45315206 : f32
    %234 = vector.broadcast %cst_175 : f32 to vector<128x128xf32>
    %235 = arith.addf %233, %234 : vector<128x128xf32>
    %236 = arith.mulf %235, %231 : vector<128x128xf32>
    %cst_176 = arith.constant 1.42141378 : f32
    %237 = vector.broadcast %cst_176 : f32 to vector<128x128xf32>
    %238 = arith.addf %236, %237 : vector<128x128xf32>
    %239 = arith.mulf %238, %231 : vector<128x128xf32>
    %cst_177 = arith.constant -0.284496725 : f32
    %240 = vector.broadcast %cst_177 : f32 to vector<128x128xf32>
    %241 = arith.addf %239, %240 : vector<128x128xf32>
    %242 = arith.mulf %241, %231 : vector<128x128xf32>
    %cst_178 = arith.constant 0.254829586 : f32
    %243 = vector.broadcast %cst_178 : f32 to vector<128x128xf32>
    %244 = arith.addf %242, %243 : vector<128x128xf32>
    %245 = arith.mulf %244, %231 : vector<128x128xf32>
    %cst_179 = arith.constant 0.000000e+00 : f32
    %246 = vector.broadcast %cst_179 : f32 to vector<128x128xf32>
    %247 = arith.subf %246, %225 : vector<128x128xf32>
    %248 = arith.mulf %247, %225 : vector<128x128xf32>
    %249 = math.exp %248 : vector<128x128xf32>
    %250 = arith.mulf %245, %249 : vector<128x128xf32>
    %cst_180 = arith.constant 1.000000e+00 : f32
    %251 = vector.broadcast %cst_180 : f32 to vector<128x128xf32>
    %252 = arith.subf %251, %250 : vector<128x128xf32>
    %cst_181 = arith.constant 0.000000e+00 : f32
    %253 = vector.broadcast %cst_181 : f32 to vector<128x128xf32>
    %254 = arith.cmpf oge, %224, %253 : vector<128x128xf32>
    %cst_182 = arith.constant 0.000000e+00 : f32
    %255 = vector.broadcast %cst_182 : f32 to vector<128x128xf32>
    %256 = arith.subf %255, %252 : vector<128x128xf32>
    %257 = arith.select %254, %252, %256 : vector<128x128xi1>, vector<128x128xf32>
    %cst_183 = arith.constant 1.000000e+00 : f32
    %258 = vector.broadcast %cst_183 : f32 to vector<128x128xf32>
    %259 = arith.addf %258, %257 : vector<128x128xf32>
    %260 = arith.mulf %222, %259 : vector<128x128xf32>
    %c0_184 = arith.constant 0 : index
    %c0_185 = arith.constant 0 : index
    %261 = vector.load %arg9[%c0_184, %c0_185] : memref<128x32xf32, #tpu.memory_space<vmem>>, vector<128x32xf32>
    %cst_186 = arith.constant dense<0.000000e+00> : vector<128x32xf32>
    %262 = tpu.matmul %260, %261, %cst_186 {dimension_numbers = #tpu.dot_dimension_numbers<[1], [0], [0], [1], [0, 0, 1, 1], [], []>} : vector<128x128xf32>, vector<128x32xf32>, vector<128x32xf32> -> vector<128x32xf32>
    %263 = vector.extract_strided_slice %2 {offsets = [1, 0], sizes = [1, 32], strides = [1, 1]} : vector<2x32xf32> to vector<1x32xf32>
    %264 = vector.broadcast %263 : vector<1x32xf32> to vector<128x32xf32>
    %265 = arith.addf %262, %264 : vector<128x32xf32>
    %266 = arith.addf %191, %265 : vector<128x32xf32>
    %c0_187 = arith.constant 0 : index
    %c0_188 = arith.constant 0 : index
    %267 = vector.load %arg10[%c0_187, %c0_188] : memref<128x32xf32, #tpu.memory_space<vmem>>, vector<128x32xf32>
    tpu.vector_store %arg10[%c0_187, %c0_188], %266 {strides = array<i32>} : memref<128x32xf32, #tpu.memory_space<vmem>>, vector<128x32xf32>,
    return
  }
}

</mosaic_0001>

<llo_original>
// kernel: tpu_custom_call.1
$region0: #{tpu_custom_call.1}
  #allocation0 [shape = 'u32[]', space=smem, size = 0x4, offset = 0x4, fixed_abs, tag = 'smem constant byte address 0x4 - core index']
  #allocation1 [shape = 'u32[144,128]{1,0:T(1,128)}', space=vmem, size = 0x12000, scoped, tag = 'internal scratch']
  %s0 = inlined_call_operand.vmem [shape: f32[128,32], index: 0, kind: input, shape index: {}]
  %s1 = inlined_call_operand.vmem [shape: f32[4,128,128], index: 1, kind: input, shape index: {}]
  %s2 = inlined_call_operand.vmem [shape: f32[4,32], index: 2, kind: input, shape index: {}]
  %s3 = inlined_call_operand.vmem [shape: f32[3,4,32,8], index: 3, kind: input, shape index: {}]
  %s4 = inlined_call_operand.vmem [shape: f32[3,4,1,8], index: 4, kind: input, shape index: {}]
  %s5 = inlined_call_operand.vmem [shape: f32[4,8,32], index: 5, kind: input, shape index: {}]
  %s6 = inlined_call_operand.vmem [shape: f32[2,32], index: 6, kind: input, shape index: {}]
  %s7 = inlined_call_operand.vmem [shape: f32[32,128], index: 7, kind: input, shape index: {}]
  %s8 = inlined_call_operand.vmem [shape: f32[1,128], index: 8, kind: input, shape index: {}]
  %s9 = inlined_call_operand.vmem [shape: f32[128,32], index: 9, kind: input, shape index: {}]
  %s10 = inlined_call_operand.vmem [shape: f32[128,32], index: 10, kind: output, shape index: {}]
  %s11 = sld [smem:[#allocation0]]
  $region50: #{tpu_custom_call.1} parent=0
    _
  %s13 = ssub.s32 1, %s11
  %s14 = scalar_select 0, %s13, %s11
  // Predicated region
  $region2: #{tpu_custom_call.1} parent=0 // pred_check
    _
  $region3: #{tpu_custom_call.1} parent=0 // pred_check_branch
    %16 = sbr.rel (0) target = $region5
  $region4: #{tpu_custom_call.1} parent=0 // pred_region
    _
  $region5: #{tpu_custom_call.1} parent=0 // pred_fallthru
    _
  // Predicated region
  $region6: #{tpu_custom_call.1} parent=0 // pred_check
    _
  $region7: #{tpu_custom_call.1} parent=0 // pred_check_branch
    %18 = sbr.rel (0) target = $region9
  $region8: #{tpu_custom_call.1} parent=0 // pred_region
    _
  $region9: #{tpu_custom_call.1} parent=0 // pred_fallthru
    _
  // Predicated region
  $region10: #{tpu_custom_call.1} parent=0 // pred_check
    _
  $region11: #{tpu_custom_call.1} parent=0 // pred_check_branch
    %20 = sbr.rel (0) target = $region13
  $region12: #{tpu_custom_call.1} parent=0 // pred_region
    _
  $region13: #{tpu_custom_call.1} parent=0 // pred_fallthru
    _
  // Predicated region
  $region14: #{tpu_custom_call.1} parent=0 // pred_check
    _
  $region15: #{tpu_custom_call.1} parent=0 // pred_check_branch
    %22 = sbr.rel (0) target = $region17
  $region16: #{tpu_custom_call.1} parent=0 // pred_region
    _
  $region17: #{tpu_custom_call.1} parent=0 // pred_fallthru
    _
  // Predicated region
  $region18: #{tpu_custom_call.1} parent=0 // pred_check
    _
  $region19: #{tpu_custom_call.1} parent=0 // pred_check_branch
    %24 = sbr.rel (0) target = $region21
  $region20: #{tpu_custom_call.1} parent=0 // pred_region
    _
  $region21: #{tpu_custom_call.1} parent=0 // pred_fallthru
    _
  // Predicated region
  $region22: #{tpu_custom_call.1} parent=0 // pred_check
    _
  $region23: #{tpu_custom_call.1} parent=0 // pred_check_branch
    %26 = sbr.rel (0) target = $region25
  $region24: #{tpu_custom_call.1} parent=0 // pred_region
    _
  $region25: #{tpu_custom_call.1} parent=0 // pred_fallthru
    _
  // Predicated region
  $region26: #{tpu_custom_call.1} parent=0 // pred_check
    _
  $region27: #{tpu_custom_call.1} parent=0 // pred_check_branch
    %28 = sbr.rel (0) target = $region29
  $region28: #{tpu_custom_call.1} parent=0 // pred_region
    _
  $region29: #{tpu_custom_call.1} parent=0 // pred_fallthru
    _
  // Predicated region
  $region30: #{tpu_custom_call.1} parent=0 // pred_check
    _
  $region31: #{tpu_custom_call.1} parent=0 // pred_check_branch
    %30 = sbr.rel (0) target = $region33
  $region32: #{tpu_custom_call.1} parent=0 // pred_region
    _
  $region33: #{tpu_custom_call.1} parent=0 // pred_fallthru
    _
  // Predicated region
  $region34: #{tpu_custom_call.1} parent=0 // pred_check
    _
  $region35: #{tpu_custom_call.1} parent=0 // pred_check_branch
    %32 = sbr.rel (0) target = $region37
  $region36: #{tpu_custom_call.1} parent=0 // pred_region
    _
  $region37: #{tpu_custom_call.1} parent=0 // pred_fallthru
    _
  // Predicated region
  $region38: #{tpu_custom_call.1} parent=0 // pred_check
    _
  $region39: #{tpu_custom_call.1} parent=0 // pred_check_branch
    %34 = sbr.rel (0) target = $region41
  $region40: #{tpu_custom_call.1} parent=0 // pred_region
    _
  $region41: #{tpu_custom_call.1} parent=0 // pred_fallthru
    _
  %v35 = vld [vmem:[%s0] sm:$0xff]
  %v36 = vld [vmem:[%s0 + $0x8] sm:$0xff]
  %v37 = vld [vmem:[%s0 + $0x10] sm:$0xff]
  %v38 = vld [vmem:[%s0 + $0x18] sm:$0xff]
  %v39 = vld [vmem:[%s0 + $0x20] sm:$0xff]
  %v40 = vld [vmem:[%s0 + $0x28] sm:$0xff]
  %v41 = vld [vmem:[%s0 + $0x30] sm:$0xff]
  %v42 = vld [vmem:[%s0 + $0x38] sm:$0xff]
  %v43 = vld [vmem:[%s0 + $0x40] sm:$0xff]
  %v44 = vld [vmem:[%s0 + $0x48] sm:$0xff]
  %v45 = vld [vmem:[%s0 + $0x50] sm:$0xff]
  %v46 = vld [vmem:[%s0 + $0x58] sm:$0xff]
  %v47 = vld [vmem:[%s0 + $0x60] sm:$0xff]
  %v48 = vld [vmem:[%s0 + $0x68] sm:$0xff]
  %v49 = vld [vmem:[%s0 + $0x70] sm:$0xff]
  %v50 = vld [vmem:[%s0 + $0x78] sm:$0xff]
  %v51 = vld [vmem:[%s2] sm:$0xf]
  %v52 = vld [vmem:[%s6] sm:$0x3]
  %vm53 = vcmask 261120
  %v54 = vsel %vm53, %v35, 0.0
  %55 = vadd.xlane.f32.xlu0 %v54
  %v56 = vpop.xlane.xlu0 %55
  %v57 = vsel %vm53, %v36, 0.0
  %58 = vadd.xlane.f32.xlu0 %v57
  %v59 = vpop.xlane.xlu0 %58
  %v60 = vsel %vm53, %v37, 0.0
  %61 = vadd.xlane.f32.xlu0 %v60
  %v62 = vpop.xlane.xlu0 %61
  %v63 = vsel %vm53, %v38, 0.0
  %64 = vadd.xlane.f32.xlu0 %v63
  %v65 = vpop.xlane.xlu0 %64
  %v66 = vsel %vm53, %v39, 0.0
  %67 = vadd.xlane.f32.xlu0 %v66
  %v68 = vpop.xlane.xlu0 %67
  %v69 = vsel %vm53, %v40, 0.0
  %70 = vadd.xlane.f32.xlu0 %v69
  %v71 = vpop.xlane.xlu0 %70
  %v72 = vsel %vm53, %v41, 0.0
  %73 = vadd.xlane.f32.xlu0 %v72
  %v74 = vpop.xlane.xlu0 %73
  %v75 = vsel %vm53, %v42, 0.0
  %76 = vadd.xlane.f32.xlu0 %v75
  %v77 = vpop.xlane.xlu0 %76
  %v78 = vsel %vm53, %v43, 0.0
  %79 = vadd.xlane.f32.xlu0 %v78
  %v80 = vpop.xlane.xlu0 %79
  %v81 = vsel %vm53, %v44, 0.0
  %82 = vadd.xlane.f32.xlu0 %v81
  %v83 = vpop.xlane.xlu0 %82
  %v84 = vsel %vm53, %v45, 0.0
  %85 = vadd.xlane.f32.xlu0 %v84
  %v86 = vpop.xlane.xlu0 %85
  %v87 = vsel %vm53, %v46, 0.0
  %88 = vadd.xlane.f32.xlu0 %v87
  %v89 = vpop.xlane.xlu0 %88
  %v90 = vsel %vm53, %v47, 0.0
  %91 = vadd.xlane.f32.xlu0 %v90
  %v92 = vpop.xlane.xlu0 %91
  %v93 = vsel %vm53, %v48, 0.0
  %94 = vadd.xlane.f32.xlu0 %v93
  %v95 = vpop.xlane.xlu0 %94
  %v96 = vsel %vm53, %v49, 0.0
  %97 = vadd.xlane.f32.xlu0 %v96
  %v98 = vpop.xlane.xlu0 %97
  %v99 = vsel %vm53, %v50, 0.0
  %100 = vadd.xlane.f32.xlu0 %v99
  %v101 = vpop.xlane.xlu0 %100
  %v102 = vrcp.pop 32.0
  %v103 = vmul.f32 %v56, %v102
  %v104 = vmul.f32 %v59, %v102
  %v105 = vmul.f32 %v62, %v102
  %v106 = vmul.f32 %v65, %v102
  %v107 = vmul.f32 %v68, %v102
  %v108 = vmul.f32 %v71, %v102
  %v109 = vmul.f32 %v74, %v102
  %v110 = vmul.f32 %v77, %v102
  %v111 = vmul.f32 %v80, %v102
  %v112 = vmul.f32 %v83, %v102
  %v113 = vmul.f32 %v86, %v102
  %v114 = vmul.f32 %v89, %v102
  %v115 = vmul.f32 %v92, %v102
  %v116 = vmul.f32 %v95, %v102
  %v117 = vmul.f32 %v98, %v102
  %v118 = vmul.f32 %v101, %v102
  %v119 = vsub.f32 %v35, %v103
  %v120 = vsub.f32 %v36, %v104
  %v121 = vsub.f32 %v37, %v105
  %v122 = vsub.f32 %v38, %v106
  %v123 = vsub.f32 %v39, %v107
  %v124 = vsub.f32 %v40, %v108
  %v125 = vsub.f32 %v41, %v109
  %v126 = vsub.f32 %v42, %v110
  %v127 = vsub.f32 %v43, %v111
  %v128 = vsub.f32 %v44, %v112
  %v129 = vsub.f32 %v45, %v113
  %v130 = vsub.f32 %v46, %v114
  %v131 = vsub.f32 %v47, %v115
  %v132 = vsub.f32 %v48, %v116
  %v133 = vsub.f32 %v49, %v117
  %v134 = vsub.f32 %v50, %v118
  %v135 = vmul.f32 %v119, %v119
  %v136 = vmul.f32 %v120, %v120
  %v137 = vmul.f32 %v121, %v121
  %v138 = vmul.f32 %v122, %v122
  %v139 = vmul.f32 %v123, %v123
  %v140 = vmul.f32 %v124, %v124
  %v141 = vmul.f32 %v125, %v125
  %v142 = vmul.f32 %v126, %v126
  %v143 = vmul.f32 %v127, %v127
  %v144 = vmul.f32 %v128, %v128
  %v145 = vmul.f32 %v129, %v129
  %v146 = vmul.f32 %v130, %v130
  %v147 = vmul.f32 %v131, %v131
  %v148 = vmul.f32 %v132, %v132
  %v149 = vmul.f32 %v133, %v133
  %v150 = vmul.f32 %v134, %v134
  %v151 = vsel %vm53, %v135, 0.0
  %152 = vadd.xlane.f32.xlu0 %v151
  %v153 = vpop.xlane.xlu0 %152
  %v154 = vsel %vm53, %v136, 0.0
  %155 = vadd.xlane.f32.xlu0 %v154
  %v156 = vpop.xlane.xlu0 %155
  %v157 = vsel %vm53, %v137, 0.0
  %158 = vadd.xlane.f32.xlu0 %v157
  %v159 = vpop.xlane.xlu0 %158
  %v160 = vsel %vm53, %v138, 0.0
  %161 = vadd.xlane.f32.xlu0 %v160
  %v162 = vpop.xlane.xlu0 %161
  %v163 = vsel %vm53, %v139, 0.0
  %164 = vadd.xlane.f32.xlu0 %v163
  %v165 = vpop.xlane.xlu0 %164
  %v166 = vsel %vm53, %v140, 0.0
  %167 = vadd.xlane.f32.xlu0 %v166
  %v168 = vpop.xlane.xlu0 %167
  %v169 = vsel %vm53, %v141, 0.0
  %170 = vadd.xlane.f32.xlu0 %v169
  %v171 = vpop.xlane.xlu0 %170
  %v172 = vsel %vm53, %v142, 0.0
  %173 = vadd.xlane.f32.xlu0 %v172
  %v174 = vpop.xlane.xlu0 %173
  %v175 = vsel %vm53, %v143, 0.0
  %176 = vadd.xlane.f32.xlu0 %v175
  %v177 = vpop.xlane.xlu0 %176
  %v178 = vsel %vm53, %v144, 0.0
  %179 = vadd.xlane.f32.xlu0 %v178
  %v180 = vpop.xlane.xlu0 %179
  %v181 = vsel %vm53, %v145, 0.0
  %182 = vadd.xlane.f32.xlu0 %v181
  %v183 = vpop.xlane.xlu0 %182
  %v184 = vsel %vm53, %v146, 0.0
  %185 = vadd.xlane.f32.xlu0 %v184
  %v186 = vpop.xlane.xlu0 %185
  %v187 = vsel %vm53, %v147, 0.0
  %188 = vadd.xlane.f32.xlu0 %v187
  %v189 = vpop.xlane.xlu0 %188
  %v190 = vsel %vm53, %v148, 0.0
  %191 = vadd.xlane.f32.xlu0 %v190
  %v192 = vpop.xlane.xlu0 %191
  %v193 = vsel %vm53, %v149, 0.0
  %194 = vadd.xlane.f32.xlu0 %v193
  %v195 = vpop.xlane.xlu0 %194
  %v196 = vsel %vm53, %v150, 0.0
  %197 = vadd.xlane.f32.xlu0 %v196
  %v198 = vpop.xlane.xlu0 %197
  %v199 = vmul.f32 %v153, %v102
  %v200 = vmul.f32 %v156, %v102
  %v201 = vmul.f32 %v159, %v102
  %v202 = vmul.f32 %v162, %v102
  %v203 = vmul.f32 %v165, %v102
  %v204 = vmul.f32 %v168, %v102
  %v205 = vmul.f32 %v171, %v102
  %v206 = vmul.f32 %v174, %v102
  %v207 = vmul.f32 %v177, %v102
  %v208 = vmul.f32 %v180, %v102
  %v209 = vmul.f32 %v183, %v102
  %v210 = vmul.f32 %v186, %v102
  %v211 = vmul.f32 %v189, %v102
  %v212 = vmul.f32 %v192, %v102
  %v213 = vmul.f32 %v195, %v102
  %v214 = vmul.f32 %v198, %v102
  %v215 = vadd.f32 %v199, 1e-05
  %v216 = vadd.f32 %v200, 1e-05
  %v217 = vadd.f32 %v201, 1e-05
  %v218 = vadd.f32 %v202, 1e-05
  %v219 = vadd.f32 %v203, 1e-05
  %v220 = vadd.f32 %v204, 1e-05
  %v221 = vadd.f32 %v205, 1e-05
  %v222 = vadd.f32 %v206, 1e-05
  %v223 = vadd.f32 %v207, 1e-05
  %v224 = vadd.f32 %v208, 1e-05
  %v225 = vadd.f32 %v209, 1e-05
  %v226 = vadd.f32 %v210, 1e-05
  %v227 = vadd.f32 %v211, 1e-05
  %v228 = vadd.f32 %v212, 1e-05
  %v229 = vadd.f32 %v213, 1e-05
  %v230 = vadd.f32 %v214, 1e-05
  %v231 = vrsqrt.pop %v215
  %v232 = vrsqrt.pop %v216
  %v233 = vrsqrt.pop %v217
  %v234 = vrsqrt.pop %v218
  %v235 = vrsqrt.pop %v219
  %v236 = vrsqrt.pop %v220
  %v237 = vrsqrt.pop %v221
  %v238 = vrsqrt.pop %v222
  %v239 = vrsqrt.pop %v223
  %v240 = vrsqrt.pop %v224
  %v241 = vrsqrt.pop %v225
  %v242 = vrsqrt.pop %v226
  %v243 = vrsqrt.pop %v227
  %v244 = vrsqrt.pop %v228
  %v245 = vrsqrt.pop %v229
  %v246 = vrsqrt.pop %v230
  %v247 = vmul.f32 %v119, %v231
  %v248 = vmul.f32 %v120, %v232
  %v249 = vmul.f32 %v121, %v233
  %v250 = vmul.f32 %v122, %v234
  %v251 = vmul.f32 %v123, %v235
  %v252 = vmul.f32 %v124, %v236
  %v253 = vmul.f32 %v125, %v237
  %v254 = vmul.f32 %v126, %v238
  %v255 = vmul.f32 %v127, %v239
  %v256 = vmul.f32 %v128, %v240
  %v257 = vmul.f32 %v129, %v241
  %v258 = vmul.f32 %v130, %v242
  %v259 = vmul.f32 %v131, %v243
  %v260 = vmul.f32 %v132, %v244
  %v261 = vmul.f32 %v133, %v245
  %v262 = vmul.f32 %v134, %v246
  %v263 = vlaneseq
  %v264 = vshrl.u32 %v263, 7
  %v265 = vsub.s32 0, %v264
  %v266 = vrot.slane %v51, %v265
  %v267 = vmul.f32 %v247, %v266
  %v268 = vmul.f32 %v248, %v266
  %v269 = vmul.f32 %v249, %v266
  %v270 = vmul.f32 %v250, %v266
  %v271 = vmul.f32 %v251, %v266
  %v272 = vmul.f32 %v252, %v266
  %v273 = vmul.f32 %v253, %v266
  %v274 = vmul.f32 %v254, %v266
  %v275 = vmul.f32 %v255, %v266
  %v276 = vmul.f32 %v256, %v266
  %v277 = vmul.f32 %v257, %v266
  %v278 = vmul.f32 %v258, %v266
  %v279 = vmul.f32 %v259, %v266
  %v280 = vmul.f32 %v260, %v266
  %v281 = vmul.f32 %v261, %v266
  %v282 = vmul.f32 %v262, %v266
  %v283 = vlaneseq
  %v284 = vshrl.u32 %v283, 7
  %v285 = vsub.s32 1, %v284
  %v286 = vrot.slane %v51, %v285
  %v287 = vadd.f32 %v267, %v286
  %v288 = vadd.f32 %v268, %v286
  %v289 = vadd.f32 %v269, %v286
  %v290 = vadd.f32 %v270, %v286
  %v291 = vadd.f32 %v271, %v286
  %v292 = vadd.f32 %v272, %v286
  %v293 = vadd.f32 %v273, %v286
  %v294 = vadd.f32 %v274, %v286
  %v295 = vadd.f32 %v275, %v286
  %v296 = vadd.f32 %v276, %v286
  %v297 = vadd.f32 %v277, %v286
  %v298 = vadd.f32 %v278, %v286
  %v299 = vadd.f32 %v279, %v286
  %v300 = vadd.f32 %v280, %v286
  %v301 = vadd.f32 %v281, %v286
  %v302 = vadd.f32 %v282, %v286
  %v303 = vld [vmem:[%s3] sm:$0xff]
  %v304 = vld [vmem:[%s3 + $0x8] sm:$0xff]
  %v305 = vld [vmem:[%s3 + $0x10] sm:$0xff]
  %v306 = vld [vmem:[%s3 + $0x18] sm:$0xff]
  %v307 = vld [vmem:[%s4] sm:$0x1]
  %v309 = vlaneseq
  %v310 = vshrl.u32 %v309, 7
  %v311 = vsub.s32 0, %v310
  %v312 = vrot.slane %v307, %v311
  %v315 = vsel %vm53, %v287, 0
  %v318 = vsel %vm53, %v288, 0
  %v321 = vsel %vm53, %v289, 0
  %v324 = vsel %vm53, %v290, 0
  %v327 = vsel %vm53, %v291, 0
  %v330 = vsel %vm53, %v292, 0
  %v333 = vsel %vm53, %v293, 0
  %v336 = vsel %vm53, %v294, 0
  %v339 = vsel %vm53, %v295, 0
  %v342 = vsel %vm53, %v296, 0
  %v345 = vsel %vm53, %v297, 0
  %v348 = vsel %vm53, %v298, 0
  %v351 = vsel %vm53, %v299, 0
  %v354 = vsel %vm53, %v300, 0
  %v357 = vsel %vm53, %v301, 0
  %v360 = vsel %vm53, %v302, 0
  %362 = vmatprep.subr.mxu0 0.0
  %363 = vmatpush1.msra.mxu0 %v303
  %364 = vmatprep.subr.mxu0 0.0
  %365 = vmatpush1.msra.mxu0 %v304
  %366 = vmatprep.subr.mxu0 0.0
  %367 = vmatpush1.msra.mxu0 %v305
  %368 = vmatprep.subr.mxu0 0.0
  %369 = vmatpush1.msra.mxu0 %v306
  %370 = vmatprep.subr.mxu0 0.0
  %371 = vmatpush1.msra.mxu0 0.0
  %372 = vmatprep.subr.mxu0 0.0
  %373 = vmatpush1.msra.mxu0 0.0
  %374 = vmatprep.subr.mxu0 0.0
  %375 = vmatpush1.msra.mxu0 0.0
  %376 = vmatprep.subr.mxu0 0.0
  %377 = vmatpush1.msra.mxu0 0.0
  %378 = vmatprep.subr.mxu0 0.0
  %379 = vmatpush1.msra.mxu0 0.0
  %380 = vmatprep.subr.mxu0 0.0
  %381 = vmatpush1.msra.mxu0 0.0
  %382 = vmatprep.subr.mxu0 0.0
  %383 = vmatpush1.msra.mxu0 0.0
  %384 = vmatprep.subr.mxu0 0.0
  %385 = vmatpush1.msra.mxu0 0.0
  %386 = vmatprep.subr.mxu0 0.0
  %387 = vmatpush1.msra.mxu0 0.0
  %388 = vmatprep.subr.mxu0 0.0
  %389 = vmatpush1.msra.mxu0 0.0
  %390 = vmatprep.subr.mxu0 0.0
  %391 = vmatpush1.msra.mxu0 0.0
  %392 = vmatprep.subr.mxu0 0.0
  %393 = vmatpush1.msra.mxu0 0.0
  %394 = vmatprep.subr.mxu0 0.0
  %395 = vmatpush1.msra.mxu0 0.0
  %396 = vmatprep.subr.mxu0 0.0
  %397 = vmatpush1.msra.mxu0 0.0
  %398 = vmatprep.subr.mxu0 0.0
  %399 = vmatpush1.msra.mxu0 0.0
  %400 = vmatprep.subr.mxu0 0.0
  %401 = vmatpush1.msra.mxu0 0.0
  %402 = vmatprep.subr.mxu0 0.0
  %403 = vmatpush1.msra.mxu0 0.0
  %404 = vmatprep.subr.mxu0 0.0
  %405 = vmatpush1.msra.mxu0 0.0
  %406 = vmatprep.subr.mxu0 0.0
  %407 = vmatpush1.msra.mxu0 0.0
  %408 = vmatprep.subr.mxu0 0.0
  %409 = vmatpush1.msra.mxu0 0.0
  %410 = vmatprep.subr.mxu0 0.0
  %411 = vmatpush1.msra.mxu0 0.0
  %412 = vmatprep.subr.mxu0 0.0
  %413 = vmatpush1.msra.mxu0 0.0
  %414 = vmatprep.subr.mxu0 0.0
  %415 = vmatpush1.msra.mxu0 0.0
  %416 = vmatprep.subr.mxu0 0.0
  %417 = vmatpush1.msra.mxu0 0.0
  %418 = vmatprep.subr.mxu0 0.0
  %419 = vmatpush1.msra.mxu0 0.0
  %420 = vmatprep.subr.mxu0 0.0
  %421 = vmatpush1.msra.mxu0 0.0
  %422 = vmatprep.subr.mxu0 0.0
  %423 = vmatpush1.msra.mxu0 0.0
  %424 = vmatprep.subr.mxu0 0.0
  %425 = vmatpush1.msra.mxu0 0.0
  %426 = vmatprep.mubr.f32.mxu0 0.0
  %427 = vmatmul.mubr.f32.gmra.mrb[0].mxu0 %v315
  %v428 = vpop.f32.mrb[0].mxu0
  %v429 = vadd.f32 %v312, %v428
  %v430 = vpop.f32.mrb[0].mxu0
  %431 = vmatprep.mubr.f32.mxu0 0.0
  %432 = vmatmul.mubr.f32.gmra.mrb[0].mxu0 %v318
  %v433 = vpop.f32.mrb[0].mxu0
  %v434 = vadd.f32 %v312, %v433
  %v435 = vpop.f32.mrb[0].mxu0
  %436 = vmatprep.mubr.f32.mxu0 0.0
  %437 = vmatmul.mubr.f32.gmra.mrb[0].mxu0 %v321
  %v438 = vpop.f32.mrb[0].mxu0
  %v439 = vadd.f32 %v312, %v438
  %v440 = vpop.f32.mrb[0].mxu0
  %441 = vmatprep.mubr.f32.mxu0 0.0
  %442 = vmatmul.mubr.f32.gmra.mrb[0].mxu0 %v324
  %v443 = vpop.f32.mrb[0].mxu0
  %v444 = vadd.f32 %v312, %v443
  %v445 = vpop.f32.mrb[0].mxu0
  %446 = vmatprep.mubr.f32.mxu0 0.0
  %447 = vmatmul.mubr.f32.gmra.mrb[0].mxu0 %v327
  %v448 = vpop.f32.mrb[0].mxu0
  %v449 = vadd.f32 %v312, %v448
  %v450 = vpop.f32.mrb[0].mxu0
  %451 = vmatprep.mubr.f32.mxu0 0.0
  %452 = vmatmul.mubr.f32.gmra.mrb[0].mxu0 %v330
  %v453 = vpop.f32.mrb[0].mxu0
  %v454 = vadd.f32 %v312, %v453
  %v455 = vpop.f32.mrb[0].mxu0
  %456 = vmatprep.mubr.f32.mxu0 0.0
  %457 = vmatmul.mubr.f32.gmra.mrb[0].mxu0 %v333
  %v458 = vpop.f32.mrb[0].mxu0
  %v459 = vadd.f32 %v312, %v458
  %v460 = vpop.f32.mrb[0].mxu0
  %461 = vmatprep.mubr.f32.mxu0 0.0
  %462 = vmatmul.mubr.f32.gmra.mrb[0].mxu0 %v336
  %v463 = vpop.f32.mrb[0].mxu0
  %v464 = vadd.f32 %v312, %v463
  %v465 = vpop.f32.mrb[0].mxu0
  %466 = vmatprep.mubr.f32.mxu0 0.0
  %467 = vmatmul.mubr.f32.gmra.mrb[0].mxu0 %v339
  %v468 = vpop.f32.mrb[0].mxu0
  %v469 = vadd.f32 %v312, %v468
  %v470 = vpop.f32.mrb[0].mxu0
  %471 = vmatprep.mubr.f32.mxu0 0.0
  %472 = vmatmul.mubr.f32.gmra.mrb[0].mxu0 %v342
  %v473 = vpop.f32.mrb[0].mxu0
  %v474 = vadd.f32 %v312, %v473
  %v475 = vpop.f32.mrb[0].mxu0
  %476 = vmatprep.mubr.f32.mxu0 0.0
  %477 = vmatmul.mubr.f32.gmra.mrb[0].mxu0 %v345
  %v478 = vpop.f32.mrb[0].mxu0
  %v479 = vadd.f32 %v312, %v478
  %v480 = vpop.f32.mrb[0].mxu0
  %481 = vmatprep.mubr.f32.mxu0 0.0
  %482 = vmatmul.mubr.f32.gmra.mrb[0].mxu0 %v348
  %v483 = vpop.f32.mrb[0].mxu0
  %v484 = vadd.f32 %v312, %v483
  %v485 = vpop.f32.mrb[0].mxu0
  %486 = vmatprep.mubr.f32.mxu0 0.0
  %487 = vmatmul.mubr.f32.gmra.mrb[0].mxu0 %v351
  %v488 = vpop.f32.mrb[0].mxu0
  %v489 = vadd.f32 %v312, %v488
  %v490 = vpop.f32.mrb[0].mxu0
  %491 = vmatprep.mubr.f32.mxu0 0.0
  %492 = vmatmul.mubr.f32.gmra.mrb[0].mxu0 %v354
  %v493 = vpop.f32.mrb[0].mxu0
  %v494 = vadd.f32 %v312, %v493
  %v495 = vpop.f32.mrb[0].mxu0
  %496 = vmatprep.mubr.f32.mxu0 0.0
  %497 = vmatmul.mubr.f32.gmra.mrb[0].mxu0 %v357
  %v498 = vpop.f32.mrb[0].mxu0
  %v499 = vadd.f32 %v312, %v498
  %v500 = vpop.f32.mrb[0].mxu0
  %501 = vmatprep.mubr.f32.mxu0 0.0
  %502 = vmatmul.mubr.f32.gmra.mrb[0].mxu0 %v360
  %v503 = vpop.f32.mrb[0].mxu0
  %v504 = vadd.f32 %v312, %v503
  %v505 = vpop.f32.mrb[0].mxu0
  %506 = vdwg.mxu0
  %s507 = scalar_lea.vmem %s3, 128
  %v508 = vld [vmem:[%s507] sm:$0xff]
  %v509 = vld [vmem:[%s507 + $0x8] sm:$0xff]
  %v510 = vld [vmem:[%s507 + $0x10] sm:$0xff]
  %v511 = vld [vmem:[%s507 + $0x18] sm:$0xff]
  %s512 = scalar_lea.vmem %s4, 4
  %v513 = vld [vmem:[%s512] sm:$0x1]
  %v515 = vlaneseq
  %v516 = vshrl.u32 %v515, 7
  %v517 = vsub.s32 0, %v516
  %v518 = vrot.slane %v513, %v517
  %520 = vmatprep.subr.mxu0 0.0
  %521 = vmatpush1.msra.mxu0 %v508
  %522 = vmatprep.subr.mxu0 0.0
  %523 = vmatpush1.msra.mxu0 %v509
  %524 = vmatprep.subr.mxu0 0.0
  %525 = vmatpush1.msra.mxu0 %v510
  %526 = vmatprep.subr.mxu0 0.0
  %527 = vmatpush1.msra.mxu0 %v511
  %528 = vmatprep.subr.mxu0 0.0
  %529 = vmatpush1.msra.mxu0 0.0
  %530 = vmatprep.subr.mxu0 0.0
  %531 = vmatpush1.msra.mxu0 0.0
  %532 = vmatprep.subr.mxu0 0.0
  %533 = vmatpush1.msra.mxu0 0.0
  %534 = vmatprep.subr.mxu0 0.0
  %535 = vmatpush1.msra.mxu0 0.0
  %536 = vmatprep.subr.mxu0 0.0
  %537 = vmatpush1.msra.mxu0 0.0
  %538 = vmatprep.subr.mxu0 0.0
  %539 = vmatpush1.msra.mxu0 0.0
  %540 = vmatprep.subr.mxu0 0.0
  %541 = vmatpush1.msra.mxu0 0.0
  %542 = vmatprep.subr.mxu0 0.0
  %543 = vmatpush1.msra.mxu0 0.0
  %544 = vmatprep.subr.mxu0 0.0
  %545 = vmatpush1.msra.mxu0 0.0
  %546 = vmatprep.subr.mxu0 0.0
  %547 = vmatpush1.msra.mxu0 0.0
  %548 = vmatprep.subr.mxu0 0.0
  %549 = vmatpush1.msra.mxu0 0.0
  %550 = vmatprep.subr.mxu0 0.0
  %551 = vmatpush1.msra.mxu0 0.0
  %552 = vmatprep.subr.mxu0 0.0
  %553 = vmatpush1.msra.mxu0 0.0
  %554 = vmatprep.subr.mxu0 0.0
  %555 = vmatpush1.msra.mxu0 0.0
  %556 = vmatprep.subr.mxu0 0.0
  %557 = vmatpush1.msra.mxu0 0.0
  %558 = vmatprep.subr.mxu0 0.0
  %559 = vmatpush1.msra.mxu0 0.0
  %560 = vmatprep.subr.mxu0 0.0
  %561 = vmatpush1.msra.mxu0 0.0
  %562 = vmatprep.subr.mxu0 0.0
  %563 = vmatpush1.msra.mxu0 0.0
  %564 = vmatprep.subr.mxu0 0.0
  %565 = vmatpush1.msra.mxu0 0.0
  %566 = vmatprep.subr.mxu0 0.0
  %567 = vmatpush1.msra.mxu0 0.0
  %568 = vmatprep.subr.mxu0 0.0
  %569 = vmatpush1.msra.mxu0 0.0
  %570 = vmatprep.subr.mxu0 0.0
  %571 = vmatpush1.msra.mxu0 0.0
  %572 = vmatprep.subr.mxu0 0.0
  %573 = vmatpush1.msra.mxu0 0.0
  %574 = vmatprep.subr.mxu0 0.0
  %575 = vmatpush1.msra.mxu0 0.0
  %576 = vmatprep.subr.mxu0 0.0
  %577 = vmatpush1.msra.mxu0 0.0
  %578 = vmatprep.subr.mxu0 0.0
  %579 = vmatpush1.msra.mxu0 0.0
  %580 = vmatprep.subr.mxu0 0.0
  %581 = vmatpush1.msra.mxu0 0.0
  %582 = vmatprep.subr.mxu0 0.0
  %583 = vmatpush1.msra.mxu0 0.0
  %584 = vmatprep.mubr.f32.mxu0 0.0
  %585 = vmatmul.mubr.f32.gmra.mrb[0].mxu0 %v315
  %v586 = vpop.f32.mrb[0].mxu0
  %v587 = vadd.f32 %v518, %v586
  %v588 = vpop.f32.mrb[0].mxu0
  %589 = vmatprep.mubr.f32.mxu0 0.0
  %590 = vmatmul.mubr.f32.gmra.mrb[0].mxu0 %v318
  %v591 = vpop.f32.mrb[0].mxu0
  %v592 = vadd.f32 %v518, %v591
  %v593 = vpop.f32.mrb[0].mxu0
  %594 = vmatprep.mubr.f32.mxu0 0.0
  %595 = vmatmul.mubr.f32.gmra.mrb[0].mxu0 %v321
  %v596 = vpop.f32.mrb[0].mxu0
  %v597 = vadd.f32 %v518, %v596
  %v598 = vpop.f32.mrb[0].mxu0
  %599 = vmatprep.mubr.f32.mxu0 0.0
  %600 = vmatmul.mubr.f32.gmra.mrb[0].mxu0 %v324
  %v601 = vpop.f32.mrb[0].mxu0
  %v602 = vadd.f32 %v518, %v601
  %v603 = vpop.f32.mrb[0].mxu0
  %604 = vmatprep.mubr.f32.mxu0 0.0
  %605 = vmatmul.mubr.f32.gmra.mrb[0].mxu0 %v327
  %v606 = vpop.f32.mrb[0].mxu0
  %v607 = vadd.f32 %v518, %v606
  %v608 = vpop.f32.mrb[0].mxu0
  %609 = vmatprep.mubr.f32.mxu0 0.0
  %610 = vmatmul.mubr.f32.gmra.mrb[0].mxu0 %v330
  %v611 = vpop.f32.mrb[0].mxu0
  %v612 = vadd.f32 %v518, %v611
  %v613 = vpop.f32.mrb[0].mxu0
  %614 = vmatprep.mubr.f32.mxu0 0.0
  %615 = vmatmul.mubr.f32.gmra.mrb[0].mxu0 %v333
  %v616 = vpop.f32.mrb[0].mxu0
  %v617 = vadd.f32 %v518, %v616
  %v618 = vpop.f32.mrb[0].mxu0
  %619 = vmatprep.mubr.f32.mxu0 0.0
  %620 = vmatmul.mubr.f32.gmra.mrb[0].mxu0 %v336
  %v621 = vpop.f32.mrb[0].mxu0
  %v622 = vadd.f32 %v518, %v621
  %v623 = vpop.f32.mrb[0].mxu0
  %624 = vmatprep.mubr.f32.mxu0 0.0
  %625 = vmatmul.mubr.f32.gmra.mrb[0].mxu0 %v339
  %v626 = vpop.f32.mrb[0].mxu0
  %v627 = vadd.f32 %v518, %v626
  %v628 = vpop.f32.mrb[0].mxu0
  %629 = vmatprep.mubr.f32.mxu0 0.0
  %630 = vmatmul.mubr.f32.gmra.mrb[0].mxu0 %v342
  %v631 = vpop.f32.mrb[0].mxu0
  %v632 = vadd.f32 %v518, %v631
  %v633 = vpop.f32.mrb[0].mxu0
  %634 = vmatprep.mubr.f32.mxu0 0.0
  %635 = vmatmul.mubr.f32.gmra.mrb[0].mxu0 %v345
  %v636 = vpop.f32.mrb[0].mxu0
  %v637 = vadd.f32 %v518, %v636
  %v638 = vpop.f32.mrb[0].mxu0
  %639 = vmatprep.mubr.f32.mxu0 0.0
  %640 = vmatmul.mubr.f32.gmra.mrb[0].mxu0 %v348
  %v641 = vpop.f32.mrb[0].mxu0
  %v642 = vadd.f32 %v518, %v641
  %v643 = vpop.f32.mrb[0].mxu0
  %644 = vmatprep.mubr.f32.mxu0 0.0
  %645 = vmatmul.mubr.f32.gmra.mrb[0].mxu0 %v351
  %v646 = vpop.f32.mrb[0].mxu0
  %v647 = vadd.f32 %v518, %v646
  %v648 = vpop.f32.mrb[0].mxu0
  %649 = vmatprep.mubr.f32.mxu0 0.0
  %650 = vmatmul.mubr.f32.gmra.mrb[0].mxu0 %v354
  %v651 = vpop.f32.mrb[0].mxu0
  %v652 = vadd.f32 %v518, %v651
  %v653 = vpop.f32.mrb[0].mxu0
  %654 = vmatprep.mubr.f32.mxu0 0.0
  %655 = vmatmul.mubr.f32.gmra.mrb[0].mxu0 %v357
  %v656 = vpop.f32.mrb[0].mxu0
  %v657 = vadd.f32 %v518, %v656
  %v658 = vpop.f32.mrb[0].mxu0
  %659 = vmatprep.mubr.f32.mxu0 0.0
  %660 = vmatmul.mubr.f32.gmra.mrb[0].mxu0 %v360
  %v661 = vpop.f32.mrb[0].mxu0
  %v662 = vadd.f32 %v518, %v661
  %v663 = vpop.f32.mrb[0].mxu0
  %664 = vdwg.mxu0
  %s665 = scalar_lea.vmem %s3, 256
  %v666 = vld [vmem:[%s665] sm:$0xff]
  %v667 = vld [vmem:[%s665 + $0x8] sm:$0xff]
  %v668 = vld [vmem:[%s665 + $0x10] sm:$0xff]
  %v669 = vld [vmem:[%s665 + $0x18] sm:$0xff]
  %s670 = scalar_lea.vmem %s4, 8
  %v671 = vld [vmem:[%s670] sm:$0x1]
  %v673 = vlaneseq
  %v674 = vshrl.u32 %v673, 7
  %v675 = vsub.s32 0, %v674
  %v676 = vrot.slane %v671, %v675
  %678 = vmatprep.subr.mxu0 0.0
  %679 = vmatpush1.msra.mxu0 %v666
  %680 = vmatprep.subr.mxu0 0.0
  %681 = vmatpush1.msra.mxu0 %v667
  %682 = vmatprep.subr.mxu0 0.0
  %683 = vmatpush1.msra.mxu0 %v668
  %684 = vmatprep.subr.mxu0 0.0
  %685 = vmatpush1.msra.mxu0 %v669
  %686 = vmatprep.subr.mxu0 0.0
  %687 = vmatpush1.msra.mxu0 0.0
  %688 = vmatprep.subr.mxu0 0.0
  %689 = vmatpush1.msra.mxu0 0.0
  %690 = vmatprep.subr.mxu0 0.0
  %691 = vmatpush1.msra.mxu0 0.0
  %692 = vmatprep.subr.mxu0 0.0
  %693 = vmatpush1.msra.mxu0 0.0
  %694 = vmatprep.subr.mxu0 0.0
  %695 = vmatpush1.msra.mxu0 0.0
  %696 = vmatprep.subr.mxu0 0.0
  %697 = vmatpush1.msra.mxu0 0.0
  %698 = vmatprep.subr.mxu0 0.0
  %699 = vmatpush1.msra.mxu0 0.0
  %700 = vmatprep.subr.mxu0 0.0
  %701 = vmatpush1.msra.mxu0 0.0
  %702 = vmatprep.subr.mxu0 0.0
  %703 = vmatpush1.msra.mxu0 0.0
  %704 = vmatprep.subr.mxu0 0.0
  %705 = vmatpush1.msra.mxu0 0.0
  %706 = vmatprep.subr.mxu0 0.0
  %707 = vmatpush1.msra.mxu0 0.0
  %708 = vmatprep.subr.mxu0 0.0
  %709 = vmatpush1.msra.mxu0 0.0
  %710 = vmatprep.subr.mxu0 0.0
  %711 = vmatpush1.msra.mxu0 0.0
  %712 = vmatprep.subr.mxu0 0.0
  %713 = vmatpush1.msra.mxu0 0.0
  %714 = vmatprep.subr.mxu0 0.0
  %715 = vmatpush1.msra.mxu0 0.0
  %716 = vmatprep.subr.mxu0 0.0
  %717 = vmatpush1.msra.mxu0 0.0
  %718 = vmatprep.subr.mxu0 0.0
  %719 = vmatpush1.msra.mxu0 0.0
  %720 = vmatprep.subr.mxu0 0.0
  %721 = vmatpush1.msra.mxu0 0.0
  %722 = vmatprep.subr.mxu0 0.0
  %723 = vmatpush1.msra.mxu0 0.0
  %724 = vmatprep.subr.mxu0 0.0
  %725 = vmatpush1.msra.mxu0 0.0
  %726 = vmatprep.subr.mxu0 0.0
  %727 = vmatpush1.msra.mxu0 0.0
  %728 = vmatprep.subr.mxu0 0.0
  %729 = vmatpush1.msra.mxu0 0.0
  %730 = vmatprep.subr.mxu0 0.0
  %731 = vmatpush1.msra.mxu0 0.0
  %732 = vmatprep.subr.mxu0 0.0
  %733 = vmatpush1.msra.mxu0 0.0
  %734 = vmatprep.subr.mxu0 0.0
  %735 = vmatpush1.msra.mxu0 0.0
  %736 = vmatprep.subr.mxu0 0.0
  %737 = vmatpush1.msra.mxu0 0.0
  %738 = vmatprep.subr.mxu0 0.0
  %739 = vmatpush1.msra.mxu0 0.0
  %740 = vmatprep.subr.mxu0 0.0
  %741 = vmatpush1.msra.mxu0 0.0
  %742 = vmatprep.mubr.f32.mxu0 0.0
  %743 = vmatmul.mubr.f32.gmra.mrb[0].mxu0 %v315
  %v744 = vpop.f32.mrb[0].mxu0
  %v745 = vadd.f32 %v676, %v744
  %v746 = vpop.f32.mrb[0].mxu0
  %747 = vmatprep.mubr.f32.mxu0 0.0
  %748 = vmatmul.mubr.f32.gmra.mrb[0].mxu0 %v318
  %v749 = vpop.f32.mrb[0].mxu0
  %v750 = vadd.f32 %v676, %v749
  %v751 = vpop.f32.mrb[0].mxu0
  %752 = vmatprep.mubr.f32.mxu0 0.0
  %753 = vmatmul.mubr.f32.gmra.mrb[0].mxu0 %v321
  %v754 = vpop.f32.mrb[0].mxu0
  %v755 = vadd.f32 %v676, %v754
  %v756 = vpop.f32.mrb[0].mxu0
  %757 = vmatprep.mubr.f32.mxu0 0.0
  %758 = vmatmul.mubr.f32.gmra.mrb[0].mxu0 %v324
  %v759 = vpop.f32.mrb[0].mxu0
  %v760 = vadd.f32 %v676, %v759
  %v761 = vpop.f32.mrb[0].mxu0
  %762 = vmatprep.mubr.f32.mxu0 0.0
  %763 = vmatmul.mubr.f32.gmra.mrb[0].mxu0 %v327
  %v764 = vpop.f32.mrb[0].mxu0
  %v765 = vadd.f32 %v676, %v764
  %v766 = vpop.f32.mrb[0].mxu0
  %767 = vmatprep.mubr.f32.mxu0 0.0
  %768 = vmatmul.mubr.f32.gmra.mrb[0].mxu0 %v330
  %v769 = vpop.f32.mrb[0].mxu0
  %v770 = vadd.f32 %v676, %v769
  %v771 = vpop.f32.mrb[0].mxu0
  %772 = vmatprep.mubr.f32.mxu0 0.0
  %773 = vmatmul.mubr.f32.gmra.mrb[0].mxu0 %v333
  %v774 = vpop.f32.mrb[0].mxu0
  %v775 = vadd.f32 %v676, %v774
  %v776 = vpop.f32.mrb[0].mxu0
  %777 = vmatprep.mubr.f32.mxu0 0.0
  %778 = vmatmul.mubr.f32.gmra.mrb[0].mxu0 %v336
  %v779 = vpop.f32.mrb[0].mxu0
  %v780 = vadd.f32 %v676, %v779
  %v781 = vpop.f32.mrb[0].mxu0
  %782 = vmatprep.mubr.f32.mxu0 0.0
  %783 = vmatmul.mubr.f32.gmra.mrb[0].mxu0 %v339
  %v784 = vpop.f32.mrb[0].mxu0
  %v785 = vadd.f32 %v676, %v784
  %v786 = vpop.f32.mrb[0].mxu0
  %787 = vmatprep.mubr.f32.mxu0 0.0
  %788 = vmatmul.mubr.f32.gmra.mrb[0].mxu0 %v342
  %v789 = vpop.f32.mrb[0].mxu0
  %v790 = vadd.f32 %v676, %v789
  %v791 = vpop.f32.mrb[0].mxu0
  %792 = vmatprep.mubr.f32.mxu0 0.0
  %793 = vmatmul.mubr.f32.gmra.mrb[0].mxu0 %v345
  %v794 = vpop.f32.mrb[0].mxu0
  %v795 = vadd.f32 %v676, %v794
  %v796 = vpop.f32.mrb[0].mxu0
  %797 = vmatprep.mubr.f32.mxu0 0.0
  %798 = vmatmul.mubr.f32.gmra.mrb[0].mxu0 %v348
  %v799 = vpop.f32.mrb[0].mxu0
  %v800 = vadd.f32 %v676, %v799
  %v801 = vpop.f32.mrb[0].mxu0
  %802 = vmatprep.mubr.f32.mxu0 0.0
  %803 = vmatmul.mubr.f32.gmra.mrb[0].mxu0 %v351
  %v804 = vpop.f32.mrb[0].mxu0
  %v805 = vadd.f32 %v676, %v804
  %v806 = vpop.f32.mrb[0].mxu0
  %807 = vmatprep.mubr.f32.mxu0 0.0
  %808 = vmatmul.mubr.f32.gmra.mrb[0].mxu0 %v354
  %v809 = vpop.f32.mrb[0].mxu0
  %v810 = vadd.f32 %v676, %v809
  %v811 = vpop.f32.mrb[0].mxu0
  %812 = vmatprep.mubr.f32.mxu0 0.0
  %813 = vmatmul.mubr.f32.gmra.mrb[0].mxu0 %v357
  %v814 = vpop.f32.mrb[0].mxu0
  %v815 = vadd.f32 %v676, %v814
  %v816 = vpop.f32.mrb[0].mxu0
  %817 = vmatprep.mubr.f32.mxu0 0.0
  %818 = vmatmul.mubr.f32.gmra.mrb[0].mxu0 %v360
  %v819 = vpop.f32.mrb[0].mxu0
  %v820 = vadd.f32 %v676, %v819
  %v821 = vpop.f32.mrb[0].mxu0
  %822 = vdwg.mxu0
  %v823 = vld [vmem:[%s1] sm:$0xff]
  %v824 = vld [vmem:[%s1 + $0x8] sm:$0xff]
  %v825 = vld [vmem:[%s1 + $0x10] sm:$0xff]
  %v826 = vld [vmem:[%s1 + $0x18] sm:$0xff]
  %v827 = vld [vmem:[%s1 + $0x20] sm:$0xff]
  %v828 = vld [vmem:[%s1 + $0x28] sm:$0xff]
  %v829 = vld [vmem:[%s1 + $0x30] sm:$0xff]
  %v830 = vld [vmem:[%s1 + $0x38] sm:$0xff]
  %v831 = vld [vmem:[%s1 + $0x40] sm:$0xff]
  %v832 = vld [vmem:[%s1 + $0x48] sm:$0xff]
  %v833 = vld [vmem:[%s1 + $0x50] sm:$0xff]
  %v834 = vld [vmem:[%s1 + $0x58] sm:$0xff]
  %v835 = vld [vmem:[%s1 + $0x60] sm:$0xff]
  %v836 = vld [vmem:[%s1 + $0x68] sm:$0xff]
  %v837 = vld [vmem:[%s1 + $0x70] sm:$0xff]
  %v838 = vld [vmem:[%s1 + $0x78] sm:$0xff]
  %vm839 = vcmask 64512
  %v841 = vsel %vm839, %v429, 0
  %v844 = vsel %vm839, %v434, 0
  %v847 = vsel %vm839, %v439, 0
  %v850 = vsel %vm839, %v444, 0
  %v853 = vsel %vm839, %v449, 0
  %v856 = vsel %vm839, %v454, 0
  %v859 = vsel %vm839, %v459, 0
  %v862 = vsel %vm839, %v464, 0
  %v865 = vsel %vm839, %v469, 0
  %v868 = vsel %vm839, %v474, 0
  %v871 = vsel %vm839, %v479, 0
  %v874 = vsel %vm839, %v484, 0
  %v877 = vsel %vm839, %v489, 0
  %v880 = vsel %vm839, %v494, 0
  %v883 = vsel %vm839, %v499, 0
  %v886 = vsel %vm839, %v504, 0
  %v889 = vsel %vm839, %v587, 0
  %v892 = vsel %vm839, %v592, 0
  %v895 = vsel %vm839, %v597, 0
  %v898 = vsel %vm839, %v602, 0
  %v901 = vsel %vm839, %v607, 0
  %v904 = vsel %vm839, %v612, 0
  %v907 = vsel %vm839, %v617, 0
  %v910 = vsel %vm839, %v622, 0
  %v913 = vsel %vm839, %v627, 0
  %v916 = vsel %vm839, %v632, 0
  %v919 = vsel %vm839, %v637, 0
  %v922 = vsel %vm839, %v642, 0
  %v925 = vsel %vm839, %v647, 0
  %v928 = vsel %vm839, %v652, 0
  %v931 = vsel %vm839, %v657, 0
  %v934 = vsel %vm839, %v662, 0
  %936 = vmatprep.subr.mxu0 0.0
  %937 = vmatpush1.xpose.msra.mxu0 %v889
  %938 = vmatprep.subr.mxu0 0.0
  %939 = vmatpush1.xpose.msra.mxu0 %v892
  %940 = vmatprep.subr.mxu0 0.0
  %941 = vmatpush1.xpose.msra.mxu0 %v895
  %942 = vmatprep.subr.mxu0 0.0
  %943 = vmatpush1.xpose.msra.mxu0 %v898
  %944 = vmatprep.subr.mxu0 0.0
  %945 = vmatpush1.xpose.msra.mxu0 %v901
  %946 = vmatprep.subr.mxu0 0.0
  %947 = vmatpush1.xpose.msra.mxu0 %v904
  %948 = vmatprep.subr.mxu0 0.0
  %949 = vmatpush1.xpose.msra.mxu0 %v907
  %950 = vmatprep.subr.mxu0 0.0
  %951 = vmatpush1.xpose.msra.mxu0 %v910
  %952 = vmatprep.subr.mxu0 0.0
  %953 = vmatpush1.xpose.msra.mxu0 %v913
  %954 = vmatprep.subr.mxu0 0.0
  %955 = vmatpush1.xpose.msra.mxu0 %v916
  %956 = vmatprep.subr.mxu0 0.0
  %957 = vmatpush1.xpose.msra.mxu0 %v919
  %958 = vmatprep.subr.mxu0 0.0
  %959 = vmatpush1.xpose.msra.mxu0 %v922
  %960 = vmatprep.subr.mxu0 0.0
  %961 = vmatpush1.xpose.msra.mxu0 %v925
  %962 = vmatprep.subr.mxu0 0.0
  %963 = vmatpush1.xpose.msra.mxu0 %v928
  %964 = vmatprep.subr.mxu0 0.0
  %965 = vmatpush1.xpose.msra.mxu0 %v931
  %966 = vmatprep.subr.mxu0 0.0
  %967 = vmatpush1.xpose.msra.mxu0 %v934
  %968 = vmatprep.subr.mxu0 0.0
  %969 = vmatpush1.xpose.msra.mxu0 0.0
  %970 = vmatprep.subr.mxu0 0.0
  %971 = vmatpush1.xpose.msra.mxu0 0.0
  %972 = vmatprep.subr.mxu0 0.0
  %973 = vmatpush1.xpose.msra.mxu0 0.0
  %974 = vmatprep.subr.mxu0 0.0
  %975 = vmatpush1.xpose.msra.mxu0 0.0
  %976 = vmatprep.subr.mxu0 0.0
  %977 = vmatpush1.xpose.msra.mxu0 0.0
  %978 = vmatprep.subr.mxu0 0.0
  %979 = vmatpush1.xpose.msra.mxu0 0.0
  %980 = vmatprep.subr.mxu0 0.0
  %981 = vmatpush1.xpose.msra.mxu0 0.0
  %982 = vmatprep.subr.mxu0 0.0
  %983 = vmatpush1.xpose.msra.mxu0 0.0
  %984 = vmatprep.subr.mxu0 0.0
  %985 = vmatpush1.xpose.msra.mxu0 0.0
  %986 = vmatprep.subr.mxu0 0.0
  %987 = vmatpush1.xpose.msra.mxu0 0.0
  %988 = vmatprep.subr.mxu0 0.0
  %989 = vmatpush1.xpose.msra.mxu0 0.0
  %990 = vmatprep.subr.mxu0 0.0
  %991 = vmatpush1.xpose.msra.mxu0 0.0
  %992 = vmatprep.subr.mxu0 0.0
  %993 = vmatpush1.xpose.msra.mxu0 0.0
  %994 = vmatprep.subr.mxu0 0.0
  %995 = vmatpush1.xpose.msra.mxu0 0.0
  %996 = vmatprep.subr.mxu0 0.0
  %997 = vmatpush1.xpose.msra.mxu0 0.0
  %998 = vmatprep.subr.mxu0 0.0
  %999 = vmatpush1.xpose.msra.mxu0 0.0
  %1000 = vmatprep.mubr.f32.mxu0 0.0
  %1001 = vmatmul.mubr.f32.gmra.mrb[0].mxu0 %v841
  %v1002 = vpop.f32.mrb[0].mxu0
  %v1003 = vadd.f32 %v823, %v1002
  %v1004 = vpop.f32.mrb[0].mxu0
  %1005 = vmatprep.mubr.f32.mxu0 0.0
  %1006 = vmatmul.mubr.f32.gmra.mrb[0].mxu0 %v844
  %v1007 = vpop.f32.mrb[0].mxu0
  %v1008 = vadd.f32 %v824, %v1007
  %v1009 = vpop.f32.mrb[0].mxu0
  %1010 = vmatprep.mubr.f32.mxu0 0.0
  %1011 = vmatmul.mubr.f32.gmra.mrb[0].mxu0 %v847
  %v1012 = vpop.f32.mrb[0].mxu0
  %v1013 = vadd.f32 %v825, %v1012
  %v1014 = vpop.f32.mrb[0].mxu0
  %1015 = vmatprep.mubr.f32.mxu0 0.0
  %1016 = vmatmul.mubr.f32.gmra.mrb[0].mxu0 %v850
  %v1017 = vpop.f32.mrb[0].mxu0
  %v1018 = vadd.f32 %v826, %v1017
  %v1019 = vpop.f32.mrb[0].mxu0
  %1020 = vmatprep.mubr.f32.mxu0 0.0
  %1021 = vmatmul.mubr.f32.gmra.mrb[0].mxu0 %v853
  %v1022 = vpop.f32.mrb[0].mxu0
  %v1023 = vadd.f32 %v827, %v1022
  %v1024 = vpop.f32.mrb[0].mxu0
  %1025 = vmatprep.mubr.f32.mxu0 0.0
  %1026 = vmatmul.mubr.f32.gmra.mrb[0].mxu0 %v856
  %v1027 = vpop.f32.mrb[0].mxu0
  %v1028 = vadd.f32 %v828, %v1027
  %v1029 = vpop.f32.mrb[0].mxu0
  %1030 = vmatprep.mubr.f32.mxu0 0.0
  %1031 = vmatmul.mubr.f32.gmra.mrb[0].mxu0 %v859
  %v1032 = vpop.f32.mrb[0].mxu0
  %v1033 = vadd.f32 %v829, %v1032
  %v1034 = vpop.f32.mrb[0].mxu0
  %1035 = vmatprep.mubr.f32.mxu0 0.0
  %1036 = vmatmul.mubr.f32.gmra.mrb[0].mxu0 %v862
  %v1037 = vpop.f32.mrb[0].mxu0
  %v1038 = vadd.f32 %v830, %v1037
  %v1039 = vpop.f32.mrb[0].mxu0
  %1040 = vmatprep.mubr.f32.mxu0 0.0
  %1041 = vmatmul.mubr.f32.gmra.mrb[0].mxu0 %v865
  %v1042 = vpop.f32.mrb[0].mxu0
  %v1043 = vadd.f32 %v831, %v1042
  %v1044 = vpop.f32.mrb[0].mxu0
  %1045 = vmatprep.mubr.f32.mxu0 0.0
  %1046 = vmatmul.mubr.f32.gmra.mrb[0].mxu0 %v868
  %v1047 = vpop.f32.mrb[0].mxu0
  %v1048 = vadd.f32 %v832, %v1047
  %v1049 = vpop.f32.mrb[0].mxu0
  %1050 = vmatprep.mubr.f32.mxu0 0.0
  %1051 = vmatmul.mubr.f32.gmra.mrb[0].mxu0 %v871
  %v1052 = vpop.f32.mrb[0].mxu0
  %v1053 = vadd.f32 %v833, %v1052
  %v1054 = vpop.f32.mrb[0].mxu0
  %1055 = vmatprep.mubr.f32.mxu0 0.0
  %1056 = vmatmul.mubr.f32.gmra.mrb[0].mxu0 %v874
  %v1057 = vpop.f32.mrb[0].mxu0
  %v1058 = vadd.f32 %v834, %v1057
  %v1059 = vpop.f32.mrb[0].mxu0
  %1060 = vmatprep.mubr.f32.mxu0 0.0
  %1061 = vmatmul.mubr.f32.gmra.mrb[0].mxu0 %v877
  %v1062 = vpop.f32.mrb[0].mxu0
  %v1063 = vadd.f32 %v835, %v1062
  %v1064 = vpop.f32.mrb[0].mxu0
  %1065 = vmatprep.mubr.f32.mxu0 0.0
  %1066 = vmatmul.mubr.f32.gmra.mrb[0].mxu0 %v880
  %v1067 = vpop.f32.mrb[0].mxu0
  %v1068 = vadd.f32 %v836, %v1067
  %v1069 = vpop.f32.mrb[0].mxu0
  %1070 = vmatprep.mubr.f32.mxu0 0.0
  %1071 = vmatmul.mubr.f32.gmra.mrb[0].mxu0 %v883
  %v1072 = vpop.f32.mrb[0].mxu0
  %v1073 = vadd.f32 %v837, %v1072
  %v1074 = vpop.f32.mrb[0].mxu0
  %1075 = vmatprep.mubr.f32.mxu0 0.0
  %1076 = vmatmul.mubr.f32.gmra.mrb[0].mxu0 %v886
  %v1077 = vpop.f32.mrb[0].mxu0
  %v1078 = vadd.f32 %v838, %v1077
  %v1079 = vpop.f32.mrb[0].mxu0
  %1080 = vdwg.mxu0
  %1081 = vmax.xlane.f32.xlu0 %v1003
  %v1082 = vpop.xlane.xlu0 %1081
  %1083 = vmax.xlane.f32.xlu0 %v1008
  %v1084 = vpop.xlane.xlu0 %1083
  %1085 = vmax.xlane.f32.xlu0 %v1013
  %v1086 = vpop.xlane.xlu0 %1085
  %1087 = vmax.xlane.f32.xlu0 %v1018
  %v1088 = vpop.xlane.xlu0 %1087
  %1089 = vmax.xlane.f32.xlu0 %v1023
  %v1090 = vpop.xlane.xlu0 %1089
  %1091 = vmax.xlane.f32.xlu0 %v1028
  %v1092 = vpop.xlane.xlu0 %1091
  %1093 = vmax.xlane.f32.xlu0 %v1033
  %v1094 = vpop.xlane.xlu0 %1093
  %1095 = vmax.xlane.f32.xlu0 %v1038
  %v1096 = vpop.xlane.xlu0 %1095
  %1097 = vmax.xlane.f32.xlu0 %v1043
  %v1098 = vpop.xlane.xlu0 %1097
  %1099 = vmax.xlane.f32.xlu0 %v1048
  %v1100 = vpop.xlane.xlu0 %1099
  %1101 = vmax.xlane.f32.xlu0 %v1053
  %v1102 = vpop.xlane.xlu0 %1101
  %1103 = vmax.xlane.f32.xlu0 %v1058
  %v1104 = vpop.xlane.xlu0 %1103
  %1105 = vmax.xlane.f32.xlu0 %v1063
  %v1106 = vpop.xlane.xlu0 %1105
  %1107 = vmax.xlane.f32.xlu0 %v1068
  %v1108 = vpop.xlane.xlu0 %1107
  %1109 = vmax.xlane.f32.xlu0 %v1073
  %v1110 = vpop.xlane.xlu0 %1109
  %1111 = vmax.xlane.f32.xlu0 %v1078
  %v1112 = vpop.xlane.xlu0 %1111
  %v1113 = vsub.f32 %v1003, %v1082
  %v1114 = vsub.f32 %v1008, %v1084
  %v1115 = vsub.f32 %v1013, %v1086
  %v1116 = vsub.f32 %v1018, %v1088
  %v1117 = vsub.f32 %v1023, %v1090
  %v1118 = vsub.f32 %v1028, %v1092
  %v1119 = vsub.f32 %v1033, %v1094
  %v1120 = vsub.f32 %v1038, %v1096
  %v1121 = vsub.f32 %v1043, %v1098
  %v1122 = vsub.f32 %v1048, %v1100
  %v1123 = vsub.f32 %v1053, %v1102
  %v1124 = vsub.f32 %v1058, %v1104
  %v1125 = vsub.f32 %v1063, %v1106
  %v1126 = vsub.f32 %v1068, %v1108
  %v1127 = vsub.f32 %v1073, %v1110
  %v1128 = vsub.f32 %v1078, %v1112
  %v1129 = vmul.f32 %v1113, 1.442695
  %v1130 = vpow.pop %v1129
  %v1131 = vmul.f32 %v1114, 1.442695
  %v1132 = vpow.pop %v1131
  %v1133 = vmul.f32 %v1115, 1.442695
  %v1134 = vpow.pop %v1133
  %v1135 = vmul.f32 %v1116, 1.442695
  %v1136 = vpow.pop %v1135
  %v1137 = vmul.f32 %v1117, 1.442695
  %v1138 = vpow.pop %v1137
  %v1139 = vmul.f32 %v1118, 1.442695
  %v1140 = vpow.pop %v1139
  %v1141 = vmul.f32 %v1119, 1.442695
  %v1142 = vpow.pop %v1141
  %v1143 = vmul.f32 %v1120, 1.442695
  %v1144 = vpow.pop %v1143
  %v1145 = vmul.f32 %v1121, 1.442695
  %v1146 = vpow.pop %v1145
  %v1147 = vmul.f32 %v1122, 1.442695
  %v1148 = vpow.pop %v1147
  %v1149 = vmul.f32 %v1123, 1.442695
  %v1150 = vpow.pop %v1149
  %v1151 = vmul.f32 %v1124, 1.442695
  %v1152 = vpow.pop %v1151
  %v1153 = vmul.f32 %v1125, 1.442695
  %v1154 = vpow.pop %v1153
  %v1155 = vmul.f32 %v1126, 1.442695
  %v1156 = vpow.pop %v1155
  %v1157 = vmul.f32 %v1127, 1.442695
  %v1158 = vpow.pop %v1157
  %v1159 = vmul.f32 %v1128, 1.442695
  %v1160 = vpow.pop %v1159
  %1161 = vadd.xlane.f32.xlu0 %v1130
  %v1162 = vpop.xlane.xlu0 %1161
  %1163 = vadd.xlane.f32.xlu0 %v1132
  %v1164 = vpop.xlane.xlu0 %1163
  %1165 = vadd.xlane.f32.xlu0 %v1134
  %v1166 = vpop.xlane.xlu0 %1165
  %1167 = vadd.xlane.f32.xlu0 %v1136
  %v1168 = vpop.xlane.xlu0 %1167
  %1169 = vadd.xlane.f32.xlu0 %v1138
  %v1170 = vpop.xlane.xlu0 %1169
  %1171 = vadd.xlane.f32.xlu0 %v1140
  %v1172 = vpop.xlane.xlu0 %1171
  %1173 = vadd.xlane.f32.xlu0 %v1142
  %v1174 = vpop.xlane.xlu0 %1173
  %1175 = vadd.xlane.f32.xlu0 %v1144
  %v1176 = vpop.xlane.xlu0 %1175
  %1177 = vadd.xlane.f32.xlu0 %v1146
  %v1178 = vpop.xlane.xlu0 %1177
  %1179 = vadd.xlane.f32.xlu0 %v1148
  %v1180 = vpop.xlane.xlu0 %1179
  %1181 = vadd.xlane.f32.xlu0 %v1150
  %v1182 = vpop.xlane.xlu0 %1181
  %1183 = vadd.xlane.f32.xlu0 %v1152
  %v1184 = vpop.xlane.xlu0 %1183
  %1185 = vadd.xlane.f32.xlu0 %v1154
  %v1186 = vpop.xlane.xlu0 %1185
  %1187 = vadd.xlane.f32.xlu0 %v1156
  %v1188 = vpop.xlane.xlu0 %1187
  %1189 = vadd.xlane.f32.xlu0 %v1158
  %v1190 = vpop.xlane.xlu0 %1189
  %1191 = vadd.xlane.f32.xlu0 %v1160
  %v1192 = vpop.xlane.xlu0 %1191
  %v1193 = vrcp.pop %v1162
  %v1194 = vrcp.pop %v1164
  %v1195 = vrcp.pop %v1166
  %v1196 = vrcp.pop %v1168
  %v1197 = vrcp.pop %v1170
  %v1198 = vrcp.pop %v1172
  %v1199 = vrcp.pop %v1174
  %v1200 = vrcp.pop %v1176
  %v1201 = vrcp.pop %v1178
  %v1202 = vrcp.pop %v1180
  %v1203 = vrcp.pop %v1182
  %v1204 = vrcp.pop %v1184
  %v1205 = vrcp.pop %v1186
  %v1206 = vrcp.pop %v1188
  %v1207 = vrcp.pop %v1190
  %v1208 = vrcp.pop %v1192
  %v1209 = vmul.f32 %v1130, %v1193
  %v1210 = vmul.f32 %v1132, %v1194
  %v1211 = vmul.f32 %v1134, %v1195
  %v1212 = vmul.f32 %v1136, %v1196
  %v1213 = vmul.f32 %v1138, %v1197
  %v1214 = vmul.f32 %v1140, %v1198
  %v1215 = vmul.f32 %v1142, %v1199
  %v1216 = vmul.f32 %v1144, %v1200
  %v1217 = vmul.f32 %v1146, %v1201
  %v1218 = vmul.f32 %v1148, %v1202
  %v1219 = vmul.f32 %v1150, %v1203
  %v1220 = vmul.f32 %v1152, %v1204
  %v1221 = vmul.f32 %v1154, %v1205
  %v1222 = vmul.f32 %v1156, %v1206
  %v1223 = vmul.f32 %v1158, %v1207
  %v1224 = vmul.f32 %v1160, %v1208
  %1225 = vmatprep.subr.mxu0 0.0
  %1226 = vmatpush1.msra.mxu0 %v745
  %1227 = vmatprep.subr.mxu0 0.0
  %1228 = vmatpush1.msra.mxu0 %v750
  %1229 = vmatprep.subr.mxu0 0.0
  %1230 = vmatpush1.msra.mxu0 %v755
  %1231 = vmatprep.subr.mxu0 0.0
  %1232 = vmatpush1.msra.mxu0 %v760
  %1233 = vmatprep.subr.mxu0 0.0
  %1234 = vmatpush1.msra.mxu0 %v765
  %1235 = vmatprep.subr.mxu0 0.0
  %1236 = vmatpush1.msra.mxu0 %v770
  %1237 = vmatprep.subr.mxu0 0.0
  %1238 = vmatpush1.msra.mxu0 %v775
  %1239 = vmatprep.subr.mxu0 0.0
  %1240 = vmatpush1.msra.mxu0 %v780
  %1241 = vmatprep.subr.mxu0 0.0
  %1242 = vmatpush1.msra.mxu0 %v785
  %1243 = vmatprep.subr.mxu0 0.0
  %1244 = vmatpush1.msra.mxu0 %v790
  %1245 = vmatprep.subr.mxu0 0.0
  %1246 = vmatpush1.msra.mxu0 %v795
  %1247 = vmatprep.subr.mxu0 0.0
  %1248 = vmatpush1.msra.mxu0 %v800
  %1249 = vmatprep.subr.mxu0 0.0
  %1250 = vmatpush1.msra.mxu0 %v805
  %1251 = vmatprep.subr.mxu0 0.0
  %1252 = vmatpush1.msra.mxu0 %v810
  %1253 = vmatprep.subr.mxu0 0.0
  %1254 = vmatpush1.msra.mxu0 %v815
  %1255 = vmatprep.subr.mxu0 0.0
  %1256 = vmatpush1.msra.mxu0 %v820
  %1257 = vmatprep.subr.mxu0 0.0
  %1258 = vmatpush1.msra.mxu0 0.0
  %1259 = vmatprep.subr.mxu0 0.0
  %1260 = vmatpush1.msra.mxu0 0.0
  %1261 = vmatprep.subr.mxu0 0.0
  %1262 = vmatpush1.msra.mxu0 0.0
  %1263 = vmatprep.subr.mxu0 0.0
  %1264 = vmatpush1.msra.mxu0 0.0
  %1265 = vmatprep.subr.mxu0 0.0
  %1266 = vmatpush1.msra.mxu0 0.0
  %1267 = vmatprep.subr.mxu0 0.0
  %1268 = vmatpush1.msra.mxu0 0.0
  %1269 = vmatprep.subr.mxu0 0.0
  %1270 = vmatpush1.msra.mxu0 0.0
  %1271 = vmatprep.subr.mxu0 0.0
  %1272 = vmatpush1.msra.mxu0 0.0
  %1273 = vmatprep.subr.mxu0 0.0
  %1274 = vmatpush1.msra.mxu0 0.0
  %1275 = vmatprep.subr.mxu0 0.0
  %1276 = vmatpush1.msra.mxu0 0.0
  %1277 = vmatprep.subr.mxu0 0.0
  %1278 = vmatpush1.msra.mxu0 0.0
  %1279 = vmatprep.subr.mxu0 0.0
  %1280 = vmatpush1.msra.mxu0 0.0
  %1281 = vmatprep.subr.mxu0 0.0
  %1282 = vmatpush1.msra.mxu0 0.0
  %1283 = vmatprep.subr.mxu0 0.0
  %1284 = vmatpush1.msra.mxu0 0.0
  %1285 = vmatprep.subr.mxu0 0.0
  %1286 = vmatpush1.msra.mxu0 0.0
  %1287 = vmatprep.subr.mxu0 0.0
  %1288 = vmatpush1.msra.mxu0 0.0
  %1289 = vmatprep.mubr.f32.mxu0 0.0
  %1290 = vmatmul.mubr.f32.gmra.mrb[0].mxu0 %v1209
  %v1291 = vpop.f32.mrb[0].mxu0
  %v1292 = vadd.f32 0.0, %v1291
  %v1293 = vpop.f32.mrb[0].mxu0
  %1294 = vmatprep.mubr.f32.mxu0 0.0
  %1295 = vmatmul.mubr.f32.gmra.mrb[0].mxu0 %v1210
  %v1296 = vpop.f32.mrb[0].mxu0
  %v1297 = vadd.f32 0.0, %v1296
  %v1298 = vpop.f32.mrb[0].mxu0
  %1299 = vmatprep.mubr.f32.mxu0 0.0
  %1300 = vmatmul.mubr.f32.gmra.mrb[0].mxu0 %v1211
  %v1301 = vpop.f32.mrb[0].mxu0
  %v1302 = vadd.f32 0.0, %v1301
  %v1303 = vpop.f32.mrb[0].mxu0
  %1304 = vmatprep.mubr.f32.mxu0 0.0
  %1305 = vmatmul.mubr.f32.gmra.mrb[0].mxu0 %v1212
  %v1306 = vpop.f32.mrb[0].mxu0
  %v1307 = vadd.f32 0.0, %v1306
  %v1308 = vpop.f32.mrb[0].mxu0
  %1309 = vmatprep.mubr.f32.mxu0 0.0
  %1310 = vmatmul.mubr.f32.gmra.mrb[0].mxu0 %v1213
  %v1311 = vpop.f32.mrb[0].mxu0
  %v1312 = vadd.f32 0.0, %v1311
  %v1313 = vpop.f32.mrb[0].mxu0
  %1314 = vmatprep.mubr.f32.mxu0 0.0
  %1315 = vmatmul.mubr.f32.gmra.mrb[0].mxu0 %v1214
  %v1316 = vpop.f32.mrb[0].mxu0
  %v1317 = vadd.f32 0.0, %v1316
  %v1318 = vpop.f32.mrb[0].mxu0
  %1319 = vmatprep.mubr.f32.mxu0 0.0
  %1320 = vmatmul.mubr.f32.gmra.mrb[0].mxu0 %v1215
  %v1321 = vpop.f32.mrb[0].mxu0
  %v1322 = vadd.f32 0.0, %v1321
  %v1323 = vpop.f32.mrb[0].mxu0
  %1324 = vmatprep.mubr.f32.mxu0 0.0
  %1325 = vmatmul.mubr.f32.gmra.mrb[0].mxu0 %v1216
  %v1326 = vpop.f32.mrb[0].mxu0
  %v1327 = vadd.f32 0.0, %v1326
  %v1328 = vpop.f32.mrb[0].mxu0
  %1329 = vmatprep.mubr.f32.mxu0 0.0
  %1330 = vmatmul.mubr.f32.gmra.mrb[0].mxu0 %v1217
  %v1331 = vpop.f32.mrb[0].mxu0
  %v1332 = vadd.f32 0.0, %v1331
  %v1333 = vpop.f32.mrb[0].mxu0
  %1334 = vmatprep.mubr.f32.mxu0 0.0
  %1335 = vmatmul.mubr.f32.gmra.mrb[0].mxu0 %v1218
  %v1336 = vpop.f32.mrb[0].mxu0
  %v1337 = vadd.f32 0.0, %v1336
  %v1338 = vpop.f32.mrb[0].mxu0
  %1339 = vmatprep.mubr.f32.mxu0 0.0
  %1340 = vmatmul.mubr.f32.gmra.mrb[0].mxu0 %v1219
  %v1341 = vpop.f32.mrb[0].mxu0
  %v1342 = vadd.f32 0.0, %v1341
  %v1343 = vpop.f32.mrb[0].mxu0
  %1344 = vmatprep.mubr.f32.mxu0 0.0
  %1345 = vmatmul.mubr.f32.gmra.mrb[0].mxu0 %v1220
  %v1346 = vpop.f32.mrb[0].mxu0
  %v1347 = vadd.f32 0.0, %v1346
  %v1348 = vpop.f32.mrb[0].mxu0
  %1349 = vmatprep.mubr.f32.mxu0 0.0
  %1350 = vmatmul.mubr.f32.gmra.mrb[0].mxu0 %v1221
  %v1351 = vpop.f32.mrb[0].mxu0
  %v1352 = vadd.f32 0.0, %v1351
  %v1353 = vpop.f32.mrb[0].mxu0
  %1354 = vmatprep.mubr.f32.mxu0 0.0
  %1355 = vmatmul.mubr.f32.gmra.mrb[0].mxu0 %v1222
  %v1356 = vpop.f32.mrb[0].mxu0
  %v1357 = vadd.f32 0.0, %v1356
  %v1358 = vpop.f32.mrb[0].mxu0
  %1359 = vmatprep.mubr.f32.mxu0 0.0
  %1360 = vmatmul.mubr.f32.gmra.mrb[0].mxu0 %v1223
  %v1361 = vpop.f32.mrb[0].mxu0
  %v1362 = vadd.f32 0.0, %v1361
  %v1363 = vpop.f32.mrb[0].mxu0
  %1364 = vmatprep.mubr.f32.mxu0 0.0
  %1365 = vmatmul.mubr.f32.gmra.mrb[0].mxu0 %v1224
  %v1366 = vpop.f32.mrb[0].mxu0
  %v1367 = vadd.f32 0.0, %v1366
  %v1368 = vpop.f32.mrb[0].mxu0
  %1369 = vdwg.mxu0
  %v1370 = vld [vmem:[%s5] sm:$0xff]
  %s1371 = scalar_lea.vmem %s3, 32
  %v1372 = vld [vmem:[%s1371] sm:$0xff]
  %v1373 = vld [vmem:[%s1371 + $0x8] sm:$0xff]
  %v1374 = vld [vmem:[%s1371 + $0x10] sm:$0xff]
  %v1375 = vld [vmem:[%s1371 + $0x18] sm:$0xff]
  %s1376 = scalar_lea.vmem %s4, 1
  %v1377 = vld [vmem:[%s1376] sm:$0x1]
  %v1379 = vlaneseq
  %v1380 = vshrl.u32 %v1379, 7
  %v1381 = vsub.s32 0, %v1380
  %v1382 = vrot.slane %v1377, %v1381
  %1384 = vmatprep.subr.mxu0 0.0
  %1385 = vmatpush1.msra.mxu0 %v1372
  %1386 = vmatprep.subr.mxu0 0.0
  %1387 = vmatpush1.msra.mxu0 %v1373
  %1388 = vmatprep.subr.mxu0 0.0
  %1389 = vmatpush1.msra.mxu0 %v1374
  %1390 = vmatprep.subr.mxu0 0.0
  %1391 = vmatpush1.msra.mxu0 %v1375
  %1392 = vmatprep.subr.mxu0 0.0
  %1393 = vmatpush1.msra.mxu0 0.0
  %1394 = vmatprep.subr.mxu0 0.0
  %1395 = vmatpush1.msra.mxu0 0.0
  %1396 = vmatprep.subr.mxu0 0.0
  %1397 = vmatpush1.msra.mxu0 0.0
  %1398 = vmatprep.subr.mxu0 0.0
  %1399 = vmatpush1.msra.mxu0 0.0
  %1400 = vmatprep.subr.mxu0 0.0
  %1401 = vmatpush1.msra.mxu0 0.0
  %1402 = vmatprep.subr.mxu0 0.0
  %1403 = vmatpush1.msra.mxu0 0.0
  %1404 = vmatprep.subr.mxu0 0.0
  %1405 = vmatpush1.msra.mxu0 0.0
  %1406 = vmatprep.subr.mxu0 0.0
  %1407 = vmatpush1.msra.mxu0 0.0
  %1408 = vmatprep.subr.mxu0 0.0
  %1409 = vmatpush1.msra.mxu0 0.0
  %1410 = vmatprep.subr.mxu0 0.0
  %1411 = vmatpush1.msra.mxu0 0.0
  %1412 = vmatprep.subr.mxu0 0.0
  %1413 = vmatpush1.msra.mxu0 0.0
  %1414 = vmatprep.subr.mxu0 0.0
  %1415 = vmatpush1.msra.mxu0 0.0
  %1416 = vmatprep.subr.mxu0 0.0
  %1417 = vmatpush1.msra.mxu0 0.0
  %1418 = vmatprep.subr.mxu0 0.0
  %1419 = vmatpush1.msra.mxu0 0.0
  %1420 = vmatprep.subr.mxu0 0.0
  %1421 = vmatpush1.msra.mxu0 0.0
  %1422 = vmatprep.subr.mxu0 0.0
  %1423 = vmatpush1.msra.mxu0 0.0
  %1424 = vmatprep.subr.mxu0 0.0
  %1425 = vmatpush1.msra.mxu0 0.0
  %1426 = vmatprep.subr.mxu0 0.0
  %1427 = vmatpush1.msra.mxu0 0.0
  %1428 = vmatprep.subr.mxu0 0.0
  %1429 = vmatpush1.msra.mxu0 0.0
  %1430 = vmatprep.subr.mxu0 0.0
  %1431 = vmatpush1.msra.mxu0 0.0
  %1432 = vmatprep.subr.mxu0 0.0
  %1433 = vmatpush1.msra.mxu0 0.0
  %1434 = vmatprep.subr.mxu0 0.0
  %1435 = vmatpush1.msra.mxu0 0.0
  %1436 = vmatprep.subr.mxu0 0.0
  %1437 = vmatpush1.msra.mxu0 0.0
  %1438 = vmatprep.subr.mxu0 0.0
  %1439 = vmatpush1.msra.mxu0 0.0
  %1440 = vmatprep.subr.mxu0 0.0
  %1441 = vmatpush1.msra.mxu0 0.0
  %1442 = vmatprep.subr.mxu0 0.0
  %1443 = vmatpush1.msra.mxu0 0.0
  %1444 = vmatprep.subr.mxu0 0.0
  %1445 = vmatpush1.msra.mxu0 0.0
  %1446 = vmatprep.subr.mxu0 0.0
  %1447 = vmatpush1.msra.mxu0 0.0
  %1448 = vmatprep.mubr.f32.mxu0 0.0
  %1449 = vmatmul.mubr.f32.gmra.mrb[0].mxu0 %v315
  %v1450 = vpop.f32.mrb[0].mxu0
  %v1451 = vadd.f32 %v1382, %v1450
  %v1452 = vpop.f32.mrb[0].mxu0
  %1453 = vmatprep.mubr.f32.mxu0 0.0
  %1454 = vmatmul.mubr.f32.gmra.mrb[0].mxu0 %v318
  %v1455 = vpop.f32.mrb[0].mxu0
  %v1456 = vadd.f32 %v1382, %v1455
  %v1457 = vpop.f32.mrb[0].mxu0
  %1458 = vmatprep.mubr.f32.mxu0 0.0
  %1459 = vmatmul.mubr.f32.gmra.mrb[0].mxu0 %v321
  %v1460 = vpop.f32.mrb[0].mxu0
  %v1461 = vadd.f32 %v1382, %v1460
  %v1462 = vpop.f32.mrb[0].mxu0
  %1463 = vmatprep.mubr.f32.mxu0 0.0
  %1464 = vmatmul.mubr.f32.gmra.mrb[0].mxu0 %v324
  %v1465 = vpop.f32.mrb[0].mxu0
  %v1466 = vadd.f32 %v1382, %v1465
  %v1467 = vpop.f32.mrb[0].mxu0
  %1468 = vmatprep.mubr.f32.mxu0 0.0
  %1469 = vmatmul.mubr.f32.gmra.mrb[0].mxu0 %v327
  %v1470 = vpop.f32.mrb[0].mxu0
  %v1471 = vadd.f32 %v1382, %v1470
  %v1472 = vpop.f32.mrb[0].mxu0
  %1473 = vmatprep.mubr.f32.mxu0 0.0
  %1474 = vmatmul.mubr.f32.gmra.mrb[0].mxu0 %v330
  %v1475 = vpop.f32.mrb[0].mxu0
  %v1476 = vadd.f32 %v1382, %v1475
  %v1477 = vpop.f32.mrb[0].mxu0
  %1478 = vmatprep.mubr.f32.mxu0 0.0
  %1479 = vmatmul.mubr.f32.gmra.mrb[0].mxu0 %v333
  %v1480 = vpop.f32.mrb[0].mxu0
  %v1481 = vadd.f32 %v1382, %v1480
  %v1482 = vpop.f32.mrb[0].mxu0
  %1483 = vmatprep.mubr.f32.mxu0 0.0
  %1484 = vmatmul.mubr.f32.gmra.mrb[0].mxu0 %v336
  %v1485 = vpop.f32.mrb[0].mxu0
  %v1486 = vadd.f32 %v1382, %v1485
  %v1487 = vpop.f32.mrb[0].mxu0
  %1488 = vmatprep.mubr.f32.mxu0 0.0
  %1489 = vmatmul.mubr.f32.gmra.mrb[0].mxu0 %v339
  %v1490 = vpop.f32.mrb[0].mxu0
  %v1491 = vadd.f32 %v1382, %v1490
  %v1492 = vpop.f32.mrb[0].mxu0
  %1493 = vmatprep.mubr.f32.mxu0 0.0
  %1494 = vmatmul.mubr.f32.gmra.mrb[0].mxu0 %v342
  %v1495 = vpop.f32.mrb[0].mxu0
  %v1496 = vadd.f32 %v1382, %v1495
  %v1497 = vpop.f32.mrb[0].mxu0
  %1498 = vmatprep.mubr.f32.mxu0 0.0
  %1499 = vmatmul.mubr.f32.gmra.mrb[0].mxu0 %v345
  %v1500 = vpop.f32.mrb[0].mxu0
  %v1501 = vadd.f32 %v1382, %v1500
  %v1502 = vpop.f32.mrb[0].mxu0
  %1503 = vmatprep.mubr.f32.mxu0 0.0
  %1504 = vmatmul.mubr.f32.gmra.mrb[0].mxu0 %v348
  %v1505 = vpop.f32.mrb[0].mxu0
  %v1506 = vadd.f32 %v1382, %v1505
  %v1507 = vpop.f32.mrb[0].mxu0
  %1508 = vmatprep.mubr.f32.mxu0 0.0
  %1509 = vmatmul.mubr.f32.gmra.mrb[0].mxu0 %v351
  %v1510 = vpop.f32.mrb[0].mxu0
  %v1511 = vadd.f32 %v1382, %v1510
  %v1512 = vpop.f32.mrb[0].mxu0
  %1513 = vmatprep.mubr.f32.mxu0 0.0
  %1514 = vmatmul.mubr.f32.gmra.mrb[0].mxu0 %v354
  %v1515 = vpop.f32.mrb[0].mxu0
  %v1516 = vadd.f32 %v1382, %v1515
  %v1517 = vpop.f32.mrb[0].mxu0
  %1518 = vmatprep.mubr.f32.mxu0 0.0
  %1519 = vmatmul.mubr.f32.gmra.mrb[0].mxu0 %v357
  %v1520 = vpop.f32.mrb[0].mxu0
  %v1521 = vadd.f32 %v1382, %v1520
  %v1522 = vpop.f32.mrb[0].mxu0
  %1523 = vmatprep.mubr.f32.mxu0 0.0
  %1524 = vmatmul.mubr.f32.gmra.mrb[0].mxu0 %v360
  %v1525 = vpop.f32.mrb[0].mxu0
  %v1526 = vadd.f32 %v1382, %v1525
  %v1527 = vpop.f32.mrb[0].mxu0
  %1528 = vdwg.mxu0
  %s1529 = scalar_lea.vmem %s3, 160
  %v1530 = vld [vmem:[%s1529] sm:$0xff]
  %v1531 = vld [vmem:[%s1529 + $0x8] sm:$0xff]
  %v1532 = vld [vmem:[%s1529 + $0x10] sm:$0xff]
  %v1533 = vld [vmem:[%s1529 + $0x18] sm:$0xff]
  %s1534 = scalar_lea.vmem %s4, 5
  %v1535 = vld [vmem:[%s1534] sm:$0x1]
  %v1537 = vlaneseq
  %v1538 = vshrl.u32 %v1537, 7
  %v1539 = vsub.s32 0, %v1538
  %v1540 = vrot.slane %v1535, %v1539
  %1542 = vmatprep.subr.mxu0 0.0
  %1543 = vmatpush1.msra.mxu0 %v1530
  %1544 = vmatprep.subr.mxu0 0.0
  %1545 = vmatpush1.msra.mxu0 %v1531
  %1546 = vmatprep.subr.mxu0 0.0
  %1547 = vmatpush1.msra.mxu0 %v1532
  %1548 = vmatprep.subr.mxu0 0.0
  %1549 = vmatpush1.msra.mxu0 %v1533
  %1550 = vmatprep.subr.mxu0 0.0
  %1551 = vmatpush1.msra.mxu0 0.0
  %1552 = vmatprep.subr.mxu0 0.0
  %1553 = vmatpush1.msra.mxu0 0.0
  %1554 = vmatprep.subr.mxu0 0.0
  %1555 = vmatpush1.msra.mxu0 0.0
  %1556 = vmatprep.subr.mxu0 0.0
  %1557 = vmatpush1.msra.mxu0 0.0
  %1558 = vmatprep.subr.mxu0 0.0
  %1559 = vmatpush1.msra.mxu0 0.0
  %1560 = vmatprep.subr.mxu0 0.0
  %1561 = vmatpush1.msra.mxu0 0.0
  %1562 = vmatprep.subr.mxu0 0.0
  %1563 = vmatpush1.msra.mxu0 0.0
  %1564 = vmatprep.subr.mxu0 0.0
  %1565 = vmatpush1.msra.mxu0 0.0
  %1566 = vmatprep.subr.mxu0 0.0
  %1567 = vmatpush1.msra.mxu0 0.0
  %1568 = vmatprep.subr.mxu0 0.0
  %1569 = vmatpush1.msra.mxu0 0.0
  %1570 = vmatprep.subr.mxu0 0.0
  %1571 = vmatpush1.msra.mxu0 0.0
  %1572 = vmatprep.subr.mxu0 0.0
  %1573 = vmatpush1.msra.mxu0 0.0
  %1574 = vmatprep.subr.mxu0 0.0
  %1575 = vmatpush1.msra.mxu0 0.0
  %1576 = vmatprep.subr.mxu0 0.0
  %1577 = vmatpush1.msra.mxu0 0.0
  %1578 = vmatprep.subr.mxu0 0.0
  %1579 = vmatpush1.msra.mxu0 0.0
  %1580 = vmatprep.subr.mxu0 0.0
  %1581 = vmatpush1.msra.mxu0 0.0
  %1582 = vmatprep.subr.mxu0 0.0
  %1583 = vmatpush1.msra.mxu0 0.0
  %1584 = vmatprep.subr.mxu0 0.0
  %1585 = vmatpush1.msra.mxu0 0.0
  %1586 = vmatprep.subr.mxu0 0.0
  %1587 = vmatpush1.msra.mxu0 0.0
  %1588 = vmatprep.subr.mxu0 0.0
  %1589 = vmatpush1.msra.mxu0 0.0
  %1590 = vmatprep.subr.mxu0 0.0
  %1591 = vmatpush1.msra.mxu0 0.0
  %1592 = vmatprep.subr.mxu0 0.0
  %1593 = vmatpush1.msra.mxu0 0.0
  %1594 = vmatprep.subr.mxu0 0.0
  %1595 = vmatpush1.msra.mxu0 0.0
  %1596 = vmatprep.subr.mxu0 0.0
  %1597 = vmatpush1.msra.mxu0 0.0
  %1598 = vmatprep.subr.mxu0 0.0
  %1599 = vmatpush1.msra.mxu0 0.0
  %1600 = vmatprep.subr.mxu0 0.0
  %1601 = vmatpush1.msra.mxu0 0.0
  %1602 = vmatprep.subr.mxu0 0.0
  %1603 = vmatpush1.msra.mxu0 0.0
  %1604 = vmatprep.subr.mxu0 0.0
  %1605 = vmatpush1.msra.mxu0 0.0
  %1606 = vmatprep.mubr.f32.mxu0 0.0
  %1607 = vmatmul.mubr.f32.gmra.mrb[0].mxu0 %v315
  %v1608 = vpop.f32.mrb[0].mxu0
  %v1609 = vadd.f32 %v1540, %v1608
  %v1610 = vpop.f32.mrb[0].mxu0
  %1611 = vmatprep.mubr.f32.mxu0 0.0
  %1612 = vmatmul.mubr.f32.gmra.mrb[0].mxu0 %v318
  %v1613 = vpop.f32.mrb[0].mxu0
  %v1614 = vadd.f32 %v1540, %v1613
  %v1615 = vpop.f32.mrb[0].mxu0
  %1616 = vmatprep.mubr.f32.mxu0 0.0
  %1617 = vmatmul.mubr.f32.gmra.mrb[0].mxu0 %v321
  %v1618 = vpop.f32.mrb[0].mxu0
  %v1619 = vadd.f32 %v1540, %v1618
  %v1620 = vpop.f32.mrb[0].mxu0
  %1621 = vmatprep.mubr.f32.mxu0 0.0
  %1622 = vmatmul.mubr.f32.gmra.mrb[0].mxu0 %v324
  %v1623 = vpop.f32.mrb[0].mxu0
  %v1624 = vadd.f32 %v1540, %v1623
  %v1625 = vpop.f32.mrb[0].mxu0
  %1626 = vmatprep.mubr.f32.mxu0 0.0
  %1627 = vmatmul.mubr.f32.gmra.mrb[0].mxu0 %v327
  %v1628 = vpop.f32.mrb[0].mxu0
  %v1629 = vadd.f32 %v1540, %v1628
  %v1630 = vpop.f32.mrb[0].mxu0
  %1631 = vmatprep.mubr.f32.mxu0 0.0
  %1632 = vmatmul.mubr.f32.gmra.mrb[0].mxu0 %v330
  %v1633 = vpop.f32.mrb[0].mxu0
  %v1634 = vadd.f32 %v1540, %v1633
  %v1635 = vpop.f32.mrb[0].mxu0
  %1636 = vmatprep.mubr.f32.mxu0 0.0
  %1637 = vmatmul.mubr.f32.gmra.mrb[0].mxu0 %v333
  %v1638 = vpop.f32.mrb[0].mxu0
  %v1639 = vadd.f32 %v1540, %v1638
  %v1640 = vpop.f32.mrb[0].mxu0
  %1641 = vmatprep.mubr.f32.mxu0 0.0
  %1642 = vmatmul.mubr.f32.gmra.mrb[0].mxu0 %v336
  %v1643 = vpop.f32.mrb[0].mxu0
  %v1644 = vadd.f32 %v1540, %v1643
  %v1645 = vpop.f32.mrb[0].mxu0
  %1646 = vmatprep.mubr.f32.mxu0 0.0
  %1647 = vmatmul.mubr.f32.gmra.mrb[0].mxu0 %v339
  %v1648 = vpop.f32.mrb[0].mxu0
  %v1649 = vadd.f32 %v1540, %v1648
  %v1650 = vpop.f32.mrb[0].mxu0
  %1651 = vmatprep.mubr.f32.mxu0 0.0
  %1652 = vmatmul.mubr.f32.gmra.mrb[0].mxu0 %v342
  %v1653 = vpop.f32.mrb[0].mxu0
  %v1654 = vadd.f32 %v1540, %v1653
  %v1655 = vpop.f32.mrb[0].mxu0
  %1656 = vmatprep.mubr.f32.mxu0 0.0
  %1657 = vmatmul.mubr.f32.gmra.mrb[0].mxu0 %v345
  %v1658 = vpop.f32.mrb[0].mxu0
  %v1659 = vadd.f32 %v1540, %v1658
  %v1660 = vpop.f32.mrb[0].mxu0
  %1661 = vmatprep.mubr.f32.mxu0 0.0
  %1662 = vmatmul.mubr.f32.gmra.mrb[0].mxu0 %v348
  %v1663 = vpop.f32.mrb[0].mxu0
  %v1664 = vadd.f32 %v1540, %v1663
  %v1665 = vpop.f32.mrb[0].mxu0
  %1666 = vmatprep.mubr.f32.mxu0 0.0
  %1667 = vmatmul.mubr.f32.gmra.mrb[0].mxu0 %v351
  %v1668 = vpop.f32.mrb[0].mxu0
  %v1669 = vadd.f32 %v1540, %v1668
  %v1670 = vpop.f32.mrb[0].mxu0
  %1671 = vmatprep.mubr.f32.mxu0 0.0
  %1672 = vmatmul.mubr.f32.gmra.mrb[0].mxu0 %v354
  %v1673 = vpop.f32.mrb[0].mxu0
  %v1674 = vadd.f32 %v1540, %v1673
  %v1675 = vpop.f32.mrb[0].mxu0
  %1676 = vmatprep.mubr.f32.mxu0 0.0
  %1677 = vmatmul.mubr.f32.gmra.mrb[0].mxu0 %v357
  %v1678 = vpop.f32.mrb[0].mxu0
  %v1679 = vadd.f32 %v1540, %v1678
  %v1680 = vpop.f32.mrb[0].mxu0
  %1681 = vmatprep.mubr.f32.mxu0 0.0
  %1682 = vmatmul.mubr.f32.gmra.mrb[0].mxu0 %v360
  %v1683 = vpop.f32.mrb[0].mxu0
  %v1684 = vadd.f32 %v1540, %v1683
  %v1685 = vpop.f32.mrb[0].mxu0
  %1686 = vdwg.mxu0
  %s1687 = scalar_lea.vmem %s3, 288
  %v1688 = vld [vmem:[%s1687] sm:$0xff]
  %v1689 = vld [vmem:[%s1687 + $0x8] sm:$0xff]
  %v1690 = vld [vmem:[%s1687 + $0x10] sm:$0xff]
  %v1691 = vld [vmem:[%s1687 + $0x18] sm:$0xff]
  %s1692 = scalar_lea.vmem %s4, 9
  %v1693 = vld [vmem:[%s1692] sm:$0x1]
  %v1695 = vlaneseq
  %v1696 = vshrl.u32 %v1695, 7
  %v1697 = vsub.s32 0, %v1696
  %v1698 = vrot.slane %v1693, %v1697
  %1700 = vmatprep.subr.mxu0 0.0
  %1701 = vmatpush1.msra.mxu0 %v1688
  %1702 = vmatprep.subr.mxu0 0.0
  %1703 = vmatpush1.msra.mxu0 %v1689
  %1704 = vmatprep.subr.mxu0 0.0
  %1705 = vmatpush1.msra.mxu0 %v1690
  %1706 = vmatprep.subr.mxu0 0.0
  %1707 = vmatpush1.msra.mxu0 %v1691
  %1708 = vmatprep.subr.mxu0 0.0
  %1709 = vmatpush1.msra.mxu0 0.0
  %1710 = vmatprep.subr.mxu0 0.0
  %1711 = vmatpush1.msra.mxu0 0.0
  %1712 = vmatprep.subr.mxu0 0.0
  %1713 = vmatpush1.msra.mxu0 0.0
  %1714 = vmatprep.subr.mxu0 0.0
  %1715 = vmatpush1.msra.mxu0 0.0
  %1716 = vmatprep.subr.mxu0 0.0
  %1717 = vmatpush1.msra.mxu0 0.0
  %1718 = vmatprep.subr.mxu0 0.0
  %1719 = vmatpush1.msra.mxu0 0.0
  %1720 = vmatprep.subr.mxu0 0.0
  %1721 = vmatpush1.msra.mxu0 0.0
  %1722 = vmatprep.subr.mxu0 0.0
  %1723 = vmatpush1.msra.mxu0 0.0
  %1724 = vmatprep.subr.mxu0 0.0
  %1725 = vmatpush1.msra.mxu0 0.0
  %1726 = vmatprep.subr.mxu0 0.0
  %1727 = vmatpush1.msra.mxu0 0.0
  %1728 = vmatprep.subr.mxu0 0.0
  %1729 = vmatpush1.msra.mxu0 0.0
  %1730 = vmatprep.subr.mxu0 0.0
  %1731 = vmatpush1.msra.mxu0 0.0
  %1732 = vmatprep.subr.mxu0 0.0
  %1733 = vmatpush1.msra.mxu0 0.0
  %1734 = vmatprep.subr.mxu0 0.0
  %1735 = vmatpush1.msra.mxu0 0.0
  %1736 = vmatprep.subr.mxu0 0.0
  %1737 = vmatpush1.msra.mxu0 0.0
  %1738 = vmatprep.subr.mxu0 0.0
  %1739 = vmatpush1.msra.mxu0 0.0
  %1740 = vmatprep.subr.mxu0 0.0
  %1741 = vmatpush1.msra.mxu0 0.0
  %1742 = vmatprep.subr.mxu0 0.0
  %1743 = vmatpush1.msra.mxu0 0.0
  %1744 = vmatprep.subr.mxu0 0.0
  %1745 = vmatpush1.msra.mxu0 0.0
  %1746 = vmatprep.subr.mxu0 0.0
  %1747 = vmatpush1.msra.mxu0 0.0
  %1748 = vmatprep.subr.mxu0 0.0
  %1749 = vmatpush1.msra.mxu0 0.0
  %1750 = vmatprep.subr.mxu0 0.0
  %1751 = vmatpush1.msra.mxu0 0.0
  %1752 = vmatprep.subr.mxu0 0.0
  %1753 = vmatpush1.msra.mxu0 0.0
  %1754 = vmatprep.subr.mxu0 0.0
  %1755 = vmatpush1.msra.mxu0 0.0
  %1756 = vmatprep.subr.mxu0 0.0
  %1757 = vmatpush1.msra.mxu0 0.0
  %1758 = vmatprep.subr.mxu0 0.0
  %1759 = vmatpush1.msra.mxu0 0.0
  %1760 = vmatprep.subr.mxu0 0.0
  %1761 = vmatpush1.msra.mxu0 0.0
  %1762 = vmatprep.subr.mxu0 0.0
  %1763 = vmatpush1.msra.mxu0 0.0
  %1764 = vmatprep.mubr.f32.mxu0 0.0
  %1765 = vmatmul.mubr.f32.gmra.mrb[0].mxu0 %v315
  %v1766 = vpop.f32.mrb[0].mxu0
  %v1767 = vadd.f32 %v1698, %v1766
  %v1768 = vpop.f32.mrb[0].mxu0
  %1769 = vmatprep.mubr.f32.mxu0 0.0
  %1770 = vmatmul.mubr.f32.gmra.mrb[0].mxu0 %v318
  %v1771 = vpop.f32.mrb[0].mxu0
  %v1772 = vadd.f32 %v1698, %v1771
  %v1773 = vpop.f32.mrb[0].mxu0
  %1774 = vmatprep.mubr.f32.mxu0 0.0
  %1775 = vmatmul.mubr.f32.gmra.mrb[0].mxu0 %v321
  %v1776 = vpop.f32.mrb[0].mxu0
  %v1777 = vadd.f32 %v1698, %v1776
  %v1778 = vpop.f32.mrb[0].mxu0
  %1779 = vmatprep.mubr.f32.mxu0 0.0
  %1780 = vmatmul.mubr.f32.gmra.mrb[0].mxu0 %v324
  %v1781 = vpop.f32.mrb[0].mxu0
  %v1782 = vadd.f32 %v1698, %v1781
  %v1783 = vpop.f32.mrb[0].mxu0
  %1784 = vmatprep.mubr.f32.mxu0 0.0
  %1785 = vmatmul.mubr.f32.gmra.mrb[0].mxu0 %v327
  %v1786 = vpop.f32.mrb[0].mxu0
  %v1787 = vadd.f32 %v1698, %v1786
  %v1788 = vpop.f32.mrb[0].mxu0
  %1789 = vmatprep.mubr.f32.mxu0 0.0
  %1790 = vmatmul.mubr.f32.gmra.mrb[0].mxu0 %v330
  %v1791 = vpop.f32.mrb[0].mxu0
  %v1792 = vadd.f32 %v1698, %v1791
  %v1793 = vpop.f32.mrb[0].mxu0
  %1794 = vmatprep.mubr.f32.mxu0 0.0
  %1795 = vmatmul.mubr.f32.gmra.mrb[0].mxu0 %v333
  %v1796 = vpop.f32.mrb[0].mxu0
  %v1797 = vadd.f32 %v1698, %v1796
  %v1798 = vpop.f32.mrb[0].mxu0
  %1799 = vmatprep.mubr.f32.mxu0 0.0
  %1800 = vmatmul.mubr.f32.gmra.mrb[0].mxu0 %v336
  %v1801 = vpop.f32.mrb[0].mxu0
  %v1802 = vadd.f32 %v1698, %v1801
  %v1803 = vpop.f32.mrb[0].mxu0
  %1804 = vmatprep.mubr.f32.mxu0 0.0
  %1805 = vmatmul.mubr.f32.gmra.mrb[0].mxu0 %v339
  %v1806 = vpop.f32.mrb[0].mxu0
  %v1807 = vadd.f32 %v1698, %v1806
  %v1808 = vpop.f32.mrb[0].mxu0
  %1809 = vmatprep.mubr.f32.mxu0 0.0
  %1810 = vmatmul.mubr.f32.gmra.mrb[0].mxu0 %v342
  %v1811 = vpop.f32.mrb[0].mxu0
  %v1812 = vadd.f32 %v1698, %v1811
  %v1813 = vpop.f32.mrb[0].mxu0
  %1814 = vmatprep.mubr.f32.mxu0 0.0
  %1815 = vmatmul.mubr.f32.gmra.mrb[0].mxu0 %v345
  %v1816 = vpop.f32.mrb[0].mxu0
  %v1817 = vadd.f32 %v1698, %v1816
  %v1818 = vpop.f32.mrb[0].mxu0
  %1819 = vmatprep.mubr.f32.mxu0 0.0
  %1820 = vmatmul.mubr.f32.gmra.mrb[0].mxu0 %v348
  %v1821 = vpop.f32.mrb[0].mxu0
  %v1822 = vadd.f32 %v1698, %v1821
  %v1823 = vpop.f32.mrb[0].mxu0
  %1824 = vmatprep.mubr.f32.mxu0 0.0
  %1825 = vmatmul.mubr.f32.gmra.mrb[0].mxu0 %v351
  %v1826 = vpop.f32.mrb[0].mxu0
  %v1827 = vadd.f32 %v1698, %v1826
  %v1828 = vpop.f32.mrb[0].mxu0
  %1829 = vmatprep.mubr.f32.mxu0 0.0
  %1830 = vmatmul.mubr.f32.gmra.mrb[0].mxu0 %v354
  %v1831 = vpop.f32.mrb[0].mxu0
  %v1832 = vadd.f32 %v1698, %v1831
  %v1833 = vpop.f32.mrb[0].mxu0
  %1834 = vmatprep.mubr.f32.mxu0 0.0
  %1835 = vmatmul.mubr.f32.gmra.mrb[0].mxu0 %v357
  %v1836 = vpop.f32.mrb[0].mxu0
  %v1837 = vadd.f32 %v1698, %v1836
  %v1838 = vpop.f32.mrb[0].mxu0
  %1839 = vmatprep.mubr.f32.mxu0 0.0
  %1840 = vmatmul.mubr.f32.gmra.mrb[0].mxu0 %v360
  %v1841 = vpop.f32.mrb[0].mxu0
  %v1842 = vadd.f32 %v1698, %v1841
  %v1843 = vpop.f32.mrb[0].mxu0
  %1844 = vdwg.mxu0
  %s1845 = scalar_lea.vmem %s1, 128
  %v1846 = vld [vmem:[%s1845] sm:$0xff]
  %v1847 = vld [vmem:[%s1845 + $0x8] sm:$0xff]
  %v1848 = vld [vmem:[%s1845 + $0x10] sm:$0xff]
  %v1849 = vld [vmem:[%s1845 + $0x18] sm:$0xff]
  %v1850 = vld [vmem:[%s1845 + $0x20] sm:$0xff]
  %v1851 = vld [vmem:[%s1845 + $0x28] sm:$0xff]
  %v1852 = vld [vmem:[%s1845 + $0x30] sm:$0xff]
  %v1853 = vld [vmem:[%s1845 + $0x38] sm:$0xff]
  %v1854 = vld [vmem:[%s1845 + $0x40] sm:$0xff]
  %v1855 = vld [vmem:[%s1845 + $0x48] sm:$0xff]
  %v1856 = vld [vmem:[%s1845 + $0x50] sm:$0xff]
  %v1857 = vld [vmem:[%s1845 + $0x58] sm:$0xff]
  %v1858 = vld [vmem:[%s1845 + $0x60] sm:$0xff]
  %v1859 = vld [vmem:[%s1845 + $0x68] sm:$0xff]
  %v1860 = vld [vmem:[%s1845 + $0x70] sm:$0xff]
  %v1861 = vld [vmem:[%s1845 + $0x78] sm:$0xff]
  %v1863 = vsel %vm839, %v1451, 0
  %v1866 = vsel %vm839, %v1456, 0
  %v1869 = vsel %vm839, %v1461, 0
  %v1872 = vsel %vm839, %v1466, 0
  %v1875 = vsel %vm839, %v1471, 0
  %v1878 = vsel %vm839, %v1476, 0
  %v1881 = vsel %vm839, %v1481, 0
  %v1884 = vsel %vm839, %v1486, 0
  %v1887 = vsel %vm839, %v1491, 0
  %v1890 = vsel %vm839, %v1496, 0
  %v1893 = vsel %vm839, %v1501, 0
  %v1896 = vsel %vm839, %v1506, 0
  %v1899 = vsel %vm839, %v1511, 0
  %v1902 = vsel %vm839, %v1516, 0
  %v1905 = vsel %vm839, %v1521, 0
  %v1908 = vsel %vm839, %v1526, 0
  %v1911 = vsel %vm839, %v1609, 0
  %v1914 = vsel %vm839, %v1614, 0
  %v1917 = vsel %vm839, %v1619, 0
  %v1920 = vsel %vm839, %v1624, 0
  %v1923 = vsel %vm839, %v1629, 0
  %v1926 = vsel %vm839, %v1634, 0
  %v1929 = vsel %vm839, %v1639, 0
  %v1932 = vsel %vm839, %v1644, 0
  %v1935 = vsel %vm839, %v1649, 0
  %v1938 = vsel %vm839, %v1654, 0
  %v1941 = vsel %vm839, %v1659, 0
  %v1944 = vsel %vm839, %v1664, 0
  %v1947 = vsel %vm839, %v1669, 0
  %v1950 = vsel %vm839, %v1674, 0
  %v1953 = vsel %vm839, %v1679, 0
  %v1956 = vsel %vm839, %v1684, 0
  %1958 = vmatprep.subr.mxu0 0.0
  %1959 = vmatpush1.xpose.msra.mxu0 %v1911
  %1960 = vmatprep.subr.mxu0 0.0
  %1961 = vmatpush1.xpose.msra.mxu0 %v1914
  %1962 = vmatprep.subr.mxu0 0.0
  %1963 = vmatpush1.xpose.msra.mxu0 %v1917
  %1964 = vmatprep.subr.mxu0 0.0
  %1965 = vmatpush1.xpose.msra.mxu0 %v1920
  %1966 = vmatprep.subr.mxu0 0.0
  %1967 = vmatpush1.xpose.msra.mxu0 %v1923
  %1968 = vmatprep.subr.mxu0 0.0
  %1969 = vmatpush1.xpose.msra.mxu0 %v1926
  %1970 = vmatprep.subr.mxu0 0.0
  %1971 = vmatpush1.xpose.msra.mxu0 %v1929
  %1972 = vmatprep.subr.mxu0 0.0
  %1973 = vmatpush1.xpose.msra.mxu0 %v1932
  %1974 = vmatprep.subr.mxu0 0.0
  %1975 = vmatpush1.xpose.msra.mxu0 %v1935
  %1976 = vmatprep.subr.mxu0 0.0
  %1977 = vmatpush1.xpose.msra.mxu0 %v1938
  %1978 = vmatprep.subr.mxu0 0.0
  %1979 = vmatpush1.xpose.msra.mxu0 %v1941
  %1980 = vmatprep.subr.mxu0 0.0
  %1981 = vmatpush1.xpose.msra.mxu0 %v1944
  %1982 = vmatprep.subr.mxu0 0.0
  %1983 = vmatpush1.xpose.msra.mxu0 %v1947
  %1984 = vmatprep.subr.mxu0 0.0
  %1985 = vmatpush1.xpose.msra.mxu0 %v1950
  %1986 = vmatprep.subr.mxu0 0.0
  %1987 = vmatpush1.xpose.msra.mxu0 %v1953
  %1988 = vmatprep.subr.mxu0 0.0
  %1989 = vmatpush1.xpose.msra.mxu0 %v1956
  %1990 = vmatprep.subr.mxu0 0.0
  %1991 = vmatpush1.xpose.msra.mxu0 0.0
  %1992 = vmatprep.subr.mxu0 0.0
  %1993 = vmatpush1.xpose.msra.mxu0 0.0
  %1994 = vmatprep.subr.mxu0 0.0
  %1995 = vmatpush1.xpose.msra.mxu0 0.0
  %1996 = vmatprep.subr.mxu0 0.0
  %1997 = vmatpush1.xpose.msra.mxu0 0.0
  %1998 = vmatprep.subr.mxu0 0.0
  %1999 = vmatpush1.xpose.msra.mxu0 0.0
  %2000 = vmatprep.subr.mxu0 0.0
  %2001 = vmatpush1.xpose.msra.mxu0 0.0
  %2002 = vmatprep.subr.mxu0 0.0
  %2003 = vmatpush1.xpose.msra.mxu0 0.0
  %2004 = vmatprep.subr.mxu0 0.0
  %2005 = vmatpush1.xpose.msra.mxu0 0.0
  %2006 = vmatprep.subr.mxu0 0.0
  %2007 = vmatpush1.xpose.msra.mxu0 0.0
  %2008 = vmatprep.subr.mxu0 0.0
  %2009 = vmatpush1.xpose.msra.mxu0 0.0
  %2010 = vmatprep.subr.mxu0 0.0
  %2011 = vmatpush1.xpose.msra.mxu0 0.0
  %2012 = vmatprep.subr.mxu0 0.0
  %2013 = vmatpush1.xpose.msra.mxu0 0.0
  %2014 = vmatprep.subr.mxu0 0.0
  %2015 = vmatpush1.xpose.msra.mxu0 0.0
  %2016 = vmatprep.subr.mxu0 0.0
  %2017 = vmatpush1.xpose.msra.mxu0 0.0
  %2018 = vmatprep.subr.mxu0 0.0
  %2019 = vmatpush1.xpose.msra.mxu0 0.0
  %2020 = vmatprep.subr.mxu0 0.0
  %2021 = vmatpush1.xpose.msra.mxu0 0.0
  %2022 = vmatprep.mubr.f32.mxu0 0.0
  %2023 = vmatmul.mubr.f32.gmra.mrb[0].mxu0 %v1863
  %v2024 = vpop.f32.mrb[0].mxu0
  %v2025 = vadd.f32 %v1846, %v2024
  %v2026 = vpop.f32.mrb[0].mxu0
  %2027 = vmatprep.mubr.f32.mxu0 0.0
  %2028 = vmatmul.mubr.f32.gmra.mrb[0].mxu0 %v1866
  %v2029 = vpop.f32.mrb[0].mxu0
  %v2030 = vadd.f32 %v1847, %v2029
  %v2031 = vpop.f32.mrb[0].mxu0
  %2032 = vmatprep.mubr.f32.mxu0 0.0
  %2033 = vmatmul.mubr.f32.gmra.mrb[0].mxu0 %v1869
  %v2034 = vpop.f32.mrb[0].mxu0
  %v2035 = vadd.f32 %v1848, %v2034
  %v2036 = vpop.f32.mrb[0].mxu0
  %2037 = vmatprep.mubr.f32.mxu0 0.0
  %2038 = vmatmul.mubr.f32.gmra.mrb[0].mxu0 %v1872
  %v2039 = vpop.f32.mrb[0].mxu0
  %v2040 = vadd.f32 %v1849, %v2039
  %v2041 = vpop.f32.mrb[0].mxu0
  %2042 = vmatprep.mubr.f32.mxu0 0.0
  %2043 = vmatmul.mubr.f32.gmra.mrb[0].mxu0 %v1875
  %v2044 = vpop.f32.mrb[0].mxu0
  %v2045 = vadd.f32 %v1850, %v2044
  %v2046 = vpop.f32.mrb[0].mxu0
  %2047 = vmatprep.mubr.f32.mxu0 0.0
  %2048 = vmatmul.mubr.f32.gmra.mrb[0].mxu0 %v1878
  %v2049 = vpop.f32.mrb[0].mxu0
  %v2050 = vadd.f32 %v1851, %v2049
  %v2051 = vpop.f32.mrb[0].mxu0
  %2052 = vmatprep.mubr.f32.mxu0 0.0
  %2053 = vmatmul.mubr.f32.gmra.mrb[0].mxu0 %v1881
  %v2054 = vpop.f32.mrb[0].mxu0
  %v2055 = vadd.f32 %v1852, %v2054
  %v2056 = vpop.f32.mrb[0].mxu0
  %2057 = vmatprep.mubr.f32.mxu0 0.0
  %2058 = vmatmul.mubr.f32.gmra.mrb[0].mxu0 %v1884
  %v2059 = vpop.f32.mrb[0].mxu0
  %v2060 = vadd.f32 %v1853, %v2059
  %v2061 = vpop.f32.mrb[0].mxu0
  %2062 = vmatprep.mubr.f32.mxu0 0.0
  %2063 = vmatmul.mubr.f32.gmra.mrb[0].mxu0 %v1887
  %v2064 = vpop.f32.mrb[0].mxu0
  %v2065 = vadd.f32 %v1854, %v2064
  %v2066 = vpop.f32.mrb[0].mxu0
  %2067 = vmatprep.mubr.f32.mxu0 0.0
  %2068 = vmatmul.mubr.f32.gmra.mrb[0].mxu0 %v1890
  %v2069 = vpop.f32.mrb[0].mxu0
  %v2070 = vadd.f32 %v1855, %v2069
  %v2071 = vpop.f32.mrb[0].mxu0
  %2072 = vmatprep.mubr.f32.mxu0 0.0
  %2073 = vmatmul.mubr.f32.gmra.mrb[0].mxu0 %v1893
  %v2074 = vpop.f32.mrb[0].mxu0
  %v2075 = vadd.f32 %v1856, %v2074
  %v2076 = vpop.f32.mrb[0].mxu0
  %2077 = vmatprep.mubr.f32.mxu0 0.0
  %2078 = vmatmul.mubr.f32.gmra.mrb[0].mxu0 %v1896
  %v2079 = vpop.f32.mrb[0].mxu0
  %v2080 = vadd.f32 %v1857, %v2079
  %v2081 = vpop.f32.mrb[0].mxu0
  %2082 = vmatprep.mubr.f32.mxu0 0.0
  %2083 = vmatmul.mubr.f32.gmra.mrb[0].mxu0 %v1899
  %v2084 = vpop.f32.mrb[0].mxu0
  %v2085 = vadd.f32 %v1858, %v2084
  %v2086 = vpop.f32.mrb[0].mxu0
  %2087 = vmatprep.mubr.f32.mxu0 0.0
  %2088 = vmatmul.mubr.f32.gmra.mrb[0].mxu0 %v1902
  %v2089 = vpop.f32.mrb[0].mxu0
  %v2090 = vadd.f32 %v1859, %v2089
  %v2091 = vpop.f32.mrb[0].mxu0
  %2092 = vmatprep.mubr.f32.mxu0 0.0
  %2093 = vmatmul.mubr.f32.gmra.mrb[0].mxu0 %v1905
  %v2094 = vpop.f32.mrb[0].mxu0
  %v2095 = vadd.f32 %v1860, %v2094
  %v2096 = vpop.f32.mrb[0].mxu0
  %2097 = vmatprep.mubr.f32.mxu0 0.0
  %2098 = vmatmul.mubr.f32.gmra.mrb[0].mxu0 %v1908
  %v2099 = vpop.f32.mrb[0].mxu0
  %v2100 = vadd.f32 %v1861, %v2099
  %v2101 = vpop.f32.mrb[0].mxu0
  %2102 = vdwg.mxu0
  %2103 = vmax.xlane.f32.xlu0 %v2025
  %v2104 = vpop.xlane.xlu0 %2103
  %2105 = vmax.xlane.f32.xlu0 %v2030
  %v2106 = vpop.xlane.xlu0 %2105
  %2107 = vmax.xlane.f32.xlu0 %v2035
  %v2108 = vpop.xlane.xlu0 %2107
  %2109 = vmax.xlane.f32.xlu0 %v2040
  %v2110 = vpop.xlane.xlu0 %2109
  %2111 = vmax.xlane.f32.xlu0 %v2045
  %v2112 = vpop.xlane.xlu0 %2111
  %2113 = vmax.xlane.f32.xlu0 %v2050
  %v2114 = vpop.xlane.xlu0 %2113
  %2115 = vmax.xlane.f32.xlu0 %v2055
  %v2116 = vpop.xlane.xlu0 %2115
  %2117 = vmax.xlane.f32.xlu0 %v2060
  %v2118 = vpop.xlane.xlu0 %2117
  %2119 = vmax.xlane.f32.xlu0 %v2065
  %v2120 = vpop.xlane.xlu0 %2119
  %2121 = vmax.xlane.f32.xlu0 %v2070
  %v2122 = vpop.xlane.xlu0 %2121
  %2123 = vmax.xlane.f32.xlu0 %v2075
  %v2124 = vpop.xlane.xlu0 %2123
  %2125 = vmax.xlane.f32.xlu0 %v2080
  %v2126 = vpop.xlane.xlu0 %2125
  %2127 = vmax.xlane.f32.xlu0 %v2085
  %v2128 = vpop.xlane.xlu0 %2127
  %2129 = vmax.xlane.f32.xlu0 %v2090
  %v2130 = vpop.xlane.xlu0 %2129
  %2131 = vmax.xlane.f32.xlu0 %v2095
  %v2132 = vpop.xlane.xlu0 %2131
  %2133 = vmax.xlane.f32.xlu0 %v2100
  %v2134 = vpop.xlane.xlu0 %2133
  %v2135 = vsub.f32 %v2025, %v2104
  %v2136 = vsub.f32 %v2030, %v2106
  %v2137 = vsub.f32 %v2035, %v2108
  %v2138 = vsub.f32 %v2040, %v2110
  %v2139 = vsub.f32 %v2045, %v2112
  %v2140 = vsub.f32 %v2050, %v2114
  %v2141 = vsub.f32 %v2055, %v2116
  %v2142 = vsub.f32 %v2060, %v2118
  %v2143 = vsub.f32 %v2065, %v2120
  %v2144 = vsub.f32 %v2070, %v2122
  %v2145 = vsub.f32 %v2075, %v2124
  %v2146 = vsub.f32 %v2080, %v2126
  %v2147 = vsub.f32 %v2085, %v2128
  %v2148 = vsub.f32 %v2090, %v2130
  %v2149 = vsub.f32 %v2095, %v2132
  %v2150 = vsub.f32 %v2100, %v2134
  %v2151 = vmul.f32 %v2135, 1.442695
  %v2152 = vpow.pop %v2151
  %v2153 = vmul.f32 %v2136, 1.442695
  %v2154 = vpow.pop %v2153
  %v2155 = vmul.f32 %v2137, 1.442695
  %v2156 = vpow.pop %v2155
  %v2157 = vmul.f32 %v2138, 1.442695
  %v2158 = vpow.pop %v2157
  %v2159 = vmul.f32 %v2139, 1.442695
  %v2160 = vpow.pop %v2159
  %v2161 = vmul.f32 %v2140, 1.442695
  %v2162 = vpow.pop %v2161
  %v2163 = vmul.f32 %v2141, 1.442695
  %v2164 = vpow.pop %v2163
  %v2165 = vmul.f32 %v2142, 1.442695
  %v2166 = vpow.pop %v2165
  %v2167 = vmul.f32 %v2143, 1.442695
  %v2168 = vpow.pop %v2167
  %v2169 = vmul.f32 %v2144, 1.442695
  %v2170 = vpow.pop %v2169
  %v2171 = vmul.f32 %v2145, 1.442695
  %v2172 = vpow.pop %v2171
  %v2173 = vmul.f32 %v2146, 1.442695
  %v2174 = vpow.pop %v2173
  %v2175 = vmul.f32 %v2147, 1.442695
  %v2176 = vpow.pop %v2175
  %v2177 = vmul.f32 %v2148, 1.442695
  %v2178 = vpow.pop %v2177
  %v2179 = vmul.f32 %v2149, 1.442695
  %v2180 = vpow.pop %v2179
  %v2181 = vmul.f32 %v2150, 1.442695
  %v2182 = vpow.pop %v2181
  %2183 = vadd.xlane.f32.xlu0 %v2152
  %v2184 = vpop.xlane.xlu0 %2183
  %2185 = vadd.xlane.f32.xlu0 %v2154
  %v2186 = vpop.xlane.xlu0 %2185
  %2187 = vadd.xlane.f32.xlu0 %v2156
  %v2188 = vpop.xlane.xlu0 %2187
  %2189 = vadd.xlane.f32.xlu0 %v2158
  %v2190 = vpop.xlane.xlu0 %2189
  %2191 = vadd.xlane.f32.xlu0 %v2160
  %v2192 = vpop.xlane.xlu0 %2191
  %2193 = vadd.xlane.f32.xlu0 %v2162
  %v2194 = vpop.xlane.xlu0 %2193
  %2195 = vadd.xlane.f32.xlu0 %v2164
  %v2196 = vpop.xlane.xlu0 %2195
  %2197 = vadd.xlane.f32.xlu0 %v2166
  %v2198 = vpop.xlane.xlu0 %2197
  %2199 = vadd.xlane.f32.xlu0 %v2168
  %v2200 = vpop.xlane.xlu0 %2199
  %2201 = vadd.xlane.f32.xlu0 %v2170
  %v2202 = vpop.xlane.xlu0 %2201
  %2203 = vadd.xlane.f32.xlu0 %v2172
  %v2204 = vpop.xlane.xlu0 %2203
  %2205 = vadd.xlane.f32.xlu0 %v2174
  %v2206 = vpop.xlane.xlu0 %2205
  %2207 = vadd.xlane.f32.xlu0 %v2176
  %v2208 = vpop.xlane.xlu0 %2207
  %2209 = vadd.xlane.f32.xlu0 %v2178
  %v2210 = vpop.xlane.xlu0 %2209
  %2211 = vadd.xlane.f32.xlu0 %v2180
  %v2212 = vpop.xlane.xlu0 %2211
  %2213 = vadd.xlane.f32.xlu0 %v2182
  %v2214 = vpop.xlane.xlu0 %2213
  %v2215 = vrcp.pop %v2184
  %v2216 = vrcp.pop %v2186
  %v2217 = vrcp.pop %v2188
  %v2218 = vrcp.pop %v2190
  %v2219 = vrcp.pop %v2192
  %v2220 = vrcp.pop %v2194
  %v2221 = vrcp.pop %v2196
  %v2222 = vrcp.pop %v2198
  %v2223 = vrcp.pop %v2200
  %v2224 = vrcp.pop %v2202
  %v2225 = vrcp.pop %v2204
  %v2226 = vrcp.pop %v2206
  %v2227 = vrcp.pop %v2208
  %v2228 = vrcp.pop %v2210
  %v2229 = vrcp.pop %v2212
  %v2230 = vrcp.pop %v2214
  %v2231 = vmul.f32 %v2152, %v2215
  %v2232 = vmul.f32 %v2154, %v2216
  %v2233 = vmul.f32 %v2156, %v2217
  %v2234 = vmul.f32 %v2158, %v2218
  %v2235 = vmul.f32 %v2160, %v2219
  %v2236 = vmul.f32 %v2162, %v2220
  %v2237 = vmul.f32 %v2164, %v2221
  %v2238 = vmul.f32 %v2166, %v2222
  %v2239 = vmul.f32 %v2168, %v2223
  %v2240 = vmul.f32 %v2170, %v2224
  %v2241 = vmul.f32 %v2172, %v2225
  %v2242 = vmul.f32 %v2174, %v2226
  %v2243 = vmul.f32 %v2176, %v2227
  %v2244 = vmul.f32 %v2178, %v2228
  %v2245 = vmul.f32 %v2180, %v2229
  %v2246 = vmul.f32 %v2182, %v2230
  %2247 = vmatprep.subr.mxu0 0.0
  %2248 = vmatpush1.msra.mxu0 %v1767
  %2249 = vmatprep.subr.mxu0 0.0
  %2250 = vmatpush1.msra.mxu0 %v1772
  %2251 = vmatprep.subr.mxu0 0.0
  %2252 = vmatpush1.msra.mxu0 %v1777
  %2253 = vmatprep.subr.mxu0 0.0
  %2254 = vmatpush1.msra.mxu0 %v1782
  %2255 = vmatprep.subr.mxu0 0.0
  %2256 = vmatpush1.msra.mxu0 %v1787
  %2257 = vmatprep.subr.mxu0 0.0
  %2258 = vmatpush1.msra.mxu0 %v1792
  %2259 = vmatprep.subr.mxu0 0.0
  %2260 = vmatpush1.msra.mxu0 %v1797
  %2261 = vmatprep.subr.mxu0 0.0
  %2262 = vmatpush1.msra.mxu0 %v1802
  %2263 = vmatprep.subr.mxu0 0.0
  %2264 = vmatpush1.msra.mxu0 %v1807
  %2265 = vmatprep.subr.mxu0 0.0
  %2266 = vmatpush1.msra.mxu0 %v1812
  %2267 = vmatprep.subr.mxu0 0.0
  %2268 = vmatpush1.msra.mxu0 %v1817
  %2269 = vmatprep.subr.mxu0 0.0
  %2270 = vmatpush1.msra.mxu0 %v1822
  %2271 = vmatprep.subr.mxu0 0.0
  %2272 = vmatpush1.msra.mxu0 %v1827
  %2273 = vmatprep.subr.mxu0 0.0
  %2274 = vmatpush1.msra.mxu0 %v1832
  %2275 = vmatprep.subr.mxu0 0.0
  %2276 = vmatpush1.msra.mxu0 %v1837
  %2277 = vmatprep.subr.mxu0 0.0
  %2278 = vmatpush1.msra.mxu0 %v1842
  %2279 = vmatprep.subr.mxu0 0.0
  %2280 = vmatpush1.msra.mxu0 0.0
  %2281 = vmatprep.subr.mxu0 0.0
  %2282 = vmatpush1.msra.mxu0 0.0
  %2283 = vmatprep.subr.mxu0 0.0
  %2284 = vmatpush1.msra.mxu0 0.0
  %2285 = vmatprep.subr.mxu0 0.0
  %2286 = vmatpush1.msra.mxu0 0.0
  %2287 = vmatprep.subr.mxu0 0.0
  %2288 = vmatpush1.msra.mxu0 0.0
  %2289 = vmatprep.subr.mxu0 0.0
  %2290 = vmatpush1.msra.mxu0 0.0
  %2291 = vmatprep.subr.mxu0 0.0
  %2292 = vmatpush1.msra.mxu0 0.0
  %2293 = vmatprep.subr.mxu0 0.0
  %2294 = vmatpush1.msra.mxu0 0.0
  %2295 = vmatprep.subr.mxu0 0.0
  %2296 = vmatpush1.msra.mxu0 0.0
  %2297 = vmatprep.subr.mxu0 0.0
  %2298 = vmatpush1.msra.mxu0 0.0
  %2299 = vmatprep.subr.mxu0 0.0
  %2300 = vmatpush1.msra.mxu0 0.0
  %2301 = vmatprep.subr.mxu0 0.0
  %2302 = vmatpush1.msra.mxu0 0.0
  %2303 = vmatprep.subr.mxu0 0.0
  %2304 = vmatpush1.msra.mxu0 0.0
  %2305 = vmatprep.subr.mxu0 0.0
  %2306 = vmatpush1.msra.mxu0 0.0
  %2307 = vmatprep.subr.mxu0 0.0
  %2308 = vmatpush1.msra.mxu0 0.0
  %2309 = vmatprep.subr.mxu0 0.0
  %2310 = vmatpush1.msra.mxu0 0.0
  %2311 = vmatprep.mubr.f32.mxu0 0.0
  %2312 = vmatmul.mubr.f32.gmra.mrb[0].mxu0 %v2231
  %v2313 = vpop.f32.mrb[0].mxu0
  %v2314 = vadd.f32 0.0, %v2313
  %v2315 = vpop.f32.mrb[0].mxu0
  %2316 = vmatprep.mubr.f32.mxu0 0.0
  %2317 = vmatmul.mubr.f32.gmra.mrb[0].mxu0 %v2232
  %v2318 = vpop.f32.mrb[0].mxu0
  %v2319 = vadd.f32 0.0, %v2318
  %v2320 = vpop.f32.mrb[0].mxu0
  %2321 = vmatprep.mubr.f32.mxu0 0.0
  %2322 = vmatmul.mubr.f32.gmra.mrb[0].mxu0 %v2233
  %v2323 = vpop.f32.mrb[0].mxu0
  %v2324 = vadd.f32 0.0, %v2323
  %v2325 = vpop.f32.mrb[0].mxu0
  %2326 = vmatprep.mubr.f32.mxu0 0.0
  %2327 = vmatmul.mubr.f32.gmra.mrb[0].mxu0 %v2234
  %v2328 = vpop.f32.mrb[0].mxu0
  %v2329 = vadd.f32 0.0, %v2328
  %v2330 = vpop.f32.mrb[0].mxu0
  %2331 = vmatprep.mubr.f32.mxu0 0.0
  %2332 = vmatmul.mubr.f32.gmra.mrb[0].mxu0 %v2235
  %v2333 = vpop.f32.mrb[0].mxu0
  %v2334 = vadd.f32 0.0, %v2333
  %v2335 = vpop.f32.mrb[0].mxu0
  %2336 = vmatprep.mubr.f32.mxu0 0.0
  %2337 = vmatmul.mubr.f32.gmra.mrb[0].mxu0 %v2236
  %v2338 = vpop.f32.mrb[0].mxu0
  %v2339 = vadd.f32 0.0, %v2338
  %v2340 = vpop.f32.mrb[0].mxu0
  %2341 = vmatprep.mubr.f32.mxu0 0.0
  %2342 = vmatmul.mubr.f32.gmra.mrb[0].mxu0 %v2237
  %v2343 = vpop.f32.mrb[0].mxu0
  %v2344 = vadd.f32 0.0, %v2343
  %v2345 = vpop.f32.mrb[0].mxu0
  %2346 = vmatprep.mubr.f32.mxu0 0.0
  %2347 = vmatmul.mubr.f32.gmra.mrb[0].mxu0 %v2238
  %v2348 = vpop.f32.mrb[0].mxu0
  %v2349 = vadd.f32 0.0, %v2348
  %v2350 = vpop.f32.mrb[0].mxu0
  %2351 = vmatprep.mubr.f32.mxu0 0.0
  %2352 = vmatmul.mubr.f32.gmra.mrb[0].mxu0 %v2239
  %v2353 = vpop.f32.mrb[0].mxu0
  %v2354 = vadd.f32 0.0, %v2353
  %v2355 = vpop.f32.mrb[0].mxu0
  %2356 = vmatprep.mubr.f32.mxu0 0.0
  %2357 = vmatmul.mubr.f32.gmra.mrb[0].mxu0 %v2240
  %v2358 = vpop.f32.mrb[0].mxu0
  %v2359 = vadd.f32 0.0, %v2358
  %v2360 = vpop.f32.mrb[0].mxu0
  %2361 = vmatprep.mubr.f32.mxu0 0.0
  %2362 = vmatmul.mubr.f32.gmra.mrb[0].mxu0 %v2241
  %v2363 = vpop.f32.mrb[0].mxu0
  %v2364 = vadd.f32 0.0, %v2363
  %v2365 = vpop.f32.mrb[0].mxu0
  %2366 = vmatprep.mubr.f32.mxu0 0.0
  %2367 = vmatmul.mubr.f32.gmra.mrb[0].mxu0 %v2242
  %v2368 = vpop.f32.mrb[0].mxu0
  %v2369 = vadd.f32 0.0, %v2368
  %v2370 = vpop.f32.mrb[0].mxu0
  %2371 = vmatprep.mubr.f32.mxu0 0.0
  %2372 = vmatmul.mubr.f32.gmra.mrb[0].mxu0 %v2243
  %v2373 = vpop.f32.mrb[0].mxu0
  %v2374 = vadd.f32 0.0, %v2373
  %v2375 = vpop.f32.mrb[0].mxu0
  %2376 = vmatprep.mubr.f32.mxu0 0.0
  %2377 = vmatmul.mubr.f32.gmra.mrb[0].mxu0 %v2244
  %v2378 = vpop.f32.mrb[0].mxu0
  %v2379 = vadd.f32 0.0, %v2378
  %v2380 = vpop.f32.mrb[0].mxu0
  %2381 = vmatprep.mubr.f32.mxu0 0.0
  %2382 = vmatmul.mubr.f32.gmra.mrb[0].mxu0 %v2245
  %v2383 = vpop.f32.mrb[0].mxu0
  %v2384 = vadd.f32 0.0, %v2383
  %v2385 = vpop.f32.mrb[0].mxu0
  %2386 = vmatprep.mubr.f32.mxu0 0.0
  %2387 = vmatmul.mubr.f32.gmra.mrb[0].mxu0 %v2246
  %v2388 = vpop.f32.mrb[0].mxu0
  %v2389 = vadd.f32 0.0, %v2388
  %v2390 = vpop.f32.mrb[0].mxu0
  %2391 = vdwg.mxu0
  %s2392 = scalar_lea.vmem %s5, 8
  %v2393 = vld [vmem:[%s2392] sm:$0xff]
  %v2395 = vsel %vm839, %v2314, 0
  %v2398 = vsel %vm839, %v2319, 0
  %v2401 = vsel %vm839, %v2324, 0
  %v2404 = vsel %vm839, %v2329, 0
  %v2407 = vsel %vm839, %v2334, 0
  %v2410 = vsel %vm839, %v2339, 0
  %v2413 = vsel %vm839, %v2344, 0
  %v2416 = vsel %vm839, %v2349, 0
  %v2419 = vsel %vm839, %v2354, 0
  %v2422 = vsel %vm839, %v2359, 0
  %v2425 = vsel %vm839, %v2364, 0
  %v2428 = vsel %vm839, %v2369, 0
  %v2431 = vsel %vm839, %v2374, 0
  %v2434 = vsel %vm839, %v2379, 0
  %v2437 = vsel %vm839, %v2384, 0
  %v2440 = vsel %vm839, %v2389, 0
  %2442 = vmatprep.subr.mxu0 0.0
  %2443 = vmatpush1.msra.mxu0 %v2393
  %2444 = vmatprep.subr.mxu0 0.0
  %2445 = vmatpush1.msra.mxu0 0.0
  %2446 = vmatprep.subr.mxu0 0.0
  %2447 = vmatpush1.msra.mxu0 0.0
  %2448 = vmatprep.subr.mxu0 0.0
  %2449 = vmatpush1.msra.mxu0 0.0
  %2450 = vmatprep.subr.mxu0 0.0
  %2451 = vmatpush1.msra.mxu0 0.0
  %2452 = vmatprep.subr.mxu0 0.0
  %2453 = vmatpush1.msra.mxu0 0.0
  %2454 = vmatprep.subr.mxu0 0.0
  %2455 = vmatpush1.msra.mxu0 0.0
  %2456 = vmatprep.subr.mxu0 0.0
  %2457 = vmatpush1.msra.mxu0 0.0
  %2458 = vmatprep.subr.mxu0 0.0
  %2459 = vmatpush1.msra.mxu0 0.0
  %2460 = vmatprep.subr.mxu0 0.0
  %2461 = vmatpush1.msra.mxu0 0.0
  %2462 = vmatprep.subr.mxu0 0.0
  %2463 = vmatpush1.msra.mxu0 0.0
  %2464 = vmatprep.subr.mxu0 0.0
  %2465 = vmatpush1.msra.mxu0 0.0
  %2466 = vmatprep.subr.mxu0 0.0
  %2467 = vmatpush1.msra.mxu0 0.0
  %2468 = vmatprep.subr.mxu0 0.0
  %2469 = vmatpush1.msra.mxu0 0.0
  %2470 = vmatprep.subr.mxu0 0.0
  %2471 = vmatpush1.msra.mxu0 0.0
  %2472 = vmatprep.subr.mxu0 0.0
  %2473 = vmatpush1.msra.mxu0 0.0
  %2474 = vmatprep.subr.mxu0 0.0
  %2475 = vmatpush1.msra.mxu0 0.0
  %2476 = vmatprep.subr.mxu0 0.0
  %2477 = vmatpush1.msra.mxu0 0.0
  %2478 = vmatprep.subr.mxu0 0.0
  %2479 = vmatpush1.msra.mxu0 0.0
  %2480 = vmatprep.subr.mxu0 0.0
  %2481 = vmatpush1.msra.mxu0 0.0
  %2482 = vmatprep.subr.mxu0 0.0
  %2483 = vmatpush1.msra.mxu0 0.0
  %2484 = vmatprep.subr.mxu0 0.0
  %2485 = vmatpush1.msra.mxu0 0.0
  %2486 = vmatprep.subr.mxu0 0.0
  %2487 = vmatpush1.msra.mxu0 0.0
  %2488 = vmatprep.subr.mxu0 0.0
  %2489 = vmatpush1.msra.mxu0 0.0
  %2490 = vmatprep.subr.mxu0 0.0
  %2491 = vmatpush1.msra.mxu0 0.0
  %2492 = vmatprep.subr.mxu0 0.0
  %2493 = vmatpush1.msra.mxu0 0.0
  %2494 = vmatprep.subr.mxu0 0.0
  %2495 = vmatpush1.msra.mxu0 0.0
  %2496 = vmatprep.subr.mxu0 0.0
  %2497 = vmatpush1.msra.mxu0 0.0
  %2498 = vmatprep.subr.mxu0 0.0
  %2499 = vmatpush1.msra.mxu0 0.0
  %2500 = vmatprep.subr.mxu0 0.0
  %2501 = vmatpush1.msra.mxu0 0.0
  %2502 = vmatprep.subr.mxu0 0.0
  %2503 = vmatpush1.msra.mxu0 0.0
  %2504 = vmatprep.subr.mxu0 0.0
  %2505 = vmatpush1.msra.mxu0 0.0
  %2506 = vmatprep.mubr.f32.mxu0 0.0
  %2507 = vmatmul.mubr.f32.gmra.mrb[0].mxu0 %v2395
  %v2508 = vpop.f32.mrb[0].mxu0
  %v2509 = vadd.f32 0.0, %v2508
  %v2510 = vpop.f32.mrb[0].mxu0
  %2511 = vmatprep.mubr.f32.mxu0 0.0
  %2512 = vmatmul.mubr.f32.gmra.mrb[0].mxu0 %v2398
  %v2513 = vpop.f32.mrb[0].mxu0
  %v2514 = vadd.f32 0.0, %v2513
  %v2515 = vpop.f32.mrb[0].mxu0
  %2516 = vmatprep.mubr.f32.mxu0 0.0
  %2517 = vmatmul.mubr.f32.gmra.mrb[0].mxu0 %v2401
  %v2518 = vpop.f32.mrb[0].mxu0
  %v2519 = vadd.f32 0.0, %v2518
  %v2520 = vpop.f32.mrb[0].mxu0
  %2521 = vmatprep.mubr.f32.mxu0 0.0
  %2522 = vmatmul.mubr.f32.gmra.mrb[0].mxu0 %v2404
  %v2523 = vpop.f32.mrb[0].mxu0
  %v2524 = vadd.f32 0.0, %v2523
  %v2525 = vpop.f32.mrb[0].mxu0
  %2526 = vmatprep.mubr.f32.mxu0 0.0
  %2527 = vmatmul.mubr.f32.gmra.mrb[0].mxu0 %v2407
  %v2528 = vpop.f32.mrb[0].mxu0
  %v2529 = vadd.f32 0.0, %v2528
  %v2530 = vpop.f32.mrb[0].mxu0
  %2531 = vmatprep.mubr.f32.mxu0 0.0
  %2532 = vmatmul.mubr.f32.gmra.mrb[0].mxu0 %v2410
  %v2533 = vpop.f32.mrb[0].mxu0
  %v2534 = vadd.f32 0.0, %v2533
  %v2535 = vpop.f32.mrb[0].mxu0
  %2536 = vmatprep.mubr.f32.mxu0 0.0
  %2537 = vmatmul.mubr.f32.gmra.mrb[0].mxu0 %v2413
  %v2538 = vpop.f32.mrb[0].mxu0
  %v2539 = vadd.f32 0.0, %v2538
  %v2540 = vpop.f32.mrb[0].mxu0
  %2541 = vmatprep.mubr.f32.mxu0 0.0
  %2542 = vmatmul.mubr.f32.gmra.mrb[0].mxu0 %v2416
  %v2543 = vpop.f32.mrb[0].mxu0
  %v2544 = vadd.f32 0.0, %v2543
  %v2545 = vpop.f32.mrb[0].mxu0
  %2546 = vmatprep.mubr.f32.mxu0 0.0
  %2547 = vmatmul.mubr.f32.gmra.mrb[0].mxu0 %v2419
  %v2548 = vpop.f32.mrb[0].mxu0
  %v2549 = vadd.f32 0.0, %v2548
  %v2550 = vpop.f32.mrb[0].mxu0
  %2551 = vmatprep.mubr.f32.mxu0 0.0
  %2552 = vmatmul.mubr.f32.gmra.mrb[0].mxu0 %v2422
  %v2553 = vpop.f32.mrb[0].mxu0
  %v2554 = vadd.f32 0.0, %v2553
  %v2555 = vpop.f32.mrb[0].mxu0
  %2556 = vmatprep.mubr.f32.mxu0 0.0
  %2557 = vmatmul.mubr.f32.gmra.mrb[0].mxu0 %v2425
  %v2558 = vpop.f32.mrb[0].mxu0
  %v2559 = vadd.f32 0.0, %v2558
  %v2560 = vpop.f32.mrb[0].mxu0
  %2561 = vmatprep.mubr.f32.mxu0 0.0
  %2562 = vmatmul.mubr.f32.gmra.mrb[0].mxu0 %v2428
  %v2563 = vpop.f32.mrb[0].mxu0
  %v2564 = vadd.f32 0.0, %v2563
  %v2565 = vpop.f32.mrb[0].mxu0
  %2566 = vmatprep.mubr.f32.mxu0 0.0
  %2567 = vmatmul.mubr.f32.gmra.mrb[0].mxu0 %v2431
  %v2568 = vpop.f32.mrb[0].mxu0
  %v2569 = vadd.f32 0.0, %v2568
  %v2570 = vpop.f32.mrb[0].mxu0
  %2571 = vmatprep.mubr.f32.mxu0 0.0
  %2572 = vmatmul.mubr.f32.gmra.mrb[0].mxu0 %v2434
  %v2573 = vpop.f32.mrb[0].mxu0
  %v2574 = vadd.f32 0.0, %v2573
  %v2575 = vpop.f32.mrb[0].mxu0
  %2576 = vmatprep.mubr.f32.mxu0 0.0
  %2577 = vmatmul.mubr.f32.gmra.mrb[0].mxu0 %v2437
  %v2578 = vpop.f32.mrb[0].mxu0
  %v2579 = vadd.f32 0.0, %v2578
  %v2580 = vpop.f32.mrb[0].mxu0
  %2581 = vmatprep.mubr.f32.mxu0 0.0
  %2582 = vmatmul.mubr.f32.gmra.mrb[0].mxu0 %v2440
  %v2583 = vpop.f32.mrb[0].mxu0
  %v2584 = vadd.f32 0.0, %v2583
  %v2585 = vpop.f32.mrb[0].mxu0
  %2586 = vdwg.mxu0
  %v2588 = vsel %vm839, %v1292, 0
  %v2591 = vsel %vm839, %v1297, 0
  %v2594 = vsel %vm839, %v1302, 0
  %v2597 = vsel %vm839, %v1307, 0
  %v2600 = vsel %vm839, %v1312, 0
  %v2603 = vsel %vm839, %v1317, 0
  %v2606 = vsel %vm839, %v1322, 0
  %v2609 = vsel %vm839, %v1327, 0
  %v2612 = vsel %vm839, %v1332, 0
  %v2615 = vsel %vm839, %v1337, 0
  %v2618 = vsel %vm839, %v1342, 0
  %v2621 = vsel %vm839, %v1347, 0
  %v2624 = vsel %vm839, %v1352, 0
  %v2627 = vsel %vm839, %v1357, 0
  %v2630 = vsel %vm839, %v1362, 0
  %v2633 = vsel %vm839, %v1367, 0
  %2635 = vmatprep.subr.mxu0 0.0
  %2636 = vmatpush1.msra.mxu0 %v1370
  %2637 = vmatprep.subr.mxu0 0.0
  %2638 = vmatpush1.msra.mxu0 0.0
  %2639 = vmatprep.subr.mxu0 0.0
  %2640 = vmatpush1.msra.mxu0 0.0
  %2641 = vmatprep.subr.mxu0 0.0
  %2642 = vmatpush1.msra.mxu0 0.0
  %2643 = vmatprep.subr.mxu0 0.0
  %2644 = vmatpush1.msra.mxu0 0.0
  %2645 = vmatprep.subr.mxu0 0.0
  %2646 = vmatpush1.msra.mxu0 0.0
  %2647 = vmatprep.subr.mxu0 0.0
  %2648 = vmatpush1.msra.mxu0 0.0
  %2649 = vmatprep.subr.mxu0 0.0
  %2650 = vmatpush1.msra.mxu0 0.0
  %2651 = vmatprep.subr.mxu0 0.0
  %2652 = vmatpush1.msra.mxu0 0.0
  %2653 = vmatprep.subr.mxu0 0.0
  %2654 = vmatpush1.msra.mxu0 0.0
  %2655 = vmatprep.subr.mxu0 0.0
  %2656 = vmatpush1.msra.mxu0 0.0
  %2657 = vmatprep.subr.mxu0 0.0
  %2658 = vmatpush1.msra.mxu0 0.0
  %2659 = vmatprep.subr.mxu0 0.0
  %2660 = vmatpush1.msra.mxu0 0.0
  %2661 = vmatprep.subr.mxu0 0.0
  %2662 = vmatpush1.msra.mxu0 0.0
  %2663 = vmatprep.subr.mxu0 0.0
  %2664 = vmatpush1.msra.mxu0 0.0
  %2665 = vmatprep.subr.mxu0 0.0
  %2666 = vmatpush1.msra.mxu0 0.0
  %2667 = vmatprep.subr.mxu0 0.0
  %2668 = vmatpush1.msra.mxu0 0.0
  %2669 = vmatprep.subr.mxu0 0.0
  %2670 = vmatpush1.msra.mxu0 0.0
  %2671 = vmatprep.subr.mxu0 0.0
  %2672 = vmatpush1.msra.mxu0 0.0
  %2673 = vmatprep.subr.mxu0 0.0
  %2674 = vmatpush1.msra.mxu0 0.0
  %2675 = vmatprep.subr.mxu0 0.0
  %2676 = vmatpush1.msra.mxu0 0.0
  %2677 = vmatprep.subr.mxu0 0.0
  %2678 = vmatpush1.msra.mxu0 0.0
  %2679 = vmatprep.subr.mxu0 0.0
  %2680 = vmatpush1.msra.mxu0 0.0
  %2681 = vmatprep.subr.mxu0 0.0
  %2682 = vmatpush1.msra.mxu0 0.0
  %2683 = vmatprep.subr.mxu0 0.0
  %2684 = vmatpush1.msra.mxu0 0.0
  %2685 = vmatprep.subr.mxu0 0.0
  %2686 = vmatpush1.msra.mxu0 0.0
  %2687 = vmatprep.subr.mxu0 0.0
  %2688 = vmatpush1.msra.mxu0 0.0
  %2689 = vmatprep.subr.mxu0 0.0
  %2690 = vmatpush1.msra.mxu0 0.0
  %2691 = vmatprep.subr.mxu0 0.0
  %2692 = vmatpush1.msra.mxu0 0.0
  %2693 = vmatprep.subr.mxu0 0.0
  %2694 = vmatpush1.msra.mxu0 0.0
  %2695 = vmatprep.subr.mxu0 0.0
  %2696 = vmatpush1.msra.mxu0 0.0
  %2697 = vmatprep.subr.mxu0 0.0
  %2698 = vmatpush1.msra.mxu0 0.0
  %2699 = vmatprep.mubr.f32.mxu0 0.0
  %2700 = vmatmul.mubr.f32.gmra.mrb[0].mxu0 %v2588
  %v2701 = vpop.f32.mrb[0].mxu0
  %v2702 = vadd.f32 %v2509, %v2701
  %v2703 = vpop.f32.mrb[0].mxu0
  %2704 = vmatprep.mubr.f32.mxu0 0.0
  %2705 = vmatmul.mubr.f32.gmra.mrb[0].mxu0 %v2591
  %v2706 = vpop.f32.mrb[0].mxu0
  %v2707 = vadd.f32 %v2514, %v2706
  %v2708 = vpop.f32.mrb[0].mxu0
  %2709 = vmatprep.mubr.f32.mxu0 0.0
  %2710 = vmatmul.mubr.f32.gmra.mrb[0].mxu0 %v2594
  %v2711 = vpop.f32.mrb[0].mxu0
  %v2712 = vadd.f32 %v2519, %v2711
  %v2713 = vpop.f32.mrb[0].mxu0
  %2714 = vmatprep.mubr.f32.mxu0 0.0
  %2715 = vmatmul.mubr.f32.gmra.mrb[0].mxu0 %v2597
  %v2716 = vpop.f32.mrb[0].mxu0
  %v2717 = vadd.f32 %v2524, %v2716
  %v2718 = vpop.f32.mrb[0].mxu0
  %2719 = vmatprep.mubr.f32.mxu0 0.0
  %2720 = vmatmul.mubr.f32.gmra.mrb[0].mxu0 %v2600
  %v2721 = vpop.f32.mrb[0].mxu0
  %v2722 = vadd.f32 %v2529, %v2721
  %v2723 = vpop.f32.mrb[0].mxu0
  %2724 = vmatprep.mubr.f32.mxu0 0.0
  %2725 = vmatmul.mubr.f32.gmra.mrb[0].mxu0 %v2603
  %v2726 = vpop.f32.mrb[0].mxu0
  %v2727 = vadd.f32 %v2534, %v2726
  %v2728 = vpop.f32.mrb[0].mxu0
  %2729 = vmatprep.mubr.f32.mxu0 0.0
  %2730 = vmatmul.mubr.f32.gmra.mrb[0].mxu0 %v2606
  %v2731 = vpop.f32.mrb[0].mxu0
  %v2732 = vadd.f32 %v2539, %v2731
  %v2733 = vpop.f32.mrb[0].mxu0
  %2734 = vmatprep.mubr.f32.mxu0 0.0
  %2735 = vmatmul.mubr.f32.gmra.mrb[0].mxu0 %v2609
  %v2736 = vpop.f32.mrb[0].mxu0
  %v2737 = vadd.f32 %v2544, %v2736
  %v2738 = vpop.f32.mrb[0].mxu0
  %2739 = vmatprep.mubr.f32.mxu0 0.0
  %2740 = vmatmul.mubr.f32.gmra.mrb[0].mxu0 %v2612
  %v2741 = vpop.f32.mrb[0].mxu0
  %v2742 = vadd.f32 %v2549, %v2741
  %v2743 = vpop.f32.mrb[0].mxu0
  %2744 = vmatprep.mubr.f32.mxu0 0.0
  %2745 = vmatmul.mubr.f32.gmra.mrb[0].mxu0 %v2615
  %v2746 = vpop.f32.mrb[0].mxu0
  %v2747 = vadd.f32 %v2554, %v2746
  %v2748 = vpop.f32.mrb[0].mxu0
  %2749 = vmatprep.mubr.f32.mxu0 0.0
  %2750 = vmatmul.mubr.f32.gmra.mrb[0].mxu0 %v2618
  %v2751 = vpop.f32.mrb[0].mxu0
  %v2752 = vadd.f32 %v2559, %v2751
  %v2753 = vpop.f32.mrb[0].mxu0
  %2754 = vmatprep.mubr.f32.mxu0 0.0
  %2755 = vmatmul.mubr.f32.gmra.mrb[0].mxu0 %v2621
  %v2756 = vpop.f32.mrb[0].mxu0
  %v2757 = vadd.f32 %v2564, %v2756
  %v2758 = vpop.f32.mrb[0].mxu0
  %2759 = vmatprep.mubr.f32.mxu0 0.0
  %2760 = vmatmul.mubr.f32.gmra.mrb[0].mxu0 %v2624
  %v2761 = vpop.f32.mrb[0].mxu0
  %v2762 = vadd.f32 %v2569, %v2761
  %v2763 = vpop.f32.mrb[0].mxu0
  %2764 = vmatprep.mubr.f32.mxu0 0.0
  %2765 = vmatmul.mubr.f32.gmra.mrb[0].mxu0 %v2627
  %v2766 = vpop.f32.mrb[0].mxu0
  %v2767 = vadd.f32 %v2574, %v2766
  %v2768 = vpop.f32.mrb[0].mxu0
  %2769 = vmatprep.mubr.f32.mxu0 0.0
  %2770 = vmatmul.mubr.f32.gmra.mrb[0].mxu0 %v2630
  %v2771 = vpop.f32.mrb[0].mxu0
  %v2772 = vadd.f32 %v2579, %v2771
  %v2773 = vpop.f32.mrb[0].mxu0
  %2774 = vmatprep.mubr.f32.mxu0 0.0
  %2775 = vmatmul.mubr.f32.gmra.mrb[0].mxu0 %v2633
  %v2776 = vpop.f32.mrb[0].mxu0
  %v2777 = vadd.f32 %v2584, %v2776
  %v2778 = vpop.f32.mrb[0].mxu0
  %2779 = vdwg.mxu0
  %s2780 = scalar_lea.vmem %s3, 64
  %v2781 = vld [vmem:[%s2780] sm:$0xff]
  %v2782 = vld [vmem:[%s2780 + $0x8] sm:$0xff]
  %v2783 = vld [vmem:[%s2780 + $0x10] sm:$0xff]
  %v2784 = vld [vmem:[%s2780 + $0x18] sm:$0xff]
  %s2785 = scalar_lea.vmem %s4, 2
  %v2786 = vld [vmem:[%s2785] sm:$0x1]
  %v2788 = vlaneseq
  %v2789 = vshrl.u32 %v2788, 7
  %v2790 = vsub.s32 0, %v2789
  %v2791 = vrot.slane %v2786, %v2790
  %2793 = vmatprep.subr.mxu0 0.0
  %2794 = vmatpush1.msra.mxu0 %v2781
  %2795 = vmatprep.subr.mxu0 0.0
  %2796 = vmatpush1.msra.mxu0 %v2782
  %2797 = vmatprep.subr.mxu0 0.0
  %2798 = vmatpush1.msra.mxu0 %v2783
  %2799 = vmatprep.subr.mxu0 0.0
  %2800 = vmatpush1.msra.mxu0 %v2784
  %2801 = vmatprep.subr.mxu0 0.0
  %2802 = vmatpush1.msra.mxu0 0.0
  %2803 = vmatprep.subr.mxu0 0.0
  %2804 = vmatpush1.msra.mxu0 0.0
  %2805 = vmatprep.subr.mxu0 0.0
  %2806 = vmatpush1.msra.mxu0 0.0
  %2807 = vmatprep.subr.mxu0 0.0
  %2808 = vmatpush1.msra.mxu0 0.0
  %2809 = vmatprep.subr.mxu0 0.0
  %2810 = vmatpush1.msra.mxu0 0.0
  %2811 = vmatprep.subr.mxu0 0.0
  %2812 = vmatpush1.msra.mxu0 0.0
  %2813 = vmatprep.subr.mxu0 0.0
  %2814 = vmatpush1.msra.mxu0 0.0
  %2815 = vmatprep.subr.mxu0 0.0
  %2816 = vmatpush1.msra.mxu0 0.0
  %2817 = vmatprep.subr.mxu0 0.0
  %2818 = vmatpush1.msra.mxu0 0.0
  %2819 = vmatprep.subr.mxu0 0.0
  %2820 = vmatpush1.msra.mxu0 0.0
  %2821 = vmatprep.subr.mxu0 0.0
  %2822 = vmatpush1.msra.mxu0 0.0
  %2823 = vmatprep.subr.mxu0 0.0
  %2824 = vmatpush1.msra.mxu0 0.0
  %2825 = vmatprep.subr.mxu0 0.0
  %2826 = vmatpush1.msra.mxu0 0.0
  %2827 = vmatprep.subr.mxu0 0.0
  %2828 = vmatpush1.msra.mxu0 0.0
  %2829 = vmatprep.subr.mxu0 0.0
  %2830 = vmatpush1.msra.mxu0 0.0
  %2831 = vmatprep.subr.mxu0 0.0
  %2832 = vmatpush1.msra.mxu0 0.0
  %2833 = vmatprep.subr.mxu0 0.0
  %2834 = vmatpush1.msra.mxu0 0.0
  %2835 = vmatprep.subr.mxu0 0.0
  %2836 = vmatpush1.msra.mxu0 0.0
  %2837 = vmatprep.subr.mxu0 0.0
  %2838 = vmatpush1.msra.mxu0 0.0
  %2839 = vmatprep.subr.mxu0 0.0
  %2840 = vmatpush1.msra.mxu0 0.0
  %2841 = vmatprep.subr.mxu0 0.0
  %2842 = vmatpush1.msra.mxu0 0.0
  %2843 = vmatprep.subr.mxu0 0.0
  %2844 = vmatpush1.msra.mxu0 0.0
  %2845 = vmatprep.subr.mxu0 0.0
  %2846 = vmatpush1.msra.mxu0 0.0
  %2847 = vmatprep.subr.mxu0 0.0
  %2848 = vmatpush1.msra.mxu0 0.0
  %2849 = vmatprep.subr.mxu0 0.0
  %2850 = vmatpush1.msra.mxu0 0.0
  %2851 = vmatprep.subr.mxu0 0.0
  %2852 = vmatpush1.msra.mxu0 0.0
  %2853 = vmatprep.subr.mxu0 0.0
  %2854 = vmatpush1.msra.mxu0 0.0
  %2855 = vmatprep.subr.mxu0 0.0
  %2856 = vmatpush1.msra.mxu0 0.0
  %2857 = vmatprep.mubr.f32.mxu0 0.0
  %2858 = vmatmul.mubr.f32.gmra.mrb[0].mxu0 %v315
  %v2859 = vpop.f32.mrb[0].mxu0
  %v2860 = vadd.f32 %v2791, %v2859
  %v2861 = vpop.f32.mrb[0].mxu0
  %2862 = vmatprep.mubr.f32.mxu0 0.0
  %2863 = vmatmul.mubr.f32.gmra.mrb[0].mxu0 %v318
  %v2864 = vpop.f32.mrb[0].mxu0
  %v2865 = vadd.f32 %v2791, %v2864
  %v2866 = vpop.f32.mrb[0].mxu0
  %2867 = vmatprep.mubr.f32.mxu0 0.0
  %2868 = vmatmul.mubr.f32.gmra.mrb[0].mxu0 %v321
  %v2869 = vpop.f32.mrb[0].mxu0
  %v2870 = vadd.f32 %v2791, %v2869
  %v2871 = vpop.f32.mrb[0].mxu0
  %2872 = vmatprep.mubr.f32.mxu0 0.0
  %2873 = vmatmul.mubr.f32.gmra.mrb[0].mxu0 %v324
  %v2874 = vpop.f32.mrb[0].mxu0
  %v2875 = vadd.f32 %v2791, %v2874
  %v2876 = vpop.f32.mrb[0].mxu0
  %2877 = vmatprep.mubr.f32.mxu0 0.0
  %2878 = vmatmul.mubr.f32.gmra.mrb[0].mxu0 %v327
  %v2879 = vpop.f32.mrb[0].mxu0
  %v2880 = vadd.f32 %v2791, %v2879
  %v2881 = vpop.f32.mrb[0].mxu0
  %2882 = vmatprep.mubr.f32.mxu0 0.0
  %2883 = vmatmul.mubr.f32.gmra.mrb[0].mxu0 %v330
  %v2884 = vpop.f32.mrb[0].mxu0
  %v2885 = vadd.f32 %v2791, %v2884
  %v2886 = vpop.f32.mrb[0].mxu0
  %2887 = vmatprep.mubr.f32.mxu0 0.0
  %2888 = vmatmul.mubr.f32.gmra.mrb[0].mxu0 %v333
  %v2889 = vpop.f32.mrb[0].mxu0
  %v2890 = vadd.f32 %v2791, %v2889
  %v2891 = vpop.f32.mrb[0].mxu0
  %2892 = vmatprep.mubr.f32.mxu0 0.0
  %2893 = vmatmul.mubr.f32.gmra.mrb[0].mxu0 %v336
  %v2894 = vpop.f32.mrb[0].mxu0
  %v2895 = vadd.f32 %v2791, %v2894
  %v2896 = vpop.f32.mrb[0].mxu0
  %2897 = vmatprep.mubr.f32.mxu0 0.0
  %2898 = vmatmul.mubr.f32.gmra.mrb[0].mxu0 %v339
  %v2899 = vpop.f32.mrb[0].mxu0
  %v2900 = vadd.f32 %v2791, %v2899
  %v2901 = vpop.f32.mrb[0].mxu0
  %2902 = vmatprep.mubr.f32.mxu0 0.0
  %2903 = vmatmul.mubr.f32.gmra.mrb[0].mxu0 %v342
  %v2904 = vpop.f32.mrb[0].mxu0
  %v2905 = vadd.f32 %v2791, %v2904
  %v2906 = vpop.f32.mrb[0].mxu0
  %2907 = vmatprep.mubr.f32.mxu0 0.0
  %2908 = vmatmul.mubr.f32.gmra.mrb[0].mxu0 %v345
  %v2909 = vpop.f32.mrb[0].mxu0
  %v2910 = vadd.f32 %v2791, %v2909
  %v2911 = vpop.f32.mrb[0].mxu0
  %2912 = vmatprep.mubr.f32.mxu0 0.0
  %2913 = vmatmul.mubr.f32.gmra.mrb[0].mxu0 %v348
  %v2914 = vpop.f32.mrb[0].mxu0
  %v2915 = vadd.f32 %v2791, %v2914
  %v2916 = vpop.f32.mrb[0].mxu0
  %2917 = vmatprep.mubr.f32.mxu0 0.0
  %2918 = vmatmul.mubr.f32.gmra.mrb[0].mxu0 %v351
  %v2919 = vpop.f32.mrb[0].mxu0
  %v2920 = vadd.f32 %v2791, %v2919
  %v2921 = vpop.f32.mrb[0].mxu0
  %2922 = vmatprep.mubr.f32.mxu0 0.0
  %2923 = vmatmul.mubr.f32.gmra.mrb[0].mxu0 %v354
  %v2924 = vpop.f32.mrb[0].mxu0
  %v2925 = vadd.f32 %v2791, %v2924
  %v2926 = vpop.f32.mrb[0].mxu0
  %2927 = vmatprep.mubr.f32.mxu0 0.0
  %2928 = vmatmul.mubr.f32.gmra.mrb[0].mxu0 %v357
  %v2929 = vpop.f32.mrb[0].mxu0
  %v2930 = vadd.f32 %v2791, %v2929
  %v2931 = vpop.f32.mrb[0].mxu0
  %2932 = vmatprep.mubr.f32.mxu0 0.0
  %2933 = vmatmul.mubr.f32.gmra.mrb[0].mxu0 %v360
  %v2934 = vpop.f32.mrb[0].mxu0
  %v2935 = vadd.f32 %v2791, %v2934
  %v2936 = vpop.f32.mrb[0].mxu0
  %2937 = vdwg.mxu0
  %s2938 = scalar_lea.vmem %s3, 192
  %v2939 = vld [vmem:[%s2938] sm:$0xff]
  %v2940 = vld [vmem:[%s2938 + $0x8] sm:$0xff]
  %v2941 = vld [vmem:[%s2938 + $0x10] sm:$0xff]
  %v2942 = vld [vmem:[%s2938 + $0x18] sm:$0xff]
  %s2943 = scalar_lea.vmem %s4, 6
  %v2944 = vld [vmem:[%s2943] sm:$0x1]
  %v2946 = vlaneseq
  %v2947 = vshrl.u32 %v2946, 7
  %v2948 = vsub.s32 0, %v2947
  %v2949 = vrot.slane %v2944, %v2948
  %2951 = vmatprep.subr.mxu0 0.0
  %2952 = vmatpush1.msra.mxu0 %v2939
  %2953 = vmatprep.subr.mxu0 0.0
  %2954 = vmatpush1.msra.mxu0 %v2940
  %2955 = vmatprep.subr.mxu0 0.0
  %2956 = vmatpush1.msra.mxu0 %v2941
  %2957 = vmatprep.subr.mxu0 0.0
  %2958 = vmatpush1.msra.mxu0 %v2942
  %2959 = vmatprep.subr.mxu0 0.0
  %2960 = vmatpush1.msra.mxu0 0.0
  %2961 = vmatprep.subr.mxu0 0.0
  %2962 = vmatpush1.msra.mxu0 0.0
  %2963 = vmatprep.subr.mxu0 0.0
  %2964 = vmatpush1.msra.mxu0 0.0
  %2965 = vmatprep.subr.mxu0 0.0
  %2966 = vmatpush1.msra.mxu0 0.0
  %2967 = vmatprep.subr.mxu0 0.0
  %2968 = vmatpush1.msra.mxu0 0.0
  %2969 = vmatprep.subr.mxu0 0.0
  %2970 = vmatpush1.msra.mxu0 0.0
  %2971 = vmatprep.subr.mxu0 0.0
  %2972 = vmatpush1.msra.mxu0 0.0
  %2973 = vmatprep.subr.mxu0 0.0
  %2974 = vmatpush1.msra.mxu0 0.0
  %2975 = vmatprep.subr.mxu0 0.0
  %2976 = vmatpush1.msra.mxu0 0.0
  %2977 = vmatprep.subr.mxu0 0.0
  %2978 = vmatpush1.msra.mxu0 0.0
  %2979 = vmatprep.subr.mxu0 0.0
  %2980 = vmatpush1.msra.mxu0 0.0
  %2981 = vmatprep.subr.mxu0 0.0
  %2982 = vmatpush1.msra.mxu0 0.0
  %2983 = vmatprep.subr.mxu0 0.0
  %2984 = vmatpush1.msra.mxu0 0.0
  %2985 = vmatprep.subr.mxu0 0.0
  %2986 = vmatpush1.msra.mxu0 0.0
  %2987 = vmatprep.subr.mxu0 0.0
  %2988 = vmatpush1.msra.mxu0 0.0
  %2989 = vmatprep.subr.mxu0 0.0
  %2990 = vmatpush1.msra.mxu0 0.0
  %2991 = vmatprep.subr.mxu0 0.0
  %2992 = vmatpush1.msra.mxu0 0.0
  %2993 = vmatprep.subr.mxu0 0.0
  %2994 = vmatpush1.msra.mxu0 0.0
  %2995 = vmatprep.subr.mxu0 0.0
  %2996 = vmatpush1.msra.mxu0 0.0
  %2997 = vmatprep.subr.mxu0 0.0
  %2998 = vmatpush1.msra.mxu0 0.0
  %2999 = vmatprep.subr.mxu0 0.0
  %3000 = vmatpush1.msra.mxu0 0.0
  %3001 = vmatprep.subr.mxu0 0.0
  %3002 = vmatpush1.msra.mxu0 0.0
  %3003 = vmatprep.subr.mxu0 0.0
  %3004 = vmatpush1.msra.mxu0 0.0
  %3005 = vmatprep.subr.mxu0 0.0
  %3006 = vmatpush1.msra.mxu0 0.0
  %3007 = vmatprep.subr.mxu0 0.0
  %3008 = vmatpush1.msra.mxu0 0.0
  %3009 = vmatprep.subr.mxu0 0.0
  %3010 = vmatpush1.msra.mxu0 0.0
  %3011 = vmatprep.subr.mxu0 0.0
  %3012 = vmatpush1.msra.mxu0 0.0
  %3013 = vmatprep.subr.mxu0 0.0
  %3014 = vmatpush1.msra.mxu0 0.0
  %3015 = vmatprep.mubr.f32.mxu0 0.0
  %3016 = vmatmul.mubr.f32.gmra.mrb[0].mxu0 %v315
  %v3017 = vpop.f32.mrb[0].mxu0
  %v3018 = vadd.f32 %v2949, %v3017
  %v3019 = vpop.f32.mrb[0].mxu0
  %3020 = vmatprep.mubr.f32.mxu0 0.0
  %3021 = vmatmul.mubr.f32.gmra.mrb[0].mxu0 %v318
  %v3022 = vpop.f32.mrb[0].mxu0
  %v3023 = vadd.f32 %v2949, %v3022
  %v3024 = vpop.f32.mrb[0].mxu0
  %3025 = vmatprep.mubr.f32.mxu0 0.0
  %3026 = vmatmul.mubr.f32.gmra.mrb[0].mxu0 %v321
  %v3027 = vpop.f32.mrb[0].mxu0
  %v3028 = vadd.f32 %v2949, %v3027
  %v3029 = vpop.f32.mrb[0].mxu0
  %3030 = vmatprep.mubr.f32.mxu0 0.0
  %3031 = vmatmul.mubr.f32.gmra.mrb[0].mxu0 %v324
  %v3032 = vpop.f32.mrb[0].mxu0
  %v3033 = vadd.f32 %v2949, %v3032
  %v3034 = vpop.f32.mrb[0].mxu0
  %3035 = vmatprep.mubr.f32.mxu0 0.0
  %3036 = vmatmul.mubr.f32.gmra.mrb[0].mxu0 %v327
  %v3037 = vpop.f32.mrb[0].mxu0
  %v3038 = vadd.f32 %v2949, %v3037
  %v3039 = vpop.f32.mrb[0].mxu0
  %3040 = vmatprep.mubr.f32.mxu0 0.0
  %3041 = vmatmul.mubr.f32.gmra.mrb[0].mxu0 %v330
  %v3042 = vpop.f32.mrb[0].mxu0
  %v3043 = vadd.f32 %v2949, %v3042
  %v3044 = vpop.f32.mrb[0].mxu0
  %3045 = vmatprep.mubr.f32.mxu0 0.0
  %3046 = vmatmul.mubr.f32.gmra.mrb[0].mxu0 %v333
  %v3047 = vpop.f32.mrb[0].mxu0
  %v3048 = vadd.f32 %v2949, %v3047
  %v3049 = vpop.f32.mrb[0].mxu0
  %3050 = vmatprep.mubr.f32.mxu0 0.0
  %3051 = vmatmul.mubr.f32.gmra.mrb[0].mxu0 %v336
  %v3052 = vpop.f32.mrb[0].mxu0
  %v3053 = vadd.f32 %v2949, %v3052
  %v3054 = vpop.f32.mrb[0].mxu0
  %3055 = vmatprep.mubr.f32.mxu0 0.0
  %3056 = vmatmul.mubr.f32.gmra.mrb[0].mxu0 %v339
  %v3057 = vpop.f32.mrb[0].mxu0
  %v3058 = vadd.f32 %v2949, %v3057
  %v3059 = vpop.f32.mrb[0].mxu0
  %3060 = vmatprep.mubr.f32.mxu0 0.0
  %3061 = vmatmul.mubr.f32.gmra.mrb[0].mxu0 %v342
  %v3062 = vpop.f32.mrb[0].mxu0
  %v3063 = vadd.f32 %v2949, %v3062
  %v3064 = vpop.f32.mrb[0].mxu0
  %3065 = vmatprep.mubr.f32.mxu0 0.0
  %3066 = vmatmul.mubr.f32.gmra.mrb[0].mxu0 %v345
  %v3067 = vpop.f32.mrb[0].mxu0
  %v3068 = vadd.f32 %v2949, %v3067
  %v3069 = vpop.f32.mrb[0].mxu0
  %3070 = vmatprep.mubr.f32.mxu0 0.0
  %3071 = vmatmul.mubr.f32.gmra.mrb[0].mxu0 %v348
  %v3072 = vpop.f32.mrb[0].mxu0
  %v3073 = vadd.f32 %v2949, %v3072
  %v3074 = vpop.f32.mrb[0].mxu0
  %3075 = vmatprep.mubr.f32.mxu0 0.0
  %3076 = vmatmul.mubr.f32.gmra.mrb[0].mxu0 %v351
  %v3077 = vpop.f32.mrb[0].mxu0
  %v3078 = vadd.f32 %v2949, %v3077
  %v3079 = vpop.f32.mrb[0].mxu0
  %3080 = vmatprep.mubr.f32.mxu0 0.0
  %3081 = vmatmul.mubr.f32.gmra.mrb[0].mxu0 %v354
  %v3082 = vpop.f32.mrb[0].mxu0
  %v3083 = vadd.f32 %v2949, %v3082
  %v3084 = vpop.f32.mrb[0].mxu0
  %3085 = vmatprep.mubr.f32.mxu0 0.0
  %3086 = vmatmul.mubr.f32.gmra.mrb[0].mxu0 %v357
  %v3087 = vpop.f32.mrb[0].mxu0
  %v3088 = vadd.f32 %v2949, %v3087
  %v3089 = vpop.f32.mrb[0].mxu0
  %3090 = vmatprep.mubr.f32.mxu0 0.0
  %3091 = vmatmul.mubr.f32.gmra.mrb[0].mxu0 %v360
  %v3092 = vpop.f32.mrb[0].mxu0
  %v3093 = vadd.f32 %v2949, %v3092
  %v3094 = vpop.f32.mrb[0].mxu0
  %3095 = vdwg.mxu0
  %s3096 = scalar_lea.vmem %s3, 320
  %v3097 = vld [vmem:[%s3096] sm:$0xff]
  %v3098 = vld [vmem:[%s3096 + $0x8] sm:$0xff]
  %v3099 = vld [vmem:[%s3096 + $0x10] sm:$0xff]
  %v3100 = vld [vmem:[%s3096 + $0x18] sm:$0xff]
  %s3101 = scalar_lea.vmem %s4, 10
  %v3102 = vld [vmem:[%s3101] sm:$0x1]
  %v3104 = vlaneseq
  %v3105 = vshrl.u32 %v3104, 7
  %v3106 = vsub.s32 0, %v3105
  %v3107 = vrot.slane %v3102, %v3106
  %3109 = vmatprep.subr.mxu0 0.0
  %3110 = vmatpush1.msra.mxu0 %v3097
  %3111 = vmatprep.subr.mxu0 0.0
  %3112 = vmatpush1.msra.mxu0 %v3098
  %3113 = vmatprep.subr.mxu0 0.0
  %3114 = vmatpush1.msra.mxu0 %v3099
  %3115 = vmatprep.subr.mxu0 0.0
  %3116 = vmatpush1.msra.mxu0 %v3100
  %3117 = vmatprep.subr.mxu0 0.0
  %3118 = vmatpush1.msra.mxu0 0.0
  %3119 = vmatprep.subr.mxu0 0.0
  %3120 = vmatpush1.msra.mxu0 0.0
  %3121 = vmatprep.subr.mxu0 0.0
  %3122 = vmatpush1.msra.mxu0 0.0
  %3123 = vmatprep.subr.mxu0 0.0
  %3124 = vmatpush1.msra.mxu0 0.0
  %3125 = vmatprep.subr.mxu0 0.0
  %3126 = vmatpush1.msra.mxu0 0.0
  %3127 = vmatprep.subr.mxu0 0.0
  %3128 = vmatpush1.msra.mxu0 0.0
  %3129 = vmatprep.subr.mxu0 0.0
  %3130 = vmatpush1.msra.mxu0 0.0
  %3131 = vmatprep.subr.mxu0 0.0
  %3132 = vmatpush1.msra.mxu0 0.0
  %3133 = vmatprep.subr.mxu0 0.0
  %3134 = vmatpush1.msra.mxu0 0.0
  %3135 = vmatprep.subr.mxu0 0.0
  %3136 = vmatpush1.msra.mxu0 0.0
  %3137 = vmatprep.subr.mxu0 0.0
  %3138 = vmatpush1.msra.mxu0 0.0
  %3139 = vmatprep.subr.mxu0 0.0
  %3140 = vmatpush1.msra.mxu0 0.0
  %3141 = vmatprep.subr.mxu0 0.0
  %3142 = vmatpush1.msra.mxu0 0.0
  %3143 = vmatprep.subr.mxu0 0.0
  %3144 = vmatpush1.msra.mxu0 0.0
  %3145 = vmatprep.subr.mxu0 0.0
  %3146 = vmatpush1.msra.mxu0 0.0
  %3147 = vmatprep.subr.mxu0 0.0
  %3148 = vmatpush1.msra.mxu0 0.0
  %3149 = vmatprep.subr.mxu0 0.0
  %3150 = vmatpush1.msra.mxu0 0.0
  %3151 = vmatprep.subr.mxu0 0.0
  %3152 = vmatpush1.msra.mxu0 0.0
  %3153 = vmatprep.subr.mxu0 0.0
  %3154 = vmatpush1.msra.mxu0 0.0
  %3155 = vmatprep.subr.mxu0 0.0
  %3156 = vmatpush1.msra.mxu0 0.0
  %3157 = vmatprep.subr.mxu0 0.0
  %3158 = vmatpush1.msra.mxu0 0.0
  %3159 = vmatprep.subr.mxu0 0.0
  %3160 = vmatpush1.msra.mxu0 0.0
  %3161 = vmatprep.subr.mxu0 0.0
  %3162 = vmatpush1.msra.mxu0 0.0
  %3163 = vmatprep.subr.mxu0 0.0
  %3164 = vmatpush1.msra.mxu0 0.0
  %3165 = vmatprep.subr.mxu0 0.0
  %3166 = vmatpush1.msra.mxu0 0.0
  %3167 = vmatprep.subr.mxu0 0.0
  %3168 = vmatpush1.msra.mxu0 0.0
  %3169 = vmatprep.subr.mxu0 0.0
  %3170 = vmatpush1.msra.mxu0 0.0
  %3171 = vmatprep.subr.mxu0 0.0
  %3172 = vmatpush1.msra.mxu0 0.0
  %3173 = vmatprep.mubr.f32.mxu0 0.0
  %3174 = vmatmul.mubr.f32.gmra.mrb[0].mxu0 %v315
  %v3175 = vpop.f32.mrb[0].mxu0
  %v3176 = vadd.f32 %v3107, %v3175
  %v3177 = vpop.f32.mrb[0].mxu0
  %3178 = vmatprep.mubr.f32.mxu0 0.0
  %3179 = vmatmul.mubr.f32.gmra.mrb[0].mxu0 %v318
  %v3180 = vpop.f32.mrb[0].mxu0
  %v3181 = vadd.f32 %v3107, %v3180
  %v3182 = vpop.f32.mrb[0].mxu0
  %3183 = vmatprep.mubr.f32.mxu0 0.0
  %3184 = vmatmul.mubr.f32.gmra.mrb[0].mxu0 %v321
  %v3185 = vpop.f32.mrb[0].mxu0
  %v3186 = vadd.f32 %v3107, %v3185
  %v3187 = vpop.f32.mrb[0].mxu0
  %3188 = vmatprep.mubr.f32.mxu0 0.0
  %3189 = vmatmul.mubr.f32.gmra.mrb[0].mxu0 %v324
  %v3190 = vpop.f32.mrb[0].mxu0
  %v3191 = vadd.f32 %v3107, %v3190
  %v3192 = vpop.f32.mrb[0].mxu0
  %3193 = vmatprep.mubr.f32.mxu0 0.0
  %3194 = vmatmul.mubr.f32.gmra.mrb[0].mxu0 %v327
  %v3195 = vpop.f32.mrb[0].mxu0
  %v3196 = vadd.f32 %v3107, %v3195
  %v3197 = vpop.f32.mrb[0].mxu0
  %3198 = vmatprep.mubr.f32.mxu0 0.0
  %3199 = vmatmul.mubr.f32.gmra.mrb[0].mxu0 %v330
  %v3200 = vpop.f32.mrb[0].mxu0
  %v3201 = vadd.f32 %v3107, %v3200
  %v3202 = vpop.f32.mrb[0].mxu0
  %3203 = vmatprep.mubr.f32.mxu0 0.0
  %3204 = vmatmul.mubr.f32.gmra.mrb[0].mxu0 %v333
  %v3205 = vpop.f32.mrb[0].mxu0
  %v3206 = vadd.f32 %v3107, %v3205
  %v3207 = vpop.f32.mrb[0].mxu0
  %3208 = vmatprep.mubr.f32.mxu0 0.0
  %3209 = vmatmul.mubr.f32.gmra.mrb[0].mxu0 %v336
  %v3210 = vpop.f32.mrb[0].mxu0
  %v3211 = vadd.f32 %v3107, %v3210
  %v3212 = vpop.f32.mrb[0].mxu0
  %3213 = vmatprep.mubr.f32.mxu0 0.0
  %3214 = vmatmul.mubr.f32.gmra.mrb[0].mxu0 %v339
  %v3215 = vpop.f32.mrb[0].mxu0
  %v3216 = vadd.f32 %v3107, %v3215
  %v3217 = vpop.f32.mrb[0].mxu0
  %3218 = vmatprep.mubr.f32.mxu0 0.0
  %3219 = vmatmul.mubr.f32.gmra.mrb[0].mxu0 %v342
  %v3220 = vpop.f32.mrb[0].mxu0
  %v3221 = vadd.f32 %v3107, %v3220
  %v3222 = vpop.f32.mrb[0].mxu0
  %3223 = vmatprep.mubr.f32.mxu0 0.0
  %3224 = vmatmul.mubr.f32.gmra.mrb[0].mxu0 %v345
  %v3225 = vpop.f32.mrb[0].mxu0
  %v3226 = vadd.f32 %v3107, %v3225
  %v3227 = vpop.f32.mrb[0].mxu0
  %3228 = vmatprep.mubr.f32.mxu0 0.0
  %3229 = vmatmul.mubr.f32.gmra.mrb[0].mxu0 %v348
  %v3230 = vpop.f32.mrb[0].mxu0
  %v3231 = vadd.f32 %v3107, %v3230
  %v3232 = vpop.f32.mrb[0].mxu0
  %3233 = vmatprep.mubr.f32.mxu0 0.0
  %3234 = vmatmul.mubr.f32.gmra.mrb[0].mxu0 %v351
  %v3235 = vpop.f32.mrb[0].mxu0
  %v3236 = vadd.f32 %v3107, %v3235
  %v3237 = vpop.f32.mrb[0].mxu0
  %3238 = vmatprep.mubr.f32.mxu0 0.0
  %3239 = vmatmul.mubr.f32.gmra.mrb[0].mxu0 %v354
  %v3240 = vpop.f32.mrb[0].mxu0
  %v3241 = vadd.f32 %v3107, %v3240
  %v3242 = vpop.f32.mrb[0].mxu0
  %3243 = vmatprep.mubr.f32.mxu0 0.0
  %3244 = vmatmul.mubr.f32.gmra.mrb[0].mxu0 %v357
  %v3245 = vpop.f32.mrb[0].mxu0
  %v3246 = vadd.f32 %v3107, %v3245
  %v3247 = vpop.f32.mrb[0].mxu0
  %3248 = vmatprep.mubr.f32.mxu0 0.0
  %3249 = vmatmul.mubr.f32.gmra.mrb[0].mxu0 %v360
  %v3250 = vpop.f32.mrb[0].mxu0
  %v3251 = vadd.f32 %v3107, %v3250
  %v3252 = vpop.f32.mrb[0].mxu0
  %3253 = vdwg.mxu0
  %s3254 = scalar_lea.vmem %s1, 256
  %v3255 = vld [vmem:[%s3254] sm:$0xff]
  %v3256 = vld [vmem:[%s3254 + $0x8] sm:$0xff]
  %v3257 = vld [vmem:[%s3254 + $0x10] sm:$0xff]
  %v3258 = vld [vmem:[%s3254 + $0x18] sm:$0xff]
  %v3259 = vld [vmem:[%s3254 + $0x20] sm:$0xff]
  %v3260 = vld [vmem:[%s3254 + $0x28] sm:$0xff]
  %v3261 = vld [vmem:[%s3254 + $0x30] sm:$0xff]
  %v3262 = vld [vmem:[%s3254 + $0x38] sm:$0xff]
  %v3263 = vld [vmem:[%s3254 + $0x40] sm:$0xff]
  %v3264 = vld [vmem:[%s3254 + $0x48] sm:$0xff]
  %v3265 = vld [vmem:[%s3254 + $0x50] sm:$0xff]
  %v3266 = vld [vmem:[%s3254 + $0x58] sm:$0xff]
  %v3267 = vld [vmem:[%s3254 + $0x60] sm:$0xff]
  %v3268 = vld [vmem:[%s3254 + $0x68] sm:$0xff]
  %v3269 = vld [vmem:[%s3254 + $0x70] sm:$0xff]
  %v3270 = vld [vmem:[%s3254 + $0x78] sm:$0xff]
  %v3272 = vsel %vm839, %v2860, 0
  %v3275 = vsel %vm839, %v2865, 0
  %v3278 = vsel %vm839, %v2870, 0
  %v3281 = vsel %vm839, %v2875, 0
  %v3284 = vsel %vm839, %v2880, 0
  %v3287 = vsel %vm839, %v2885, 0
  %v3290 = vsel %vm839, %v2890, 0
  %v3293 = vsel %vm839, %v2895, 0
  %v3296 = vsel %vm839, %v2900, 0
  %v3299 = vsel %vm839, %v2905, 0
  %v3302 = vsel %vm839, %v2910, 0
  %v3305 = vsel %vm839, %v2915, 0
  %v3308 = vsel %vm839, %v2920, 0
  %v3311 = vsel %vm839, %v2925, 0
  %v3314 = vsel %vm839, %v2930, 0
  %v3317 = vsel %vm839, %v2935, 0
  %v3320 = vsel %vm839, %v3018, 0
  %v3323 = vsel %vm839, %v3023, 0
  %v3326 = vsel %vm839, %v3028, 0
  %v3329 = vsel %vm839, %v3033, 0
  %v3332 = vsel %vm839, %v3038, 0
  %v3335 = vsel %vm839, %v3043, 0
  %v3338 = vsel %vm839, %v3048, 0
  %v3341 = vsel %vm839, %v3053, 0
  %v3344 = vsel %vm839, %v3058, 0
  %v3347 = vsel %vm839, %v3063, 0
  %v3350 = vsel %vm839, %v3068, 0
  %v3353 = vsel %vm839, %v3073, 0
  %v3356 = vsel %vm839, %v3078, 0
  %v3359 = vsel %vm839, %v3083, 0
  %v3362 = vsel %vm839, %v3088, 0
  %v3365 = vsel %vm839, %v3093, 0
  %3367 = vmatprep.subr.mxu0 0.0
  %3368 = vmatpush1.xpose.msra.mxu0 %v3320
  %3369 = vmatprep.subr.mxu0 0.0
  %3370 = vmatpush1.xpose.msra.mxu0 %v3323
  %3371 = vmatprep.subr.mxu0 0.0
  %3372 = vmatpush1.xpose.msra.mxu0 %v3326
  %3373 = vmatprep.subr.mxu0 0.0
  %3374 = vmatpush1.xpose.msra.mxu0 %v3329
  %3375 = vmatprep.subr.mxu0 0.0
  %3376 = vmatpush1.xpose.msra.mxu0 %v3332
  %3377 = vmatprep.subr.mxu0 0.0
  %3378 = vmatpush1.xpose.msra.mxu0 %v3335
  %3379 = vmatprep.subr.mxu0 0.0
  %3380 = vmatpush1.xpose.msra.mxu0 %v3338
  %3381 = vmatprep.subr.mxu0 0.0
  %3382 = vmatpush1.xpose.msra.mxu0 %v3341
  %3383 = vmatprep.subr.mxu0 0.0
  %3384 = vmatpush1.xpose.msra.mxu0 %v3344
  %3385 = vmatprep.subr.mxu0 0.0
  %3386 = vmatpush1.xpose.msra.mxu0 %v3347
  %3387 = vmatprep.subr.mxu0 0.0
  %3388 = vmatpush1.xpose.msra.mxu0 %v3350
  %3389 = vmatprep.subr.mxu0 0.0
  %3390 = vmatpush1.xpose.msra.mxu0 %v3353
  %3391 = vmatprep.subr.mxu0 0.0
  %3392 = vmatpush1.xpose.msra.mxu0 %v3356
  %3393 = vmatprep.subr.mxu0 0.0
  %3394 = vmatpush1.xpose.msra.mxu0 %v3359
  %3395 = vmatprep.subr.mxu0 0.0
  %3396 = vmatpush1.xpose.msra.mxu0 %v3362
  %3397 = vmatprep.subr.mxu0 0.0
  %3398 = vmatpush1.xpose.msra.mxu0 %v3365
  %3399 = vmatprep.subr.mxu0 0.0
  %3400 = vmatpush1.xpose.msra.mxu0 0.0
  %3401 = vmatprep.subr.mxu0 0.0
  %3402 = vmatpush1.xpose.msra.mxu0 0.0
  %3403 = vmatprep.subr.mxu0 0.0
  %3404 = vmatpush1.xpose.msra.mxu0 0.0
  %3405 = vmatprep.subr.mxu0 0.0
  %3406 = vmatpush1.xpose.msra.mxu0 0.0
  %3407 = vmatprep.subr.mxu0 0.0
  %3408 = vmatpush1.xpose.msra.mxu0 0.0
  %3409 = vmatprep.subr.mxu0 0.0
  %3410 = vmatpush1.xpose.msra.mxu0 0.0
  %3411 = vmatprep.subr.mxu0 0.0
  %3412 = vmatpush1.xpose.msra.mxu0 0.0
  %3413 = vmatprep.subr.mxu0 0.0
  %3414 = vmatpush1.xpose.msra.mxu0 0.0
  %3415 = vmatprep.subr.mxu0 0.0
  %3416 = vmatpush1.xpose.msra.mxu0 0.0
  %3417 = vmatprep.subr.mxu0 0.0
  %3418 = vmatpush1.xpose.msra.mxu0 0.0
  %3419 = vmatprep.subr.mxu0 0.0
  %3420 = vmatpush1.xpose.msra.mxu0 0.0
  %3421 = vmatprep.subr.mxu0 0.0
  %3422 = vmatpush1.xpose.msra.mxu0 0.0
  %3423 = vmatprep.subr.mxu0 0.0
  %3424 = vmatpush1.xpose.msra.mxu0 0.0
  %3425 = vmatprep.subr.mxu0 0.0
  %3426 = vmatpush1.xpose.msra.mxu0 0.0
  %3427 = vmatprep.subr.mxu0 0.0
  %3428 = vmatpush1.xpose.msra.mxu0 0.0
  %3429 = vmatprep.subr.mxu0 0.0
  %3430 = vmatpush1.xpose.msra.mxu0 0.0
  %3431 = vmatprep.mubr.f32.mxu0 0.0
  %3432 = vmatmul.mubr.f32.gmra.mrb[0].mxu0 %v3272
  %v3433 = vpop.f32.mrb[0].mxu0
  %v3434 = vadd.f32 %v3255, %v3433
  %v3435 = vpop.f32.mrb[0].mxu0
  %3436 = vmatprep.mubr.f32.mxu0 0.0
  %3437 = vmatmul.mubr.f32.gmra.mrb[0].mxu0 %v3275
  %v3438 = vpop.f32.mrb[0].mxu0
  %v3439 = vadd.f32 %v3256, %v3438
  %v3440 = vpop.f32.mrb[0].mxu0
  %3441 = vmatprep.mubr.f32.mxu0 0.0
  %3442 = vmatmul.mubr.f32.gmra.mrb[0].mxu0 %v3278
  %v3443 = vpop.f32.mrb[0].mxu0
  %v3444 = vadd.f32 %v3257, %v3443
  %v3445 = vpop.f32.mrb[0].mxu0
  %3446 = vmatprep.mubr.f32.mxu0 0.0
  %3447 = vmatmul.mubr.f32.gmra.mrb[0].mxu0 %v3281
  %v3448 = vpop.f32.mrb[0].mxu0
  %v3449 = vadd.f32 %v3258, %v3448
  %v3450 = vpop.f32.mrb[0].mxu0
  %3451 = vmatprep.mubr.f32.mxu0 0.0
  %3452 = vmatmul.mubr.f32.gmra.mrb[0].mxu0 %v3284
  %v3453 = vpop.f32.mrb[0].mxu0
  %v3454 = vadd.f32 %v3259, %v3453
  %v3455 = vpop.f32.mrb[0].mxu0
  %3456 = vmatprep.mubr.f32.mxu0 0.0
  %3457 = vmatmul.mubr.f32.gmra.mrb[0].mxu0 %v3287
  %v3458 = vpop.f32.mrb[0].mxu0
  %v3459 = vadd.f32 %v3260, %v3458
  %v3460 = vpop.f32.mrb[0].mxu0
  %3461 = vmatprep.mubr.f32.mxu0 0.0
  %3462 = vmatmul.mubr.f32.gmra.mrb[0].mxu0 %v3290
  %v3463 = vpop.f32.mrb[0].mxu0
  %v3464 = vadd.f32 %v3261, %v3463
  %v3465 = vpop.f32.mrb[0].mxu0
  %3466 = vmatprep.mubr.f32.mxu0 0.0
  %3467 = vmatmul.mubr.f32.gmra.mrb[0].mxu0 %v3293
  %v3468 = vpop.f32.mrb[0].mxu0
  %v3469 = vadd.f32 %v3262, %v3468
  %v3470 = vpop.f32.mrb[0].mxu0
  %3471 = vmatprep.mubr.f32.mxu0 0.0
  %3472 = vmatmul.mubr.f32.gmra.mrb[0].mxu0 %v3296
  %v3473 = vpop.f32.mrb[0].mxu0
  %v3474 = vadd.f32 %v3263, %v3473
  %v3475 = vpop.f32.mrb[0].mxu0
  %3476 = vmatprep.mubr.f32.mxu0 0.0
  %3477 = vmatmul.mubr.f32.gmra.mrb[0].mxu0 %v3299
  %v3478 = vpop.f32.mrb[0].mxu0
  %v3479 = vadd.f32 %v3264, %v3478
  %v3480 = vpop.f32.mrb[0].mxu0
  %3481 = vmatprep.mubr.f32.mxu0 0.0
  %3482 = vmatmul.mubr.f32.gmra.mrb[0].mxu0 %v3302
  %v3483 = vpop.f32.mrb[0].mxu0
  %v3484 = vadd.f32 %v3265, %v3483
  %v3485 = vpop.f32.mrb[0].mxu0
  %3486 = vmatprep.mubr.f32.mxu0 0.0
  %3487 = vmatmul.mubr.f32.gmra.mrb[0].mxu0 %v3305
  %v3488 = vpop.f32.mrb[0].mxu0
  %v3489 = vadd.f32 %v3266, %v3488
  %v3490 = vpop.f32.mrb[0].mxu0
  %3491 = vmatprep.mubr.f32.mxu0 0.0
  %3492 = vmatmul.mubr.f32.gmra.mrb[0].mxu0 %v3308
  %v3493 = vpop.f32.mrb[0].mxu0
  %v3494 = vadd.f32 %v3267, %v3493
  %v3495 = vpop.f32.mrb[0].mxu0
  %3496 = vmatprep.mubr.f32.mxu0 0.0
  %3497 = vmatmul.mubr.f32.gmra.mrb[0].mxu0 %v3311
  %v3498 = vpop.f32.mrb[0].mxu0
  %v3499 = vadd.f32 %v3268, %v3498
  %v3500 = vpop.f32.mrb[0].mxu0
  %3501 = vmatprep.mubr.f32.mxu0 0.0
  %3502 = vmatmul.mubr.f32.gmra.mrb[0].mxu0 %v3314
  %v3503 = vpop.f32.mrb[0].mxu0
  %v3504 = vadd.f32 %v3269, %v3503
  %v3505 = vpop.f32.mrb[0].mxu0
  %3506 = vmatprep.mubr.f32.mxu0 0.0
  %3507 = vmatmul.mubr.f32.gmra.mrb[0].mxu0 %v3317
  %v3508 = vpop.f32.mrb[0].mxu0
  %v3509 = vadd.f32 %v3270, %v3508
  %v3510 = vpop.f32.mrb[0].mxu0
  %3511 = vdwg.mxu0
  %3512 = vmax.xlane.f32.xlu0 %v3434
  %v3513 = vpop.xlane.xlu0 %3512
  %3514 = vmax.xlane.f32.xlu0 %v3439
  %v3515 = vpop.xlane.xlu0 %3514
  %3516 = vmax.xlane.f32.xlu0 %v3444
  %v3517 = vpop.xlane.xlu0 %3516
  %3518 = vmax.xlane.f32.xlu0 %v3449
  %v3519 = vpop.xlane.xlu0 %3518
  %3520 = vmax.xlane.f32.xlu0 %v3454
  %v3521 = vpop.xlane.xlu0 %3520
  %3522 = vmax.xlane.f32.xlu0 %v3459
  %v3523 = vpop.xlane.xlu0 %3522
  %3524 = vmax.xlane.f32.xlu0 %v3464
  %v3525 = vpop.xlane.xlu0 %3524
  %3526 = vmax.xlane.f32.xlu0 %v3469
  %v3527 = vpop.xlane.xlu0 %3526
  %3528 = vmax.xlane.f32.xlu0 %v3474
  %v3529 = vpop.xlane.xlu0 %3528
  %3530 = vmax.xlane.f32.xlu0 %v3479
  %v3531 = vpop.xlane.xlu0 %3530
  %3532 = vmax.xlane.f32.xlu0 %v3484
  %v3533 = vpop.xlane.xlu0 %3532
  %3534 = vmax.xlane.f32.xlu0 %v3489
  %v3535 = vpop.xlane.xlu0 %3534
  %3536 = vmax.xlane.f32.xlu0 %v3494
  %v3537 = vpop.xlane.xlu0 %3536
  %3538 = vmax.xlane.f32.xlu0 %v3499
  %v3539 = vpop.xlane.xlu0 %3538
  %3540 = vmax.xlane.f32.xlu0 %v3504
  %v3541 = vpop.xlane.xlu0 %3540
  %3542 = vmax.xlane.f32.xlu0 %v3509
  %v3543 = vpop.xlane.xlu0 %3542
  %v3544 = vsub.f32 %v3434, %v3513
  %v3545 = vsub.f32 %v3439, %v3515
  %v3546 = vsub.f32 %v3444, %v3517
  %v3547 = vsub.f32 %v3449, %v3519
  %v3548 = vsub.f32 %v3454, %v3521
  %v3549 = vsub.f32 %v3459, %v3523
  %v3550 = vsub.f32 %v3464, %v3525
  %v3551 = vsub.f32 %v3469, %v3527
  %v3552 = vsub.f32 %v3474, %v3529
  %v3553 = vsub.f32 %v3479, %v3531
  %v3554 = vsub.f32 %v3484, %v3533
  %v3555 = vsub.f32 %v3489, %v3535
  %v3556 = vsub.f32 %v3494, %v3537
  %v3557 = vsub.f32 %v3499, %v3539
  %v3558 = vsub.f32 %v3504, %v3541
  %v3559 = vsub.f32 %v3509, %v3543
  %v3560 = vmul.f32 %v3544, 1.442695
  %v3561 = vpow.pop %v3560
  %v3562 = vmul.f32 %v3545, 1.442695
  %v3563 = vpow.pop %v3562
  %v3564 = vmul.f32 %v3546, 1.442695
  %v3565 = vpow.pop %v3564
  %v3566 = vmul.f32 %v3547, 1.442695
  %v3567 = vpow.pop %v3566
  %v3568 = vmul.f32 %v3548, 1.442695
  %v3569 = vpow.pop %v3568
  %v3570 = vmul.f32 %v3549, 1.442695
  %v3571 = vpow.pop %v3570
  %v3572 = vmul.f32 %v3550, 1.442695
  %v3573 = vpow.pop %v3572
  %v3574 = vmul.f32 %v3551, 1.442695
  %v3575 = vpow.pop %v3574
  %v3576 = vmul.f32 %v3552, 1.442695
  %v3577 = vpow.pop %v3576
  %v3578 = vmul.f32 %v3553, 1.442695
  %v3579 = vpow.pop %v3578
  %v3580 = vmul.f32 %v3554, 1.442695
  %v3581 = vpow.pop %v3580
  %v3582 = vmul.f32 %v3555, 1.442695
  %v3583 = vpow.pop %v3582
  %v3584 = vmul.f32 %v3556, 1.442695
  %v3585 = vpow.pop %v3584
  %v3586 = vmul.f32 %v3557, 1.442695
  %v3587 = vpow.pop %v3586
  %v3588 = vmul.f32 %v3558, 1.442695
  %v3589 = vpow.pop %v3588
  %v3590 = vmul.f32 %v3559, 1.442695
  %v3591 = vpow.pop %v3590
  %3592 = vadd.xlane.f32.xlu0 %v3561
  %v3593 = vpop.xlane.xlu0 %3592
  %3594 = vadd.xlane.f32.xlu0 %v3563
  %v3595 = vpop.xlane.xlu0 %3594
  %3596 = vadd.xlane.f32.xlu0 %v3565
  %v3597 = vpop.xlane.xlu0 %3596
  %3598 = vadd.xlane.f32.xlu0 %v3567
  %v3599 = vpop.xlane.xlu0 %3598
  %3600 = vadd.xlane.f32.xlu0 %v3569
  %v3601 = vpop.xlane.xlu0 %3600
  %3602 = vadd.xlane.f32.xlu0 %v3571
  %v3603 = vpop.xlane.xlu0 %3602
  %3604 = vadd.xlane.f32.xlu0 %v3573
  %v3605 = vpop.xlane.xlu0 %3604
  %3606 = vadd.xlane.f32.xlu0 %v3575
  %v3607 = vpop.xlane.xlu0 %3606
  %3608 = vadd.xlane.f32.xlu0 %v3577
  %v3609 = vpop.xlane.xlu0 %3608
  %3610 = vadd.xlane.f32.xlu0 %v3579
  %v3611 = vpop.xlane.xlu0 %3610
  %3612 = vadd.xlane.f32.xlu0 %v3581
  %v3613 = vpop.xlane.xlu0 %3612
  %3614 = vadd.xlane.f32.xlu0 %v3583
  %v3615 = vpop.xlane.xlu0 %3614
  %3616 = vadd.xlane.f32.xlu0 %v3585
  %v3617 = vpop.xlane.xlu0 %3616
  %3618 = vadd.xlane.f32.xlu0 %v3587
  %v3619 = vpop.xlane.xlu0 %3618
  %3620 = vadd.xlane.f32.xlu0 %v3589
  %v3621 = vpop.xlane.xlu0 %3620
  %3622 = vadd.xlane.f32.xlu0 %v3591
  %v3623 = vpop.xlane.xlu0 %3622
  %v3624 = vrcp.pop %v3593
  %v3625 = vrcp.pop %v3595
  %v3626 = vrcp.pop %v3597
  %v3627 = vrcp.pop %v3599
  %v3628 = vrcp.pop %v3601
  %v3629 = vrcp.pop %v3603
  %v3630 = vrcp.pop %v3605
  %v3631 = vrcp.pop %v3607
  %v3632 = vrcp.pop %v3609
  %v3633 = vrcp.pop %v3611
  %v3634 = vrcp.pop %v3613
  %v3635 = vrcp.pop %v3615
  %v3636 = vrcp.pop %v3617
  %v3637 = vrcp.pop %v3619
  %v3638 = vrcp.pop %v3621
  %v3639 = vrcp.pop %v3623
  %v3640 = vmul.f32 %v3561, %v3624
  %v3641 = vmul.f32 %v3563, %v3625
  %v3642 = vmul.f32 %v3565, %v3626
  %v3643 = vmul.f32 %v3567, %v3627
  %v3644 = vmul.f32 %v3569, %v3628
  %v3645 = vmul.f32 %v3571, %v3629
  %v3646 = vmul.f32 %v3573, %v3630
  %v3647 = vmul.f32 %v3575, %v3631
  %v3648 = vmul.f32 %v3577, %v3632
  %v3649 = vmul.f32 %v3579, %v3633
  %v3650 = vmul.f32 %v3581, %v3634
  %v3651 = vmul.f32 %v3583, %v3635
  %v3652 = vmul.f32 %v3585, %v3636
  %v3653 = vmul.f32 %v3587, %v3637
  %v3654 = vmul.f32 %v3589, %v3638
  %v3655 = vmul.f32 %v3591, %v3639
  %3656 = vmatprep.subr.mxu0 0.0
  %3657 = vmatpush1.msra.mxu0 %v3176
  %3658 = vmatprep.subr.mxu0 0.0
  %3659 = vmatpush1.msra.mxu0 %v3181
  %3660 = vmatprep.subr.mxu0 0.0
  %3661 = vmatpush1.msra.mxu0 %v3186
  %3662 = vmatprep.subr.mxu0 0.0
  %3663 = vmatpush1.msra.mxu0 %v3191
  %3664 = vmatprep.subr.mxu0 0.0
  %3665 = vmatpush1.msra.mxu0 %v3196
  %3666 = vmatprep.subr.mxu0 0.0
  %3667 = vmatpush1.msra.mxu0 %v3201
  %3668 = vmatprep.subr.mxu0 0.0
  %3669 = vmatpush1.msra.mxu0 %v3206
  %3670 = vmatprep.subr.mxu0 0.0
  %3671 = vmatpush1.msra.mxu0 %v3211
  %3672 = vmatprep.subr.mxu0 0.0
  %3673 = vmatpush1.msra.mxu0 %v3216
  %3674 = vmatprep.subr.mxu0 0.0
  %3675 = vmatpush1.msra.mxu0 %v3221
  %3676 = vmatprep.subr.mxu0 0.0
  %3677 = vmatpush1.msra.mxu0 %v3226
  %3678 = vmatprep.subr.mxu0 0.0
  %3679 = vmatpush1.msra.mxu0 %v3231
  %3680 = vmatprep.subr.mxu0 0.0
  %3681 = vmatpush1.msra.mxu0 %v3236
  %3682 = vmatprep.subr.mxu0 0.0
  %3683 = vmatpush1.msra.mxu0 %v3241
  %3684 = vmatprep.subr.mxu0 0.0
  %3685 = vmatpush1.msra.mxu0 %v3246
  %3686 = vmatprep.subr.mxu0 0.0
  %3687 = vmatpush1.msra.mxu0 %v3251
  %3688 = vmatprep.subr.mxu0 0.0
  %3689 = vmatpush1.msra.mxu0 0.0
  %3690 = vmatprep.subr.mxu0 0.0
  %3691 = vmatpush1.msra.mxu0 0.0
  %3692 = vmatprep.subr.mxu0 0.0
  %3693 = vmatpush1.msra.mxu0 0.0
  %3694 = vmatprep.subr.mxu0 0.0
  %3695 = vmatpush1.msra.mxu0 0.0
  %3696 = vmatprep.subr.mxu0 0.0
  %3697 = vmatpush1.msra.mxu0 0.0
  %3698 = vmatprep.subr.mxu0 0.0
  %3699 = vmatpush1.msra.mxu0 0.0
  %3700 = vmatprep.subr.mxu0 0.0
  %3701 = vmatpush1.msra.mxu0 0.0
  %3702 = vmatprep.subr.mxu0 0.0
  %3703 = vmatpush1.msra.mxu0 0.0
  %3704 = vmatprep.subr.mxu0 0.0
  %3705 = vmatpush1.msra.mxu0 0.0
  %3706 = vmatprep.subr.mxu0 0.0
  %3707 = vmatpush1.msra.mxu0 0.0
  %3708 = vmatprep.subr.mxu0 0.0
  %3709 = vmatpush1.msra.mxu0 0.0
  %3710 = vmatprep.subr.mxu0 0.0
  %3711 = vmatpush1.msra.mxu0 0.0
  %3712 = vmatprep.subr.mxu0 0.0
  %3713 = vmatpush1.msra.mxu0 0.0
  %3714 = vmatprep.subr.mxu0 0.0
  %3715 = vmatpush1.msra.mxu0 0.0
  %3716 = vmatprep.subr.mxu0 0.0
  %3717 = vmatpush1.msra.mxu0 0.0
  %3718 = vmatprep.subr.mxu0 0.0
  %3719 = vmatpush1.msra.mxu0 0.0
  %3720 = vmatprep.mubr.f32.mxu0 0.0
  %3721 = vmatmul.mubr.f32.gmra.mrb[0].mxu0 %v3640
  %v3722 = vpop.f32.mrb[0].mxu0
  %v3723 = vadd.f32 0.0, %v3722
  %v3724 = vpop.f32.mrb[0].mxu0
  %3725 = vmatprep.mubr.f32.mxu0 0.0
  %3726 = vmatmul.mubr.f32.gmra.mrb[0].mxu0 %v3641
  %v3727 = vpop.f32.mrb[0].mxu0
  %v3728 = vadd.f32 0.0, %v3727
  %v3729 = vpop.f32.mrb[0].mxu0
  %3730 = vmatprep.mubr.f32.mxu0 0.0
  %3731 = vmatmul.mubr.f32.gmra.mrb[0].mxu0 %v3642
  %v3732 = vpop.f32.mrb[0].mxu0
  %v3733 = vadd.f32 0.0, %v3732
  %v3734 = vpop.f32.mrb[0].mxu0
  %3735 = vmatprep.mubr.f32.mxu0 0.0
  %3736 = vmatmul.mubr.f32.gmra.mrb[0].mxu0 %v3643
  %v3737 = vpop.f32.mrb[0].mxu0
  %v3738 = vadd.f32 0.0, %v3737
  %v3739 = vpop.f32.mrb[0].mxu0
  %3740 = vmatprep.mubr.f32.mxu0 0.0
  %3741 = vmatmul.mubr.f32.gmra.mrb[0].mxu0 %v3644
  %v3742 = vpop.f32.mrb[0].mxu0
  %v3743 = vadd.f32 0.0, %v3742
  %v3744 = vpop.f32.mrb[0].mxu0
  %3745 = vmatprep.mubr.f32.mxu0 0.0
  %3746 = vmatmul.mubr.f32.gmra.mrb[0].mxu0 %v3645
  %v3747 = vpop.f32.mrb[0].mxu0
  %v3748 = vadd.f32 0.0, %v3747
  %v3749 = vpop.f32.mrb[0].mxu0
  %3750 = vmatprep.mubr.f32.mxu0 0.0
  %3751 = vmatmul.mubr.f32.gmra.mrb[0].mxu0 %v3646
  %v3752 = vpop.f32.mrb[0].mxu0
  %v3753 = vadd.f32 0.0, %v3752
  %v3754 = vpop.f32.mrb[0].mxu0
  %3755 = vmatprep.mubr.f32.mxu0 0.0
  %3756 = vmatmul.mubr.f32.gmra.mrb[0].mxu0 %v3647
  %v3757 = vpop.f32.mrb[0].mxu0
  %v3758 = vadd.f32 0.0, %v3757
  %v3759 = vpop.f32.mrb[0].mxu0
  %3760 = vmatprep.mubr.f32.mxu0 0.0
  %3761 = vmatmul.mubr.f32.gmra.mrb[0].mxu0 %v3648
  %v3762 = vpop.f32.mrb[0].mxu0
  %v3763 = vadd.f32 0.0, %v3762
  %v3764 = vpop.f32.mrb[0].mxu0
  %3765 = vmatprep.mubr.f32.mxu0 0.0
  %3766 = vmatmul.mubr.f32.gmra.mrb[0].mxu0 %v3649
  %v3767 = vpop.f32.mrb[0].mxu0
  %v3768 = vadd.f32 0.0, %v3767
  %v3769 = vpop.f32.mrb[0].mxu0
  %3770 = vmatprep.mubr.f32.mxu0 0.0
  %3771 = vmatmul.mubr.f32.gmra.mrb[0].mxu0 %v3650
  %v3772 = vpop.f32.mrb[0].mxu0
  %v3773 = vadd.f32 0.0, %v3772
  %v3774 = vpop.f32.mrb[0].mxu0
  %3775 = vmatprep.mubr.f32.mxu0 0.0
  %3776 = vmatmul.mubr.f32.gmra.mrb[0].mxu0 %v3651
  %v3777 = vpop.f32.mrb[0].mxu0
  %v3778 = vadd.f32 0.0, %v3777
  %v3779 = vpop.f32.mrb[0].mxu0
  %3780 = vmatprep.mubr.f32.mxu0 0.0
  %3781 = vmatmul.mubr.f32.gmra.mrb[0].mxu0 %v3652
  %v3782 = vpop.f32.mrb[0].mxu0
  %v3783 = vadd.f32 0.0, %v3782
  %v3784 = vpop.f32.mrb[0].mxu0
  %3785 = vmatprep.mubr.f32.mxu0 0.0
  %3786 = vmatmul.mubr.f32.gmra.mrb[0].mxu0 %v3653
  %v3787 = vpop.f32.mrb[0].mxu0
  %v3788 = vadd.f32 0.0, %v3787
  %v3789 = vpop.f32.mrb[0].mxu0
  %3790 = vmatprep.mubr.f32.mxu0 0.0
  %3791 = vmatmul.mubr.f32.gmra.mrb[0].mxu0 %v3654
  %v3792 = vpop.f32.mrb[0].mxu0
  %v3793 = vadd.f32 0.0, %v3792
  %v3794 = vpop.f32.mrb[0].mxu0
  %3795 = vmatprep.mubr.f32.mxu0 0.0
  %3796 = vmatmul.mubr.f32.gmra.mrb[0].mxu0 %v3655
  %v3797 = vpop.f32.mrb[0].mxu0
  %v3798 = vadd.f32 0.0, %v3797
  %v3799 = vpop.f32.mrb[0].mxu0
  %3800 = vdwg.mxu0
  %s3801 = scalar_lea.vmem %s5, 16
  %v3802 = vld [vmem:[%s3801] sm:$0xff]
  %v3804 = vsel %vm839, %v3723, 0
  %v3807 = vsel %vm839, %v3728, 0
  %v3810 = vsel %vm839, %v3733, 0
  %v3813 = vsel %vm839, %v3738, 0
  %v3816 = vsel %vm839, %v3743, 0
  %v3819 = vsel %vm839, %v3748, 0
  %v3822 = vsel %vm839, %v3753, 0
  %v3825 = vsel %vm839, %v3758, 0
  %v3828 = vsel %vm839, %v3763, 0
  %v3831 = vsel %vm839, %v3768, 0
  %v3834 = vsel %vm839, %v3773, 0
  %v3837 = vsel %vm839, %v3778, 0
  %v3840 = vsel %vm839, %v3783, 0
  %v3843 = vsel %vm839, %v3788, 0
  %v3846 = vsel %vm839, %v3793, 0
  %v3849 = vsel %vm839, %v3798, 0
  %3851 = vmatprep.subr.mxu0 0.0
  %3852 = vmatpush1.msra.mxu0 %v3802
  %3853 = vmatprep.subr.mxu0 0.0
  %3854 = vmatpush1.msra.mxu0 0.0
  %3855 = vmatprep.subr.mxu0 0.0
  %3856 = vmatpush1.msra.mxu0 0.0
  %3857 = vmatprep.subr.mxu0 0.0
  %3858 = vmatpush1.msra.mxu0 0.0
  %3859 = vmatprep.subr.mxu0 0.0
  %3860 = vmatpush1.msra.mxu0 0.0
  %3861 = vmatprep.subr.mxu0 0.0
  %3862 = vmatpush1.msra.mxu0 0.0
  %3863 = vmatprep.subr.mxu0 0.0
  %3864 = vmatpush1.msra.mxu0 0.0
  %3865 = vmatprep.subr.mxu0 0.0
  %3866 = vmatpush1.msra.mxu0 0.0
  %3867 = vmatprep.subr.mxu0 0.0
  %3868 = vmatpush1.msra.mxu0 0.0
  %3869 = vmatprep.subr.mxu0 0.0
  %3870 = vmatpush1.msra.mxu0 0.0
  %3871 = vmatprep.subr.mxu0 0.0
  %3872 = vmatpush1.msra.mxu0 0.0
  %3873 = vmatprep.subr.mxu0 0.0
  %3874 = vmatpush1.msra.mxu0 0.0
  %3875 = vmatprep.subr.mxu0 0.0
  %3876 = vmatpush1.msra.mxu0 0.0
  %3877 = vmatprep.subr.mxu0 0.0
  %3878 = vmatpush1.msra.mxu0 0.0
  %3879 = vmatprep.subr.mxu0 0.0
  %3880 = vmatpush1.msra.mxu0 0.0
  %3881 = vmatprep.subr.mxu0 0.0
  %3882 = vmatpush1.msra.mxu0 0.0
  %3883 = vmatprep.subr.mxu0 0.0
  %3884 = vmatpush1.msra.mxu0 0.0
  %3885 = vmatprep.subr.mxu0 0.0
  %3886 = vmatpush1.msra.mxu0 0.0
  %3887 = vmatprep.subr.mxu0 0.0
  %3888 = vmatpush1.msra.mxu0 0.0
  %3889 = vmatprep.subr.mxu0 0.0
  %3890 = vmatpush1.msra.mxu0 0.0
  %3891 = vmatprep.subr.mxu0 0.0
  %3892 = vmatpush1.msra.mxu0 0.0
  %3893 = vmatprep.subr.mxu0 0.0
  %3894 = vmatpush1.msra.mxu0 0.0
  %3895 = vmatprep.subr.mxu0 0.0
  %3896 = vmatpush1.msra.mxu0 0.0
  %3897 = vmatprep.subr.mxu0 0.0
  %3898 = vmatpush1.msra.mxu0 0.0
  %3899 = vmatprep.subr.mxu0 0.0
  %3900 = vmatpush1.msra.mxu0 0.0
  %3901 = vmatprep.subr.mxu0 0.0
  %3902 = vmatpush1.msra.mxu0 0.0
  %3903 = vmatprep.subr.mxu0 0.0
  %3904 = vmatpush1.msra.mxu0 0.0
  %3905 = vmatprep.subr.mxu0 0.0
  %3906 = vmatpush1.msra.mxu0 0.0
  %3907 = vmatprep.subr.mxu0 0.0
  %3908 = vmatpush1.msra.mxu0 0.0
  %3909 = vmatprep.subr.mxu0 0.0
  %3910 = vmatpush1.msra.mxu0 0.0
  %3911 = vmatprep.subr.mxu0 0.0
  %3912 = vmatpush1.msra.mxu0 0.0
  %3913 = vmatprep.subr.mxu0 0.0
  %3914 = vmatpush1.msra.mxu0 0.0
  %3915 = vmatprep.mubr.f32.mxu0 0.0
  %3916 = vmatmul.mubr.f32.gmra.mrb[0].mxu0 %v3804
  %v3917 = vpop.f32.mrb[0].mxu0
  %v3918 = vadd.f32 0.0, %v3917
  %v3919 = vpop.f32.mrb[0].mxu0
  %3920 = vmatprep.mubr.f32.mxu0 0.0
  %3921 = vmatmul.mubr.f32.gmra.mrb[0].mxu0 %v3807
  %v3922 = vpop.f32.mrb[0].mxu0
  %v3923 = vadd.f32 0.0, %v3922
  %v3924 = vpop.f32.mrb[0].mxu0
  %3925 = vmatprep.mubr.f32.mxu0 0.0
  %3926 = vmatmul.mubr.f32.gmra.mrb[0].mxu0 %v3810
  %v3927 = vpop.f32.mrb[0].mxu0
  %v3928 = vadd.f32 0.0, %v3927
  %v3929 = vpop.f32.mrb[0].mxu0
  %3930 = vmatprep.mubr.f32.mxu0 0.0
  %3931 = vmatmul.mubr.f32.gmra.mrb[0].mxu0 %v3813
  %v3932 = vpop.f32.mrb[0].mxu0
  %v3933 = vadd.f32 0.0, %v3932
  %v3934 = vpop.f32.mrb[0].mxu0
  %3935 = vmatprep.mubr.f32.mxu0 0.0
  %3936 = vmatmul.mubr.f32.gmra.mrb[0].mxu0 %v3816
  %v3937 = vpop.f32.mrb[0].mxu0
  %v3938 = vadd.f32 0.0, %v3937
  %v3939 = vpop.f32.mrb[0].mxu0
  %3940 = vmatprep.mubr.f32.mxu0 0.0
  %3941 = vmatmul.mubr.f32.gmra.mrb[0].mxu0 %v3819
  %v3942 = vpop.f32.mrb[0].mxu0
  %v3943 = vadd.f32 0.0, %v3942
  %v3944 = vpop.f32.mrb[0].mxu0
  %3945 = vmatprep.mubr.f32.mxu0 0.0
  %3946 = vmatmul.mubr.f32.gmra.mrb[0].mxu0 %v3822
  %v3947 = vpop.f32.mrb[0].mxu0
  %v3948 = vadd.f32 0.0, %v3947
  %v3949 = vpop.f32.mrb[0].mxu0
  %3950 = vmatprep.mubr.f32.mxu0 0.0
  %3951 = vmatmul.mubr.f32.gmra.mrb[0].mxu0 %v3825
  %v3952 = vpop.f32.mrb[0].mxu0
  %v3953 = vadd.f32 0.0, %v3952
  %v3954 = vpop.f32.mrb[0].mxu0
  %3955 = vmatprep.mubr.f32.mxu0 0.0
  %3956 = vmatmul.mubr.f32.gmra.mrb[0].mxu0 %v3828
  %v3957 = vpop.f32.mrb[0].mxu0
  %v3958 = vadd.f32 0.0, %v3957
  %v3959 = vpop.f32.mrb[0].mxu0
  %3960 = vmatprep.mubr.f32.mxu0 0.0
  %3961 = vmatmul.mubr.f32.gmra.mrb[0].mxu0 %v3831
  %v3962 = vpop.f32.mrb[0].mxu0
  %v3963 = vadd.f32 0.0, %v3962
  %v3964 = vpop.f32.mrb[0].mxu0
  %3965 = vmatprep.mubr.f32.mxu0 0.0
  %3966 = vmatmul.mubr.f32.gmra.mrb[0].mxu0 %v3834
  %v3967 = vpop.f32.mrb[0].mxu0
  %v3968 = vadd.f32 0.0, %v3967
  %v3969 = vpop.f32.mrb[0].mxu0
  %3970 = vmatprep.mubr.f32.mxu0 0.0
  %3971 = vmatmul.mubr.f32.gmra.mrb[0].mxu0 %v3837
  %v3972 = vpop.f32.mrb[0].mxu0
  %v3973 = vadd.f32 0.0, %v3972
  %v3974 = vpop.f32.mrb[0].mxu0
  %3975 = vmatprep.mubr.f32.mxu0 0.0
  %3976 = vmatmul.mubr.f32.gmra.mrb[0].mxu0 %v3840
  %v3977 = vpop.f32.mrb[0].mxu0
  %v3978 = vadd.f32 0.0, %v3977
  %v3979 = vpop.f32.mrb[0].mxu0
  %3980 = vmatprep.mubr.f32.mxu0 0.0
  %3981 = vmatmul.mubr.f32.gmra.mrb[0].mxu0 %v3843
  %v3982 = vpop.f32.mrb[0].mxu0
  %v3983 = vadd.f32 0.0, %v3982
  %v3984 = vpop.f32.mrb[0].mxu0
  %3985 = vmatprep.mubr.f32.mxu0 0.0
  %3986 = vmatmul.mubr.f32.gmra.mrb[0].mxu0 %v3846
  %v3987 = vpop.f32.mrb[0].mxu0
  %v3988 = vadd.f32 0.0, %v3987
  %v3989 = vpop.f32.mrb[0].mxu0
  %3990 = vmatprep.mubr.f32.mxu0 0.0
  %3991 = vmatmul.mubr.f32.gmra.mrb[0].mxu0 %v3849
  %v3992 = vpop.f32.mrb[0].mxu0
  %v3993 = vadd.f32 0.0, %v3992
  %v3994 = vpop.f32.mrb[0].mxu0
  %3995 = vdwg.mxu0
  %v3996 = vadd.f32 %v2702, %v3918
  %v3997 = vadd.f32 %v2707, %v3923
  %v3998 = vadd.f32 %v2712, %v3928
  %v3999 = vadd.f32 %v2717, %v3933
  %v4000 = vadd.f32 %v2722, %v3938
  %v4001 = vadd.f32 %v2727, %v3943
  %v4002 = vadd.f32 %v2732, %v3948
  %v4003 = vadd.f32 %v2737, %v3953
  %v4004 = vadd.f32 %v2742, %v3958
  %v4005 = vadd.f32 %v2747, %v3963
  %v4006 = vadd.f32 %v2752, %v3968
  %v4007 = vadd.f32 %v2757, %v3973
  %v4008 = vadd.f32 %v2762, %v3978
  %v4009 = vadd.f32 %v2767, %v3983
  %v4010 = vadd.f32 %v2772, %v3988
  %v4011 = vadd.f32 %v2777, %v3993
  %s4012 = scalar_lea.vmem %s3, 96
  %v4013 = vld [vmem:[%s4012] sm:$0xff]
  %v4014 = vld [vmem:[%s4012 + $0x8] sm:$0xff]
  %v4015 = vld [vmem:[%s4012 + $0x10] sm:$0xff]
  %v4016 = vld [vmem:[%s4012 + $0x18] sm:$0xff]
  %s4017 = scalar_lea.vmem %s4, 3
  %v4018 = vld [vmem:[%s4017] sm:$0x1]
  %v4020 = vlaneseq
  %v4021 = vshrl.u32 %v4020, 7
  %v4022 = vsub.s32 0, %v4021
  %v4023 = vrot.slane %v4018, %v4022
  %4025 = vmatprep.subr.mxu0 0.0
  %4026 = vmatpush1.msra.mxu0 %v4013
  %4027 = vmatprep.subr.mxu0 0.0
  %4028 = vmatpush1.msra.mxu0 %v4014
  %4029 = vmatprep.subr.mxu0 0.0
  %4030 = vmatpush1.msra.mxu0 %v4015
  %4031 = vmatprep.subr.mxu0 0.0
  %4032 = vmatpush1.msra.mxu0 %v4016
  %4033 = vmatprep.subr.mxu0 0.0
  %4034 = vmatpush1.msra.mxu0 0.0
  %4035 = vmatprep.subr.mxu0 0.0
  %4036 = vmatpush1.msra.mxu0 0.0
  %4037 = vmatprep.subr.mxu0 0.0
  %4038 = vmatpush1.msra.mxu0 0.0
  %4039 = vmatprep.subr.mxu0 0.0
  %4040 = vmatpush1.msra.mxu0 0.0
  %4041 = vmatprep.subr.mxu0 0.0
  %4042 = vmatpush1.msra.mxu0 0.0
  %4043 = vmatprep.subr.mxu0 0.0
  %4044 = vmatpush1.msra.mxu0 0.0
  %4045 = vmatprep.subr.mxu0 0.0
  %4046 = vmatpush1.msra.mxu0 0.0
  %4047 = vmatprep.subr.mxu0 0.0
  %4048 = vmatpush1.msra.mxu0 0.0
  %4049 = vmatprep.subr.mxu0 0.0
  %4050 = vmatpush1.msra.mxu0 0.0
  %4051 = vmatprep.subr.mxu0 0.0
  %4052 = vmatpush1.msra.mxu0 0.0
  %4053 = vmatprep.subr.mxu0 0.0
  %4054 = vmatpush1.msra.mxu0 0.0
  %4055 = vmatprep.subr.mxu0 0.0
  %4056 = vmatpush1.msra.mxu0 0.0
  %4057 = vmatprep.subr.mxu0 0.0
  %4058 = vmatpush1.msra.mxu0 0.0
  %4059 = vmatprep.subr.mxu0 0.0
  %4060 = vmatpush1.msra.mxu0 0.0
  %4061 = vmatprep.subr.mxu0 0.0
  %4062 = vmatpush1.msra.mxu0 0.0
  %4063 = vmatprep.subr.mxu0 0.0
  %4064 = vmatpush1.msra.mxu0 0.0
  %4065 = vmatprep.subr.mxu0 0.0
  %4066 = vmatpush1.msra.mxu0 0.0
  %4067 = vmatprep.subr.mxu0 0.0
  %4068 = vmatpush1.msra.mxu0 0.0
  %4069 = vmatprep.subr.mxu0 0.0
  %4070 = vmatpush1.msra.mxu0 0.0
  %4071 = vmatprep.subr.mxu0 0.0
  %4072 = vmatpush1.msra.mxu0 0.0
  %4073 = vmatprep.subr.mxu0 0.0
  %4074 = vmatpush1.msra.mxu0 0.0
  %4075 = vmatprep.subr.mxu0 0.0
  %4076 = vmatpush1.msra.mxu0 0.0
  %4077 = vmatprep.subr.mxu0 0.0
  %4078 = vmatpush1.msra.mxu0 0.0
  %4079 = vmatprep.subr.mxu0 0.0
  %4080 = vmatpush1.msra.mxu0 0.0
  %4081 = vmatprep.subr.mxu0 0.0
  %4082 = vmatpush1.msra.mxu0 0.0
  %4083 = vmatprep.subr.mxu0 0.0
  %4084 = vmatpush1.msra.mxu0 0.0
  %4085 = vmatprep.subr.mxu0 0.0
  %4086 = vmatpush1.msra.mxu0 0.0
  %4087 = vmatprep.subr.mxu0 0.0
  %4088 = vmatpush1.msra.mxu0 0.0
  %4089 = vmatprep.mubr.f32.mxu0 0.0
  %4090 = vmatmul.mubr.f32.gmra.mrb[0].mxu0 %v315
  %v4091 = vpop.f32.mrb[0].mxu0
  %v4092 = vadd.f32 %v4023, %v4091
  %v4093 = vpop.f32.mrb[0].mxu0
  %4094 = vmatprep.mubr.f32.mxu0 0.0
  %4095 = vmatmul.mubr.f32.gmra.mrb[0].mxu0 %v318
  %v4096 = vpop.f32.mrb[0].mxu0
  %v4097 = vadd.f32 %v4023, %v4096
  %v4098 = vpop.f32.mrb[0].mxu0
  %4099 = vmatprep.mubr.f32.mxu0 0.0
  %4100 = vmatmul.mubr.f32.gmra.mrb[0].mxu0 %v321
  %v4101 = vpop.f32.mrb[0].mxu0
  %v4102 = vadd.f32 %v4023, %v4101
  %v4103 = vpop.f32.mrb[0].mxu0
  %4104 = vmatprep.mubr.f32.mxu0 0.0
  %4105 = vmatmul.mubr.f32.gmra.mrb[0].mxu0 %v324
  %v4106 = vpop.f32.mrb[0].mxu0
  %v4107 = vadd.f32 %v4023, %v4106
  %v4108 = vpop.f32.mrb[0].mxu0
  %4109 = vmatprep.mubr.f32.mxu0 0.0
  %4110 = vmatmul.mubr.f32.gmra.mrb[0].mxu0 %v327
  %v4111 = vpop.f32.mrb[0].mxu0
  %v4112 = vadd.f32 %v4023, %v4111
  %v4113 = vpop.f32.mrb[0].mxu0
  %4114 = vmatprep.mubr.f32.mxu0 0.0
  %4115 = vmatmul.mubr.f32.gmra.mrb[0].mxu0 %v330
  %v4116 = vpop.f32.mrb[0].mxu0
  %v4117 = vadd.f32 %v4023, %v4116
  %v4118 = vpop.f32.mrb[0].mxu0
  %4119 = vmatprep.mubr.f32.mxu0 0.0
  %4120 = vmatmul.mubr.f32.gmra.mrb[0].mxu0 %v333
  %v4121 = vpop.f32.mrb[0].mxu0
  %v4122 = vadd.f32 %v4023, %v4121
  %v4123 = vpop.f32.mrb[0].mxu0
  %4124 = vmatprep.mubr.f32.mxu0 0.0
  %4125 = vmatmul.mubr.f32.gmra.mrb[0].mxu0 %v336
  %v4126 = vpop.f32.mrb[0].mxu0
  %v4127 = vadd.f32 %v4023, %v4126
  %v4128 = vpop.f32.mrb[0].mxu0
  %4129 = vmatprep.mubr.f32.mxu0 0.0
  %4130 = vmatmul.mubr.f32.gmra.mrb[0].mxu0 %v339
  %v4131 = vpop.f32.mrb[0].mxu0
  %v4132 = vadd.f32 %v4023, %v4131
  %v4133 = vpop.f32.mrb[0].mxu0
  %4134 = vmatprep.mubr.f32.mxu0 0.0
  %4135 = vmatmul.mubr.f32.gmra.mrb[0].mxu0 %v342
  %v4136 = vpop.f32.mrb[0].mxu0
  %v4137 = vadd.f32 %v4023, %v4136
  %v4138 = vpop.f32.mrb[0].mxu0
  %4139 = vmatprep.mubr.f32.mxu0 0.0
  %4140 = vmatmul.mubr.f32.gmra.mrb[0].mxu0 %v345
  %v4141 = vpop.f32.mrb[0].mxu0
  %v4142 = vadd.f32 %v4023, %v4141
  %v4143 = vpop.f32.mrb[0].mxu0
  %4144 = vmatprep.mubr.f32.mxu0 0.0
  %4145 = vmatmul.mubr.f32.gmra.mrb[0].mxu0 %v348
  %v4146 = vpop.f32.mrb[0].mxu0
  %v4147 = vadd.f32 %v4023, %v4146
  %v4148 = vpop.f32.mrb[0].mxu0
  %4149 = vmatprep.mubr.f32.mxu0 0.0
  %4150 = vmatmul.mubr.f32.gmra.mrb[0].mxu0 %v351
  %v4151 = vpop.f32.mrb[0].mxu0
  %v4152 = vadd.f32 %v4023, %v4151
  %v4153 = vpop.f32.mrb[0].mxu0
  %4154 = vmatprep.mubr.f32.mxu0 0.0
  %4155 = vmatmul.mubr.f32.gmra.mrb[0].mxu0 %v354
  %v4156 = vpop.f32.mrb[0].mxu0
  %v4157 = vadd.f32 %v4023, %v4156
  %v4158 = vpop.f32.mrb[0].mxu0
  %4159 = vmatprep.mubr.f32.mxu0 0.0
  %4160 = vmatmul.mubr.f32.gmra.mrb[0].mxu0 %v357
  %v4161 = vpop.f32.mrb[0].mxu0
  %v4162 = vadd.f32 %v4023, %v4161
  %v4163 = vpop.f32.mrb[0].mxu0
  %4164 = vmatprep.mubr.f32.mxu0 0.0
  %4165 = vmatmul.mubr.f32.gmra.mrb[0].mxu0 %v360
  %v4166 = vpop.f32.mrb[0].mxu0
  %v4167 = vadd.f32 %v4023, %v4166
  %v4168 = vpop.f32.mrb[0].mxu0
  %4169 = vdwg.mxu0
  %s4170 = scalar_lea.vmem %s3, 224
  %v4171 = vld [vmem:[%s4170] sm:$0xff]
  %v4172 = vld [vmem:[%s4170 + $0x8] sm:$0xff]
  %v4173 = vld [vmem:[%s4170 + $0x10] sm:$0xff]
  %v4174 = vld [vmem:[%s4170 + $0x18] sm:$0xff]
  %s4175 = scalar_lea.vmem %s4, 7
  %v4176 = vld [vmem:[%s4175] sm:$0x1]
  %v4178 = vlaneseq
  %v4179 = vshrl.u32 %v4178, 7
  %v4180 = vsub.s32 0, %v4179
  %v4181 = vrot.slane %v4176, %v4180
  %4183 = vmatprep.subr.mxu0 0.0
  %4184 = vmatpush1.msra.mxu0 %v4171
  %4185 = vmatprep.subr.mxu0 0.0
  %4186 = vmatpush1.msra.mxu0 %v4172
  %4187 = vmatprep.subr.mxu0 0.0
  %4188 = vmatpush1.msra.mxu0 %v4173
  %4189 = vmatprep.subr.mxu0 0.0
  %4190 = vmatpush1.msra.mxu0 %v4174
  %4191 = vmatprep.subr.mxu0 0.0
  %4192 = vmatpush1.msra.mxu0 0.0
  %4193 = vmatprep.subr.mxu0 0.0
  %4194 = vmatpush1.msra.mxu0 0.0
  %4195 = vmatprep.subr.mxu0 0.0
  %4196 = vmatpush1.msra.mxu0 0.0
  %4197 = vmatprep.subr.mxu0 0.0
  %4198 = vmatpush1.msra.mxu0 0.0
  %4199 = vmatprep.subr.mxu0 0.0
  %4200 = vmatpush1.msra.mxu0 0.0
  %4201 = vmatprep.subr.mxu0 0.0
  %4202 = vmatpush1.msra.mxu0 0.0
  %4203 = vmatprep.subr.mxu0 0.0
  %4204 = vmatpush1.msra.mxu0 0.0
  %4205 = vmatprep.subr.mxu0 0.0
  %4206 = vmatpush1.msra.mxu0 0.0
  %4207 = vmatprep.subr.mxu0 0.0
  %4208 = vmatpush1.msra.mxu0 0.0
  %4209 = vmatprep.subr.mxu0 0.0
  %4210 = vmatpush1.msra.mxu0 0.0
  %4211 = vmatprep.subr.mxu0 0.0
  %4212 = vmatpush1.msra.mxu0 0.0
  %4213 = vmatprep.subr.mxu0 0.0
  %4214 = vmatpush1.msra.mxu0 0.0
  %4215 = vmatprep.subr.mxu0 0.0
  %4216 = vmatpush1.msra.mxu0 0.0
  %4217 = vmatprep.subr.mxu0 0.0
  %4218 = vmatpush1.msra.mxu0 0.0
  %4219 = vmatprep.subr.mxu0 0.0
  %4220 = vmatpush1.msra.mxu0 0.0
  %4221 = vmatprep.subr.mxu0 0.0
  %4222 = vmatpush1.msra.mxu0 0.0
  %4223 = vmatprep.subr.mxu0 0.0
  %4224 = vmatpush1.msra.mxu0 0.0
  %4225 = vmatprep.subr.mxu0 0.0
  %4226 = vmatpush1.msra.mxu0 0.0
  %4227 = vmatprep.subr.mxu0 0.0
  %4228 = vmatpush1.msra.mxu0 0.0
  %4229 = vmatprep.subr.mxu0 0.0
  %4230 = vmatpush1.msra.mxu0 0.0
  %4231 = vmatprep.subr.mxu0 0.0
  %4232 = vmatpush1.msra.mxu0 0.0
  %4233 = vmatprep.subr.mxu0 0.0
  %4234 = vmatpush1.msra.mxu0 0.0
  %4235 = vmatprep.subr.mxu0 0.0
  %4236 = vmatpush1.msra.mxu0 0.0
  %4237 = vmatprep.subr.mxu0 0.0
  %4238 = vmatpush1.msra.mxu0 0.0
  %4239 = vmatprep.subr.mxu0 0.0
  %4240 = vmatpush1.msra.mxu0 0.0
  %4241 = vmatprep.subr.mxu0 0.0
  %4242 = vmatpush1.msra.mxu0 0.0
  %4243 = vmatprep.subr.mxu0 0.0
  %4244 = vmatpush1.msra.mxu0 0.0
  %4245 = vmatprep.subr.mxu0 0.0
  %4246 = vmatpush1.msra.mxu0 0.0
  %4247 = vmatprep.mubr.f32.mxu0 0.0
  %4248 = vmatmul.mubr.f32.gmra.mrb[0].mxu0 %v315
  %v4249 = vpop.f32.mrb[0].mxu0
  %v4250 = vadd.f32 %v4181, %v4249
  %v4251 = vpop.f32.mrb[0].mxu0
  %4252 = vmatprep.mubr.f32.mxu0 0.0
  %4253 = vmatmul.mubr.f32.gmra.mrb[0].mxu0 %v318
  %v4254 = vpop.f32.mrb[0].mxu0
  %v4255 = vadd.f32 %v4181, %v4254
  %v4256 = vpop.f32.mrb[0].mxu0
  %4257 = vmatprep.mubr.f32.mxu0 0.0
  %4258 = vmatmul.mubr.f32.gmra.mrb[0].mxu0 %v321
  %v4259 = vpop.f32.mrb[0].mxu0
  %v4260 = vadd.f32 %v4181, %v4259
  %v4261 = vpop.f32.mrb[0].mxu0
  %4262 = vmatprep.mubr.f32.mxu0 0.0
  %4263 = vmatmul.mubr.f32.gmra.mrb[0].mxu0 %v324
  %v4264 = vpop.f32.mrb[0].mxu0
  %v4265 = vadd.f32 %v4181, %v4264
  %v4266 = vpop.f32.mrb[0].mxu0
  %4267 = vmatprep.mubr.f32.mxu0 0.0
  %4268 = vmatmul.mubr.f32.gmra.mrb[0].mxu0 %v327
  %v4269 = vpop.f32.mrb[0].mxu0
  %v4270 = vadd.f32 %v4181, %v4269
  %v4271 = vpop.f32.mrb[0].mxu0
  %4272 = vmatprep.mubr.f32.mxu0 0.0
  %4273 = vmatmul.mubr.f32.gmra.mrb[0].mxu0 %v330
  %v4274 = vpop.f32.mrb[0].mxu0
  %v4275 = vadd.f32 %v4181, %v4274
  %v4276 = vpop.f32.mrb[0].mxu0
  %4277 = vmatprep.mubr.f32.mxu0 0.0
  %4278 = vmatmul.mubr.f32.gmra.mrb[0].mxu0 %v333
  %v4279 = vpop.f32.mrb[0].mxu0
  %v4280 = vadd.f32 %v4181, %v4279
  %v4281 = vpop.f32.mrb[0].mxu0
  %4282 = vmatprep.mubr.f32.mxu0 0.0
  %4283 = vmatmul.mubr.f32.gmra.mrb[0].mxu0 %v336
  %v4284 = vpop.f32.mrb[0].mxu0
  %v4285 = vadd.f32 %v4181, %v4284
  %v4286 = vpop.f32.mrb[0].mxu0
  %4287 = vmatprep.mubr.f32.mxu0 0.0
  %4288 = vmatmul.mubr.f32.gmra.mrb[0].mxu0 %v339
  %v4289 = vpop.f32.mrb[0].mxu0
  %v4290 = vadd.f32 %v4181, %v4289
  %v4291 = vpop.f32.mrb[0].mxu0
  %4292 = vmatprep.mubr.f32.mxu0 0.0
  %4293 = vmatmul.mubr.f32.gmra.mrb[0].mxu0 %v342
  %v4294 = vpop.f32.mrb[0].mxu0
  %v4295 = vadd.f32 %v4181, %v4294
  %v4296 = vpop.f32.mrb[0].mxu0
  %4297 = vmatprep.mubr.f32.mxu0 0.0
  %4298 = vmatmul.mubr.f32.gmra.mrb[0].mxu0 %v345
  %v4299 = vpop.f32.mrb[0].mxu0
  %v4300 = vadd.f32 %v4181, %v4299
  %v4301 = vpop.f32.mrb[0].mxu0
  %4302 = vmatprep.mubr.f32.mxu0 0.0
  %4303 = vmatmul.mubr.f32.gmra.mrb[0].mxu0 %v348
  %v4304 = vpop.f32.mrb[0].mxu0
  %v4305 = vadd.f32 %v4181, %v4304
  %v4306 = vpop.f32.mrb[0].mxu0
  %4307 = vmatprep.mubr.f32.mxu0 0.0
  %4308 = vmatmul.mubr.f32.gmra.mrb[0].mxu0 %v351
  %v4309 = vpop.f32.mrb[0].mxu0
  %v4310 = vadd.f32 %v4181, %v4309
  %v4311 = vpop.f32.mrb[0].mxu0
  %4312 = vmatprep.mubr.f32.mxu0 0.0
  %4313 = vmatmul.mubr.f32.gmra.mrb[0].mxu0 %v354
  %v4314 = vpop.f32.mrb[0].mxu0
  %v4315 = vadd.f32 %v4181, %v4314
  %v4316 = vpop.f32.mrb[0].mxu0
  %4317 = vmatprep.mubr.f32.mxu0 0.0
  %4318 = vmatmul.mubr.f32.gmra.mrb[0].mxu0 %v357
  %v4319 = vpop.f32.mrb[0].mxu0
  %v4320 = vadd.f32 %v4181, %v4319
  %v4321 = vpop.f32.mrb[0].mxu0
  %4322 = vmatprep.mubr.f32.mxu0 0.0
  %4323 = vmatmul.mubr.f32.gmra.mrb[0].mxu0 %v360
  %v4324 = vpop.f32.mrb[0].mxu0
  %v4325 = vadd.f32 %v4181, %v4324
  %v4326 = vpop.f32.mrb[0].mxu0
  %4327 = vdwg.mxu0
  %s4328 = scalar_lea.vmem %s3, 352
  %v4329 = vld [vmem:[%s4328] sm:$0xff]
  %v4330 = vld [vmem:[%s4328 + $0x8] sm:$0xff]
  %v4331 = vld [vmem:[%s4328 + $0x10] sm:$0xff]
  %v4332 = vld [vmem:[%s4328 + $0x18] sm:$0xff]
  %s4333 = scalar_lea.vmem %s4, 11
  %v4334 = vld [vmem:[%s4333] sm:$0x1]
  %v4336 = vlaneseq
  %v4337 = vshrl.u32 %v4336, 7
  %v4338 = vsub.s32 0, %v4337
  %v4339 = vrot.slane %v4334, %v4338
  %4341 = vmatprep.subr.mxu0 0.0
  %4342 = vmatpush1.msra.mxu0 %v4329
  %4343 = vmatprep.subr.mxu0 0.0
  %4344 = vmatpush1.msra.mxu0 %v4330
  %4345 = vmatprep.subr.mxu0 0.0
  %4346 = vmatpush1.msra.mxu0 %v4331
  %4347 = vmatprep.subr.mxu0 0.0
  %4348 = vmatpush1.msra.mxu0 %v4332
  %4349 = vmatprep.subr.mxu0 0.0
  %4350 = vmatpush1.msra.mxu0 0.0
  %4351 = vmatprep.subr.mxu0 0.0
  %4352 = vmatpush1.msra.mxu0 0.0
  %4353 = vmatprep.subr.mxu0 0.0
  %4354 = vmatpush1.msra.mxu0 0.0
  %4355 = vmatprep.subr.mxu0 0.0
  %4356 = vmatpush1.msra.mxu0 0.0
  %4357 = vmatprep.subr.mxu0 0.0
  %4358 = vmatpush1.msra.mxu0 0.0
  %4359 = vmatprep.subr.mxu0 0.0
  %4360 = vmatpush1.msra.mxu0 0.0
  %4361 = vmatprep.subr.mxu0 0.0
  %4362 = vmatpush1.msra.mxu0 0.0
  %4363 = vmatprep.subr.mxu0 0.0
  %4364 = vmatpush1.msra.mxu0 0.0
  %4365 = vmatprep.subr.mxu0 0.0
  %4366 = vmatpush1.msra.mxu0 0.0
  %4367 = vmatprep.subr.mxu0 0.0
  %4368 = vmatpush1.msra.mxu0 0.0
  %4369 = vmatprep.subr.mxu0 0.0
  %4370 = vmatpush1.msra.mxu0 0.0
  %4371 = vmatprep.subr.mxu0 0.0
  %4372 = vmatpush1.msra.mxu0 0.0
  %4373 = vmatprep.subr.mxu0 0.0
  %4374 = vmatpush1.msra.mxu0 0.0
  %4375 = vmatprep.subr.mxu0 0.0
  %4376 = vmatpush1.msra.mxu0 0.0
  %4377 = vmatprep.subr.mxu0 0.0
  %4378 = vmatpush1.msra.mxu0 0.0
  %4379 = vmatprep.subr.mxu0 0.0
  %4380 = vmatpush1.msra.mxu0 0.0
  %4381 = vmatprep.subr.mxu0 0.0
  %4382 = vmatpush1.msra.mxu0 0.0
  %4383 = vmatprep.subr.mxu0 0.0
  %4384 = vmatpush1.msra.mxu0 0.0
  %4385 = vmatprep.subr.mxu0 0.0
  %4386 = vmatpush1.msra.mxu0 0.0
  %4387 = vmatprep.subr.mxu0 0.0
  %4388 = vmatpush1.msra.mxu0 0.0
  %4389 = vmatprep.subr.mxu0 0.0
  %4390 = vmatpush1.msra.mxu0 0.0
  %4391 = vmatprep.subr.mxu0 0.0
  %4392 = vmatpush1.msra.mxu0 0.0
  %4393 = vmatprep.subr.mxu0 0.0
  %4394 = vmatpush1.msra.mxu0 0.0
  %4395 = vmatprep.subr.mxu0 0.0
  %4396 = vmatpush1.msra.mxu0 0.0
  %4397 = vmatprep.subr.mxu0 0.0
  %4398 = vmatpush1.msra.mxu0 0.0
  %4399 = vmatprep.subr.mxu0 0.0
  %4400 = vmatpush1.msra.mxu0 0.0
  %4401 = vmatprep.subr.mxu0 0.0
  %4402 = vmatpush1.msra.mxu0 0.0
  %4403 = vmatprep.subr.mxu0 0.0
  %4404 = vmatpush1.msra.mxu0 0.0
  %4405 = vmatprep.mubr.f32.mxu0 0.0
  %4406 = vmatmul.mubr.f32.gmra.mrb[0].mxu0 %v315
  %v4407 = vpop.f32.mrb[0].mxu0
  %v4408 = vadd.f32 %v4339, %v4407
  %v4409 = vpop.f32.mrb[0].mxu0
  %4410 = vmatprep.mubr.f32.mxu0 0.0
  %4411 = vmatmul.mubr.f32.gmra.mrb[0].mxu0 %v318
  %v4412 = vpop.f32.mrb[0].mxu0
  %v4413 = vadd.f32 %v4339, %v4412
  %v4414 = vpop.f32.mrb[0].mxu0
  %4415 = vmatprep.mubr.f32.mxu0 0.0
  %4416 = vmatmul.mubr.f32.gmra.mrb[0].mxu0 %v321
  %v4417 = vpop.f32.mrb[0].mxu0
  %v4418 = vadd.f32 %v4339, %v4417
  %v4419 = vpop.f32.mrb[0].mxu0
  %4420 = vmatprep.mubr.f32.mxu0 0.0
  %4421 = vmatmul.mubr.f32.gmra.mrb[0].mxu0 %v324
  %v4422 = vpop.f32.mrb[0].mxu0
  %v4423 = vadd.f32 %v4339, %v4422
  %v4424 = vpop.f32.mrb[0].mxu0
  %4425 = vmatprep.mubr.f32.mxu0 0.0
  %4426 = vmatmul.mubr.f32.gmra.mrb[0].mxu0 %v327
  %v4427 = vpop.f32.mrb[0].mxu0
  %v4428 = vadd.f32 %v4339, %v4427
  %v4429 = vpop.f32.mrb[0].mxu0
  %4430 = vmatprep.mubr.f32.mxu0 0.0
  %4431 = vmatmul.mubr.f32.gmra.mrb[0].mxu0 %v330
  %v4432 = vpop.f32.mrb[0].mxu0
  %v4433 = vadd.f32 %v4339, %v4432
  %v4434 = vpop.f32.mrb[0].mxu0
  %4435 = vmatprep.mubr.f32.mxu0 0.0
  %4436 = vmatmul.mubr.f32.gmra.mrb[0].mxu0 %v333
  %v4437 = vpop.f32.mrb[0].mxu0
  %v4438 = vadd.f32 %v4339, %v4437
  %v4439 = vpop.f32.mrb[0].mxu0
  %4440 = vmatprep.mubr.f32.mxu0 0.0
  %4441 = vmatmul.mubr.f32.gmra.mrb[0].mxu0 %v336
  %v4442 = vpop.f32.mrb[0].mxu0
  %v4443 = vadd.f32 %v4339, %v4442
  %v4444 = vpop.f32.mrb[0].mxu0
  %4445 = vmatprep.mubr.f32.mxu0 0.0
  %4446 = vmatmul.mubr.f32.gmra.mrb[0].mxu0 %v339
  %v4447 = vpop.f32.mrb[0].mxu0
  %v4448 = vadd.f32 %v4339, %v4447
  %v4449 = vpop.f32.mrb[0].mxu0
  %4450 = vmatprep.mubr.f32.mxu0 0.0
  %4451 = vmatmul.mubr.f32.gmra.mrb[0].mxu0 %v342
  %v4452 = vpop.f32.mrb[0].mxu0
  %v4453 = vadd.f32 %v4339, %v4452
  %v4454 = vpop.f32.mrb[0].mxu0
  %4455 = vmatprep.mubr.f32.mxu0 0.0
  %4456 = vmatmul.mubr.f32.gmra.mrb[0].mxu0 %v345
  %v4457 = vpop.f32.mrb[0].mxu0
  %v4458 = vadd.f32 %v4339, %v4457
  %v4459 = vpop.f32.mrb[0].mxu0
  %4460 = vmatprep.mubr.f32.mxu0 0.0
  %4461 = vmatmul.mubr.f32.gmra.mrb[0].mxu0 %v348
  %v4462 = vpop.f32.mrb[0].mxu0
  %v4463 = vadd.f32 %v4339, %v4462
  %v4464 = vpop.f32.mrb[0].mxu0
  %4465 = vmatprep.mubr.f32.mxu0 0.0
  %4466 = vmatmul.mubr.f32.gmra.mrb[0].mxu0 %v351
  %v4467 = vpop.f32.mrb[0].mxu0
  %v4468 = vadd.f32 %v4339, %v4467
  %v4469 = vpop.f32.mrb[0].mxu0
  %4470 = vmatprep.mubr.f32.mxu0 0.0
  %4471 = vmatmul.mubr.f32.gmra.mrb[0].mxu0 %v354
  %v4472 = vpop.f32.mrb[0].mxu0
  %v4473 = vadd.f32 %v4339, %v4472
  %v4474 = vpop.f32.mrb[0].mxu0
  %4475 = vmatprep.mubr.f32.mxu0 0.0
  %4476 = vmatmul.mubr.f32.gmra.mrb[0].mxu0 %v357
  %v4477 = vpop.f32.mrb[0].mxu0
  %v4478 = vadd.f32 %v4339, %v4477
  %v4479 = vpop.f32.mrb[0].mxu0
  %4480 = vmatprep.mubr.f32.mxu0 0.0
  %4481 = vmatmul.mubr.f32.gmra.mrb[0].mxu0 %v360
  %v4482 = vpop.f32.mrb[0].mxu0
  %v4483 = vadd.f32 %v4339, %v4482
  %v4484 = vpop.f32.mrb[0].mxu0
  %4485 = vdwg.mxu0
  %s4486 = scalar_lea.vmem %s1, 384
  %v4487 = vld [vmem:[%s4486] sm:$0xff]
  %v4488 = vld [vmem:[%s4486 + $0x8] sm:$0xff]
  %v4489 = vld [vmem:[%s4486 + $0x10] sm:$0xff]
  %v4490 = vld [vmem:[%s4486 + $0x18] sm:$0xff]
  %v4491 = vld [vmem:[%s4486 + $0x20] sm:$0xff]
  %v4492 = vld [vmem:[%s4486 + $0x28] sm:$0xff]
  %v4493 = vld [vmem:[%s4486 + $0x30] sm:$0xff]
  %v4494 = vld [vmem:[%s4486 + $0x38] sm:$0xff]
  %v4495 = vld [vmem:[%s4486 + $0x40] sm:$0xff]
  %v4496 = vld [vmem:[%s4486 + $0x48] sm:$0xff]
  %v4497 = vld [vmem:[%s4486 + $0x50] sm:$0xff]
  %v4498 = vld [vmem:[%s4486 + $0x58] sm:$0xff]
  %v4499 = vld [vmem:[%s4486 + $0x60] sm:$0xff]
  %v4500 = vld [vmem:[%s4486 + $0x68] sm:$0xff]
  %v4501 = vld [vmem:[%s4486 + $0x70] sm:$0xff]
  %v4502 = vld [vmem:[%s4486 + $0x78] sm:$0xff]
  %v4504 = vsel %vm839, %v4092, 0
  %v4507 = vsel %vm839, %v4097, 0
  %v4510 = vsel %vm839, %v4102, 0
  %v4513 = vsel %vm839, %v4107, 0
  %v4516 = vsel %vm839, %v4112, 0
  %v4519 = vsel %vm839, %v4117, 0
  %v4522 = vsel %vm839, %v4122, 0
  %v4525 = vsel %vm839, %v4127, 0
  %v4528 = vsel %vm839, %v4132, 0
  %v4531 = vsel %vm839, %v4137, 0
  %v4534 = vsel %vm839, %v4142, 0
  %v4537 = vsel %vm839, %v4147, 0
  %v4540 = vsel %vm839, %v4152, 0
  %v4543 = vsel %vm839, %v4157, 0
  %v4546 = vsel %vm839, %v4162, 0
  %v4549 = vsel %vm839, %v4167, 0
  %v4552 = vsel %vm839, %v4250, 0
  %v4555 = vsel %vm839, %v4255, 0
  %v4558 = vsel %vm839, %v4260, 0
  %v4561 = vsel %vm839, %v4265, 0
  %v4564 = vsel %vm839, %v4270, 0
  %v4567 = vsel %vm839, %v4275, 0
  %v4570 = vsel %vm839, %v4280, 0
  %v4573 = vsel %vm839, %v4285, 0
  %v4576 = vsel %vm839, %v4290, 0
  %v4579 = vsel %vm839, %v4295, 0
  %v4582 = vsel %vm839, %v4300, 0
  %v4585 = vsel %vm839, %v4305, 0
  %v4588 = vsel %vm839, %v4310, 0
  %v4591 = vsel %vm839, %v4315, 0
  %v4594 = vsel %vm839, %v4320, 0
  %v4597 = vsel %vm839, %v4325, 0
  %4599 = vmatprep.subr.mxu0 0.0
  %4600 = vmatpush1.xpose.msra.mxu0 %v4552
  %4601 = vmatprep.subr.mxu0 0.0
  %4602 = vmatpush1.xpose.msra.mxu0 %v4555
  %4603 = vmatprep.subr.mxu0 0.0
  %4604 = vmatpush1.xpose.msra.mxu0 %v4558
  %4605 = vmatprep.subr.mxu0 0.0
  %4606 = vmatpush1.xpose.msra.mxu0 %v4561
  %4607 = vmatprep.subr.mxu0 0.0
  %4608 = vmatpush1.xpose.msra.mxu0 %v4564
  %4609 = vmatprep.subr.mxu0 0.0
  %4610 = vmatpush1.xpose.msra.mxu0 %v4567
  %4611 = vmatprep.subr.mxu0 0.0
  %4612 = vmatpush1.xpose.msra.mxu0 %v4570
  %4613 = vmatprep.subr.mxu0 0.0
  %4614 = vmatpush1.xpose.msra.mxu0 %v4573
  %4615 = vmatprep.subr.mxu0 0.0
  %4616 = vmatpush1.xpose.msra.mxu0 %v4576
  %4617 = vmatprep.subr.mxu0 0.0
  %4618 = vmatpush1.xpose.msra.mxu0 %v4579
  %4619 = vmatprep.subr.mxu0 0.0
  %4620 = vmatpush1.xpose.msra.mxu0 %v4582
  %4621 = vmatprep.subr.mxu0 0.0
  %4622 = vmatpush1.xpose.msra.mxu0 %v4585
  %4623 = vmatprep.subr.mxu0 0.0
  %4624 = vmatpush1.xpose.msra.mxu0 %v4588
  %4625 = vmatprep.subr.mxu0 0.0
  %4626 = vmatpush1.xpose.msra.mxu0 %v4591
  %4627 = vmatprep.subr.mxu0 0.0
  %4628 = vmatpush1.xpose.msra.mxu0 %v4594
  %4629 = vmatprep.subr.mxu0 0.0
  %4630 = vmatpush1.xpose.msra.mxu0 %v4597
  %4631 = vmatprep.subr.mxu0 0.0
  %4632 = vmatpush1.xpose.msra.mxu0 0.0
  %4633 = vmatprep.subr.mxu0 0.0
  %4634 = vmatpush1.xpose.msra.mxu0 0.0
  %4635 = vmatprep.subr.mxu0 0.0
  %4636 = vmatpush1.xpose.msra.mxu0 0.0
  %4637 = vmatprep.subr.mxu0 0.0
  %4638 = vmatpush1.xpose.msra.mxu0 0.0
  %4639 = vmatprep.subr.mxu0 0.0
  %4640 = vmatpush1.xpose.msra.mxu0 0.0
  %4641 = vmatprep.subr.mxu0 0.0
  %4642 = vmatpush1.xpose.msra.mxu0 0.0
  %4643 = vmatprep.subr.mxu0 0.0
  %4644 = vmatpush1.xpose.msra.mxu0 0.0
  %4645 = vmatprep.subr.mxu0 0.0
  %4646 = vmatpush1.xpose.msra.mxu0 0.0
  %4647 = vmatprep.subr.mxu0 0.0
  %4648 = vmatpush1.xpose.msra.mxu0 0.0
  %4649 = vmatprep.subr.mxu0 0.0
  %4650 = vmatpush1.xpose.msra.mxu0 0.0
  %4651 = vmatprep.subr.mxu0 0.0
  %4652 = vmatpush1.xpose.msra.mxu0 0.0
  %4653 = vmatprep.subr.mxu0 0.0
  %4654 = vmatpush1.xpose.msra.mxu0 0.0
  %4655 = vmatprep.subr.mxu0 0.0
  %4656 = vmatpush1.xpose.msra.mxu0 0.0
  %4657 = vmatprep.subr.mxu0 0.0
  %4658 = vmatpush1.xpose.msra.mxu0 0.0
  %4659 = vmatprep.subr.mxu0 0.0
  %4660 = vmatpush1.xpose.msra.mxu0 0.0
  %4661 = vmatprep.subr.mxu0 0.0
  %4662 = vmatpush1.xpose.msra.mxu0 0.0
  %4663 = vmatprep.mubr.f32.mxu0 0.0
  %4664 = vmatmul.mubr.f32.gmra.mrb[0].mxu0 %v4504
  %v4665 = vpop.f32.mrb[0].mxu0
  %v4666 = vadd.f32 %v4487, %v4665
  %v4667 = vpop.f32.mrb[0].mxu0
  %4668 = vmatprep.mubr.f32.mxu0 0.0
  %4669 = vmatmul.mubr.f32.gmra.mrb[0].mxu0 %v4507
  %v4670 = vpop.f32.mrb[0].mxu0
  %v4671 = vadd.f32 %v4488, %v4670
  %v4672 = vpop.f32.mrb[0].mxu0
  %4673 = vmatprep.mubr.f32.mxu0 0.0
  %4674 = vmatmul.mubr.f32.gmra.mrb[0].mxu0 %v4510
  %v4675 = vpop.f32.mrb[0].mxu0
  %v4676 = vadd.f32 %v4489, %v4675
  %v4677 = vpop.f32.mrb[0].mxu0
  %4678 = vmatprep.mubr.f32.mxu0 0.0
  %4679 = vmatmul.mubr.f32.gmra.mrb[0].mxu0 %v4513
  %v4680 = vpop.f32.mrb[0].mxu0
  %v4681 = vadd.f32 %v4490, %v4680
  %v4682 = vpop.f32.mrb[0].mxu0
  %4683 = vmatprep.mubr.f32.mxu0 0.0
  %4684 = vmatmul.mubr.f32.gmra.mrb[0].mxu0 %v4516
  %v4685 = vpop.f32.mrb[0].mxu0
  %v4686 = vadd.f32 %v4491, %v4685
  %v4687 = vpop.f32.mrb[0].mxu0
  %4688 = vmatprep.mubr.f32.mxu0 0.0
  %4689 = vmatmul.mubr.f32.gmra.mrb[0].mxu0 %v4519
  %v4690 = vpop.f32.mrb[0].mxu0
  %v4691 = vadd.f32 %v4492, %v4690
  %v4692 = vpop.f32.mrb[0].mxu0
  %4693 = vmatprep.mubr.f32.mxu0 0.0
  %4694 = vmatmul.mubr.f32.gmra.mrb[0].mxu0 %v4522
  %v4695 = vpop.f32.mrb[0].mxu0
  %v4696 = vadd.f32 %v4493, %v4695
  %v4697 = vpop.f32.mrb[0].mxu0
  %4698 = vmatprep.mubr.f32.mxu0 0.0
  %4699 = vmatmul.mubr.f32.gmra.mrb[0].mxu0 %v4525
  %v4700 = vpop.f32.mrb[0].mxu0
  %v4701 = vadd.f32 %v4494, %v4700
  %v4702 = vpop.f32.mrb[0].mxu0
  %4703 = vmatprep.mubr.f32.mxu0 0.0
  %4704 = vmatmul.mubr.f32.gmra.mrb[0].mxu0 %v4528
  %v4705 = vpop.f32.mrb[0].mxu0
  %v4706 = vadd.f32 %v4495, %v4705
  %v4707 = vpop.f32.mrb[0].mxu0
  %4708 = vmatprep.mubr.f32.mxu0 0.0
  %4709 = vmatmul.mubr.f32.gmra.mrb[0].mxu0 %v4531
  %v4710 = vpop.f32.mrb[0].mxu0
  %v4711 = vadd.f32 %v4496, %v4710
  %v4712 = vpop.f32.mrb[0].mxu0
  %4713 = vmatprep.mubr.f32.mxu0 0.0
  %4714 = vmatmul.mubr.f32.gmra.mrb[0].mxu0 %v4534
  %v4715 = vpop.f32.mrb[0].mxu0
  %v4716 = vadd.f32 %v4497, %v4715
  %v4717 = vpop.f32.mrb[0].mxu0
  %4718 = vmatprep.mubr.f32.mxu0 0.0
  %4719 = vmatmul.mubr.f32.gmra.mrb[0].mxu0 %v4537
  %v4720 = vpop.f32.mrb[0].mxu0
  %v4721 = vadd.f32 %v4498, %v4720
  %v4722 = vpop.f32.mrb[0].mxu0
  %4723 = vmatprep.mubr.f32.mxu0 0.0
  %4724 = vmatmul.mubr.f32.gmra.mrb[0].mxu0 %v4540
  %v4725 = vpop.f32.mrb[0].mxu0
  %v4726 = vadd.f32 %v4499, %v4725
  %v4727 = vpop.f32.mrb[0].mxu0
  %4728 = vmatprep.mubr.f32.mxu0 0.0
  %4729 = vmatmul.mubr.f32.gmra.mrb[0].mxu0 %v4543
  %v4730 = vpop.f32.mrb[0].mxu0
  %v4731 = vadd.f32 %v4500, %v4730
  %v4732 = vpop.f32.mrb[0].mxu0
  %4733 = vmatprep.mubr.f32.mxu0 0.0
  %4734 = vmatmul.mubr.f32.gmra.mrb[0].mxu0 %v4546
  %v4735 = vpop.f32.mrb[0].mxu0
  %v4736 = vadd.f32 %v4501, %v4735
  %v4737 = vpop.f32.mrb[0].mxu0
  %4738 = vmatprep.mubr.f32.mxu0 0.0
  %4739 = vmatmul.mubr.f32.gmra.mrb[0].mxu0 %v4549
  %v4740 = vpop.f32.mrb[0].mxu0
  %v4741 = vadd.f32 %v4502, %v4740
  %v4742 = vpop.f32.mrb[0].mxu0
  %4743 = vdwg.mxu0
  %4744 = vmax.xlane.f32.xlu0 %v4666
  %v4745 = vpop.xlane.xlu0 %4744
  %4746 = vmax.xlane.f32.xlu0 %v4671
  %v4747 = vpop.xlane.xlu0 %4746
  %4748 = vmax.xlane.f32.xlu0 %v4676
  %v4749 = vpop.xlane.xlu0 %4748
  %4750 = vmax.xlane.f32.xlu0 %v4681
  %v4751 = vpop.xlane.xlu0 %4750
  %4752 = vmax.xlane.f32.xlu0 %v4686
  %v4753 = vpop.xlane.xlu0 %4752
  %4754 = vmax.xlane.f32.xlu0 %v4691
  %v4755 = vpop.xlane.xlu0 %4754
  %4756 = vmax.xlane.f32.xlu0 %v4696
  %v4757 = vpop.xlane.xlu0 %4756
  %4758 = vmax.xlane.f32.xlu0 %v4701
  %v4759 = vpop.xlane.xlu0 %4758
  %4760 = vmax.xlane.f32.xlu0 %v4706
  %v4761 = vpop.xlane.xlu0 %4760
  %4762 = vmax.xlane.f32.xlu0 %v4711
  %v4763 = vpop.xlane.xlu0 %4762
  %4764 = vmax.xlane.f32.xlu0 %v4716
  %v4765 = vpop.xlane.xlu0 %4764
  %4766 = vmax.xlane.f32.xlu0 %v4721
  %v4767 = vpop.xlane.xlu0 %4766
  %4768 = vmax.xlane.f32.xlu0 %v4726
  %v4769 = vpop.xlane.xlu0 %4768
  %4770 = vmax.xlane.f32.xlu0 %v4731
  %v4771 = vpop.xlane.xlu0 %4770
  %4772 = vmax.xlane.f32.xlu0 %v4736
  %v4773 = vpop.xlane.xlu0 %4772
  %4774 = vmax.xlane.f32.xlu0 %v4741
  %v4775 = vpop.xlane.xlu0 %4774
  %v4776 = vsub.f32 %v4666, %v4745
  %v4777 = vsub.f32 %v4671, %v4747
  %v4778 = vsub.f32 %v4676, %v4749
  %v4779 = vsub.f32 %v4681, %v4751
  %v4780 = vsub.f32 %v4686, %v4753
  %v4781 = vsub.f32 %v4691, %v4755
  %v4782 = vsub.f32 %v4696, %v4757
  %v4783 = vsub.f32 %v4701, %v4759
  %v4784 = vsub.f32 %v4706, %v4761
  %v4785 = vsub.f32 %v4711, %v4763
  %v4786 = vsub.f32 %v4716, %v4765
  %v4787 = vsub.f32 %v4721, %v4767
  %v4788 = vsub.f32 %v4726, %v4769
  %v4789 = vsub.f32 %v4731, %v4771
  %v4790 = vsub.f32 %v4736, %v4773
  %v4791 = vsub.f32 %v4741, %v4775
  %v4792 = vmul.f32 %v4776, 1.442695
  %v4793 = vpow.pop %v4792
  %v4794 = vmul.f32 %v4777, 1.442695
  %v4795 = vpow.pop %v4794
  %v4796 = vmul.f32 %v4778, 1.442695
  %v4797 = vpow.pop %v4796
  %v4798 = vmul.f32 %v4779, 1.442695
  %v4799 = vpow.pop %v4798
  %v4800 = vmul.f32 %v4780, 1.442695
  %v4801 = vpow.pop %v4800
  %v4802 = vmul.f32 %v4781, 1.442695
  %v4803 = vpow.pop %v4802
  %v4804 = vmul.f32 %v4782, 1.442695
  %v4805 = vpow.pop %v4804
  %v4806 = vmul.f32 %v4783, 1.442695
  %v4807 = vpow.pop %v4806
  %v4808 = vmul.f32 %v4784, 1.442695
  %v4809 = vpow.pop %v4808
  %v4810 = vmul.f32 %v4785, 1.442695
  %v4811 = vpow.pop %v4810
  %v4812 = vmul.f32 %v4786, 1.442695
  %v4813 = vpow.pop %v4812
  %v4814 = vmul.f32 %v4787, 1.442695
  %v4815 = vpow.pop %v4814
  %v4816 = vmul.f32 %v4788, 1.442695
  %v4817 = vpow.pop %v4816
  %v4818 = vmul.f32 %v4789, 1.442695
  %v4819 = vpow.pop %v4818
  %v4820 = vmul.f32 %v4790, 1.442695
  %v4821 = vpow.pop %v4820
  %v4822 = vmul.f32 %v4791, 1.442695
  %v4823 = vpow.pop %v4822
  %4824 = vadd.xlane.f32.xlu0 %v4793
  %v4825 = vpop.xlane.xlu0 %4824
  %4826 = vadd.xlane.f32.xlu0 %v4795
  %v4827 = vpop.xlane.xlu0 %4826
  %4828 = vadd.xlane.f32.xlu0 %v4797
  %v4829 = vpop.xlane.xlu0 %4828
  %4830 = vadd.xlane.f32.xlu0 %v4799
  %v4831 = vpop.xlane.xlu0 %4830
  %4832 = vadd.xlane.f32.xlu0 %v4801
  %v4833 = vpop.xlane.xlu0 %4832
  %4834 = vadd.xlane.f32.xlu0 %v4803
  %v4835 = vpop.xlane.xlu0 %4834
  %4836 = vadd.xlane.f32.xlu0 %v4805
  %v4837 = vpop.xlane.xlu0 %4836
  %4838 = vadd.xlane.f32.xlu0 %v4807
  %v4839 = vpop.xlane.xlu0 %4838
  %4840 = vadd.xlane.f32.xlu0 %v4809
  %v4841 = vpop.xlane.xlu0 %4840
  %4842 = vadd.xlane.f32.xlu0 %v4811
  %v4843 = vpop.xlane.xlu0 %4842
  %4844 = vadd.xlane.f32.xlu0 %v4813
  %v4845 = vpop.xlane.xlu0 %4844
  %4846 = vadd.xlane.f32.xlu0 %v4815
  %v4847 = vpop.xlane.xlu0 %4846
  %4848 = vadd.xlane.f32.xlu0 %v4817
  %v4849 = vpop.xlane.xlu0 %4848
  %4850 = vadd.xlane.f32.xlu0 %v4819
  %v4851 = vpop.xlane.xlu0 %4850
  %4852 = vadd.xlane.f32.xlu0 %v4821
  %v4853 = vpop.xlane.xlu0 %4852
  %4854 = vadd.xlane.f32.xlu0 %v4823
  %v4855 = vpop.xlane.xlu0 %4854
  %v4856 = vrcp.pop %v4825
  %v4857 = vrcp.pop %v4827
  %v4858 = vrcp.pop %v4829
  %v4859 = vrcp.pop %v4831
  %v4860 = vrcp.pop %v4833
  %v4861 = vrcp.pop %v4835
  %v4862 = vrcp.pop %v4837
  %v4863 = vrcp.pop %v4839
  %v4864 = vrcp.pop %v4841
  %v4865 = vrcp.pop %v4843
  %v4866 = vrcp.pop %v4845
  %v4867 = vrcp.pop %v4847
  %v4868 = vrcp.pop %v4849
  %v4869 = vrcp.pop %v4851
  %v4870 = vrcp.pop %v4853
  %v4871 = vrcp.pop %v4855
  %v4872 = vmul.f32 %v4793, %v4856
  %v4873 = vmul.f32 %v4795, %v4857
  %v4874 = vmul.f32 %v4797, %v4858
  %v4875 = vmul.f32 %v4799, %v4859
  %v4876 = vmul.f32 %v4801, %v4860
  %v4877 = vmul.f32 %v4803, %v4861
  %v4878 = vmul.f32 %v4805, %v4862
  %v4879 = vmul.f32 %v4807, %v4863
  %v4880 = vmul.f32 %v4809, %v4864
  %v4881 = vmul.f32 %v4811, %v4865
  %v4882 = vmul.f32 %v4813, %v4866
  %v4883 = vmul.f32 %v4815, %v4867
  %v4884 = vmul.f32 %v4817, %v4868
  %v4885 = vmul.f32 %v4819, %v4869
  %v4886 = vmul.f32 %v4821, %v4870
  %v4887 = vmul.f32 %v4823, %v4871
  %4888 = vmatprep.subr.mxu0 0.0
  %4889 = vmatpush1.msra.mxu0 %v4408
  %4890 = vmatprep.subr.mxu0 0.0
  %4891 = vmatpush1.msra.mxu0 %v4413
  %4892 = vmatprep.subr.mxu0 0.0
  %4893 = vmatpush1.msra.mxu0 %v4418
  %4894 = vmatprep.subr.mxu0 0.0
  %4895 = vmatpush1.msra.mxu0 %v4423
  %4896 = vmatprep.subr.mxu0 0.0
  %4897 = vmatpush1.msra.mxu0 %v4428
  %4898 = vmatprep.subr.mxu0 0.0
  %4899 = vmatpush1.msra.mxu0 %v4433
  %4900 = vmatprep.subr.mxu0 0.0
  %4901 = vmatpush1.msra.mxu0 %v4438
  %4902 = vmatprep.subr.mxu0 0.0
  %4903 = vmatpush1.msra.mxu0 %v4443
  %4904 = vmatprep.subr.mxu0 0.0
  %4905 = vmatpush1.msra.mxu0 %v4448
  %4906 = vmatprep.subr.mxu0 0.0
  %4907 = vmatpush1.msra.mxu0 %v4453
  %4908 = vmatprep.subr.mxu0 0.0
  %4909 = vmatpush1.msra.mxu0 %v4458
  %4910 = vmatprep.subr.mxu0 0.0
  %4911 = vmatpush1.msra.mxu0 %v4463
  %4912 = vmatprep.subr.mxu0 0.0
  %4913 = vmatpush1.msra.mxu0 %v4468
  %4914 = vmatprep.subr.mxu0 0.0
  %4915 = vmatpush1.msra.mxu0 %v4473
  %4916 = vmatprep.subr.mxu0 0.0
  %4917 = vmatpush1.msra.mxu0 %v4478
  %4918 = vmatprep.subr.mxu0 0.0
  %4919 = vmatpush1.msra.mxu0 %v4483
  %4920 = vmatprep.subr.mxu0 0.0
  %4921 = vmatpush1.msra.mxu0 0.0
  %4922 = vmatprep.subr.mxu0 0.0
  %4923 = vmatpush1.msra.mxu0 0.0
  %4924 = vmatprep.subr.mxu0 0.0
  %4925 = vmatpush1.msra.mxu0 0.0
  %4926 = vmatprep.subr.mxu0 0.0
  %4927 = vmatpush1.msra.mxu0 0.0
  %4928 = vmatprep.subr.mxu0 0.0
  %4929 = vmatpush1.msra.mxu0 0.0
  %4930 = vmatprep.subr.mxu0 0.0
  %4931 = vmatpush1.msra.mxu0 0.0
  %4932 = vmatprep.subr.mxu0 0.0
  %4933 = vmatpush1.msra.mxu0 0.0
  %4934 = vmatprep.subr.mxu0 0.0
  %4935 = vmatpush1.msra.mxu0 0.0
  %4936 = vmatprep.subr.mxu0 0.0
  %4937 = vmatpush1.msra.mxu0 0.0
  %4938 = vmatprep.subr.mxu0 0.0
  %4939 = vmatpush1.msra.mxu0 0.0
  %4940 = vmatprep.subr.mxu0 0.0
  %4941 = vmatpush1.msra.mxu0 0.0
  %4942 = vmatprep.subr.mxu0 0.0
  %4943 = vmatpush1.msra.mxu0 0.0
  %4944 = vmatprep.subr.mxu0 0.0
  %4945 = vmatpush1.msra.mxu0 0.0
  %4946 = vmatprep.subr.mxu0 0.0
  %4947 = vmatpush1.msra.mxu0 0.0
  %4948 = vmatprep.subr.mxu0 0.0
  %4949 = vmatpush1.msra.mxu0 0.0
  %4950 = vmatprep.subr.mxu0 0.0
  %4951 = vmatpush1.msra.mxu0 0.0
  %4952 = vmatprep.mubr.f32.mxu0 0.0
  %4953 = vmatmul.mubr.f32.gmra.mrb[0].mxu0 %v4872
  %v4954 = vpop.f32.mrb[0].mxu0
  %v4955 = vadd.f32 0.0, %v4954
  %v4956 = vpop.f32.mrb[0].mxu0
  %4957 = vmatprep.mubr.f32.mxu0 0.0
  %4958 = vmatmul.mubr.f32.gmra.mrb[0].mxu0 %v4873
  %v4959 = vpop.f32.mrb[0].mxu0
  %v4960 = vadd.f32 0.0, %v4959
  %v4961 = vpop.f32.mrb[0].mxu0
  %4962 = vmatprep.mubr.f32.mxu0 0.0
  %4963 = vmatmul.mubr.f32.gmra.mrb[0].mxu0 %v4874
  %v4964 = vpop.f32.mrb[0].mxu0
  %v4965 = vadd.f32 0.0, %v4964
  %v4966 = vpop.f32.mrb[0].mxu0
  %4967 = vmatprep.mubr.f32.mxu0 0.0
  %4968 = vmatmul.mubr.f32.gmra.mrb[0].mxu0 %v4875
  %v4969 = vpop.f32.mrb[0].mxu0
  %v4970 = vadd.f32 0.0, %v4969
  %v4971 = vpop.f32.mrb[0].mxu0
  %4972 = vmatprep.mubr.f32.mxu0 0.0
  %4973 = vmatmul.mubr.f32.gmra.mrb[0].mxu0 %v4876
  %v4974 = vpop.f32.mrb[0].mxu0
  %v4975 = vadd.f32 0.0, %v4974
  %v4976 = vpop.f32.mrb[0].mxu0
  %4977 = vmatprep.mubr.f32.mxu0 0.0
  %4978 = vmatmul.mubr.f32.gmra.mrb[0].mxu0 %v4877
  %v4979 = vpop.f32.mrb[0].mxu0
  %v4980 = vadd.f32 0.0, %v4979
  %v4981 = vpop.f32.mrb[0].mxu0
  %4982 = vmatprep.mubr.f32.mxu0 0.0
  %4983 = vmatmul.mubr.f32.gmra.mrb[0].mxu0 %v4878
  %v4984 = vpop.f32.mrb[0].mxu0
  %v4985 = vadd.f32 0.0, %v4984
  %v4986 = vpop.f32.mrb[0].mxu0
  %4987 = vmatprep.mubr.f32.mxu0 0.0
  %4988 = vmatmul.mubr.f32.gmra.mrb[0].mxu0 %v4879
  %v4989 = vpop.f32.mrb[0].mxu0
  %v4990 = vadd.f32 0.0, %v4989
  %v4991 = vpop.f32.mrb[0].mxu0
  %4992 = vmatprep.mubr.f32.mxu0 0.0
  %4993 = vmatmul.mubr.f32.gmra.mrb[0].mxu0 %v4880
  %v4994 = vpop.f32.mrb[0].mxu0
  %v4995 = vadd.f32 0.0, %v4994
  %v4996 = vpop.f32.mrb[0].mxu0
  %4997 = vmatprep.mubr.f32.mxu0 0.0
  %4998 = vmatmul.mubr.f32.gmra.mrb[0].mxu0 %v4881
  %v4999 = vpop.f32.mrb[0].mxu0
  %v5000 = vadd.f32 0.0, %v4999
  %v5001 = vpop.f32.mrb[0].mxu0
  %5002 = vmatprep.mubr.f32.mxu0 0.0
  %5003 = vmatmul.mubr.f32.gmra.mrb[0].mxu0 %v4882
  %v5004 = vpop.f32.mrb[0].mxu0
  %v5005 = vadd.f32 0.0, %v5004
  %v5006 = vpop.f32.mrb[0].mxu0
  %5007 = vmatprep.mubr.f32.mxu0 0.0
  %5008 = vmatmul.mubr.f32.gmra.mrb[0].mxu0 %v4883
  %v5009 = vpop.f32.mrb[0].mxu0
  %v5010 = vadd.f32 0.0, %v5009
  %v5011 = vpop.f32.mrb[0].mxu0
  %5012 = vmatprep.mubr.f32.mxu0 0.0
  %5013 = vmatmul.mubr.f32.gmra.mrb[0].mxu0 %v4884
  %v5014 = vpop.f32.mrb[0].mxu0
  %v5015 = vadd.f32 0.0, %v5014
  %v5016 = vpop.f32.mrb[0].mxu0
  %5017 = vmatprep.mubr.f32.mxu0 0.0
  %5018 = vmatmul.mubr.f32.gmra.mrb[0].mxu0 %v4885
  %v5019 = vpop.f32.mrb[0].mxu0
  %v5020 = vadd.f32 0.0, %v5019
  %v5021 = vpop.f32.mrb[0].mxu0
  %5022 = vmatprep.mubr.f32.mxu0 0.0
  %5023 = vmatmul.mubr.f32.gmra.mrb[0].mxu0 %v4886
  %v5024 = vpop.f32.mrb[0].mxu0
  %v5025 = vadd.f32 0.0, %v5024
  %v5026 = vpop.f32.mrb[0].mxu0
  %5027 = vmatprep.mubr.f32.mxu0 0.0
  %5028 = vmatmul.mubr.f32.gmra.mrb[0].mxu0 %v4887
  %v5029 = vpop.f32.mrb[0].mxu0
  %v5030 = vadd.f32 0.0, %v5029
  %v5031 = vpop.f32.mrb[0].mxu0
  %5032 = vdwg.mxu0
  %s5033 = scalar_lea.vmem %s5, 24
  %v5034 = vld [vmem:[%s5033] sm:$0xff]
  %v5036 = vsel %vm839, %v4955, 0
  %v5039 = vsel %vm839, %v4960, 0
  %v5042 = vsel %vm839, %v4965, 0
  %v5045 = vsel %vm839, %v4970, 0
  %v5048 = vsel %vm839, %v4975, 0
  %v5051 = vsel %vm839, %v4980, 0
  %v5054 = vsel %vm839, %v4985, 0
  %v5057 = vsel %vm839, %v4990, 0
  %v5060 = vsel %vm839, %v4995, 0
  %v5063 = vsel %vm839, %v5000, 0
  %v5066 = vsel %vm839, %v5005, 0
  %v5069 = vsel %vm839, %v5010, 0
  %v5072 = vsel %vm839, %v5015, 0
  %v5075 = vsel %vm839, %v5020, 0
  %v5078 = vsel %vm839, %v5025, 0
  %v5081 = vsel %vm839, %v5030, 0
  %5083 = vmatprep.subr.mxu0 0.0
  %5084 = vmatpush1.msra.mxu0 %v5034
  %5085 = vmatprep.subr.mxu0 0.0
  %5086 = vmatpush1.msra.mxu0 0.0
  %5087 = vmatprep.subr.mxu0 0.0
  %5088 = vmatpush1.msra.mxu0 0.0
  %5089 = vmatprep.subr.mxu0 0.0
  %5090 = vmatpush1.msra.mxu0 0.0
  %5091 = vmatprep.subr.mxu0 0.0
  %5092 = vmatpush1.msra.mxu0 0.0
  %5093 = vmatprep.subr.mxu0 0.0
  %5094 = vmatpush1.msra.mxu0 0.0
  %5095 = vmatprep.subr.mxu0 0.0
  %5096 = vmatpush1.msra.mxu0 0.0
  %5097 = vmatprep.subr.mxu0 0.0
  %5098 = vmatpush1.msra.mxu0 0.0
  %5099 = vmatprep.subr.mxu0 0.0
  %5100 = vmatpush1.msra.mxu0 0.0
  %5101 = vmatprep.subr.mxu0 0.0
  %5102 = vmatpush1.msra.mxu0 0.0
  %5103 = vmatprep.subr.mxu0 0.0
  %5104 = vmatpush1.msra.mxu0 0.0
  %5105 = vmatprep.subr.mxu0 0.0
  %5106 = vmatpush1.msra.mxu0 0.0
  %5107 = vmatprep.subr.mxu0 0.0
  %5108 = vmatpush1.msra.mxu0 0.0
  %5109 = vmatprep.subr.mxu0 0.0
  %5110 = vmatpush1.msra.mxu0 0.0
  %5111 = vmatprep.subr.mxu0 0.0
  %5112 = vmatpush1.msra.mxu0 0.0
  %5113 = vmatprep.subr.mxu0 0.0
  %5114 = vmatpush1.msra.mxu0 0.0
  %5115 = vmatprep.subr.mxu0 0.0
  %5116 = vmatpush1.msra.mxu0 0.0
  %5117 = vmatprep.subr.mxu0 0.0
  %5118 = vmatpush1.msra.mxu0 0.0
  %5119 = vmatprep.subr.mxu0 0.0
  %5120 = vmatpush1.msra.mxu0 0.0
  %5121 = vmatprep.subr.mxu0 0.0
  %5122 = vmatpush1.msra.mxu0 0.0
  %5123 = vmatprep.subr.mxu0 0.0
  %5124 = vmatpush1.msra.mxu0 0.0
  %5125 = vmatprep.subr.mxu0 0.0
  %5126 = vmatpush1.msra.mxu0 0.0
  %5127 = vmatprep.subr.mxu0 0.0
  %5128 = vmatpush1.msra.mxu0 0.0
  %5129 = vmatprep.subr.mxu0 0.0
  %5130 = vmatpush1.msra.mxu0 0.0
  %5131 = vmatprep.subr.mxu0 0.0
  %5132 = vmatpush1.msra.mxu0 0.0
  %5133 = vmatprep.subr.mxu0 0.0
  %5134 = vmatpush1.msra.mxu0 0.0
  %5135 = vmatprep.subr.mxu0 0.0
  %5136 = vmatpush1.msra.mxu0 0.0
  %5137 = vmatprep.subr.mxu0 0.0
  %5138 = vmatpush1.msra.mxu0 0.0
  %5139 = vmatprep.subr.mxu0 0.0
  %5140 = vmatpush1.msra.mxu0 0.0
  %5141 = vmatprep.subr.mxu0 0.0
  %5142 = vmatpush1.msra.mxu0 0.0
  %5143 = vmatprep.subr.mxu0 0.0
  %5144 = vmatpush1.msra.mxu0 0.0
  %5145 = vmatprep.subr.mxu0 0.0
  %5146 = vmatpush1.msra.mxu0 0.0
  %5147 = vmatprep.mubr.f32.mxu0 0.0
  %5148 = vmatmul.mubr.f32.gmra.mrb[0].mxu0 %v5036
  %v5149 = vpop.f32.mrb[0].mxu0
  %v5150 = vadd.f32 0.0, %v5149
  %v5151 = vpop.f32.mrb[0].mxu0
  %5152 = vmatprep.mubr.f32.mxu0 0.0
  %5153 = vmatmul.mubr.f32.gmra.mrb[0].mxu0 %v5039
  %v5154 = vpop.f32.mrb[0].mxu0
  %v5155 = vadd.f32 0.0, %v5154
  %v5156 = vpop.f32.mrb[0].mxu0
  %5157 = vmatprep.mubr.f32.mxu0 0.0
  %5158 = vmatmul.mubr.f32.gmra.mrb[0].mxu0 %v5042
  %v5159 = vpop.f32.mrb[0].mxu0
  %v5160 = vadd.f32 0.0, %v5159
  %v5161 = vpop.f32.mrb[0].mxu0
  %5162 = vmatprep.mubr.f32.mxu0 0.0
  %5163 = vmatmul.mubr.f32.gmra.mrb[0].mxu0 %v5045
  %v5164 = vpop.f32.mrb[0].mxu0
  %v5165 = vadd.f32 0.0, %v5164
  %v5166 = vpop.f32.mrb[0].mxu0
  %5167 = vmatprep.mubr.f32.mxu0 0.0
  %5168 = vmatmul.mubr.f32.gmra.mrb[0].mxu0 %v5048
  %v5169 = vpop.f32.mrb[0].mxu0
  %v5170 = vadd.f32 0.0, %v5169
  %v5171 = vpop.f32.mrb[0].mxu0
  %5172 = vmatprep.mubr.f32.mxu0 0.0
  %5173 = vmatmul.mubr.f32.gmra.mrb[0].mxu0 %v5051
  %v5174 = vpop.f32.mrb[0].mxu0
  %v5175 = vadd.f32 0.0, %v5174
  %v5176 = vpop.f32.mrb[0].mxu0
  %5177 = vmatprep.mubr.f32.mxu0 0.0
  %5178 = vmatmul.mubr.f32.gmra.mrb[0].mxu0 %v5054
  %v5179 = vpop.f32.mrb[0].mxu0
  %v5180 = vadd.f32 0.0, %v5179
  %v5181 = vpop.f32.mrb[0].mxu0
  %5182 = vmatprep.mubr.f32.mxu0 0.0
  %5183 = vmatmul.mubr.f32.gmra.mrb[0].mxu0 %v5057
  %v5184 = vpop.f32.mrb[0].mxu0
  %v5185 = vadd.f32 0.0, %v5184
  %v5186 = vpop.f32.mrb[0].mxu0
  %5187 = vmatprep.mubr.f32.mxu0 0.0
  %5188 = vmatmul.mubr.f32.gmra.mrb[0].mxu0 %v5060
  %v5189 = vpop.f32.mrb[0].mxu0
  %v5190 = vadd.f32 0.0, %v5189
  %v5191 = vpop.f32.mrb[0].mxu0
  %5192 = vmatprep.mubr.f32.mxu0 0.0
  %5193 = vmatmul.mubr.f32.gmra.mrb[0].mxu0 %v5063
  %v5194 = vpop.f32.mrb[0].mxu0
  %v5195 = vadd.f32 0.0, %v5194
  %v5196 = vpop.f32.mrb[0].mxu0
  %5197 = vmatprep.mubr.f32.mxu0 0.0
  %5198 = vmatmul.mubr.f32.gmra.mrb[0].mxu0 %v5066
  %v5199 = vpop.f32.mrb[0].mxu0
  %v5200 = vadd.f32 0.0, %v5199
  %v5201 = vpop.f32.mrb[0].mxu0
  %5202 = vmatprep.mubr.f32.mxu0 0.0
  %5203 = vmatmul.mubr.f32.gmra.mrb[0].mxu0 %v5069
  %v5204 = vpop.f32.mrb[0].mxu0
  %v5205 = vadd.f32 0.0, %v5204
  %v5206 = vpop.f32.mrb[0].mxu0
  %5207 = vmatprep.mubr.f32.mxu0 0.0
  %5208 = vmatmul.mubr.f32.gmra.mrb[0].mxu0 %v5072
  %v5209 = vpop.f32.mrb[0].mxu0
  %v5210 = vadd.f32 0.0, %v5209
  %v5211 = vpop.f32.mrb[0].mxu0
  %5212 = vmatprep.mubr.f32.mxu0 0.0
  %5213 = vmatmul.mubr.f32.gmra.mrb[0].mxu0 %v5075
  %v5214 = vpop.f32.mrb[0].mxu0
  %v5215 = vadd.f32 0.0, %v5214
  %v5216 = vpop.f32.mrb[0].mxu0
  %5217 = vmatprep.mubr.f32.mxu0 0.0
  %5218 = vmatmul.mubr.f32.gmra.mrb[0].mxu0 %v5078
  %v5219 = vpop.f32.mrb[0].mxu0
  %v5220 = vadd.f32 0.0, %v5219
  %v5221 = vpop.f32.mrb[0].mxu0
  %5222 = vmatprep.mubr.f32.mxu0 0.0
  %5223 = vmatmul.mubr.f32.gmra.mrb[0].mxu0 %v5081
  %v5224 = vpop.f32.mrb[0].mxu0
  %v5225 = vadd.f32 0.0, %v5224
  %v5226 = vpop.f32.mrb[0].mxu0
  %5227 = vdwg.mxu0
  %v5228 = vadd.f32 %v3996, %v5150
  %v5229 = vadd.f32 %v3997, %v5155
  %v5230 = vadd.f32 %v3998, %v5160
  %v5231 = vadd.f32 %v3999, %v5165
  %v5232 = vadd.f32 %v4000, %v5170
  %v5233 = vadd.f32 %v4001, %v5175
  %v5234 = vadd.f32 %v4002, %v5180
  %v5235 = vadd.f32 %v4003, %v5185
  %v5236 = vadd.f32 %v4004, %v5190
  %v5237 = vadd.f32 %v4005, %v5195
  %v5238 = vadd.f32 %v4006, %v5200
  %v5239 = vadd.f32 %v4007, %v5205
  %v5240 = vadd.f32 %v4008, %v5210
  %v5241 = vadd.f32 %v4009, %v5215
  %v5242 = vadd.f32 %v4010, %v5220
  %v5243 = vadd.f32 %v4011, %v5225
  %v5244 = vadd.f32 %v35, %v5228
  %v5245 = vadd.f32 %v36, %v5229
  %v5246 = vadd.f32 %v37, %v5230
  %v5247 = vadd.f32 %v38, %v5231
  %v5248 = vadd.f32 %v39, %v5232
  %v5249 = vadd.f32 %v40, %v5233
  %v5250 = vadd.f32 %v41, %v5234
  %v5251 = vadd.f32 %v42, %v5235
  %v5252 = vadd.f32 %v43, %v5236
  %v5253 = vadd.f32 %v44, %v5237
  %v5254 = vadd.f32 %v45, %v5238
  %v5255 = vadd.f32 %v46, %v5239
  %v5256 = vadd.f32 %v47, %v5240
  %v5257 = vadd.f32 %v48, %v5241
  %v5258 = vadd.f32 %v49, %v5242
  %v5259 = vadd.f32 %v50, %v5243
  %v5260 = vlaneseq
  %v5261 = vshrl.u32 %v5260, 7
  %v5262 = vsub.s32 0, %v5261
  %v5263 = vrot.slane %v52, %v5262
  %v5264 = vadd.f32 %v5244, %v5263
  %v5265 = vadd.f32 %v5245, %v5263
  %v5266 = vadd.f32 %v5246, %v5263
  %v5267 = vadd.f32 %v5247, %v5263
  %v5268 = vadd.f32 %v5248, %v5263
  %v5269 = vadd.f32 %v5249, %v5263
  %v5270 = vadd.f32 %v5250, %v5263
  %v5271 = vadd.f32 %v5251, %v5263
  %v5272 = vadd.f32 %v5252, %v5263
  %v5273 = vadd.f32 %v5253, %v5263
  %v5274 = vadd.f32 %v5254, %v5263
  %v5275 = vadd.f32 %v5255, %v5263
  %v5276 = vadd.f32 %v5256, %v5263
  %v5277 = vadd.f32 %v5257, %v5263
  %v5278 = vadd.f32 %v5258, %v5263
  %v5279 = vadd.f32 %v5259, %v5263
  %v5280 = vsel %vm53, %v5264, 0.0
  %5281 = vadd.xlane.f32.xlu0 %v5280
  %v5282 = vpop.xlane.xlu0 %5281
  %v5283 = vsel %vm53, %v5265, 0.0
  %5284 = vadd.xlane.f32.xlu0 %v5283
  %v5285 = vpop.xlane.xlu0 %5284
  %v5286 = vsel %vm53, %v5266, 0.0
  %5287 = vadd.xlane.f32.xlu0 %v5286
  %v5288 = vpop.xlane.xlu0 %5287
  %v5289 = vsel %vm53, %v5267, 0.0
  %5290 = vadd.xlane.f32.xlu0 %v5289
  %v5291 = vpop.xlane.xlu0 %5290
  %v5292 = vsel %vm53, %v5268, 0.0
  %5293 = vadd.xlane.f32.xlu0 %v5292
  %v5294 = vpop.xlane.xlu0 %5293
  %v5295 = vsel %vm53, %v5269, 0.0
  %5296 = vadd.xlane.f32.xlu0 %v5295
  %v5297 = vpop.xlane.xlu0 %5296
  %v5298 = vsel %vm53, %v5270, 0.0
  %5299 = vadd.xlane.f32.xlu0 %v5298
  %v5300 = vpop.xlane.xlu0 %5299
  %v5301 = vsel %vm53, %v5271, 0.0
  %5302 = vadd.xlane.f32.xlu0 %v5301
  %v5303 = vpop.xlane.xlu0 %5302
  %v5304 = vsel %vm53, %v5272, 0.0
  %5305 = vadd.xlane.f32.xlu0 %v5304
  %v5306 = vpop.xlane.xlu0 %5305
  %v5307 = vsel %vm53, %v5273, 0.0
  %5308 = vadd.xlane.f32.xlu0 %v5307
  %v5309 = vpop.xlane.xlu0 %5308
  %v5310 = vsel %vm53, %v5274, 0.0
  %5311 = vadd.xlane.f32.xlu0 %v5310
  %v5312 = vpop.xlane.xlu0 %5311
  %v5313 = vsel %vm53, %v5275, 0.0
  %5314 = vadd.xlane.f32.xlu0 %v5313
  %v5315 = vpop.xlane.xlu0 %5314
  %v5316 = vsel %vm53, %v5276, 0.0
  %5317 = vadd.xlane.f32.xlu0 %v5316
  %v5318 = vpop.xlane.xlu0 %5317
  %v5319 = vsel %vm53, %v5277, 0.0
  %5320 = vadd.xlane.f32.xlu0 %v5319
  %v5321 = vpop.xlane.xlu0 %5320
  %v5322 = vsel %vm53, %v5278, 0.0
  %5323 = vadd.xlane.f32.xlu0 %v5322
  %v5324 = vpop.xlane.xlu0 %5323
  %v5325 = vsel %vm53, %v5279, 0.0
  %5326 = vadd.xlane.f32.xlu0 %v5325
  %v5327 = vpop.xlane.xlu0 %5326
  %v5328 = vmul.f32 %v5282, %v102
  %v5329 = vmul.f32 %v5285, %v102
  %v5330 = vmul.f32 %v5288, %v102
  %v5331 = vmul.f32 %v5291, %v102
  %v5332 = vmul.f32 %v5294, %v102
  %v5333 = vmul.f32 %v5297, %v102
  %v5334 = vmul.f32 %v5300, %v102
  %v5335 = vmul.f32 %v5303, %v102
  %v5336 = vmul.f32 %v5306, %v102
  %v5337 = vmul.f32 %v5309, %v102
  %v5338 = vmul.f32 %v5312, %v102
  %v5339 = vmul.f32 %v5315, %v102
  %v5340 = vmul.f32 %v5318, %v102
  %v5341 = vmul.f32 %v5321, %v102
  %v5342 = vmul.f32 %v5324, %v102
  %v5343 = vmul.f32 %v5327, %v102
  %v5344 = vsub.f32 %v5264, %v5328
  %v5345 = vsub.f32 %v5265, %v5329
  %v5346 = vsub.f32 %v5266, %v5330
  %v5347 = vsub.f32 %v5267, %v5331
  %v5348 = vsub.f32 %v5268, %v5332
  %v5349 = vsub.f32 %v5269, %v5333
  %v5350 = vsub.f32 %v5270, %v5334
  %v5351 = vsub.f32 %v5271, %v5335
  %v5352 = vsub.f32 %v5272, %v5336
  %v5353 = vsub.f32 %v5273, %v5337
  %v5354 = vsub.f32 %v5274, %v5338
  %v5355 = vsub.f32 %v5275, %v5339
  %v5356 = vsub.f32 %v5276, %v5340
  %v5357 = vsub.f32 %v5277, %v5341
  %v5358 = vsub.f32 %v5278, %v5342
  %v5359 = vsub.f32 %v5279, %v5343
  %v5360 = vmul.f32 %v5344, %v5344
  %v5361 = vmul.f32 %v5345, %v5345
  %v5362 = vmul.f32 %v5346, %v5346
  %v5363 = vmul.f32 %v5347, %v5347
  %v5364 = vmul.f32 %v5348, %v5348
  %v5365 = vmul.f32 %v5349, %v5349
  %v5366 = vmul.f32 %v5350, %v5350
  %v5367 = vmul.f32 %v5351, %v5351
  %v5368 = vmul.f32 %v5352, %v5352
  %v5369 = vmul.f32 %v5353, %v5353
  %v5370 = vmul.f32 %v5354, %v5354
  %v5371 = vmul.f32 %v5355, %v5355
  %v5372 = vmul.f32 %v5356, %v5356
  %v5373 = vmul.f32 %v5357, %v5357
  %v5374 = vmul.f32 %v5358, %v5358
  %v5375 = vmul.f32 %v5359, %v5359
  %v5376 = vsel %vm53, %v5360, 0.0
  %5377 = vadd.xlane.f32.xlu0 %v5376
  %v5378 = vpop.xlane.xlu0 %5377
  %v5379 = vsel %vm53, %v5361, 0.0
  %5380 = vadd.xlane.f32.xlu0 %v5379
  %v5381 = vpop.xlane.xlu0 %5380
  %v5382 = vsel %vm53, %v5362, 0.0
  %5383 = vadd.xlane.f32.xlu0 %v5382
  %v5384 = vpop.xlane.xlu0 %5383
  %v5385 = vsel %vm53, %v5363, 0.0
  %5386 = vadd.xlane.f32.xlu0 %v5385
  %v5387 = vpop.xlane.xlu0 %5386
  %v5388 = vsel %vm53, %v5364, 0.0
  %5389 = vadd.xlane.f32.xlu0 %v5388
  %v5390 = vpop.xlane.xlu0 %5389
  %v5391 = vsel %vm53, %v5365, 0.0
  %5392 = vadd.xlane.f32.xlu0 %v5391
  %v5393 = vpop.xlane.xlu0 %5392
  %v5394 = vsel %vm53, %v5366, 0.0
  %5395 = vadd.xlane.f32.xlu0 %v5394
  %v5396 = vpop.xlane.xlu0 %5395
  %v5397 = vsel %vm53, %v5367, 0.0
  %5398 = vadd.xlane.f32.xlu0 %v5397
  %v5399 = vpop.xlane.xlu0 %5398
  %v5400 = vsel %vm53, %v5368, 0.0
  %5401 = vadd.xlane.f32.xlu0 %v5400
  %v5402 = vpop.xlane.xlu0 %5401
  %v5403 = vsel %vm53, %v5369, 0.0
  %5404 = vadd.xlane.f32.xlu0 %v5403
  %v5405 = vpop.xlane.xlu0 %5404
  %v5406 = vsel %vm53, %v5370, 0.0
  %5407 = vadd.xlane.f32.xlu0 %v5406
  %v5408 = vpop.xlane.xlu0 %5407
  %v5409 = vsel %vm53, %v5371, 0.0
  %5410 = vadd.xlane.f32.xlu0 %v5409
  %v5411 = vpop.xlane.xlu0 %5410
  %v5412 = vsel %vm53, %v5372, 0.0
  %5413 = vadd.xlane.f32.xlu0 %v5412
  %v5414 = vpop.xlane.xlu0 %5413
  %v5415 = vsel %vm53, %v5373, 0.0
  %5416 = vadd.xlane.f32.xlu0 %v5415
  %v5417 = vpop.xlane.xlu0 %5416
  %v5418 = vsel %vm53, %v5374, 0.0
  %5419 = vadd.xlane.f32.xlu0 %v5418
  %v5420 = vpop.xlane.xlu0 %5419
  %v5421 = vsel %vm53, %v5375, 0.0
  %5422 = vadd.xlane.f32.xlu0 %v5421
  %v5423 = vpop.xlane.xlu0 %5422
  %v5424 = vmul.f32 %v5378, %v102
  %v5425 = vmul.f32 %v5381, %v102
  %v5426 = vmul.f32 %v5384, %v102
  %v5427 = vmul.f32 %v5387, %v102
  %v5428 = vmul.f32 %v5390, %v102
  %v5429 = vmul.f32 %v5393, %v102
  %v5430 = vmul.f32 %v5396, %v102
  %v5431 = vmul.f32 %v5399, %v102
  %v5432 = vmul.f32 %v5402, %v102
  %v5433 = vmul.f32 %v5405, %v102
  %v5434 = vmul.f32 %v5408, %v102
  %v5435 = vmul.f32 %v5411, %v102
  %v5436 = vmul.f32 %v5414, %v102
  %v5437 = vmul.f32 %v5417, %v102
  %v5438 = vmul.f32 %v5420, %v102
  %v5439 = vmul.f32 %v5423, %v102
  %v5440 = vadd.f32 %v5424, 1e-05
  %v5441 = vadd.f32 %v5425, 1e-05
  %v5442 = vadd.f32 %v5426, 1e-05
  %v5443 = vadd.f32 %v5427, 1e-05
  %v5444 = vadd.f32 %v5428, 1e-05
  %v5445 = vadd.f32 %v5429, 1e-05
  %v5446 = vadd.f32 %v5430, 1e-05
  %v5447 = vadd.f32 %v5431, 1e-05
  %v5448 = vadd.f32 %v5432, 1e-05
  %v5449 = vadd.f32 %v5433, 1e-05
  %v5450 = vadd.f32 %v5434, 1e-05
  %v5451 = vadd.f32 %v5435, 1e-05
  %v5452 = vadd.f32 %v5436, 1e-05
  %v5453 = vadd.f32 %v5437, 1e-05
  %v5454 = vadd.f32 %v5438, 1e-05
  %v5455 = vadd.f32 %v5439, 1e-05
  %v5456 = vrsqrt.pop %v5440
  %v5457 = vrsqrt.pop %v5441
  %v5458 = vrsqrt.pop %v5442
  %v5459 = vrsqrt.pop %v5443
  %v5460 = vrsqrt.pop %v5444
  %v5461 = vrsqrt.pop %v5445
  %v5462 = vrsqrt.pop %v5446
  %v5463 = vrsqrt.pop %v5447
  %v5464 = vrsqrt.pop %v5448
  %v5465 = vrsqrt.pop %v5449
  %v5466 = vrsqrt.pop %v5450
  %v5467 = vrsqrt.pop %v5451
  %v5468 = vrsqrt.pop %v5452
  %v5469 = vrsqrt.pop %v5453
  %v5470 = vrsqrt.pop %v5454
  %v5471 = vrsqrt.pop %v5455
  %v5472 = vmul.f32 %v5344, %v5456
  %v5473 = vmul.f32 %v5345, %v5457
  %v5474 = vmul.f32 %v5346, %v5458
  %v5475 = vmul.f32 %v5347, %v5459
  %v5476 = vmul.f32 %v5348, %v5460
  %v5477 = vmul.f32 %v5349, %v5461
  %v5478 = vmul.f32 %v5350, %v5462
  %v5479 = vmul.f32 %v5351, %v5463
  %v5480 = vmul.f32 %v5352, %v5464
  %v5481 = vmul.f32 %v5353, %v5465
  %v5482 = vmul.f32 %v5354, %v5466
  %v5483 = vmul.f32 %v5355, %v5467
  %v5484 = vmul.f32 %v5356, %v5468
  %v5485 = vmul.f32 %v5357, %v5469
  %v5486 = vmul.f32 %v5358, %v5470
  %v5487 = vmul.f32 %v5359, %v5471
  %v5488 = vlaneseq
  %v5489 = vshrl.u32 %v5488, 7
  %v5490 = vsub.s32 2, %v5489
  %v5491 = vrot.slane %v51, %v5490
  %v5492 = vmul.f32 %v5472, %v5491
  %v5493 = vmul.f32 %v5473, %v5491
  %v5494 = vmul.f32 %v5474, %v5491
  %v5495 = vmul.f32 %v5475, %v5491
  %v5496 = vmul.f32 %v5476, %v5491
  %v5497 = vmul.f32 %v5477, %v5491
  %v5498 = vmul.f32 %v5478, %v5491
  %v5499 = vmul.f32 %v5479, %v5491
  %v5500 = vmul.f32 %v5480, %v5491
  %v5501 = vmul.f32 %v5481, %v5491
  %v5502 = vmul.f32 %v5482, %v5491
  %v5503 = vmul.f32 %v5483, %v5491
  %v5504 = vmul.f32 %v5484, %v5491
  %v5505 = vmul.f32 %v5485, %v5491
  %v5506 = vmul.f32 %v5486, %v5491
  %v5507 = vmul.f32 %v5487, %v5491
  %v5508 = vlaneseq
  %v5509 = vshrl.u32 %v5508, 7
  %v5510 = vsub.s32 3, %v5509
  %v5511 = vrot.slane %v51, %v5510
  %v5512 = vadd.f32 %v5492, %v5511
  %v5513 = vadd.f32 %v5493, %v5511
  %v5514 = vadd.f32 %v5494, %v5511
  %v5515 = vadd.f32 %v5495, %v5511
  %v5516 = vadd.f32 %v5496, %v5511
  %v5517 = vadd.f32 %v5497, %v5511
  %v5518 = vadd.f32 %v5498, %v5511
  %v5519 = vadd.f32 %v5499, %v5511
  %v5520 = vadd.f32 %v5500, %v5511
  %v5521 = vadd.f32 %v5501, %v5511
  %v5522 = vadd.f32 %v5502, %v5511
  %v5523 = vadd.f32 %v5503, %v5511
  %v5524 = vadd.f32 %v5504, %v5511
  %v5525 = vadd.f32 %v5505, %v5511
  %v5526 = vadd.f32 %v5506, %v5511
  %v5527 = vadd.f32 %v5507, %v5511
  %v5528 = vld [vmem:[%s7] sm:$0xff]
  %v5529 = vld [vmem:[%s7 + $0x8] sm:$0xff]
  %v5530 = vld [vmem:[%s7 + $0x10] sm:$0xff]
  %v5531 = vld [vmem:[%s7 + $0x18] sm:$0xff]
  %v5532 = vld [vmem:[%s8] sm:$0x1]
  %v5534 = vlaneseq
  %v5535 = vshrl.u32 %v5534, 7
  %v5536 = vsub.s32 0, %v5535
  %v5537 = vrot.slane %v5532, %v5536
  %v5540 = vsel %vm53, %v5512, 0
  %v5543 = vsel %vm53, %v5513, 0
  %v5546 = vsel %vm53, %v5514, 0
  %v5549 = vsel %vm53, %v5515, 0
  %v5552 = vsel %vm53, %v5516, 0
  %v5555 = vsel %vm53, %v5517, 0
  %v5558 = vsel %vm53, %v5518, 0
  %v5561 = vsel %vm53, %v5519, 0
  %v5564 = vsel %vm53, %v5520, 0
  %v5567 = vsel %vm53, %v5521, 0
  %v5570 = vsel %vm53, %v5522, 0
  %v5573 = vsel %vm53, %v5523, 0
  %v5576 = vsel %vm53, %v5524, 0
  %v5579 = vsel %vm53, %v5525, 0
  %v5582 = vsel %vm53, %v5526, 0
  %v5585 = vsel %vm53, %v5527, 0
  %5587 = vmatprep.subr.mxu0 0.0
  %5588 = vmatpush1.msra.mxu0 %v5528
  %5589 = vmatprep.subr.mxu0 0.0
  %5590 = vmatpush1.msra.mxu0 %v5529
  %5591 = vmatprep.subr.mxu0 0.0
  %5592 = vmatpush1.msra.mxu0 %v5530
  %5593 = vmatprep.subr.mxu0 0.0
  %5594 = vmatpush1.msra.mxu0 %v5531
  %5595 = vmatprep.subr.mxu0 0.0
  %5596 = vmatpush1.msra.mxu0 0.0
  %5597 = vmatprep.subr.mxu0 0.0
  %5598 = vmatpush1.msra.mxu0 0.0
  %5599 = vmatprep.subr.mxu0 0.0
  %5600 = vmatpush1.msra.mxu0 0.0
  %5601 = vmatprep.subr.mxu0 0.0
  %5602 = vmatpush1.msra.mxu0 0.0
  %5603 = vmatprep.subr.mxu0 0.0
  %5604 = vmatpush1.msra.mxu0 0.0
  %5605 = vmatprep.subr.mxu0 0.0
  %5606 = vmatpush1.msra.mxu0 0.0
  %5607 = vmatprep.subr.mxu0 0.0
  %5608 = vmatpush1.msra.mxu0 0.0
  %5609 = vmatprep.subr.mxu0 0.0
  %5610 = vmatpush1.msra.mxu0 0.0
  %5611 = vmatprep.subr.mxu0 0.0
  %5612 = vmatpush1.msra.mxu0 0.0
  %5613 = vmatprep.subr.mxu0 0.0
  %5614 = vmatpush1.msra.mxu0 0.0
  %5615 = vmatprep.subr.mxu0 0.0
  %5616 = vmatpush1.msra.mxu0 0.0
  %5617 = vmatprep.subr.mxu0 0.0
  %5618 = vmatpush1.msra.mxu0 0.0
  %5619 = vmatprep.subr.mxu0 0.0
  %5620 = vmatpush1.msra.mxu0 0.0
  %5621 = vmatprep.subr.mxu0 0.0
  %5622 = vmatpush1.msra.mxu0 0.0
  %5623 = vmatprep.subr.mxu0 0.0
  %5624 = vmatpush1.msra.mxu0 0.0
  %5625 = vmatprep.subr.mxu0 0.0
  %5626 = vmatpush1.msra.mxu0 0.0
  %5627 = vmatprep.subr.mxu0 0.0
  %5628 = vmatpush1.msra.mxu0 0.0
  %5629 = vmatprep.subr.mxu0 0.0
  %5630 = vmatpush1.msra.mxu0 0.0
  %5631 = vmatprep.subr.mxu0 0.0
  %5632 = vmatpush1.msra.mxu0 0.0
  %5633 = vmatprep.subr.mxu0 0.0
  %5634 = vmatpush1.msra.mxu0 0.0
  %5635 = vmatprep.subr.mxu0 0.0
  %5636 = vmatpush1.msra.mxu0 0.0
  %5637 = vmatprep.subr.mxu0 0.0
  %5638 = vmatpush1.msra.mxu0 0.0
  %5639 = vmatprep.subr.mxu0 0.0
  %5640 = vmatpush1.msra.mxu0 0.0
  %5641 = vmatprep.subr.mxu0 0.0
  %5642 = vmatpush1.msra.mxu0 0.0
  %5643 = vmatprep.subr.mxu0 0.0
  %5644 = vmatpush1.msra.mxu0 0.0
  %5645 = vmatprep.subr.mxu0 0.0
  %5646 = vmatpush1.msra.mxu0 0.0
  %5647 = vmatprep.subr.mxu0 0.0
  %5648 = vmatpush1.msra.mxu0 0.0
  %5649 = vmatprep.subr.mxu0 0.0
  %5650 = vmatpush1.msra.mxu0 0.0
  %5651 = vmatprep.mubr.f32.mxu0 0.0
  %5652 = vmatmul.mubr.f32.gmra.mrb[0].mxu0 %v5540
  %v5653 = vpop.f32.mrb[0].mxu0
  %v5654 = vadd.f32 %v5537, %v5653
  %v5655 = vpop.f32.mrb[0].mxu0
  %5656 = vmatprep.mubr.f32.mxu0 0.0
  %5657 = vmatmul.mubr.f32.gmra.mrb[0].mxu0 %v5543
  %v5658 = vpop.f32.mrb[0].mxu0
  %v5659 = vadd.f32 %v5537, %v5658
  %v5660 = vpop.f32.mrb[0].mxu0
  %5661 = vmatprep.mubr.f32.mxu0 0.0
  %5662 = vmatmul.mubr.f32.gmra.mrb[0].mxu0 %v5546
  %v5663 = vpop.f32.mrb[0].mxu0
  %v5664 = vadd.f32 %v5537, %v5663
  %v5665 = vpop.f32.mrb[0].mxu0
  %5666 = vmatprep.mubr.f32.mxu0 0.0
  %5667 = vmatmul.mubr.f32.gmra.mrb[0].mxu0 %v5549
  %v5668 = vpop.f32.mrb[0].mxu0
  %v5669 = vadd.f32 %v5537, %v5668
  %v5670 = vpop.f32.mrb[0].mxu0
  %5671 = vmatprep.mubr.f32.mxu0 0.0
  %5672 = vmatmul.mubr.f32.gmra.mrb[0].mxu0 %v5552
  %v5673 = vpop.f32.mrb[0].mxu0
  %v5674 = vadd.f32 %v5537, %v5673
  %v5675 = vpop.f32.mrb[0].mxu0
  %5676 = vmatprep.mubr.f32.mxu0 0.0
  %5677 = vmatmul.mubr.f32.gmra.mrb[0].mxu0 %v5555
  %v5678 = vpop.f32.mrb[0].mxu0
  %v5679 = vadd.f32 %v5537, %v5678
  %v5680 = vpop.f32.mrb[0].mxu0
  %5681 = vmatprep.mubr.f32.mxu0 0.0
  %5682 = vmatmul.mubr.f32.gmra.mrb[0].mxu0 %v5558
  %v5683 = vpop.f32.mrb[0].mxu0
  %v5684 = vadd.f32 %v5537, %v5683
  %v5685 = vpop.f32.mrb[0].mxu0
  %5686 = vmatprep.mubr.f32.mxu0 0.0
  %5687 = vmatmul.mubr.f32.gmra.mrb[0].mxu0 %v5561
  %v5688 = vpop.f32.mrb[0].mxu0
  %v5689 = vadd.f32 %v5537, %v5688
  %v5690 = vpop.f32.mrb[0].mxu0
  %5691 = vmatprep.mubr.f32.mxu0 0.0
  %5692 = vmatmul.mubr.f32.gmra.mrb[0].mxu0 %v5564
  %v5693 = vpop.f32.mrb[0].mxu0
  %v5694 = vadd.f32 %v5537, %v5693
  %v5695 = vpop.f32.mrb[0].mxu0
  %5696 = vmatprep.mubr.f32.mxu0 0.0
  %5697 = vmatmul.mubr.f32.gmra.mrb[0].mxu0 %v5567
  %v5698 = vpop.f32.mrb[0].mxu0
  %v5699 = vadd.f32 %v5537, %v5698
  %v5700 = vpop.f32.mrb[0].mxu0
  %5701 = vmatprep.mubr.f32.mxu0 0.0
  %5702 = vmatmul.mubr.f32.gmra.mrb[0].mxu0 %v5570
  %v5703 = vpop.f32.mrb[0].mxu0
  %v5704 = vadd.f32 %v5537, %v5703
  %v5705 = vpop.f32.mrb[0].mxu0
  %5706 = vmatprep.mubr.f32.mxu0 0.0
  %5707 = vmatmul.mubr.f32.gmra.mrb[0].mxu0 %v5573
  %v5708 = vpop.f32.mrb[0].mxu0
  %v5709 = vadd.f32 %v5537, %v5708
  %v5710 = vpop.f32.mrb[0].mxu0
  %5711 = vmatprep.mubr.f32.mxu0 0.0
  %5712 = vmatmul.mubr.f32.gmra.mrb[0].mxu0 %v5576
  %v5713 = vpop.f32.mrb[0].mxu0
  %v5714 = vadd.f32 %v5537, %v5713
  %v5715 = vpop.f32.mrb[0].mxu0
  %5716 = vmatprep.mubr.f32.mxu0 0.0
  %5717 = vmatmul.mubr.f32.gmra.mrb[0].mxu0 %v5579
  %v5718 = vpop.f32.mrb[0].mxu0
  %v5719 = vadd.f32 %v5537, %v5718
  %v5720 = vpop.f32.mrb[0].mxu0
  %5721 = vmatprep.mubr.f32.mxu0 0.0
  %5722 = vmatmul.mubr.f32.gmra.mrb[0].mxu0 %v5582
  %v5723 = vpop.f32.mrb[0].mxu0
  %v5724 = vadd.f32 %v5537, %v5723
  %v5725 = vpop.f32.mrb[0].mxu0
  %5726 = vmatprep.mubr.f32.mxu0 0.0
  %5727 = vmatmul.mubr.f32.gmra.mrb[0].mxu0 %v5585
  %v5728 = vpop.f32.mrb[0].mxu0
  %v5729 = vadd.f32 %v5537, %v5728
  %v5730 = vpop.f32.mrb[0].mxu0
  %5731 = vdwg.mxu0
  %v5732 = vmul.f32 %v5654, 0.5
  %v5733 = vmul.f32 %v5659, 0.5
  %v5734 = vmul.f32 %v5664, 0.5
  %v5735 = vmul.f32 %v5669, 0.5
  %v5736 = vmul.f32 %v5674, 0.5
  %v5737 = vmul.f32 %v5679, 0.5
  %v5738 = vmul.f32 %v5684, 0.5
  %v5739 = vmul.f32 %v5689, 0.5
  %v5740 = vmul.f32 %v5694, 0.5
  %v5741 = vmul.f32 %v5699, 0.5
  %v5742 = vmul.f32 %v5704, 0.5
  %v5743 = vmul.f32 %v5709, 0.5
  %v5744 = vmul.f32 %v5714, 0.5
  %v5745 = vmul.f32 %v5719, 0.5
  %v5746 = vmul.f32 %v5724, 0.5
  %v5747 = vmul.f32 %v5729, 0.5
  %v5748 = vmul.f32 %v5654, 0.70710677
  %v5749 = vmul.f32 %v5659, 0.70710677
  %v5750 = vmul.f32 %v5664, 0.70710677
  %v5751 = vmul.f32 %v5669, 0.70710677
  %v5752 = vmul.f32 %v5674, 0.70710677
  %v5753 = vmul.f32 %v5679, 0.70710677
  %v5754 = vmul.f32 %v5684, 0.70710677
  %v5755 = vmul.f32 %v5689, 0.70710677
  %v5756 = vmul.f32 %v5694, 0.70710677
  %v5757 = vmul.f32 %v5699, 0.70710677
  %v5758 = vmul.f32 %v5704, 0.70710677
  %v5759 = vmul.f32 %v5709, 0.70710677
  %v5760 = vmul.f32 %v5714, 0.70710677
  %v5761 = vmul.f32 %v5719, 0.70710677
  %v5762 = vmul.f32 %v5724, 0.70710677
  %v5763 = vmul.f32 %v5729, 0.70710677
  %v5764 = vand.u32 2147483647, %v5748
  %v5765 = vand.u32 2147483647, %v5749
  %v5766 = vand.u32 2147483647, %v5750
  %v5767 = vand.u32 2147483647, %v5751
  %v5768 = vand.u32 2147483647, %v5752
  %v5769 = vand.u32 2147483647, %v5753
  %v5770 = vand.u32 2147483647, %v5754
  %v5771 = vand.u32 2147483647, %v5755
  %v5772 = vand.u32 2147483647, %v5756
  %v5773 = vand.u32 2147483647, %v5757
  %v5774 = vand.u32 2147483647, %v5758
  %v5775 = vand.u32 2147483647, %v5759
  %v5776 = vand.u32 2147483647, %v5760
  %v5777 = vand.u32 2147483647, %v5761
  %v5778 = vand.u32 2147483647, %v5762
  %v5779 = vand.u32 2147483647, %v5763
  %v5780 = vmul.f32 %v5764, 0.3275911
  %v5781 = vmul.f32 %v5765, 0.3275911
  %v5782 = vmul.f32 %v5766, 0.3275911
  %v5783 = vmul.f32 %v5767, 0.3275911
  %v5784 = vmul.f32 %v5768, 0.3275911
  %v5785 = vmul.f32 %v5769, 0.3275911
  %v5786 = vmul.f32 %v5770, 0.3275911
  %v5787 = vmul.f32 %v5771, 0.3275911
  %v5788 = vmul.f32 %v5772, 0.3275911
  %v5789 = vmul.f32 %v5773, 0.3275911
  %v5790 = vmul.f32 %v5774, 0.3275911
  %v5791 = vmul.f32 %v5775, 0.3275911
  %v5792 = vmul.f32 %v5776, 0.3275911
  %v5793 = vmul.f32 %v5777, 0.3275911
  %v5794 = vmul.f32 %v5778, 0.3275911
  %v5795 = vmul.f32 %v5779, 0.3275911
  %v5796 = vadd.f32 %v5780, 1.0
  %v5797 = vadd.f32 %v5781, 1.0
  %v5798 = vadd.f32 %v5782, 1.0
  %v5799 = vadd.f32 %v5783, 1.0
  %v5800 = vadd.f32 %v5784, 1.0
  %v5801 = vadd.f32 %v5785, 1.0
  %v5802 = vadd.f32 %v5786, 1.0
  %v5803 = vadd.f32 %v5787, 1.0
  %v5804 = vadd.f32 %v5788, 1.0
  %v5805 = vadd.f32 %v5789, 1.0
  %v5806 = vadd.f32 %v5790, 1.0
  %v5807 = vadd.f32 %v5791, 1.0
  %v5808 = vadd.f32 %v5792, 1.0
  %v5809 = vadd.f32 %v5793, 1.0
  %v5810 = vadd.f32 %v5794, 1.0
  %v5811 = vadd.f32 %v5795, 1.0
  %v5812 = vrcp.pop %v5796
  %v5813 = vmul.f32 1.0, %v5812
  %v5814 = vrcp.pop %v5797
  %v5815 = vmul.f32 1.0, %v5814
  %v5816 = vrcp.pop %v5798
  %v5817 = vmul.f32 1.0, %v5816
  %v5818 = vrcp.pop %v5799
  %v5819 = vmul.f32 1.0, %v5818
  %v5820 = vrcp.pop %v5800
  %v5821 = vmul.f32 1.0, %v5820
  %v5822 = vrcp.pop %v5801
  %v5823 = vmul.f32 1.0, %v5822
  %v5824 = vrcp.pop %v5802
  %v5825 = vmul.f32 1.0, %v5824
  %v5826 = vrcp.pop %v5803
  %v5827 = vmul.f32 1.0, %v5826
  %v5828 = vrcp.pop %v5804
  %v5829 = vmul.f32 1.0, %v5828
  %v5830 = vrcp.pop %v5805
  %v5831 = vmul.f32 1.0, %v5830
  %v5832 = vrcp.pop %v5806
  %v5833 = vmul.f32 1.0, %v5832
  %v5834 = vrcp.pop %v5807
  %v5835 = vmul.f32 1.0, %v5834
  %v5836 = vrcp.pop %v5808
  %v5837 = vmul.f32 1.0, %v5836
  %v5838 = vrcp.pop %v5809
  %v5839 = vmul.f32 1.0, %v5838
  %v5840 = vrcp.pop %v5810
  %v5841 = vmul.f32 1.0, %v5840
  %v5842 = vrcp.pop %v5811
  %v5843 = vmul.f32 1.0, %v5842
  %v5844 = vmul.f32 %v5813, 1.0614054
  %v5845 = vmul.f32 %v5815, 1.0614054
  %v5846 = vmul.f32 %v5817, 1.0614054
  %v5847 = vmul.f32 %v5819, 1.0614054
  %v5848 = vmul.f32 %v5821, 1.0614054
  %v5849 = vmul.f32 %v5823, 1.0614054
  %v5850 = vmul.f32 %v5825, 1.0614054
  %v5851 = vmul.f32 %v5827, 1.0614054
  %v5852 = vmul.f32 %v5829, 1.0614054
  %v5853 = vmul.f32 %v5831, 1.0614054
  %v5854 = vmul.f32 %v5833, 1.0614054
  %v5855 = vmul.f32 %v5835, 1.0614054
  %v5856 = vmul.f32 %v5837, 1.0614054
  %v5857 = vmul.f32 %v5839, 1.0614054
  %v5858 = vmul.f32 %v5841, 1.0614054
  %v5859 = vmul.f32 %v5843, 1.0614054
  %v5860 = vadd.f32 %v5844, -1.4531521
  %v5861 = vadd.f32 %v5845, -1.4531521
  %v5862 = vadd.f32 %v5846, -1.4531521
  %v5863 = vadd.f32 %v5847, -1.4531521
  %v5864 = vadd.f32 %v5848, -1.4531521
  %v5865 = vadd.f32 %v5849, -1.4531521
  %v5866 = vadd.f32 %v5850, -1.4531521
  %v5867 = vadd.f32 %v5851, -1.4531521
  %v5868 = vadd.f32 %v5852, -1.4531521
  %v5869 = vadd.f32 %v5853, -1.4531521
  %v5870 = vadd.f32 %v5854, -1.4531521
  %v5871 = vadd.f32 %v5855, -1.4531521
  %v5872 = vadd.f32 %v5856, -1.4531521
  %v5873 = vadd.f32 %v5857, -1.4531521
  %v5874 = vadd.f32 %v5858, -1.4531521
  %v5875 = vadd.f32 %v5859, -1.4531521
  %v5876 = vmul.f32 %v5860, %v5813
  %v5877 = vmul.f32 %v5861, %v5815
  %v5878 = vmul.f32 %v5862, %v5817
  %v5879 = vmul.f32 %v5863, %v5819
  %v5880 = vmul.f32 %v5864, %v5821
  %v5881 = vmul.f32 %v5865, %v5823
  %v5882 = vmul.f32 %v5866, %v5825
  %v5883 = vmul.f32 %v5867, %v5827
  %v5884 = vmul.f32 %v5868, %v5829
  %v5885 = vmul.f32 %v5869, %v5831
  %v5886 = vmul.f32 %v5870, %v5833
  %v5887 = vmul.f32 %v5871, %v5835
  %v5888 = vmul.f32 %v5872, %v5837
  %v5889 = vmul.f32 %v5873, %v5839
  %v5890 = vmul.f32 %v5874, %v5841
  %v5891 = vmul.f32 %v5875, %v5843
  %v5892 = vadd.f32 %v5876, 1.4214138
  %v5893 = vadd.f32 %v5877, 1.4214138
  %v5894 = vadd.f32 %v5878, 1.4214138
  %v5895 = vadd.f32 %v5879, 1.4214138
  %v5896 = vadd.f32 %v5880, 1.4214138
  %v5897 = vadd.f32 %v5881, 1.4214138
  %v5898 = vadd.f32 %v5882, 1.4214138
  %v5899 = vadd.f32 %v5883, 1.4214138
  %v5900 = vadd.f32 %v5884, 1.4214138
  %v5901 = vadd.f32 %v5885, 1.4214138
  %v5902 = vadd.f32 %v5886, 1.4214138
  %v5903 = vadd.f32 %v5887, 1.4214138
  %v5904 = vadd.f32 %v5888, 1.4214138
  %v5905 = vadd.f32 %v5889, 1.4214138
  %v5906 = vadd.f32 %v5890, 1.4214138
  %v5907 = vadd.f32 %v5891, 1.4214138
  %v5908 = vmul.f32 %v5892, %v5813
  %v5909 = vmul.f32 %v5893, %v5815
  %v5910 = vmul.f32 %v5894, %v5817
  %v5911 = vmul.f32 %v5895, %v5819
  %v5912 = vmul.f32 %v5896, %v5821
  %v5913 = vmul.f32 %v5897, %v5823
  %v5914 = vmul.f32 %v5898, %v5825
  %v5915 = vmul.f32 %v5899, %v5827
  %v5916 = vmul.f32 %v5900, %v5829
  %v5917 = vmul.f32 %v5901, %v5831
  %v5918 = vmul.f32 %v5902, %v5833
  %v5919 = vmul.f32 %v5903, %v5835
  %v5920 = vmul.f32 %v5904, %v5837
  %v5921 = vmul.f32 %v5905, %v5839
  %v5922 = vmul.f32 %v5906, %v5841
  %v5923 = vmul.f32 %v5907, %v5843
  %v5924 = vadd.f32 %v5908, -0.28449672
  %v5925 = vadd.f32 %v5909, -0.28449672
  %v5926 = vadd.f32 %v5910, -0.28449672
  %v5927 = vadd.f32 %v5911, -0.28449672
  %v5928 = vadd.f32 %v5912, -0.28449672
  %v5929 = vadd.f32 %v5913, -0.28449672
  %v5930 = vadd.f32 %v5914, -0.28449672
  %v5931 = vadd.f32 %v5915, -0.28449672
  %v5932 = vadd.f32 %v5916, -0.28449672
  %v5933 = vadd.f32 %v5917, -0.28449672
  %v5934 = vadd.f32 %v5918, -0.28449672
  %v5935 = vadd.f32 %v5919, -0.28449672
  %v5936 = vadd.f32 %v5920, -0.28449672
  %v5937 = vadd.f32 %v5921, -0.28449672
  %v5938 = vadd.f32 %v5922, -0.28449672
  %v5939 = vadd.f32 %v5923, -0.28449672
  %v5940 = vmul.f32 %v5924, %v5813
  %v5941 = vmul.f32 %v5925, %v5815
  %v5942 = vmul.f32 %v5926, %v5817
  %v5943 = vmul.f32 %v5927, %v5819
  %v5944 = vmul.f32 %v5928, %v5821
  %v5945 = vmul.f32 %v5929, %v5823
  %v5946 = vmul.f32 %v5930, %v5825
  %v5947 = vmul.f32 %v5931, %v5827
  %v5948 = vmul.f32 %v5932, %v5829
  %v5949 = vmul.f32 %v5933, %v5831
  %v5950 = vmul.f32 %v5934, %v5833
  %v5951 = vmul.f32 %v5935, %v5835
  %v5952 = vmul.f32 %v5936, %v5837
  %v5953 = vmul.f32 %v5937, %v5839
  %v5954 = vmul.f32 %v5938, %v5841
  %v5955 = vmul.f32 %v5939, %v5843
  %v5956 = vadd.f32 %v5940, 0.2548296
  %v5957 = vadd.f32 %v5941, 0.2548296
  %v5958 = vadd.f32 %v5942, 0.2548296
  %v5959 = vadd.f32 %v5943, 0.2548296
  %v5960 = vadd.f32 %v5944, 0.2548296
  %v5961 = vadd.f32 %v5945, 0.2548296
  %v5962 = vadd.f32 %v5946, 0.2548296
  %v5963 = vadd.f32 %v5947, 0.2548296
  %v5964 = vadd.f32 %v5948, 0.2548296
  %v5965 = vadd.f32 %v5949, 0.2548296
  %v5966 = vadd.f32 %v5950, 0.2548296
  %v5967 = vadd.f32 %v5951, 0.2548296
  %v5968 = vadd.f32 %v5952, 0.2548296
  %v5969 = vadd.f32 %v5953, 0.2548296
  %v5970 = vadd.f32 %v5954, 0.2548296
  %v5971 = vadd.f32 %v5955, 0.2548296
  %v5972 = vmul.f32 %v5956, %v5813
  %v5973 = vmul.f32 %v5957, %v5815
  %v5974 = vmul.f32 %v5958, %v5817
  %v5975 = vmul.f32 %v5959, %v5819
  %v5976 = vmul.f32 %v5960, %v5821
  %v5977 = vmul.f32 %v5961, %v5823
  %v5978 = vmul.f32 %v5962, %v5825
  %v5979 = vmul.f32 %v5963, %v5827
  %v5980 = vmul.f32 %v5964, %v5829
  %v5981 = vmul.f32 %v5965, %v5831
  %v5982 = vmul.f32 %v5966, %v5833
  %v5983 = vmul.f32 %v5967, %v5835
  %v5984 = vmul.f32 %v5968, %v5837
  %v5985 = vmul.f32 %v5969, %v5839
  %v5986 = vmul.f32 %v5970, %v5841
  %v5987 = vmul.f32 %v5971, %v5843
  %v5988 = vsub.f32 0.0, %v5764
  %v5989 = vsub.f32 0.0, %v5765
  %v5990 = vsub.f32 0.0, %v5766
  %v5991 = vsub.f32 0.0, %v5767
  %v5992 = vsub.f32 0.0, %v5768
  %v5993 = vsub.f32 0.0, %v5769
  %v5994 = vsub.f32 0.0, %v5770
  %v5995 = vsub.f32 0.0, %v5771
  %v5996 = vsub.f32 0.0, %v5772
  %v5997 = vsub.f32 0.0, %v5773
  %v5998 = vsub.f32 0.0, %v5774
  %v5999 = vsub.f32 0.0, %v5775
  %v6000 = vsub.f32 0.0, %v5776
  %v6001 = vsub.f32 0.0, %v5777
  %v6002 = vsub.f32 0.0, %v5778
  %v6003 = vsub.f32 0.0, %v5779
  %v6004 = vmul.f32 %v5988, %v5764
  %v6005 = vmul.f32 %v5989, %v5765
  %v6006 = vmul.f32 %v5990, %v5766
  %v6007 = vmul.f32 %v5991, %v5767
  %v6008 = vmul.f32 %v5992, %v5768
  %v6009 = vmul.f32 %v5993, %v5769
  %v6010 = vmul.f32 %v5994, %v5770
  %v6011 = vmul.f32 %v5995, %v5771
  %v6012 = vmul.f32 %v5996, %v5772
  %v6013 = vmul.f32 %v5997, %v5773
  %v6014 = vmul.f32 %v5998, %v5774
  %v6015 = vmul.f32 %v5999, %v5775
  %v6016 = vmul.f32 %v6000, %v5776
  %v6017 = vmul.f32 %v6001, %v5777
  %v6018 = vmul.f32 %v6002, %v5778
  %v6019 = vmul.f32 %v6003, %v5779
  %v6020 = vmul.f32 %v6004, 1.442695
  %v6021 = vpow.pop %v6020
  %v6022 = vmul.f32 %v6005, 1.442695
  %v6023 = vpow.pop %v6022
  %v6024 = vmul.f32 %v6006, 1.442695
  %v6025 = vpow.pop %v6024
  %v6026 = vmul.f32 %v6007, 1.442695
  %v6027 = vpow.pop %v6026
  %v6028 = vmul.f32 %v6008, 1.442695
  %v6029 = vpow.pop %v6028
  %v6030 = vmul.f32 %v6009, 1.442695
  %v6031 = vpow.pop %v6030
  %v6032 = vmul.f32 %v6010, 1.442695
  %v6033 = vpow.pop %v6032
  %v6034 = vmul.f32 %v6011, 1.442695
  %v6035 = vpow.pop %v6034
  %v6036 = vmul.f32 %v6012, 1.442695
  %v6037 = vpow.pop %v6036
  %v6038 = vmul.f32 %v6013, 1.442695
  %v6039 = vpow.pop %v6038
  %v6040 = vmul.f32 %v6014, 1.442695
  %v6041 = vpow.pop %v6040
  %v6042 = vmul.f32 %v6015, 1.442695
  %v6043 = vpow.pop %v6042
  %v6044 = vmul.f32 %v6016, 1.442695
  %v6045 = vpow.pop %v6044
  %v6046 = vmul.f32 %v6017, 1.442695
  %v6047 = vpow.pop %v6046
  %v6048 = vmul.f32 %v6018, 1.442695
  %v6049 = vpow.pop %v6048
  %v6050 = vmul.f32 %v6019, 1.442695
  %v6051 = vpow.pop %v6050
  %v6052 = vmul.f32 %v5972, %v6021
  %v6053 = vmul.f32 %v5973, %v6023
  %v6054 = vmul.f32 %v5974, %v6025
  %v6055 = vmul.f32 %v5975, %v6027
  %v6056 = vmul.f32 %v5976, %v6029
  %v6057 = vmul.f32 %v5977, %v6031
  %v6058 = vmul.f32 %v5978, %v6033
  %v6059 = vmul.f32 %v5979, %v6035
  %v6060 = vmul.f32 %v5980, %v6037
  %v6061 = vmul.f32 %v5981, %v6039
  %v6062 = vmul.f32 %v5982, %v6041
  %v6063 = vmul.f32 %v5983, %v6043
  %v6064 = vmul.f32 %v5984, %v6045
  %v6065 = vmul.f32 %v5985, %v6047
  %v6066 = vmul.f32 %v5986, %v6049
  %v6067 = vmul.f32 %v5987, %v6051
  %v6068 = vsub.f32 1.0, %v6052
  %v6069 = vsub.f32 1.0, %v6053
  %v6070 = vsub.f32 1.0, %v6054
  %v6071 = vsub.f32 1.0, %v6055
  %v6072 = vsub.f32 1.0, %v6056
  %v6073 = vsub.f32 1.0, %v6057
  %v6074 = vsub.f32 1.0, %v6058
  %v6075 = vsub.f32 1.0, %v6059
  %v6076 = vsub.f32 1.0, %v6060
  %v6077 = vsub.f32 1.0, %v6061
  %v6078 = vsub.f32 1.0, %v6062
  %v6079 = vsub.f32 1.0, %v6063
  %v6080 = vsub.f32 1.0, %v6064
  %v6081 = vsub.f32 1.0, %v6065
  %v6082 = vsub.f32 1.0, %v6066
  %v6083 = vsub.f32 1.0, %v6067
  %vm6084 = vcmp.ge.f32.partialorder %v5748, 0.0
  %vm6085 = vcmp.ge.f32.partialorder %v5749, 0.0
  %vm6086 = vcmp.ge.f32.partialorder %v5750, 0.0
  %vm6087 = vcmp.ge.f32.partialorder %v5751, 0.0
  %vm6088 = vcmp.ge.f32.partialorder %v5752, 0.0
  %vm6089 = vcmp.ge.f32.partialorder %v5753, 0.0
  %vm6090 = vcmp.ge.f32.partialorder %v5754, 0.0
  %vm6091 = vcmp.ge.f32.partialorder %v5755, 0.0
  %vm6092 = vcmp.ge.f32.partialorder %v5756, 0.0
  %vm6093 = vcmp.ge.f32.partialorder %v5757, 0.0
  %vm6094 = vcmp.ge.f32.partialorder %v5758, 0.0
  %vm6095 = vcmp.ge.f32.partialorder %v5759, 0.0
  %vm6096 = vcmp.ge.f32.partialorder %v5760, 0.0
  %vm6097 = vcmp.ge.f32.partialorder %v5761, 0.0
  %vm6098 = vcmp.ge.f32.partialorder %v5762, 0.0
  %vm6099 = vcmp.ge.f32.partialorder %v5763, 0.0
  %v6100 = vsub.f32 0.0, %v6068
  %v6101 = vsub.f32 0.0, %v6069
  %v6102 = vsub.f32 0.0, %v6070
  %v6103 = vsub.f32 0.0, %v6071
  %v6104 = vsub.f32 0.0, %v6072
  %v6105 = vsub.f32 0.0, %v6073
  %v6106 = vsub.f32 0.0, %v6074
  %v6107 = vsub.f32 0.0, %v6075
  %v6108 = vsub.f32 0.0, %v6076
  %v6109 = vsub.f32 0.0, %v6077
  %v6110 = vsub.f32 0.0, %v6078
  %v6111 = vsub.f32 0.0, %v6079
  %v6112 = vsub.f32 0.0, %v6080
  %v6113 = vsub.f32 0.0, %v6081
  %v6114 = vsub.f32 0.0, %v6082
  %v6115 = vsub.f32 0.0, %v6083
  %v6116 = vsel %vm6084, %v6068, %v6100
  %v6117 = vsel %vm6085, %v6069, %v6101
  %v6118 = vsel %vm6086, %v6070, %v6102
  %v6119 = vsel %vm6087, %v6071, %v6103
  %v6120 = vsel %vm6088, %v6072, %v6104
  %v6121 = vsel %vm6089, %v6073, %v6105
  %v6122 = vsel %vm6090, %v6074, %v6106
  %v6123 = vsel %vm6091, %v6075, %v6107
  %v6124 = vsel %vm6092, %v6076, %v6108
  %v6125 = vsel %vm6093, %v6077, %v6109
  %v6126 = vsel %vm6094, %v6078, %v6110
  %v6127 = vsel %vm6095, %v6079, %v6111
  %v6128 = vsel %vm6096, %v6080, %v6112
  %v6129 = vsel %vm6097, %v6081, %v6113
  %v6130 = vsel %vm6098, %v6082, %v6114
  %v6131 = vsel %vm6099, %v6083, %v6115
  %v6132 = vadd.f32 %v6116, 1.0
  %v6133 = vadd.f32 %v6117, 1.0
  %v6134 = vadd.f32 %v6118, 1.0
  %v6135 = vadd.f32 %v6119, 1.0
  %v6136 = vadd.f32 %v6120, 1.0
  %v6137 = vadd.f32 %v6121, 1.0
  %v6138 = vadd.f32 %v6122, 1.0
  %v6139 = vadd.f32 %v6123, 1.0
  %v6140 = vadd.f32 %v6124, 1.0
  %v6141 = vadd.f32 %v6125, 1.0
  %v6142 = vadd.f32 %v6126, 1.0
  %v6143 = vadd.f32 %v6127, 1.0
  %v6144 = vadd.f32 %v6128, 1.0
  %v6145 = vadd.f32 %v6129, 1.0
  %v6146 = vadd.f32 %v6130, 1.0
  %v6147 = vadd.f32 %v6131, 1.0
  %v6148 = vmul.f32 %v5732, %v6132
  %v6149 = vmul.f32 %v5733, %v6133
  %v6150 = vmul.f32 %v5734, %v6134
  %v6151 = vmul.f32 %v5735, %v6135
  %v6152 = vmul.f32 %v5736, %v6136
  %v6153 = vmul.f32 %v5737, %v6137
  %v6154 = vmul.f32 %v5738, %v6138
  %v6155 = vmul.f32 %v5739, %v6139
  %v6156 = vmul.f32 %v5740, %v6140
  %v6157 = vmul.f32 %v5741, %v6141
  %v6158 = vmul.f32 %v5742, %v6142
  %v6159 = vmul.f32 %v5743, %v6143
  %v6160 = vmul.f32 %v5744, %v6144
  %v6161 = vmul.f32 %v5745, %v6145
  %v6162 = vmul.f32 %v5746, %v6146
  %v6163 = vmul.f32 %v5747, %v6147
  %v6164 = vld [vmem:[%s9] sm:$0xff]
  %v6165 = vld [vmem:[%s9 + $0x8] sm:$0xff]
  %v6166 = vld [vmem:[%s9 + $0x10] sm:$0xff]
  %v6167 = vld [vmem:[%s9 + $0x18] sm:$0xff]
  %v6168 = vld [vmem:[%s9 + $0x20] sm:$0xff]
  %v6169 = vld [vmem:[%s9 + $0x28] sm:$0xff]
  %v6170 = vld [vmem:[%s9 + $0x30] sm:$0xff]
  %v6171 = vld [vmem:[%s9 + $0x38] sm:$0xff]
  %v6172 = vld [vmem:[%s9 + $0x40] sm:$0xff]
  %v6173 = vld [vmem:[%s9 + $0x48] sm:$0xff]
  %v6174 = vld [vmem:[%s9 + $0x50] sm:$0xff]
  %v6175 = vld [vmem:[%s9 + $0x58] sm:$0xff]
  %v6176 = vld [vmem:[%s9 + $0x60] sm:$0xff]
  %v6177 = vld [vmem:[%s9 + $0x68] sm:$0xff]
  %v6178 = vld [vmem:[%s9 + $0x70] sm:$0xff]
  %v6179 = vld [vmem:[%s9 + $0x78] sm:$0xff]
  %v6180 = vlaneseq
  %v6181 = vshrl.u32 %v6180, 7
  %v6182 = vsub.s32 1, %v6181
  %v6183 = vrot.slane %v52, %v6182
  %6184 = vmatprep.subr.mxu0 0.0
  %6185 = vmatpush1.msra.mxu0 %v6164
  %6186 = vmatprep.subr.mxu0 0.0
  %6187 = vmatpush1.msra.mxu0 %v6165
  %6188 = vmatprep.subr.mxu0 0.0
  %6189 = vmatpush1.msra.mxu0 %v6166
  %6190 = vmatprep.subr.mxu0 0.0
  %6191 = vmatpush1.msra.mxu0 %v6167
  %6192 = vmatprep.subr.mxu0 0.0
  %6193 = vmatpush1.msra.mxu0 %v6168
  %6194 = vmatprep.subr.mxu0 0.0
  %6195 = vmatpush1.msra.mxu0 %v6169
  %6196 = vmatprep.subr.mxu0 0.0
  %6197 = vmatpush1.msra.mxu0 %v6170
  %6198 = vmatprep.subr.mxu0 0.0
  %6199 = vmatpush1.msra.mxu0 %v6171
  %6200 = vmatprep.subr.mxu0 0.0
  %6201 = vmatpush1.msra.mxu0 %v6172
  %6202 = vmatprep.subr.mxu0 0.0
  %6203 = vmatpush1.msra.mxu0 %v6173
  %6204 = vmatprep.subr.mxu0 0.0
  %6205 = vmatpush1.msra.mxu0 %v6174
  %6206 = vmatprep.subr.mxu0 0.0
  %6207 = vmatpush1.msra.mxu0 %v6175
  %6208 = vmatprep.subr.mxu0 0.0
  %6209 = vmatpush1.msra.mxu0 %v6176
  %6210 = vmatprep.subr.mxu0 0.0
  %6211 = vmatpush1.msra.mxu0 %v6177
  %6212 = vmatprep.subr.mxu0 0.0
  %6213 = vmatpush1.msra.mxu0 %v6178
  %6214 = vmatprep.subr.mxu0 0.0
  %6215 = vmatpush1.msra.mxu0 %v6179
  %6216 = vmatprep.subr.mxu0 0.0
  %6217 = vmatpush1.msra.mxu0 0.0
  %6218 = vmatprep.subr.mxu0 0.0
  %6219 = vmatpush1.msra.mxu0 0.0
  %6220 = vmatprep.subr.mxu0 0.0
  %6221 = vmatpush1.msra.mxu0 0.0
  %6222 = vmatprep.subr.mxu0 0.0
  %6223 = vmatpush1.msra.mxu0 0.0
  %6224 = vmatprep.subr.mxu0 0.0
  %6225 = vmatpush1.msra.mxu0 0.0
  %6226 = vmatprep.subr.mxu0 0.0
  %6227 = vmatpush1.msra.mxu0 0.0
  %6228 = vmatprep.subr.mxu0 0.0
  %6229 = vmatpush1.msra.mxu0 0.0
  %6230 = vmatprep.subr.mxu0 0.0
  %6231 = vmatpush1.msra.mxu0 0.0
  %6232 = vmatprep.subr.mxu0 0.0
  %6233 = vmatpush1.msra.mxu0 0.0
  %6234 = vmatprep.subr.mxu0 0.0
  %6235 = vmatpush1.msra.mxu0 0.0
  %6236 = vmatprep.subr.mxu0 0.0
  %6237 = vmatpush1.msra.mxu0 0.0
  %6238 = vmatprep.subr.mxu0 0.0
  %6239 = vmatpush1.msra.mxu0 0.0
  %6240 = vmatprep.subr.mxu0 0.0
  %6241 = vmatpush1.msra.mxu0 0.0
  %6242 = vmatprep.subr.mxu0 0.0
  %6243 = vmatpush1.msra.mxu0 0.0
  %6244 = vmatprep.subr.mxu0 0.0
  %6245 = vmatpush1.msra.mxu0 0.0
  %6246 = vmatprep.subr.mxu0 0.0
  %6247 = vmatpush1.msra.mxu0 0.0
  %6248 = vmatprep.mubr.f32.mxu0 0.0
  %6249 = vmatmul.mubr.f32.gmra.mrb[0].mxu0 %v6148
  %v6250 = vpop.f32.mrb[0].mxu0
  %v6251 = vadd.f32 %v6183, %v6250
  %v6252 = vpop.f32.mrb[0].mxu0
  %6253 = vmatprep.mubr.f32.mxu0 0.0
  %6254 = vmatmul.mubr.f32.gmra.mrb[0].mxu0 %v6149
  %v6255 = vpop.f32.mrb[0].mxu0
  %v6256 = vadd.f32 %v6183, %v6255
  %v6257 = vpop.f32.mrb[0].mxu0
  %6258 = vmatprep.mubr.f32.mxu0 0.0
  %6259 = vmatmul.mubr.f32.gmra.mrb[0].mxu0 %v6150
  %v6260 = vpop.f32.mrb[0].mxu0
  %v6261 = vadd.f32 %v6183, %v6260
  %v6262 = vpop.f32.mrb[0].mxu0
  %6263 = vmatprep.mubr.f32.mxu0 0.0
  %6264 = vmatmul.mubr.f32.gmra.mrb[0].mxu0 %v6151
  %v6265 = vpop.f32.mrb[0].mxu0
  %v6266 = vadd.f32 %v6183, %v6265
  %v6267 = vpop.f32.mrb[0].mxu0
  %6268 = vmatprep.mubr.f32.mxu0 0.0
  %6269 = vmatmul.mubr.f32.gmra.mrb[0].mxu0 %v6152
  %v6270 = vpop.f32.mrb[0].mxu0
  %v6271 = vadd.f32 %v6183, %v6270
  %v6272 = vpop.f32.mrb[0].mxu0
  %6273 = vmatprep.mubr.f32.mxu0 0.0
  %6274 = vmatmul.mubr.f32.gmra.mrb[0].mxu0 %v6153
  %v6275 = vpop.f32.mrb[0].mxu0
  %v6276 = vadd.f32 %v6183, %v6275
  %v6277 = vpop.f32.mrb[0].mxu0
  %6278 = vmatprep.mubr.f32.mxu0 0.0
  %6279 = vmatmul.mubr.f32.gmra.mrb[0].mxu0 %v6154
  %v6280 = vpop.f32.mrb[0].mxu0
  %v6281 = vadd.f32 %v6183, %v6280
  %v6282 = vpop.f32.mrb[0].mxu0
  %6283 = vmatprep.mubr.f32.mxu0 0.0
  %6284 = vmatmul.mubr.f32.gmra.mrb[0].mxu0 %v6155
  %v6285 = vpop.f32.mrb[0].mxu0
  %v6286 = vadd.f32 %v6183, %v6285
  %v6287 = vpop.f32.mrb[0].mxu0
  %6288 = vmatprep.mubr.f32.mxu0 0.0
  %6289 = vmatmul.mubr.f32.gmra.mrb[0].mxu0 %v6156
  %v6290 = vpop.f32.mrb[0].mxu0
  %v6291 = vadd.f32 %v6183, %v6290
  %v6292 = vpop.f32.mrb[0].mxu0
  %6293 = vmatprep.mubr.f32.mxu0 0.0
  %6294 = vmatmul.mubr.f32.gmra.mrb[0].mxu0 %v6157
  %v6295 = vpop.f32.mrb[0].mxu0
  %v6296 = vadd.f32 %v6183, %v6295
  %v6297 = vpop.f32.mrb[0].mxu0
  %6298 = vmatprep.mubr.f32.mxu0 0.0
  %6299 = vmatmul.mubr.f32.gmra.mrb[0].mxu0 %v6158
  %v6300 = vpop.f32.mrb[0].mxu0
  %v6301 = vadd.f32 %v6183, %v6300
  %v6302 = vpop.f32.mrb[0].mxu0
  %6303 = vmatprep.mubr.f32.mxu0 0.0
  %6304 = vmatmul.mubr.f32.gmra.mrb[0].mxu0 %v6159
  %v6305 = vpop.f32.mrb[0].mxu0
  %v6306 = vadd.f32 %v6183, %v6305
  %v6307 = vpop.f32.mrb[0].mxu0
  %6308 = vmatprep.mubr.f32.mxu0 0.0
  %6309 = vmatmul.mubr.f32.gmra.mrb[0].mxu0 %v6160
  %v6310 = vpop.f32.mrb[0].mxu0
  %v6311 = vadd.f32 %v6183, %v6310
  %v6312 = vpop.f32.mrb[0].mxu0
  %6313 = vmatprep.mubr.f32.mxu0 0.0
  %6314 = vmatmul.mubr.f32.gmra.mrb[0].mxu0 %v6161
  %v6315 = vpop.f32.mrb[0].mxu0
  %v6316 = vadd.f32 %v6183, %v6315
  %v6317 = vpop.f32.mrb[0].mxu0
  %6318 = vmatprep.mubr.f32.mxu0 0.0
  %6319 = vmatmul.mubr.f32.gmra.mrb[0].mxu0 %v6162
  %v6320 = vpop.f32.mrb[0].mxu0
  %v6321 = vadd.f32 %v6183, %v6320
  %v6322 = vpop.f32.mrb[0].mxu0
  %6323 = vmatprep.mubr.f32.mxu0 0.0
  %6324 = vmatmul.mubr.f32.gmra.mrb[0].mxu0 %v6163
  %v6325 = vpop.f32.mrb[0].mxu0
  %v6326 = vadd.f32 %v6183, %v6325
  %v6327 = vpop.f32.mrb[0].mxu0
  %6328 = vdwg.mxu0
  %v6329 = vadd.f32 %v5264, %v6251
  %v6330 = vadd.f32 %v5265, %v6256
  %v6331 = vadd.f32 %v5266, %v6261
  %v6332 = vadd.f32 %v5267, %v6266
  %v6333 = vadd.f32 %v5268, %v6271
  %v6334 = vadd.f32 %v5269, %v6276
  %v6335 = vadd.f32 %v5270, %v6281
  %v6336 = vadd.f32 %v5271, %v6286
  %v6337 = vadd.f32 %v5272, %v6291
  %v6338 = vadd.f32 %v5273, %v6296
  %v6339 = vadd.f32 %v5274, %v6301
  %v6340 = vadd.f32 %v5275, %v6306
  %v6341 = vadd.f32 %v5276, %v6311
  %v6342 = vadd.f32 %v5277, %v6316
  %v6343 = vadd.f32 %v5278, %v6321
  %v6344 = vadd.f32 %v5279, %v6326
  %6345 = vst.msk [vmem:[%s10] sm:$0xff] %vm53, %v6329
  %6346 = vst.msk [vmem:[%s10 + $0x8] sm:$0xff] %vm53, %v6330
  %6347 = vst.msk [vmem:[%s10 + $0x10] sm:$0xff] %vm53, %v6331
  %6348 = vst.msk [vmem:[%s10 + $0x18] sm:$0xff] %vm53, %v6332
  %6349 = vst.msk [vmem:[%s10 + $0x20] sm:$0xff] %vm53, %v6333
  %6350 = vst.msk [vmem:[%s10 + $0x28] sm:$0xff] %vm53, %v6334
  %6351 = vst.msk [vmem:[%s10 + $0x30] sm:$0xff] %vm53, %v6335
  %6352 = vst.msk [vmem:[%s10 + $0x38] sm:$0xff] %vm53, %v6336
  %6353 = vst.msk [vmem:[%s10 + $0x40] sm:$0xff] %vm53, %v6337
  %6354 = vst.msk [vmem:[%s10 + $0x48] sm:$0xff] %vm53, %v6338
  %6355 = vst.msk [vmem:[%s10 + $0x50] sm:$0xff] %vm53, %v6339
  %6356 = vst.msk [vmem:[%s10 + $0x58] sm:$0xff] %vm53, %v6340
  %6357 = vst.msk [vmem:[%s10 + $0x60] sm:$0xff] %vm53, %v6341
  %6358 = vst.msk [vmem:[%s10 + $0x68] sm:$0xff] %vm53, %v6342
  %6359 = vst.msk [vmem:[%s10 + $0x70] sm:$0xff] %vm53, %v6343
  %6360 = vst.msk [vmem:[%s10 + $0x78] sm:$0xff] %vm53, %v6344
  // Predicated region
  $region42: #{tpu_custom_call.1} parent=0 // pred_check
    _
  $region43: #{tpu_custom_call.1} parent=0 // pred_check_branch
    %6362 = sbr.rel (0) target = $region45
  $region44: #{tpu_custom_call.1} parent=0 // pred_region
    _
  $region45: #{tpu_custom_call.1} parent=0 // pred_fallthru
    _
  // Predicated region
  $region46: #{tpu_custom_call.1} parent=0 // pred_check
    _
  $region47: #{tpu_custom_call.1} parent=0 // pred_check_branch
    %6364 = sbr.rel (0) target = $region49
  $region48: #{tpu_custom_call.1} parent=0 // pred_region
    _
  $region49: #{tpu_custom_call.1} parent=0 // pred_fallthru
    _

</llo_original>
